<compile_context>
chip_gen: v7x
topology: tpu7x:2x2x1
jax: 0.10.0
libtpu: 0.0.40
codegen_flags: <defaults>
</compile_context>

<pallas_src>
import functools
import math

import jax
import jax.numpy as jnp
from jax.experimental import pallas as pl
from jax.experimental.pallas import tpu as pltpu

N_FFT = 2048
HOP = 512
TR_MAX = 512          # max frame rows per grid step (bf16 (2,TR,n_fft) tile = 4 MiB)


def _freq_mse_kernel(frames_ref, basis_ref, out_ref, *, kf_group):
    """One row tile of stacked (pred, target) frames against one basis column group.

    frames_ref : (2, TR, n_fft)          bf16, [0]=pred rows, [1]=target rows
    basis_ref  : (n_fft, kf_group*256)   bf16 fused, window-folded [cos|sin] basis
    out_ref    : (8, 128)                f32 per-(row tile, col group) partial sum
    """
    tr = frames_ref.shape[1]
    n_fft = frames_ref.shape[2]
    # Stack pred rows on top of target rows -> one MXU LHS per slab.
    x = frames_ref[...].reshape(2 * tr, n_fft)

    col0 = jax.lax.broadcasted_iota(jnp.int32, (tr, 128), 1) == 0
    # DC/Nyquist live in lane 0 of absolute freq tile 0 == local tile 0 of group 0.
    in_group0 = pl.program_id(1) == 0

    acc = jnp.zeros((tr, 128), jnp.float32)
    for j in range(kf_group):                 # static, unrolled slab loop (N-split)
        c0 = j * 256
        bslab = basis_ref[:, c0:c0 + 256]     # static 256-aligned slice: free
        s = jnp.dot(x, bslab, preferred_element_type=jnp.float32)   # (2*TR, 256)
        sp, st = s[:tr], s[tr:]               # static sublane split pred / target
        rp, ip = sp[:, :128], sp[:, 128:]
        rt, it = st[:, :128], st[:, 128:]
        mp = jnp.sqrt(rp * rp + ip * ip)
        mt = jnp.sqrt(rt * rt + it * it)
        d = mp - mt
        sq = d * d
        if j == 0:
            # Lane 0 of the absolute first tile: cos slot carries DC, sin slot
            # carries Nyquist; both bins are purely real, magnitude = |re| / |im|.
            d_dc = jnp.abs(rp) - jnp.abs(rt)
            d_ny = jnp.abs(ip) - jnp.abs(it)
            sq = jnp.where(jnp.logical_and(col0, in_group0),
                           d_dc * d_dc + d_ny * d_ny, sq)
        acc = acc + sq
    # Fold rows (TR,128) -> (8,128) once; final scalar reduce stays in XLA glue.
    out_ref[...] = acc.reshape(tr // 8, 8, 128).sum(axis=0)


def _frames_bf16(x, n_fft, hop):
    """(n_sig, L) f32 -> ((n_sig*n_frames, n_fft) bf16, n_frames).

    Matches torch.stft(center=True, pad_mode='constant'): frame f of signal s is
    padded[s, f*hop : f*hop + n_fft].  Built from non-overlapping hop blocks with
    slices + concat (no gather).
    """
    n_sig, L = x.shape
    ratio = n_fft // hop
    n_frames = 1 + L // hop
    n_blocks = n_frames + ratio - 1
    pad_left = n_fft // 2
    pad_right = n_blocks * hop - pad_left - L   # >= 0; unused torch tail zeros dropped
    xb = jnp.pad(x, ((0, 0), (pad_left, pad_right))).astype(jnp.bfloat16)
    blocks = xb.reshape(n_sig, n_blocks, hop)
    frames = jnp.concatenate(
        [blocks[:, c:c + n_frames, :] for c in range(ratio)], axis=-1)
    return frames.reshape(n_sig * n_frames, n_fft), n_frames


def _fused_basis(n_fft):
    """Window-folded one-sided DFT basis, fused [cos|sin] per 128-bin tile, with
    the Nyquist cos column folded into bin 0's (zero) sin column."""
    kf = n_fft // 256
    n_i = jnp.arange(n_fft, dtype=jnp.int32)
    n_f = n_i.astype(jnp.float32)
    # torch.hann_window default is periodic: 0.5*(1 - cos(2*pi*n/N))
    win = 0.5 * (1.0 - jnp.cos(2.0 * jnp.pi * n_f / n_fft))
    k_i = jnp.arange(kf * 128, dtype=jnp.int32)          # bins 0 .. n_fft/2 - 1
    nk = (n_i[:, None] * k_i[None, :]) % n_fft           # exact int reduction
    ang = (2.0 * jnp.pi / n_fft) * nk.astype(jnp.float32)
    cosb = win[:, None] * jnp.cos(ang)
    sinb = win[:, None] * jnp.sin(ang)                   # sign irrelevant under |.|
    nyq = win * jnp.where(n_i % 2 == 0, 1.0, -1.0)       # cos at Nyquist = (-1)^n
    sinb = sinb.at[:, 0].set(nyq)                        # pack Nyquist into bin-0 sin
    fused = jnp.concatenate(
        [cosb.reshape(n_fft, kf, 128), sinb.reshape(n_fft, kf, 128)], axis=-1)
    return fused.reshape(n_fft, kf * 256).astype(jnp.bfloat16), kf


def freq_mse(predictions, target, n_fft=N_FFT, hop=HOP):
    assert predictions.shape == target.shape
    if predictions.ndim not in (3, 4):
        raise ValueError("expected 3D or 4D time-domain input")
    assert n_fft % hop == 0 and n_fft % 256 == 0

    L = predictions.shape[-1]
    n_sig = math.prod(predictions.shape[:-1])
    pr = predictions.reshape(n_sig, L).astype(jnp.float32)
    tg = target.reshape(n_sig, L).astype(jnp.float32)

    # Stack pred/target signals so every row tile carries matched frame pairs.
    x2 = jnp.concatenate([pr, tg], axis=0)                 # (2*n_sig, L)
    frames_all, n_frames = _frames_bf16(x2, n_fft, hop)    # (2*n_sig*n_frames, n_fft)
    R = n_sig * n_frames
    frames = frames_all.reshape(2, R, n_fft)               # [0]=pred, [1]=target

    basis, kf = _fused_basis(n_fft)

    # Row (frame) tiling: bound VMEM for long audio and balance tiles.
    n_r_tiles = pl.cdiv(R, TR_MAX)
    TR = ((pl.cdiv(R, n_r_tiles) + 7) // 8) * 8
    n_r_tiles = pl.cdiv(R, TR)
    R_pad = n_r_tiles * TR
    if R_pad != R:                                         # zero rows contribute 0
        frames = jnp.pad(frames, ((0, 0), (0, R_pad - R), (0, 0)))

    # Column groups: split the basis across both TensorCores (v7x) only when the
    # row grid is too short to keep them busy; otherwise keep the basis resident.
    nc = 2 if n_r_tiles == 1 else 1
    kf_group = kf // nc

    frame_bytes = 2 * R_pad * n_fft * 2
    basis_bytes = n_fft * n_fft * 2
    cost = pl.CostEstimate(
        flops=2 * (2 * R_pad) * n_fft * n_fft,
        transcendentals=2 * R_pad * kf * 128,
        bytes_accessed=frame_bytes + nc * basis_bytes + n_r_tiles * nc * 8 * 128 * 4)

    out = pl.pallas_call(
        functools.partial(_freq_mse_kernel, kf_group=kf_group),
        out_shape=jax.ShapeDtypeStruct((n_r_tiles, nc, 8, 128), jnp.float32),
        grid_spec=pltpu.PrefetchScalarGridSpec(
            num_scalar_prefetch=0,
            grid=(n_r_tiles, nc),
            in_specs=[
                # Stacked pred/target frame rows: one stream, double-buffered.
                pl.BlockSpec((2, TR, n_fft), lambda r, j: (0, r, 0)),
                # Fused basis (column group): single-buffered -> 8 MiB resident.
                pl.BlockSpec((n_fft, kf_group * 256), lambda r, j: (0, j),
                             pipeline_mode=pl.Buffered(1)),
            ],
            out_specs=pl.BlockSpec((None, None, 8, 128),
                                   lambda r, j: (r, j, 0, 0)),
        ),
        compiler_params=pltpu.CompilerParams(
            dimension_semantics=("parallel", "parallel"),
            vmem_limit_bytes=56 * 1024 * 1024),
        cost_estimate=cost,
    )(frames, basis)

    count = jnp.float32(n_sig * n_frames * (n_fft // 2 + 1))
    return jnp.sum(out) / count


def _reference_freq_mse(predictions, target, n_fft=N_FFT, hop=HOP):
    """Pure-JAX f32 reference (direct windowed DFT, torch.stft semantics)."""
    L = predictions.shape[-1]
    n_sig = math.prod(predictions.shape[:-1])
    pr = predictions.reshape(n_sig, L).astype(jnp.float32)
    tg = target.reshape(n_sig, L).astype(jnp.float32)
    pad = n_fft // 2
    n_frames = 1 + L // hop
    idx = jnp.arange(n_frames)[:, None] * hop + jnp.arange(n_fft)[None, :]
    n_i = jnp.arange(n_fft, dtype=jnp.int32)
    win = 0.5 * (1.0 - jnp.cos(2.0 * jnp.pi * n_i.astype(jnp.float32) / n_fft))
    n_freq = n_fft // 2 + 1
    k_i = jnp.arange(n_freq, dtype=jnp.int32)
    ang = (2.0 * jnp.pi / n_fft) * ((n_i[:, None] * k_i[None, :]) % n_fft).astype(jnp.float32)
    cosb = win[:, None] * jnp.cos(ang)
    sinb = win[:, None] * jnp.sin(ang)

    def mag(x):
        xp = jnp.pad(x, ((0, 0), (pad, pad)))
        fr = xp[:, idx]                                  # (n_sig, F, n_fft)
        re = jnp.einsum('sfn,nk->sfk', fr, cosb, precision=jax.lax.Precision.HIGHEST)
        im = jnp.einsum('sfn,nk->sfk', fr, sinb, precision=jax.lax.Precision.HIGHEST)
        return jnp.sqrt(re * re + im * im)

    d = mag(pr) - mag(tg)
    return jnp.mean(d * d)


if __name__ == "__main__":
    key = jax.random.PRNGKey(0)
    k1, k2 = jax.random.split(key)
    # [batch, sources, stereo, samples]; samples=2048 -> 5 STFT frames.
    B, S, C, L = 2, 2, 2, 2048
    predictions = jax.random.normal(k1, (B, S, C, L), dtype=jnp.float32)
    target = jax.random.normal(k2, (B, S, C, L), dtype=jnp.float32)

    loss = freq_mse(predictions, target)
    jax.block_until_ready(loss)
    assert loss.shape == () and bool(jnp.isfinite(loss))

    # Loose check vs a pure-f32 reference (kernel uses bf16 MXU inputs).
    ref = _reference_freq_mse(predictions, target)
    jax.block_until_ready(ref)
    rel = abs(float(loss) - float(ref)) / max(abs(float(ref)), 1e-12)
    assert rel < 5e-2, f"relative error {rel} vs f32 reference"

    print("KERNEL_OK")
</pallas_src>

<mosaic_0001>
module attributes {stable_mosaic.version = 11 : i64} {
  func.func @_freq_mse_kernel(%arg0: i32, %arg1: i32, %arg2: memref<2x40x2048xbf16, #tpu.memory_space<vmem>>, %arg3: memref<2048x1024xbf16, #tpu.memory_space<vmem>>, %arg4: memref<1x1x8x128xf32, #tpu.memory_space<vmem>>) attributes {dimension_semantics = [#tpu.dimension_semantics<parallel>, #tpu.dimension_semantics<parallel>], iteration_bounds = array<i64: 1, 2>, scalar_prefetch = 0 : i64, scratch_operands = 0 : i64, tpu.core_type = #tpu.core_type<tc>, window_params = [{transform_indices = @transform_0, window_bounds = array<i64: 2, 40, 2048>}, {pipeline_mode = #tpu.pipeline_mode<synchronous>, transform_indices = @transform_1, window_bounds = array<i64: 2048, 1024>}, {transform_indices = @transform_2, window_bounds = array<i64: 1, 1, 8, 128>}]} {
    %c0 = arith.constant 0 : index
    %c0_0 = arith.constant 0 : index
    %c0_1 = arith.constant 0 : index
    %0 = vector.load %arg2[%c0, %c0_0, %c0_1] : memref<2x40x2048xbf16, #tpu.memory_space<vmem>>, vector<2x40x2048xbf16>
    %1 = vector.shape_cast %0 : vector<2x40x2048xbf16> to vector<80x2048xbf16>
    %2 = tpu.iota {dimensions = array<i32: 1>} : vector<40x128xi32>
    %c0_i32 = arith.constant 0 : i32
    %3 = vector.broadcast %c0_i32 : i32 to vector<40x128xi32>
    %4 = arith.cmpi eq, %2, %3 : vector<40x128xi32>
    %c0_i32_2 = arith.constant 0 : i32
    %5 = arith.cmpi eq, %arg1, %c0_i32_2 : i32
    %cst = arith.constant 0.000000e+00 : f32
    %6 = vector.broadcast %cst : f32 to vector<40x128xf32>
    %c0_3 = arith.constant 0 : index
    %c0_4 = arith.constant 0 : index
    %7 = vector.load %arg3[%c0_3, %c0_4] : memref<2048x1024xbf16, #tpu.memory_space<vmem>>, vector<2048x256xbf16>
    %cst_5 = arith.constant dense<0.000000e+00> : vector<80x256xf32>
    %8 = tpu.matmul %1, %7, %cst_5 {dimension_numbers = #tpu.dot_dimension_numbers<[1], [0], [0], [1], [0, 0, 1, 1], [], []>} : vector<80x2048xbf16>, vector<2048x256xbf16>, vector<80x256xf32> -> vector<80x256xf32>
    %9 = vector.extract_strided_slice %8 {offsets = [0, 0], sizes = [40, 256], strides = [1, 1]} : vector<80x256xf32> to vector<40x256xf32>
    %10 = vector.extract_strided_slice %8 {offsets = [40, 0], sizes = [40, 256], strides = [1, 1]} : vector<80x256xf32> to vector<40x256xf32>
    %11 = vector.extract_strided_slice %9 {offsets = [0, 0], sizes = [40, 128], strides = [1, 1]} : vector<40x256xf32> to vector<40x128xf32>
    %12 = vector.extract_strided_slice %9 {offsets = [0, 128], sizes = [40, 128], strides = [1, 1]} : vector<40x256xf32> to vector<40x128xf32>
    %13 = vector.extract_strided_slice %10 {offsets = [0, 0], sizes = [40, 128], strides = [1, 1]} : vector<40x256xf32> to vector<40x128xf32>
    %14 = vector.extract_strided_slice %10 {offsets = [0, 128], sizes = [40, 128], strides = [1, 1]} : vector<40x256xf32> to vector<40x128xf32>
    %15 = arith.mulf %11, %11 : vector<40x128xf32>
    %16 = arith.mulf %12, %12 : vector<40x128xf32>
    %17 = arith.addf %15, %16 : vector<40x128xf32>
    %18 = math.sqrt %17 : vector<40x128xf32>
    %19 = arith.mulf %13, %13 : vector<40x128xf32>
    %20 = arith.mulf %14, %14 : vector<40x128xf32>
    %21 = arith.addf %19, %20 : vector<40x128xf32>
    %22 = math.sqrt %21 : vector<40x128xf32>
    %23 = arith.subf %18, %22 : vector<40x128xf32>
    %24 = arith.mulf %23, %23 : vector<40x128xf32>
    %25 = math.absf %11 : vector<40x128xf32>
    %26 = math.absf %13 : vector<40x128xf32>
    %27 = arith.subf %25, %26 : vector<40x128xf32>
    %28 = math.absf %12 : vector<40x128xf32>
    %29 = math.absf %14 : vector<40x128xf32>
    %30 = arith.subf %28, %29 : vector<40x128xf32>
    %31 = vector.broadcast %5 : i1 to vector<40x128xi1>
    %32 = arith.andi %4, %31 : vector<40x128xi1>
    %33 = arith.mulf %27, %27 : vector<40x128xf32>
    %34 = arith.mulf %30, %30 : vector<40x128xf32>
    %35 = arith.addf %33, %34 : vector<40x128xf32>
    %36 = arith.select %32, %35, %24 : vector<40x128xi1>, vector<40x128xf32>
    %37 = arith.addf %6, %36 : vector<40x128xf32>
    %c0_6 = arith.constant 0 : index
    %c256 = arith.constant 256 : index
    %38 = vector.load %arg3[%c0_6, %c256] : memref<2048x1024xbf16, #tpu.memory_space<vmem>>, vector<2048x256xbf16>
    %cst_7 = arith.constant dense<0.000000e+00> : vector<80x256xf32>
    %39 = tpu.matmul %1, %38, %cst_7 {dimension_numbers = #tpu.dot_dimension_numbers<[1], [0], [0], [1], [0, 0, 1, 1], [], []>} : vector<80x2048xbf16>, vector<2048x256xbf16>, vector<80x256xf32> -> vector<80x256xf32>
    %40 = vector.extract_strided_slice %39 {offsets = [0, 0], sizes = [40, 256], strides = [1, 1]} : vector<80x256xf32> to vector<40x256xf32>
    %41 = vector.extract_strided_slice %39 {offsets = [40, 0], sizes = [40, 256], strides = [1, 1]} : vector<80x256xf32> to vector<40x256xf32>
    %42 = vector.extract_strided_slice %40 {offsets = [0, 0], sizes = [40, 128], strides = [1, 1]} : vector<40x256xf32> to vector<40x128xf32>
    %43 = vector.extract_strided_slice %40 {offsets = [0, 128], sizes = [40, 128], strides = [1, 1]} : vector<40x256xf32> to vector<40x128xf32>
    %44 = vector.extract_strided_slice %41 {offsets = [0, 0], sizes = [40, 128], strides = [1, 1]} : vector<40x256xf32> to vector<40x128xf32>
    %45 = vector.extract_strided_slice %41 {offsets = [0, 128], sizes = [40, 128], strides = [1, 1]} : vector<40x256xf32> to vector<40x128xf32>
    %46 = arith.mulf %42, %42 : vector<40x128xf32>
    %47 = arith.mulf %43, %43 : vector<40x128xf32>
    %48 = arith.addf %46, %47 : vector<40x128xf32>
    %49 = math.sqrt %48 : vector<40x128xf32>
    %50 = arith.mulf %44, %44 : vector<40x128xf32>
    %51 = arith.mulf %45, %45 : vector<40x128xf32>
    %52 = arith.addf %50, %51 : vector<40x128xf32>
    %53 = math.sqrt %52 : vector<40x128xf32>
    %54 = arith.subf %49, %53 : vector<40x128xf32>
    %55 = arith.mulf %54, %54 : vector<40x128xf32>
    %56 = arith.addf %37, %55 : vector<40x128xf32>
    %c0_8 = arith.constant 0 : index
    %c512 = arith.constant 512 : index
    %57 = vector.load %arg3[%c0_8, %c512] : memref<2048x1024xbf16, #tpu.memory_space<vmem>>, vector<2048x256xbf16>
    %cst_9 = arith.constant dense<0.000000e+00> : vector<80x256xf32>
    %58 = tpu.matmul %1, %57, %cst_9 {dimension_numbers = #tpu.dot_dimension_numbers<[1], [0], [0], [1], [0, 0, 1, 1], [], []>} : vector<80x2048xbf16>, vector<2048x256xbf16>, vector<80x256xf32> -> vector<80x256xf32>
    %59 = vector.extract_strided_slice %58 {offsets = [0, 0], sizes = [40, 256], strides = [1, 1]} : vector<80x256xf32> to vector<40x256xf32>
    %60 = vector.extract_strided_slice %58 {offsets = [40, 0], sizes = [40, 256], strides = [1, 1]} : vector<80x256xf32> to vector<40x256xf32>
    %61 = vector.extract_strided_slice %59 {offsets = [0, 0], sizes = [40, 128], strides = [1, 1]} : vector<40x256xf32> to vector<40x128xf32>
    %62 = vector.extract_strided_slice %59 {offsets = [0, 128], sizes = [40, 128], strides = [1, 1]} : vector<40x256xf32> to vector<40x128xf32>
    %63 = vector.extract_strided_slice %60 {offsets = [0, 0], sizes = [40, 128], strides = [1, 1]} : vector<40x256xf32> to vector<40x128xf32>
    %64 = vector.extract_strided_slice %60 {offsets = [0, 128], sizes = [40, 128], strides = [1, 1]} : vector<40x256xf32> to vector<40x128xf32>
    %65 = arith.mulf %61, %61 : vector<40x128xf32>
    %66 = arith.mulf %62, %62 : vector<40x128xf32>
    %67 = arith.addf %65, %66 : vector<40x128xf32>
    %68 = math.sqrt %67 : vector<40x128xf32>
    %69 = arith.mulf %63, %63 : vector<40x128xf32>
    %70 = arith.mulf %64, %64 : vector<40x128xf32>
    %71 = arith.addf %69, %70 : vector<40x128xf32>
    %72 = math.sqrt %71 : vector<40x128xf32>
    %73 = arith.subf %68, %72 : vector<40x128xf32>
    %74 = arith.mulf %73, %73 : vector<40x128xf32>
    %75 = arith.addf %56, %74 : vector<40x128xf32>
    %c0_10 = arith.constant 0 : index
    %c768 = arith.constant 768 : index
    %76 = vector.load %arg3[%c0_10, %c768] : memref<2048x1024xbf16, #tpu.memory_space<vmem>>, vector<2048x256xbf16>
    %cst_11 = arith.constant dense<0.000000e+00> : vector<80x256xf32>
    %77 = tpu.matmul %1, %76, %cst_11 {dimension_numbers = #tpu.dot_dimension_numbers<[1], [0], [0], [1], [0, 0, 1, 1], [], []>} : vector<80x2048xbf16>, vector<2048x256xbf16>, vector<80x256xf32> -> vector<80x256xf32>
    %78 = vector.extract_strided_slice %77 {offsets = [0, 0], sizes = [40, 256], strides = [1, 1]} : vector<80x256xf32> to vector<40x256xf32>
    %79 = vector.extract_strided_slice %77 {offsets = [40, 0], sizes = [40, 256], strides = [1, 1]} : vector<80x256xf32> to vector<40x256xf32>
    %80 = vector.extract_strided_slice %78 {offsets = [0, 0], sizes = [40, 128], strides = [1, 1]} : vector<40x256xf32> to vector<40x128xf32>
    %81 = vector.extract_strided_slice %78 {offsets = [0, 128], sizes = [40, 128], strides = [1, 1]} : vector<40x256xf32> to vector<40x128xf32>
    %82 = vector.extract_strided_slice %79 {offsets = [0, 0], sizes = [40, 128], strides = [1, 1]} : vector<40x256xf32> to vector<40x128xf32>
    %83 = vector.extract_strided_slice %79 {offsets = [0, 128], sizes = [40, 128], strides = [1, 1]} : vector<40x256xf32> to vector<40x128xf32>
    %84 = arith.mulf %80, %80 : vector<40x128xf32>
    %85 = arith.mulf %81, %81 : vector<40x128xf32>
    %86 = arith.addf %84, %85 : vector<40x128xf32>
    %87 = math.sqrt %86 : vector<40x128xf32>
    %88 = arith.mulf %82, %82 : vector<40x128xf32>
    %89 = arith.mulf %83, %83 : vector<40x128xf32>
    %90 = arith.addf %88, %89 : vector<40x128xf32>
    %91 = math.sqrt %90 : vector<40x128xf32>
    %92 = arith.subf %87, %91 : vector<40x128xf32>
    %93 = arith.mulf %92, %92 : vector<40x128xf32>
    %94 = arith.addf %75, %93 : vector<40x128xf32>
    %95 = vector.shape_cast %94 : vector<40x128xf32> to vector<5x8x128xf32>
    %cst_12 = arith.constant dense<0.000000e+00> : vector<8x128xf32>
    %96 = vector.multi_reduction <add>, %95, %cst_12 [0] : vector<5x8x128xf32> to vector<8x128xf32>
    %c0_13 = arith.constant 0 : index
    %c0_14 = arith.constant 0 : index
    %c0_15 = arith.constant 0 : index
    %c0_16 = arith.constant 0 : index
    %97 = vector.load %arg4[%c0_13, %c0_14, %c0_15, %c0_16] : memref<1x1x8x128xf32, #tpu.memory_space<vmem>>, vector<1x1x8x128xf32>
    %98 = vector.shape_cast %97 : vector<1x1x8x128xf32> to vector<8x128xf32>
    %99 = vector.shape_cast %96 : vector<8x128xf32> to vector<1x1x8x128xf32>
    tpu.vector_store %arg4[%c0_13, %c0_14, %c0_15, %c0_16], %99 {strides = array<i32>} : memref<1x1x8x128xf32, #tpu.memory_space<vmem>>, vector<1x1x8x128xf32>,
    return
  }
  func.func @transform_0(%arg0: i32, %arg1: i32) -> (i32, i32, i32) {
    %c0_i32 = arith.constant 0 : i32
    %c0_i32_0 = arith.constant 0 : i32
    %c0_i32_1 = arith.constant 0 : i32
    return %c0_i32, %arg0, %c0_i32_0 : i32, i32, i32
  }
  func.func @transform_1(%arg0: i32, %arg1: i32) -> (i32, i32) {
    %c0_i32 = arith.constant 0 : i32
    %c0_i32_0 = arith.constant 0 : i32
    return %c0_i32, %arg1 : i32, i32
  }
  func.func @transform_2(%arg0: i32, %arg1: i32) -> (i32, i32, i32, i32) {
    %c0_i32 = arith.constant 0 : i32
    %c0_i32_0 = arith.constant 0 : i32
    %c0_i32_1 = arith.constant 0 : i32
    return %arg0, %arg1, %c0_i32, %c0_i32_0 : i32, i32, i32, i32
  }
}

</mosaic_0001>

<llo_original>
// kernel: tpu_custom_call.1
$region0: #{tpu_custom_call.1}
  #allocation0 [shape = 'u32[]', space=smem, size = 0x4, offset = 0x4, fixed_abs, tag = 'smem constant byte address 0x4 - core index']
  #allocation1 [shape = 'u32[144,128]{1,0:T(1,128)}', space=vmem, size = 0x12000, scoped, tag = 'internal scratch']
  %s0 = inlined_call_operand.hbm [shape: bf16[2,40,2048], index: 0, kind: input, shape index: {}]
  %s1 = inlined_call_operand.hbm [shape: bf16[2048,2048], index: 1, kind: input, shape index: {}]
  %s2 = inlined_call_operand.hbm [shape: f32[1,2,8,128], index: 2, kind: output, shape index: {}]
  %s3 = sld [smem:[#allocation0]]
  $region49: #{tpu_custom_call.1} parent=0
    _
  %s5 = ssub.s32 1, %s3
  %s6 = scalar_select 0, %s5, %s3
  $region1: #{tpu_custom_call.1} parent=0
    #allocation2 [shape = 'u8[327680]{0}', space=vmem, size = 0x50000, scoped, tag = 'input window, operand 0, single buffered']
    #allocation3 [shape = 's32[2]{0}', space=sflag, size = 0x8, scoped, tag = 'scoped memory for tpu_custom_call.1']
    #allocation4 [shape = 's32[2]{0}', space=sflag, size = 0x8, scoped, tag = 'scoped memory for tpu_custom_call.1']
    #allocation5 [shape = 'u8[4194304]{0}', space=vmem, size = 0x400000, scoped, tag = 'input window, operand 1, single buffered']
    #allocation6 [shape = 's32[1]{0}', space=sflag, size = 0x4, scoped, tag = 'scoped memory for tpu_custom_call.1']
    #allocation7 [shape = 'u8[8192]{0}', space=vmem, size = 0x2000, scoped, tag = 'output window, operand 0']
    %7 = vsyncpa [#allocation3], 0
    %8 = vsyncpa [#allocation6], 0
    %9 = vsyncpa [#allocation4], 0
    %s10 = scalar_lea.sflag [#allocation4], 1
    %11 = vsyncpa %s10, 0
    loop: start=0, step=1, limit=4
    $region2: #{tpu_custom_call.1} parent=1 // loop_pre_header
      _
    $region3: #{tpu_custom_call.1} parent=1 // loop_header
      %s13 = sphi 0, %s17
      %p14 = scmp.ge.s32.totalorder %s13, 4
      %s20 = sphi 0, %s32
      %s21 = sphi 0, %s28
      %s22 = sphi 0, %s20
      %s23 = sphi 0, %s21
      %s24 = sphi 0, %s22
      %s25 = sphi 0, %s23
      %s35 = sphi 0, %s37
      %s38 = sphi 0, %s35
      %s39 = sphi 0, %s38
      %s55 = sphi 0, %s39
      %s61 = sphi 0, %s63
      %s64 = sphi 0, %s61
      %s65 = sphi 0, %s64
      %s81 = sphi 0, %s65
      %s89 = sphi 0, %s91
      %s92 = sphi 0, %s89
      %s93 = sphi 0, %s92
      %s109 = sphi 0, %s93
    $region4: #{tpu_custom_call.1} parent=1 // loop_header_branch
      %16 = sbr.rel (%p14) target = $region8
    $region5: #{tpu_custom_call.1} parent=1 // loop_body
      %s18 = ssub.s32 %s13, 1
      %s19 = ssub.s32 %s13, 2
      %s26 = sadd.s32 1, %s21
      %p27 = scmp.ge.s32.totalorder %s26, 2
      %s28 = scalar_select %p27, 0, %s26
      %s29 = sadd.s32 1, %s20
      %s30 = scalar_select %p27, %s29, %s20
      %p31 = scmp.ge.s32.totalorder %s30, 1
      %s32 = scalar_select %p31, 0, %s30
      %s33 = ssub.s32 %s20, %s32
      %p34 = scmp.eq.s32.totalorder %s33, 0
      %s36 = sadd.s32 %s35, 1
      %s37 = scalar_select %p34, %s35, %s36
      %p40 = pneg %p34
      %p41 = scmp.eq.s32.totalorder %s13, 1
      %p42 = por %p40, %p41
      %p43 = scmp.ne.s32.totalorder %s35, %s38
      %p44 = scmp.eq.s32.totalorder %s13, 0
      %p45 = por %p43, %p44
      %p46 = scmp.ne.s32.totalorder %s35, %s38
      %p47 = scmp.eq.s32.totalorder %s18, 1
      %p48 = por %p46, %p47
      %p49 = scmp.ne.s32.totalorder %s38, %s39
      %p50 = scmp.eq.s32.totalorder %s18, 0
      %p51 = por %p49, %p50
      %p52 = scmp.ne.s32.totalorder %s38, %s39
      %p53 = scmp.eq.s32.totalorder %s19, 1
      %p54 = por %p52, %p53
      %p56 = scmp.ne.s32.totalorder %s39, %s55
      %p57 = scmp.eq.s32.totalorder %s19, 0
      %p58 = por %p56, %p57
      %s59 = ssub.s32 %s21, %s28
      %p60 = scmp.eq.s32.totalorder %s59, 0
      %s62 = sadd.s32 %s61, 1
      %s63 = scalar_select %p60, %s61, %s62
      %p66 = pneg %p60
      %p67 = scmp.eq.s32.totalorder %s13, 1
      %p68 = por %p66, %p67
      %p69 = scmp.ne.s32.totalorder %s61, %s64
      %p70 = scmp.eq.s32.totalorder %s13, 0
      %p71 = por %p69, %p70
      %p72 = scmp.ne.s32.totalorder %s61, %s64
      %p73 = scmp.eq.s32.totalorder %s18, 1
      %p74 = por %p72, %p73
      %p75 = scmp.ne.s32.totalorder %s64, %s65
      %p76 = scmp.eq.s32.totalorder %s18, 0
      %p77 = por %p75, %p76
      %p78 = scmp.ne.s32.totalorder %s64, %s65
      %p79 = scmp.eq.s32.totalorder %s19, 1
      %p80 = por %p78, %p79
      %p82 = scmp.ne.s32.totalorder %s65, %s81
      %p83 = scmp.eq.s32.totalorder %s19, 0
      %p84 = por %p82, %p83
      %s85 = ssub.s32 %s20, %s32
      %s86 = ssub.s32 %s21, %s28
      %s87 = sor.u32 %s85, %s86
      %p88 = scmp.eq.s32.totalorder %s87, 0
      %s90 = sadd.s32 %s89, 1
      %s91 = scalar_select %p88, %s89, %s90
      %p94 = pneg %p88
      %p95 = scmp.eq.s32.totalorder %s13, 1
      %p96 = por %p94, %p95
      %p97 = scmp.ne.s32.totalorder %s89, %s92
      %p98 = scmp.eq.s32.totalorder %s13, 0
      %p99 = por %p97, %p98
      %p100 = scmp.ne.s32.totalorder %s89, %s92
      %p101 = scmp.eq.s32.totalorder %s18, 1
      %p102 = por %p100, %p101
      %p103 = scmp.ne.s32.totalorder %s92, %s93
      %p104 = scmp.eq.s32.totalorder %s18, 0
      %p105 = por %p103, %p104
      %p106 = scmp.ne.s32.totalorder %s92, %s93
      %p107 = scmp.eq.s32.totalorder %s19, 1
      %p108 = por %p106, %p107
      %p110 = scmp.ne.s32.totalorder %s93, %s109
      %p111 = scmp.eq.s32.totalorder %s19, 0
      %p112 = por %p110, %p111
      %p113 = scmp.le.s32.totalorder 1, %s13
      %p114 = scmp.lt.s32.totalorder %s13, 3
      %p115 = pnand %p113, %p114
      %p116 = pneg %p115
      // Predicated region
      $region9: #{tpu_custom_call.1} parent=5 // pred_check
        _
      $region10: #{tpu_custom_call.1} parent=5 // pred_check_branch
        %118 = sbr.rel (%p115) target = $region12
      $region11: #{tpu_custom_call.1} parent=5 // pred_region
        %s119 = ssub.s32 %s13, 1
        // Predicated region
        $region13: #{tpu_custom_call.1} parent=11 // pred_check
          %p120 = pneg %p51
        $region14: #{tpu_custom_call.1} parent=11 // pred_check_branch
          %122 = sbr.rel (%p120) target = $region16
        $region15: #{tpu_custom_call.1} parent=11 // pred_region
          %s123 = smul.u32 5, %s22
          %s125 = ssub.s32 10240, 10240
          %126 = vsyncadd [#allocation3], %s125
          %s127 = smul.addr %s123, 16
          %s128 = smul.addr %s127, 64
          %s129 = scalar_lea.hbm %s0, %s128
          %s130 = sshll.u32 [#allocation2], 4
          %s131 = int_to_ptr.vmem [resolvable:$true] %s130
          %136 = dma.hbm_to_vmem [thread:$0]  %s129, 10240, %s131, [#allocation3], 1024, 1024, 64
        $region16: #{tpu_custom_call.1} parent=11 // pred_fallthru
          _
        // Predicated region
        $region17: #{tpu_custom_call.1} parent=11 // pred_check
          %p137 = pneg %p77
        $region18: #{tpu_custom_call.1} parent=11 // pred_check_branch
          %139 = sbr.rel (%p137) target = $region20
        $region19: #{tpu_custom_call.1} parent=11 // pred_region
          %s140 = smul.u32 8, %s23
          %s142 = ssub.s32 131072, 131072
          %143 = vsyncadd [#allocation6], %s142
          %s144 = smul.addr %s140, 64
          %s145 = scalar_lea.hbm %s1, %s144
          %s146 = sshll.u32 [#allocation5], 4
          %s147 = int_to_ptr.vmem [resolvable:$true] %s146
          %152 = dma.hbm_to_vmem [thread:$0]  %s145, 131072, %s147, [#allocation6], 1024, 512, 32
        $region20: #{tpu_custom_call.1} parent=11 // pred_fallthru
          _
      $region12: #{tpu_custom_call.1} parent=5 // pred_fallthru
        _
      %p153 = scmp.lt.s32.totalorder %s13, 2
      // Predicated region
      $region21: #{tpu_custom_call.1} parent=5 // pred_check
        %p154 = pneg %p153
      $region22: #{tpu_custom_call.1} parent=5 // pred_check_branch
        %156 = sbr.rel (%p154) target = $region24
      $region23: #{tpu_custom_call.1} parent=5 // pred_region
        _
      $region24: #{tpu_custom_call.1} parent=5 // pred_fallthru
        _
      %p157 = scmp.le.s32.totalorder 1, %s13
      %p158 = scmp.lt.s32.totalorder %s13, 3
      %p159 = pnand %p157, %p158
      %p160 = pneg %p159
      // Predicated region
      $region25: #{tpu_custom_call.1} parent=5 // pred_check
        _
      $region26: #{tpu_custom_call.1} parent=5 // pred_check_branch
        %162 = sbr.rel (%p159) target = $region28
      $region27: #{tpu_custom_call.1} parent=5 // pred_region
        %s163 = ssub.s32 %s13, 1
        // Predicated region
        $region29: #{tpu_custom_call.1} parent=27 // pred_check
          %p164 = pneg %p51
        $region30: #{tpu_custom_call.1} parent=27 // pred_check_branch
          %166 = sbr.rel (%p164) target = $region32
        $region31: #{tpu_custom_call.1} parent=27 // pred_region
          %167 = dma.done [#allocation3], 10240
        $region32: #{tpu_custom_call.1} parent=27 // pred_fallthru
          _
        // Predicated region
        $region33: #{tpu_custom_call.1} parent=27 // pred_check
          %p168 = pneg %p77
        $region34: #{tpu_custom_call.1} parent=27 // pred_check_branch
          %170 = sbr.rel (%p168) target = $region36
        $region35: #{tpu_custom_call.1} parent=27 // pred_region
          %171 = dma.done [#allocation6], 131072
        $region36: #{tpu_custom_call.1} parent=27 // pred_fallthru
          _
        %p172 = pneg %p51
        %p173 = pneg %p48
        %p174 = pneg %p77
        %p175 = pneg %p74
        %p176 = pneg %p105
        %p177 = pneg %p102
        %s178 = sand.u32 %s92, 1
        %s179 = scalar_lea.sflag [#allocation4], %s178
        %s180 = sand.u32 %s92, 1
        %s181 = smul.addr %s180, 8
        %s182 = scalar_lea.vmem [#allocation7], %s181
        %s183 = smul.u32 5, %s22
        %s184 = smul.u32 8, %s23
        %v185 = vld [vmem:[#allocation2] sm:$0xff]
        %v186 = vld [vmem:[#allocation2 + $0x8] sm:$0xff]
        %v187 = vld [vmem:[#allocation2 + $0x10] sm:$0xff]
        %v188 = vld [vmem:[#allocation2 + $0x18] sm:$0xff]
        %v189 = vld [vmem:[#allocation2 + $0x20] sm:$0xff]
        %v190 = vld [vmem:[#allocation2 + $0x28] sm:$0xff]
        %v191 = vld [vmem:[#allocation2 + $0x30] sm:$0xff]
        %v192 = vld [vmem:[#allocation2 + $0x38] sm:$0xff]
        %v193 = vld [vmem:[#allocation2 + $0x40] sm:$0xff]
        %v194 = vld [vmem:[#allocation2 + $0x48] sm:$0xff]
        %v195 = vld [vmem:[#allocation2 + $0x50] sm:$0xff]
        %v196 = vld [vmem:[#allocation2 + $0x58] sm:$0xff]
        %v197 = vld [vmem:[#allocation2 + $0x60] sm:$0xff]
        %v198 = vld [vmem:[#allocation2 + $0x68] sm:$0xff]
        %v199 = vld [vmem:[#allocation2 + $0x70] sm:$0xff]
        %v200 = vld [vmem:[#allocation2 + $0x78] sm:$0xff]
        %v201 = vld [vmem:[#allocation2 + $0x80] sm:$0xff]
        %v202 = vld [vmem:[#allocation2 + $0x88] sm:$0xff]
        %v203 = vld [vmem:[#allocation2 + $0x90] sm:$0xff]
        %v204 = vld [vmem:[#allocation2 + $0x98] sm:$0xff]
        %v205 = vld [vmem:[#allocation2 + $0xa0] sm:$0xff]
        %v206 = vld [vmem:[#allocation2 + $0xa8] sm:$0xff]
        %v207 = vld [vmem:[#allocation2 + $0xb0] sm:$0xff]
        %v208 = vld [vmem:[#allocation2 + $0xb8] sm:$0xff]
        %v209 = vld [vmem:[#allocation2 + $0xc0] sm:$0xff]
        %v210 = vld [vmem:[#allocation2 + $0xc8] sm:$0xff]
        %v211 = vld [vmem:[#allocation2 + $0xd0] sm:$0xff]
        %v212 = vld [vmem:[#allocation2 + $0xd8] sm:$0xff]
        %v213 = vld [vmem:[#allocation2 + $0xe0] sm:$0xff]
        %v214 = vld [vmem:[#allocation2 + $0xe8] sm:$0xff]
        %v215 = vld [vmem:[#allocation2 + $0xf0] sm:$0xff]
        %v216 = vld [vmem:[#allocation2 + $0xf8] sm:$0xff]
        %v217 = vld [vmem:[#allocation2 + $0x100] sm:$0xff]
        %v218 = vld [vmem:[#allocation2 + $0x108] sm:$0xff]
        %v219 = vld [vmem:[#allocation2 + $0x110] sm:$0xff]
        %v220 = vld [vmem:[#allocation2 + $0x118] sm:$0xff]
        %v221 = vld [vmem:[#allocation2 + $0x120] sm:$0xff]
        %v222 = vld [vmem:[#allocation2 + $0x128] sm:$0xff]
        %v223 = vld [vmem:[#allocation2 + $0x130] sm:$0xff]
        %v224 = vld [vmem:[#allocation2 + $0x138] sm:$0xff]
        %v225 = vld [vmem:[#allocation2 + $0x140] sm:$0xff]
        %v226 = vld [vmem:[#allocation2 + $0x148] sm:$0xff]
        %v227 = vld [vmem:[#allocation2 + $0x150] sm:$0xff]
        %v228 = vld [vmem:[#allocation2 + $0x158] sm:$0xff]
        %v229 = vld [vmem:[#allocation2 + $0x160] sm:$0xff]
        %v230 = vld [vmem:[#allocation2 + $0x168] sm:$0xff]
        %v231 = vld [vmem:[#allocation2 + $0x170] sm:$0xff]
        %v232 = vld [vmem:[#allocation2 + $0x178] sm:$0xff]
        %v233 = vld [vmem:[#allocation2 + $0x180] sm:$0xff]
        %v234 = vld [vmem:[#allocation2 + $0x188] sm:$0xff]
        %v235 = vld [vmem:[#allocation2 + $0x190] sm:$0xff]
        %v236 = vld [vmem:[#allocation2 + $0x198] sm:$0xff]
        %v237 = vld [vmem:[#allocation2 + $0x1a0] sm:$0xff]
        %v238 = vld [vmem:[#allocation2 + $0x1a8] sm:$0xff]
        %v239 = vld [vmem:[#allocation2 + $0x1b0] sm:$0xff]
        %v240 = vld [vmem:[#allocation2 + $0x1b8] sm:$0xff]
        %v241 = vld [vmem:[#allocation2 + $0x1c0] sm:$0xff]
        %v242 = vld [vmem:[#allocation2 + $0x1c8] sm:$0xff]
        %v243 = vld [vmem:[#allocation2 + $0x1d0] sm:$0xff]
        %v244 = vld [vmem:[#allocation2 + $0x1d8] sm:$0xff]
        %v245 = vld [vmem:[#allocation2 + $0x1e0] sm:$0xff]
        %v246 = vld [vmem:[#allocation2 + $0x1e8] sm:$0xff]
        %v247 = vld [vmem:[#allocation2 + $0x1f0] sm:$0xff]
        %v248 = vld [vmem:[#allocation2 + $0x1f8] sm:$0xff]
        %v249 = vld [vmem:[#allocation2 + $0x200] sm:$0xff]
        %v250 = vld [vmem:[#allocation2 + $0x208] sm:$0xff]
        %v251 = vld [vmem:[#allocation2 + $0x210] sm:$0xff]
        %v252 = vld [vmem:[#allocation2 + $0x218] sm:$0xff]
        %v253 = vld [vmem:[#allocation2 + $0x220] sm:$0xff]
        %v254 = vld [vmem:[#allocation2 + $0x228] sm:$0xff]
        %v255 = vld [vmem:[#allocation2 + $0x230] sm:$0xff]
        %v256 = vld [vmem:[#allocation2 + $0x238] sm:$0xff]
        %v257 = vld [vmem:[#allocation2 + $0x240] sm:$0xff]
        %v258 = vld [vmem:[#allocation2 + $0x248] sm:$0xff]
        %v259 = vld [vmem:[#allocation2 + $0x250] sm:$0xff]
        %v260 = vld [vmem:[#allocation2 + $0x258] sm:$0xff]
        %v261 = vld [vmem:[#allocation2 + $0x260] sm:$0xff]
        %v262 = vld [vmem:[#allocation2 + $0x268] sm:$0xff]
        %v263 = vld [vmem:[#allocation2 + $0x270] sm:$0xff]
        %v264 = vld [vmem:[#allocation2 + $0x278] sm:$0xff]
        %v265 = vlaneseq
        %v266 = vand.u32 %v265, 127
        %vm267 = vcmp.eq.s32.totalorder %v266, 0
        %p268 = scmp.eq.s32.totalorder %s23, 0
        %v269 = vld [vmem:[#allocation5] sm:$0xff]
        %v270 = vld [vmem:[#allocation5 + $0x20] sm:$0xff]
        %v271 = vld [vmem:[#allocation5 + $0x40] sm:$0xff]
        %v272 = vld [vmem:[#allocation5 + $0x60] sm:$0xff]
        %v273 = vld [vmem:[#allocation5 + $0x80] sm:$0xff]
        %v274 = vld [vmem:[#allocation5 + $0xa0] sm:$0xff]
        %v275 = vld [vmem:[#allocation5 + $0xc0] sm:$0xff]
        %v276 = vld [vmem:[#allocation5 + $0xe0] sm:$0xff]
        %v277 = vld [vmem:[#allocation5 + $0x100] sm:$0xff]
        %v278 = vld [vmem:[#allocation5 + $0x120] sm:$0xff]
        %v279 = vld [vmem:[#allocation5 + $0x140] sm:$0xff]
        %v280 = vld [vmem:[#allocation5 + $0x160] sm:$0xff]
        %v281 = vld [vmem:[#allocation5 + $0x180] sm:$0xff]
        %v282 = vld [vmem:[#allocation5 + $0x1a0] sm:$0xff]
        %v283 = vld [vmem:[#allocation5 + $0x1c0] sm:$0xff]
        %v284 = vld [vmem:[#allocation5 + $0x1e0] sm:$0xff]
        %v285 = vld [vmem:[#allocation5 + $0x200] sm:$0xff]
        %v286 = vld [vmem:[#allocation5 + $0x220] sm:$0xff]
        %v287 = vld [vmem:[#allocation5 + $0x240] sm:$0xff]
        %v288 = vld [vmem:[#allocation5 + $0x260] sm:$0xff]
        %v289 = vld [vmem:[#allocation5 + $0x280] sm:$0xff]
        %v290 = vld [vmem:[#allocation5 + $0x2a0] sm:$0xff]
        %v291 = vld [vmem:[#allocation5 + $0x2c0] sm:$0xff]
        %v292 = vld [vmem:[#allocation5 + $0x2e0] sm:$0xff]
        %v293 = vld [vmem:[#allocation5 + $0x300] sm:$0xff]
        %v294 = vld [vmem:[#allocation5 + $0x320] sm:$0xff]
        %v295 = vld [vmem:[#allocation5 + $0x340] sm:$0xff]
        %v296 = vld [vmem:[#allocation5 + $0x360] sm:$0xff]
        %v297 = vld [vmem:[#allocation5 + $0x380] sm:$0xff]
        %v298 = vld [vmem:[#allocation5 + $0x3a0] sm:$0xff]
        %v299 = vld [vmem:[#allocation5 + $0x3c0] sm:$0xff]
        %v300 = vld [vmem:[#allocation5 + $0x3e0] sm:$0xff]
        %v301 = vld [vmem:[#allocation5 + $0x400] sm:$0xff]
        %v302 = vld [vmem:[#allocation5 + $0x420] sm:$0xff]
        %v303 = vld [vmem:[#allocation5 + $0x440] sm:$0xff]
        %v304 = vld [vmem:[#allocation5 + $0x460] sm:$0xff]
        %v305 = vld [vmem:[#allocation5 + $0x480] sm:$0xff]
        %v306 = vld [vmem:[#allocation5 + $0x4a0] sm:$0xff]
        %v307 = vld [vmem:[#allocation5 + $0x4c0] sm:$0xff]
        %v308 = vld [vmem:[#allocation5 + $0x4e0] sm:$0xff]
        %v309 = vld [vmem:[#allocation5 + $0x500] sm:$0xff]
        %v310 = vld [vmem:[#allocation5 + $0x520] sm:$0xff]
        %v311 = vld [vmem:[#allocation5 + $0x540] sm:$0xff]
        %v312 = vld [vmem:[#allocation5 + $0x560] sm:$0xff]
        %v313 = vld [vmem:[#allocation5 + $0x580] sm:$0xff]
        %v314 = vld [vmem:[#allocation5 + $0x5a0] sm:$0xff]
        %v315 = vld [vmem:[#allocation5 + $0x5c0] sm:$0xff]
        %v316 = vld [vmem:[#allocation5 + $0x5e0] sm:$0xff]
        %v317 = vld [vmem:[#allocation5 + $0x600] sm:$0xff]
        %v318 = vld [vmem:[#allocation5 + $0x620] sm:$0xff]
        %v319 = vld [vmem:[#allocation5 + $0x640] sm:$0xff]
        %v320 = vld [vmem:[#allocation5 + $0x660] sm:$0xff]
        %v321 = vld [vmem:[#allocation5 + $0x680] sm:$0xff]
        %v322 = vld [vmem:[#allocation5 + $0x6a0] sm:$0xff]
        %v323 = vld [vmem:[#allocation5 + $0x6c0] sm:$0xff]
        %v324 = vld [vmem:[#allocation5 + $0x6e0] sm:$0xff]
        %v325 = vld [vmem:[#allocation5 + $0x700] sm:$0xff]
        %v326 = vld [vmem:[#allocation5 + $0x720] sm:$0xff]
        %v327 = vld [vmem:[#allocation5 + $0x740] sm:$0xff]
        %v328 = vld [vmem:[#allocation5 + $0x760] sm:$0xff]
        %v329 = vld [vmem:[#allocation5 + $0x780] sm:$0xff]
        %v330 = vld [vmem:[#allocation5 + $0x7a0] sm:$0xff]
        %v331 = vld [vmem:[#allocation5 + $0x7c0] sm:$0xff]
        %v332 = vld [vmem:[#allocation5 + $0x7e0] sm:$0xff]
        %v333 = vld [vmem:[#allocation5 + $0x800] sm:$0xff]
        %v334 = vld [vmem:[#allocation5 + $0x820] sm:$0xff]
        %v335 = vld [vmem:[#allocation5 + $0x840] sm:$0xff]
        %v336 = vld [vmem:[#allocation5 + $0x860] sm:$0xff]
        %v337 = vld [vmem:[#allocation5 + $0x880] sm:$0xff]
        %v338 = vld [vmem:[#allocation5 + $0x8a0] sm:$0xff]
        %v339 = vld [vmem:[#allocation5 + $0x8c0] sm:$0xff]
        %v340 = vld [vmem:[#allocation5 + $0x8e0] sm:$0xff]
        %v341 = vld [vmem:[#allocation5 + $0x900] sm:$0xff]
        %v342 = vld [vmem:[#allocation5 + $0x920] sm:$0xff]
        %v343 = vld [vmem:[#allocation5 + $0x940] sm:$0xff]
        %v344 = vld [vmem:[#allocation5 + $0x960] sm:$0xff]
        %v345 = vld [vmem:[#allocation5 + $0x980] sm:$0xff]
        %v346 = vld [vmem:[#allocation5 + $0x9a0] sm:$0xff]
        %v347 = vld [vmem:[#allocation5 + $0x9c0] sm:$0xff]
        %v348 = vld [vmem:[#allocation5 + $0x9e0] sm:$0xff]
        %v349 = vld [vmem:[#allocation5 + $0xa00] sm:$0xff]
        %v350 = vld [vmem:[#allocation5 + $0xa20] sm:$0xff]
        %v351 = vld [vmem:[#allocation5 + $0xa40] sm:$0xff]
        %v352 = vld [vmem:[#allocation5 + $0xa60] sm:$0xff]
        %v353 = vld [vmem:[#allocation5 + $0xa80] sm:$0xff]
        %v354 = vld [vmem:[#allocation5 + $0xaa0] sm:$0xff]
        %v355 = vld [vmem:[#allocation5 + $0xac0] sm:$0xff]
        %v356 = vld [vmem:[#allocation5 + $0xae0] sm:$0xff]
        %v357 = vld [vmem:[#allocation5 + $0xb00] sm:$0xff]
        %v358 = vld [vmem:[#allocation5 + $0xb20] sm:$0xff]
        %v359 = vld [vmem:[#allocation5 + $0xb40] sm:$0xff]
        %v360 = vld [vmem:[#allocation5 + $0xb60] sm:$0xff]
        %v361 = vld [vmem:[#allocation5 + $0xb80] sm:$0xff]
        %v362 = vld [vmem:[#allocation5 + $0xba0] sm:$0xff]
        %v363 = vld [vmem:[#allocation5 + $0xbc0] sm:$0xff]
        %v364 = vld [vmem:[#allocation5 + $0xbe0] sm:$0xff]
        %v365 = vld [vmem:[#allocation5 + $0xc00] sm:$0xff]
        %v366 = vld [vmem:[#allocation5 + $0xc20] sm:$0xff]
        %v367 = vld [vmem:[#allocation5 + $0xc40] sm:$0xff]
        %v368 = vld [vmem:[#allocation5 + $0xc60] sm:$0xff]
        %v369 = vld [vmem:[#allocation5 + $0xc80] sm:$0xff]
        %v370 = vld [vmem:[#allocation5 + $0xca0] sm:$0xff]
        %v371 = vld [vmem:[#allocation5 + $0xcc0] sm:$0xff]
        %v372 = vld [vmem:[#allocation5 + $0xce0] sm:$0xff]
        %v373 = vld [vmem:[#allocation5 + $0xd00] sm:$0xff]
        %v374 = vld [vmem:[#allocation5 + $0xd20] sm:$0xff]
        %v375 = vld [vmem:[#allocation5 + $0xd40] sm:$0xff]
        %v376 = vld [vmem:[#allocation5 + $0xd60] sm:$0xff]
        %v377 = vld [vmem:[#allocation5 + $0xd80] sm:$0xff]
        %v378 = vld [vmem:[#allocation5 + $0xda0] sm:$0xff]
        %v379 = vld [vmem:[#allocation5 + $0xdc0] sm:$0xff]
        %v380 = vld [vmem:[#allocation5 + $0xde0] sm:$0xff]
        %v381 = vld [vmem:[#allocation5 + $0xe00] sm:$0xff]
        %v382 = vld [vmem:[#allocation5 + $0xe20] sm:$0xff]
        %v383 = vld [vmem:[#allocation5 + $0xe40] sm:$0xff]
        %v384 = vld [vmem:[#allocation5 + $0xe60] sm:$0xff]
        %v385 = vld [vmem:[#allocation5 + $0xe80] sm:$0xff]
        %v386 = vld [vmem:[#allocation5 + $0xea0] sm:$0xff]
        %v387 = vld [vmem:[#allocation5 + $0xec0] sm:$0xff]
        %v388 = vld [vmem:[#allocation5 + $0xee0] sm:$0xff]
        %v389 = vld [vmem:[#allocation5 + $0xf00] sm:$0xff]
        %v390 = vld [vmem:[#allocation5 + $0xf20] sm:$0xff]
        %v391 = vld [vmem:[#allocation5 + $0xf40] sm:$0xff]
        %v392 = vld [vmem:[#allocation5 + $0xf60] sm:$0xff]
        %v393 = vld [vmem:[#allocation5 + $0xf80] sm:$0xff]
        %v394 = vld [vmem:[#allocation5 + $0xfa0] sm:$0xff]
        %v395 = vld [vmem:[#allocation5 + $0xfc0] sm:$0xff]
        %v396 = vld [vmem:[#allocation5 + $0xfe0] sm:$0xff]
        %v397 = vld [vmem:[#allocation5 + $0x1000] sm:$0xff]
        %v398 = vld [vmem:[#allocation5 + $0x1020] sm:$0xff]
        %v399 = vld [vmem:[#allocation5 + $0x1040] sm:$0xff]
        %v400 = vld [vmem:[#allocation5 + $0x1060] sm:$0xff]
        %v401 = vld [vmem:[#allocation5 + $0x1080] sm:$0xff]
        %v402 = vld [vmem:[#allocation5 + $0x10a0] sm:$0xff]
        %v403 = vld [vmem:[#allocation5 + $0x10c0] sm:$0xff]
        %v404 = vld [vmem:[#allocation5 + $0x10e0] sm:$0xff]
        %v405 = vld [vmem:[#allocation5 + $0x1100] sm:$0xff]
        %v406 = vld [vmem:[#allocation5 + $0x1120] sm:$0xff]
        %v407 = vld [vmem:[#allocation5 + $0x1140] sm:$0xff]
        %v408 = vld [vmem:[#allocation5 + $0x1160] sm:$0xff]
        %v409 = vld [vmem:[#allocation5 + $0x1180] sm:$0xff]
        %v410 = vld [vmem:[#allocation5 + $0x11a0] sm:$0xff]
        %v411 = vld [vmem:[#allocation5 + $0x11c0] sm:$0xff]
        %v412 = vld [vmem:[#allocation5 + $0x11e0] sm:$0xff]
        %v413 = vld [vmem:[#allocation5 + $0x1200] sm:$0xff]
        %v414 = vld [vmem:[#allocation5 + $0x1220] sm:$0xff]
        %v415 = vld [vmem:[#allocation5 + $0x1240] sm:$0xff]
        %v416 = vld [vmem:[#allocation5 + $0x1260] sm:$0xff]
        %v417 = vld [vmem:[#allocation5 + $0x1280] sm:$0xff]
        %v418 = vld [vmem:[#allocation5 + $0x12a0] sm:$0xff]
        %v419 = vld [vmem:[#allocation5 + $0x12c0] sm:$0xff]
        %v420 = vld [vmem:[#allocation5 + $0x12e0] sm:$0xff]
        %v421 = vld [vmem:[#allocation5 + $0x1300] sm:$0xff]
        %v422 = vld [vmem:[#allocation5 + $0x1320] sm:$0xff]
        %v423 = vld [vmem:[#allocation5 + $0x1340] sm:$0xff]
        %v424 = vld [vmem:[#allocation5 + $0x1360] sm:$0xff]
        %v425 = vld [vmem:[#allocation5 + $0x1380] sm:$0xff]
        %v426 = vld [vmem:[#allocation5 + $0x13a0] sm:$0xff]
        %v427 = vld [vmem:[#allocation5 + $0x13c0] sm:$0xff]
        %v428 = vld [vmem:[#allocation5 + $0x13e0] sm:$0xff]
        %v429 = vld [vmem:[#allocation5 + $0x1400] sm:$0xff]
        %v430 = vld [vmem:[#allocation5 + $0x1420] sm:$0xff]
        %v431 = vld [vmem:[#allocation5 + $0x1440] sm:$0xff]
        %v432 = vld [vmem:[#allocation5 + $0x1460] sm:$0xff]
        %v433 = vld [vmem:[#allocation5 + $0x1480] sm:$0xff]
        %v434 = vld [vmem:[#allocation5 + $0x14a0] sm:$0xff]
        %v435 = vld [vmem:[#allocation5 + $0x14c0] sm:$0xff]
        %v436 = vld [vmem:[#allocation5 + $0x14e0] sm:$0xff]
        %v437 = vld [vmem:[#allocation5 + $0x1500] sm:$0xff]
        %v438 = vld [vmem:[#allocation5 + $0x1520] sm:$0xff]
        %v439 = vld [vmem:[#allocation5 + $0x1540] sm:$0xff]
        %v440 = vld [vmem:[#allocation5 + $0x1560] sm:$0xff]
        %v441 = vld [vmem:[#allocation5 + $0x1580] sm:$0xff]
        %v442 = vld [vmem:[#allocation5 + $0x15a0] sm:$0xff]
        %v443 = vld [vmem:[#allocation5 + $0x15c0] sm:$0xff]
        %v444 = vld [vmem:[#allocation5 + $0x15e0] sm:$0xff]
        %v445 = vld [vmem:[#allocation5 + $0x1600] sm:$0xff]
        %v446 = vld [vmem:[#allocation5 + $0x1620] sm:$0xff]
        %v447 = vld [vmem:[#allocation5 + $0x1640] sm:$0xff]
        %v448 = vld [vmem:[#allocation5 + $0x1660] sm:$0xff]
        %v449 = vld [vmem:[#allocation5 + $0x1680] sm:$0xff]
        %v450 = vld [vmem:[#allocation5 + $0x16a0] sm:$0xff]
        %v451 = vld [vmem:[#allocation5 + $0x16c0] sm:$0xff]
        %v452 = vld [vmem:[#allocation5 + $0x16e0] sm:$0xff]
        %v453 = vld [vmem:[#allocation5 + $0x1700] sm:$0xff]
        %v454 = vld [vmem:[#allocation5 + $0x1720] sm:$0xff]
        %v455 = vld [vmem:[#allocation5 + $0x1740] sm:$0xff]
        %v456 = vld [vmem:[#allocation5 + $0x1760] sm:$0xff]
        %v457 = vld [vmem:[#allocation5 + $0x1780] sm:$0xff]
        %v458 = vld [vmem:[#allocation5 + $0x17a0] sm:$0xff]
        %v459 = vld [vmem:[#allocation5 + $0x17c0] sm:$0xff]
        %v460 = vld [vmem:[#allocation5 + $0x17e0] sm:$0xff]
        %v461 = vld [vmem:[#allocation5 + $0x1800] sm:$0xff]
        %v462 = vld [vmem:[#allocation5 + $0x1820] sm:$0xff]
        %v463 = vld [vmem:[#allocation5 + $0x1840] sm:$0xff]
        %v464 = vld [vmem:[#allocation5 + $0x1860] sm:$0xff]
        %v465 = vld [vmem:[#allocation5 + $0x1880] sm:$0xff]
        %v466 = vld [vmem:[#allocation5 + $0x18a0] sm:$0xff]
        %v467 = vld [vmem:[#allocation5 + $0x18c0] sm:$0xff]
        %v468 = vld [vmem:[#allocation5 + $0x18e0] sm:$0xff]
        %v469 = vld [vmem:[#allocation5 + $0x1900] sm:$0xff]
        %v470 = vld [vmem:[#allocation5 + $0x1920] sm:$0xff]
        %v471 = vld [vmem:[#allocation5 + $0x1940] sm:$0xff]
        %v472 = vld [vmem:[#allocation5 + $0x1960] sm:$0xff]
        %v473 = vld [vmem:[#allocation5 + $0x1980] sm:$0xff]
        %v474 = vld [vmem:[#allocation5 + $0x19a0] sm:$0xff]
        %v475 = vld [vmem:[#allocation5 + $0x19c0] sm:$0xff]
        %v476 = vld [vmem:[#allocation5 + $0x19e0] sm:$0xff]
        %v477 = vld [vmem:[#allocation5 + $0x1a00] sm:$0xff]
        %v478 = vld [vmem:[#allocation5 + $0x1a20] sm:$0xff]
        %v479 = vld [vmem:[#allocation5 + $0x1a40] sm:$0xff]
        %v480 = vld [vmem:[#allocation5 + $0x1a60] sm:$0xff]
        %v481 = vld [vmem:[#allocation5 + $0x1a80] sm:$0xff]
        %v482 = vld [vmem:[#allocation5 + $0x1aa0] sm:$0xff]
        %v483 = vld [vmem:[#allocation5 + $0x1ac0] sm:$0xff]
        %v484 = vld [vmem:[#allocation5 + $0x1ae0] sm:$0xff]
        %v485 = vld [vmem:[#allocation5 + $0x1b00] sm:$0xff]
        %v486 = vld [vmem:[#allocation5 + $0x1b20] sm:$0xff]
        %v487 = vld [vmem:[#allocation5 + $0x1b40] sm:$0xff]
        %v488 = vld [vmem:[#allocation5 + $0x1b60] sm:$0xff]
        %v489 = vld [vmem:[#allocation5 + $0x1b80] sm:$0xff]
        %v490 = vld [vmem:[#allocation5 + $0x1ba0] sm:$0xff]
        %v491 = vld [vmem:[#allocation5 + $0x1bc0] sm:$0xff]
        %v492 = vld [vmem:[#allocation5 + $0x1be0] sm:$0xff]
        %v493 = vld [vmem:[#allocation5 + $0x1c00] sm:$0xff]
        %v494 = vld [vmem:[#allocation5 + $0x1c20] sm:$0xff]
        %v495 = vld [vmem:[#allocation5 + $0x1c40] sm:$0xff]
        %v496 = vld [vmem:[#allocation5 + $0x1c60] sm:$0xff]
        %v497 = vld [vmem:[#allocation5 + $0x1c80] sm:$0xff]
        %v498 = vld [vmem:[#allocation5 + $0x1ca0] sm:$0xff]
        %v499 = vld [vmem:[#allocation5 + $0x1cc0] sm:$0xff]
        %v500 = vld [vmem:[#allocation5 + $0x1ce0] sm:$0xff]
        %v501 = vld [vmem:[#allocation5 + $0x1d00] sm:$0xff]
        %v502 = vld [vmem:[#allocation5 + $0x1d20] sm:$0xff]
        %v503 = vld [vmem:[#allocation5 + $0x1d40] sm:$0xff]
        %v504 = vld [vmem:[#allocation5 + $0x1d60] sm:$0xff]
        %v505 = vld [vmem:[#allocation5 + $0x1d80] sm:$0xff]
        %v506 = vld [vmem:[#allocation5 + $0x1da0] sm:$0xff]
        %v507 = vld [vmem:[#allocation5 + $0x1dc0] sm:$0xff]
        %v508 = vld [vmem:[#allocation5 + $0x1de0] sm:$0xff]
        %v509 = vld [vmem:[#allocation5 + $0x1e00] sm:$0xff]
        %v510 = vld [vmem:[#allocation5 + $0x1e20] sm:$0xff]
        %v511 = vld [vmem:[#allocation5 + $0x1e40] sm:$0xff]
        %v512 = vld [vmem:[#allocation5 + $0x1e60] sm:$0xff]
        %v513 = vld [vmem:[#allocation5 + $0x1e80] sm:$0xff]
        %v514 = vld [vmem:[#allocation5 + $0x1ea0] sm:$0xff]
        %v515 = vld [vmem:[#allocation5 + $0x1ec0] sm:$0xff]
        %v516 = vld [vmem:[#allocation5 + $0x1ee0] sm:$0xff]
        %v517 = vld [vmem:[#allocation5 + $0x1f00] sm:$0xff]
        %v518 = vld [vmem:[#allocation5 + $0x1f20] sm:$0xff]
        %v519 = vld [vmem:[#allocation5 + $0x1f40] sm:$0xff]
        %v520 = vld [vmem:[#allocation5 + $0x1f60] sm:$0xff]
        %v521 = vld [vmem:[#allocation5 + $0x1f80] sm:$0xff]
        %v522 = vld [vmem:[#allocation5 + $0x1fa0] sm:$0xff]
        %v523 = vld [vmem:[#allocation5 + $0x1fc0] sm:$0xff]
        %v524 = vld [vmem:[#allocation5 + $0x1fe0] sm:$0xff]
        %v605 = vunpack.c.l.b16 %v185
        %v606 = vunpack.c.h.b16 %v185
        %v607 = vunpack.c.l.b16 %v186
        %v608 = vunpack.c.h.b16 %v186
        %v609 = vunpack.c.l.b16 %v187
        %v610 = vunpack.c.h.b16 %v187
        %v611 = vunpack.c.l.b16 %v188
        %v612 = vunpack.c.h.b16 %v188
        %v613 = vunpack.c.l.b16 %v189
        %v614 = vunpack.c.h.b16 %v189
        %v615 = vunpack.c.l.b16 %v190
        %v616 = vunpack.c.h.b16 %v190
        %v617 = vunpack.c.l.b16 %v191
        %v618 = vunpack.c.h.b16 %v191
        %v619 = vunpack.c.l.b16 %v192
        %v620 = vunpack.c.h.b16 %v192
        %v621 = vunpack.c.l.b16 %v193
        %v622 = vunpack.c.h.b16 %v193
        %v623 = vunpack.c.l.b16 %v194
        %v624 = vunpack.c.h.b16 %v194
        %v625 = vunpack.c.l.b16 %v195
        %v626 = vunpack.c.h.b16 %v195
        %v627 = vunpack.c.l.b16 %v196
        %v628 = vunpack.c.h.b16 %v196
        %v629 = vunpack.c.l.b16 %v197
        %v630 = vunpack.c.h.b16 %v197
        %v631 = vunpack.c.l.b16 %v198
        %v632 = vunpack.c.h.b16 %v198
        %v633 = vunpack.c.l.b16 %v199
        %v634 = vunpack.c.h.b16 %v199
        %v635 = vunpack.c.l.b16 %v200
        %v636 = vunpack.c.h.b16 %v200
        %v637 = vunpack.c.l.b16 %v201
        %v638 = vunpack.c.h.b16 %v201
        %v639 = vunpack.c.l.b16 %v202
        %v640 = vunpack.c.h.b16 %v202
        %v641 = vunpack.c.l.b16 %v203
        %v642 = vunpack.c.h.b16 %v203
        %v643 = vunpack.c.l.b16 %v204
        %v644 = vunpack.c.h.b16 %v204
        %v645 = vunpack.c.l.b16 %v205
        %v646 = vunpack.c.h.b16 %v205
        %v647 = vunpack.c.l.b16 %v206
        %v648 = vunpack.c.h.b16 %v206
        %v649 = vunpack.c.l.b16 %v207
        %v650 = vunpack.c.h.b16 %v207
        %v651 = vunpack.c.l.b16 %v208
        %v652 = vunpack.c.h.b16 %v208
        %v653 = vunpack.c.l.b16 %v209
        %v654 = vunpack.c.h.b16 %v209
        %v655 = vunpack.c.l.b16 %v210
        %v656 = vunpack.c.h.b16 %v210
        %v657 = vunpack.c.l.b16 %v211
        %v658 = vunpack.c.h.b16 %v211
        %v659 = vunpack.c.l.b16 %v212
        %v660 = vunpack.c.h.b16 %v212
        %v661 = vunpack.c.l.b16 %v213
        %v662 = vunpack.c.h.b16 %v213
        %v663 = vunpack.c.l.b16 %v214
        %v664 = vunpack.c.h.b16 %v214
        %v665 = vunpack.c.l.b16 %v215
        %v666 = vunpack.c.h.b16 %v215
        %v667 = vunpack.c.l.b16 %v216
        %v668 = vunpack.c.h.b16 %v216
        %v669 = vunpack.c.l.b16 %v217
        %v670 = vunpack.c.h.b16 %v217
        %v671 = vunpack.c.l.b16 %v218
        %v672 = vunpack.c.h.b16 %v218
        %v673 = vunpack.c.l.b16 %v219
        %v674 = vunpack.c.h.b16 %v219
        %v675 = vunpack.c.l.b16 %v220
        %v676 = vunpack.c.h.b16 %v220
        %v677 = vunpack.c.l.b16 %v221
        %v678 = vunpack.c.h.b16 %v221
        %v679 = vunpack.c.l.b16 %v222
        %v680 = vunpack.c.h.b16 %v222
        %v681 = vunpack.c.l.b16 %v223
        %v682 = vunpack.c.h.b16 %v223
        %v683 = vunpack.c.l.b16 %v224
        %v684 = vunpack.c.h.b16 %v224
        %v685 = vunpack.c.l.b16 %v225
        %v686 = vunpack.c.h.b16 %v225
        %v687 = vunpack.c.l.b16 %v226
        %v688 = vunpack.c.h.b16 %v226
        %v689 = vunpack.c.l.b16 %v227
        %v690 = vunpack.c.h.b16 %v227
        %v691 = vunpack.c.l.b16 %v228
        %v692 = vunpack.c.h.b16 %v228
        %v693 = vunpack.c.l.b16 %v229
        %v694 = vunpack.c.h.b16 %v229
        %v695 = vunpack.c.l.b16 %v230
        %v696 = vunpack.c.h.b16 %v230
        %v697 = vunpack.c.l.b16 %v231
        %v698 = vunpack.c.h.b16 %v231
        %v699 = vunpack.c.l.b16 %v232
        %v700 = vunpack.c.h.b16 %v232
        %v701 = vunpack.c.l.b16 %v233
        %v702 = vunpack.c.h.b16 %v233
        %v703 = vunpack.c.l.b16 %v234
        %v704 = vunpack.c.h.b16 %v234
        %v705 = vunpack.c.l.b16 %v235
        %v706 = vunpack.c.h.b16 %v235
        %v707 = vunpack.c.l.b16 %v236
        %v708 = vunpack.c.h.b16 %v236
        %v709 = vunpack.c.l.b16 %v237
        %v710 = vunpack.c.h.b16 %v237
        %v711 = vunpack.c.l.b16 %v238
        %v712 = vunpack.c.h.b16 %v238
        %v713 = vunpack.c.l.b16 %v239
        %v714 = vunpack.c.h.b16 %v239
        %v715 = vunpack.c.l.b16 %v240
        %v716 = vunpack.c.h.b16 %v240
        %v717 = vunpack.c.l.b16 %v241
        %v718 = vunpack.c.h.b16 %v241
        %v719 = vunpack.c.l.b16 %v242
        %v720 = vunpack.c.h.b16 %v242
        %v721 = vunpack.c.l.b16 %v243
        %v722 = vunpack.c.h.b16 %v243
        %v723 = vunpack.c.l.b16 %v244
        %v724 = vunpack.c.h.b16 %v244
        %v725 = vunpack.c.l.b16 %v245
        %v726 = vunpack.c.h.b16 %v245
        %v727 = vunpack.c.l.b16 %v246
        %v728 = vunpack.c.h.b16 %v246
        %v729 = vunpack.c.l.b16 %v247
        %v730 = vunpack.c.h.b16 %v247
        %v731 = vunpack.c.l.b16 %v248
        %v732 = vunpack.c.h.b16 %v248
        %v733 = vunpack.c.l.b16 %v249
        %v734 = vunpack.c.h.b16 %v249
        %v735 = vunpack.c.l.b16 %v250
        %v736 = vunpack.c.h.b16 %v250
        %v737 = vunpack.c.l.b16 %v251
        %v738 = vunpack.c.h.b16 %v251
        %v739 = vunpack.c.l.b16 %v252
        %v740 = vunpack.c.h.b16 %v252
        %v741 = vunpack.c.l.b16 %v253
        %v742 = vunpack.c.h.b16 %v253
        %v743 = vunpack.c.l.b16 %v254
        %v744 = vunpack.c.h.b16 %v254
        %v745 = vunpack.c.l.b16 %v255
        %v746 = vunpack.c.h.b16 %v255
        %v747 = vunpack.c.l.b16 %v256
        %v748 = vunpack.c.h.b16 %v256
        %v749 = vunpack.c.l.b16 %v257
        %v750 = vunpack.c.h.b16 %v257
        %v751 = vunpack.c.l.b16 %v258
        %v752 = vunpack.c.h.b16 %v258
        %v753 = vunpack.c.l.b16 %v259
        %v754 = vunpack.c.h.b16 %v259
        %v755 = vunpack.c.l.b16 %v260
        %v756 = vunpack.c.h.b16 %v260
        %v757 = vunpack.c.l.b16 %v261
        %v758 = vunpack.c.h.b16 %v261
        %v759 = vunpack.c.l.b16 %v262
        %v760 = vunpack.c.h.b16 %v262
        %v761 = vunpack.c.l.b16 %v263
        %v762 = vunpack.c.h.b16 %v263
        %v763 = vunpack.c.l.b16 %v264
        %v764 = vunpack.c.h.b16 %v264
        %v765 = vpack.c.b16 %v621, %v605
        %v766 = vpack.c.b16 %v622, %v606
        %v767 = vpack.c.b16 %v623, %v607
        %v768 = vpack.c.b16 %v624, %v608
        %v769 = vpack.c.b16 %v625, %v609
        %v770 = vpack.c.b16 %v626, %v610
        %v771 = vpack.c.b16 %v627, %v611
        %v772 = vpack.c.b16 %v628, %v612
        %v773 = vpack.c.b16 %v629, %v613
        %v774 = vpack.c.b16 %v630, %v614
        %v775 = vpack.c.b16 %v631, %v615
        %v776 = vpack.c.b16 %v632, %v616
        %v777 = vpack.c.b16 %v633, %v617
        %v778 = vpack.c.b16 %v634, %v618
        %v779 = vpack.c.b16 %v635, %v619
        %v780 = vpack.c.b16 %v636, %v620
        %v781 = vpack.c.b16 %v653, %v637
        %v782 = vpack.c.b16 %v654, %v638
        %v783 = vpack.c.b16 %v655, %v639
        %v784 = vpack.c.b16 %v656, %v640
        %v785 = vpack.c.b16 %v657, %v641
        %v786 = vpack.c.b16 %v658, %v642
        %v787 = vpack.c.b16 %v659, %v643
        %v788 = vpack.c.b16 %v660, %v644
        %v789 = vpack.c.b16 %v661, %v645
        %v790 = vpack.c.b16 %v662, %v646
        %v791 = vpack.c.b16 %v663, %v647
        %v792 = vpack.c.b16 %v664, %v648
        %v793 = vpack.c.b16 %v665, %v649
        %v794 = vpack.c.b16 %v666, %v650
        %v795 = vpack.c.b16 %v667, %v651
        %v796 = vpack.c.b16 %v668, %v652
        %v797 = vpack.c.b16 %v685, %v669
        %v798 = vpack.c.b16 %v686, %v670
        %v799 = vpack.c.b16 %v687, %v671
        %v800 = vpack.c.b16 %v688, %v672
        %v801 = vpack.c.b16 %v689, %v673
        %v802 = vpack.c.b16 %v690, %v674
        %v803 = vpack.c.b16 %v691, %v675
        %v804 = vpack.c.b16 %v692, %v676
        %v805 = vpack.c.b16 %v693, %v677
        %v806 = vpack.c.b16 %v694, %v678
        %v807 = vpack.c.b16 %v695, %v679
        %v808 = vpack.c.b16 %v696, %v680
        %v809 = vpack.c.b16 %v697, %v681
        %v810 = vpack.c.b16 %v698, %v682
        %v811 = vpack.c.b16 %v699, %v683
        %v812 = vpack.c.b16 %v700, %v684
        %v813 = vpack.c.b16 %v717, %v701
        %v814 = vpack.c.b16 %v718, %v702
        %v815 = vpack.c.b16 %v719, %v703
        %v816 = vpack.c.b16 %v720, %v704
        %v817 = vpack.c.b16 %v721, %v705
        %v818 = vpack.c.b16 %v722, %v706
        %v819 = vpack.c.b16 %v723, %v707
        %v820 = vpack.c.b16 %v724, %v708
        %v821 = vpack.c.b16 %v725, %v709
        %v822 = vpack.c.b16 %v726, %v710
        %v823 = vpack.c.b16 %v727, %v711
        %v824 = vpack.c.b16 %v728, %v712
        %v825 = vpack.c.b16 %v729, %v713
        %v826 = vpack.c.b16 %v730, %v714
        %v827 = vpack.c.b16 %v731, %v715
        %v828 = vpack.c.b16 %v732, %v716
        %v829 = vpack.c.b16 %v749, %v733
        %v830 = vpack.c.b16 %v750, %v734
        %v831 = vpack.c.b16 %v751, %v735
        %v832 = vpack.c.b16 %v752, %v736
        %v833 = vpack.c.b16 %v753, %v737
        %v834 = vpack.c.b16 %v754, %v738
        %v835 = vpack.c.b16 %v755, %v739
        %v836 = vpack.c.b16 %v756, %v740
        %v837 = vpack.c.b16 %v757, %v741
        %v838 = vpack.c.b16 %v758, %v742
        %v839 = vpack.c.b16 %v759, %v743
        %v840 = vpack.c.b16 %v760, %v744
        %v841 = vpack.c.b16 %v761, %v745
        %v842 = vpack.c.b16 %v762, %v746
        %v843 = vpack.c.b16 %v763, %v747
        %v844 = vpack.c.b16 %v764, %v748
        %v1181 = vunpack.c.l.b16 %v269
        %v1182 = vunpack.c.h.b16 %v269
        %v1183 = vunpack.c.l.b16 %v270
        %v1184 = vunpack.c.h.b16 %v270
        %v1185 = vunpack.c.l.b16 %v271
        %v1186 = vunpack.c.h.b16 %v271
        %v1187 = vunpack.c.l.b16 %v272
        %v1188 = vunpack.c.h.b16 %v272
        %v1189 = vunpack.c.l.b16 %v273
        %v1190 = vunpack.c.h.b16 %v273
        %v1191 = vunpack.c.l.b16 %v274
        %v1192 = vunpack.c.h.b16 %v274
        %v1193 = vunpack.c.l.b16 %v275
        %v1194 = vunpack.c.h.b16 %v275
        %v1195 = vunpack.c.l.b16 %v276
        %v1196 = vunpack.c.h.b16 %v276
        %v1197 = vunpack.c.l.b16 %v277
        %v1198 = vunpack.c.h.b16 %v277
        %v1199 = vunpack.c.l.b16 %v278
        %v1200 = vunpack.c.h.b16 %v278
        %v1201 = vunpack.c.l.b16 %v279
        %v1202 = vunpack.c.h.b16 %v279
        %v1203 = vunpack.c.l.b16 %v280
        %v1204 = vunpack.c.h.b16 %v280
        %v1205 = vunpack.c.l.b16 %v281
        %v1206 = vunpack.c.h.b16 %v281
        %v1207 = vunpack.c.l.b16 %v282
        %v1208 = vunpack.c.h.b16 %v282
        %v1209 = vunpack.c.l.b16 %v283
        %v1210 = vunpack.c.h.b16 %v283
        %v1211 = vunpack.c.l.b16 %v284
        %v1212 = vunpack.c.h.b16 %v284
        %v1213 = vunpack.c.l.b16 %v285
        %v1214 = vunpack.c.h.b16 %v285
        %v1215 = vunpack.c.l.b16 %v286
        %v1216 = vunpack.c.h.b16 %v286
        %v1217 = vunpack.c.l.b16 %v287
        %v1218 = vunpack.c.h.b16 %v287
        %v1219 = vunpack.c.l.b16 %v288
        %v1220 = vunpack.c.h.b16 %v288
        %v1221 = vunpack.c.l.b16 %v289
        %v1222 = vunpack.c.h.b16 %v289
        %v1223 = vunpack.c.l.b16 %v290
        %v1224 = vunpack.c.h.b16 %v290
        %v1225 = vunpack.c.l.b16 %v291
        %v1226 = vunpack.c.h.b16 %v291
        %v1227 = vunpack.c.l.b16 %v292
        %v1228 = vunpack.c.h.b16 %v292
        %v1229 = vunpack.c.l.b16 %v293
        %v1230 = vunpack.c.h.b16 %v293
        %v1231 = vunpack.c.l.b16 %v294
        %v1232 = vunpack.c.h.b16 %v294
        %v1233 = vunpack.c.l.b16 %v295
        %v1234 = vunpack.c.h.b16 %v295
        %v1235 = vunpack.c.l.b16 %v296
        %v1236 = vunpack.c.h.b16 %v296
        %v1237 = vunpack.c.l.b16 %v297
        %v1238 = vunpack.c.h.b16 %v297
        %v1239 = vunpack.c.l.b16 %v298
        %v1240 = vunpack.c.h.b16 %v298
        %v1241 = vunpack.c.l.b16 %v299
        %v1242 = vunpack.c.h.b16 %v299
        %v1243 = vunpack.c.l.b16 %v300
        %v1244 = vunpack.c.h.b16 %v300
        %v1245 = vunpack.c.l.b16 %v301
        %v1246 = vunpack.c.h.b16 %v301
        %v1247 = vunpack.c.l.b16 %v302
        %v1248 = vunpack.c.h.b16 %v302
        %v1249 = vunpack.c.l.b16 %v303
        %v1250 = vunpack.c.h.b16 %v303
        %v1251 = vunpack.c.l.b16 %v304
        %v1252 = vunpack.c.h.b16 %v304
        %v1253 = vunpack.c.l.b16 %v305
        %v1254 = vunpack.c.h.b16 %v305
        %v1255 = vunpack.c.l.b16 %v306
        %v1256 = vunpack.c.h.b16 %v306
        %v1257 = vunpack.c.l.b16 %v307
        %v1258 = vunpack.c.h.b16 %v307
        %v1259 = vunpack.c.l.b16 %v308
        %v1260 = vunpack.c.h.b16 %v308
        %v1261 = vunpack.c.l.b16 %v309
        %v1262 = vunpack.c.h.b16 %v309
        %v1263 = vunpack.c.l.b16 %v310
        %v1264 = vunpack.c.h.b16 %v310
        %v1265 = vunpack.c.l.b16 %v311
        %v1266 = vunpack.c.h.b16 %v311
        %v1267 = vunpack.c.l.b16 %v312
        %v1268 = vunpack.c.h.b16 %v312
        %v1269 = vunpack.c.l.b16 %v313
        %v1270 = vunpack.c.h.b16 %v313
        %v1271 = vunpack.c.l.b16 %v314
        %v1272 = vunpack.c.h.b16 %v314
        %v1273 = vunpack.c.l.b16 %v315
        %v1274 = vunpack.c.h.b16 %v315
        %v1275 = vunpack.c.l.b16 %v316
        %v1276 = vunpack.c.h.b16 %v316
        %v1277 = vunpack.c.l.b16 %v317
        %v1278 = vunpack.c.h.b16 %v317
        %v1279 = vunpack.c.l.b16 %v318
        %v1280 = vunpack.c.h.b16 %v318
        %v1281 = vunpack.c.l.b16 %v319
        %v1282 = vunpack.c.h.b16 %v319
        %v1283 = vunpack.c.l.b16 %v320
        %v1284 = vunpack.c.h.b16 %v320
        %v1285 = vunpack.c.l.b16 %v321
        %v1286 = vunpack.c.h.b16 %v321
        %v1287 = vunpack.c.l.b16 %v322
        %v1288 = vunpack.c.h.b16 %v322
        %v1289 = vunpack.c.l.b16 %v323
        %v1290 = vunpack.c.h.b16 %v323
        %v1291 = vunpack.c.l.b16 %v324
        %v1292 = vunpack.c.h.b16 %v324
        %v1293 = vunpack.c.l.b16 %v325
        %v1294 = vunpack.c.h.b16 %v325
        %v1295 = vunpack.c.l.b16 %v326
        %v1296 = vunpack.c.h.b16 %v326
        %v1297 = vunpack.c.l.b16 %v327
        %v1298 = vunpack.c.h.b16 %v327
        %v1299 = vunpack.c.l.b16 %v328
        %v1300 = vunpack.c.h.b16 %v328
        %v1301 = vunpack.c.l.b16 %v329
        %v1302 = vunpack.c.h.b16 %v329
        %v1303 = vunpack.c.l.b16 %v330
        %v1304 = vunpack.c.h.b16 %v330
        %v1305 = vunpack.c.l.b16 %v331
        %v1306 = vunpack.c.h.b16 %v331
        %v1307 = vunpack.c.l.b16 %v332
        %v1308 = vunpack.c.h.b16 %v332
        %v1309 = vunpack.c.l.b16 %v333
        %v1310 = vunpack.c.h.b16 %v333
        %v1311 = vunpack.c.l.b16 %v334
        %v1312 = vunpack.c.h.b16 %v334
        %v1313 = vunpack.c.l.b16 %v335
        %v1314 = vunpack.c.h.b16 %v335
        %v1315 = vunpack.c.l.b16 %v336
        %v1316 = vunpack.c.h.b16 %v336
        %v1317 = vunpack.c.l.b16 %v337
        %v1318 = vunpack.c.h.b16 %v337
        %v1319 = vunpack.c.l.b16 %v338
        %v1320 = vunpack.c.h.b16 %v338
        %v1321 = vunpack.c.l.b16 %v339
        %v1322 = vunpack.c.h.b16 %v339
        %v1323 = vunpack.c.l.b16 %v340
        %v1324 = vunpack.c.h.b16 %v340
        %v1325 = vunpack.c.l.b16 %v341
        %v1326 = vunpack.c.h.b16 %v341
        %v1327 = vunpack.c.l.b16 %v342
        %v1328 = vunpack.c.h.b16 %v342
        %v1329 = vunpack.c.l.b16 %v343
        %v1330 = vunpack.c.h.b16 %v343
        %v1331 = vunpack.c.l.b16 %v344
        %v1332 = vunpack.c.h.b16 %v344
        %v1333 = vunpack.c.l.b16 %v345
        %v1334 = vunpack.c.h.b16 %v345
        %v1335 = vunpack.c.l.b16 %v346
        %v1336 = vunpack.c.h.b16 %v346
        %v1337 = vunpack.c.l.b16 %v347
        %v1338 = vunpack.c.h.b16 %v347
        %v1339 = vunpack.c.l.b16 %v348
        %v1340 = vunpack.c.h.b16 %v348
        %v1341 = vunpack.c.l.b16 %v349
        %v1342 = vunpack.c.h.b16 %v349
        %v1343 = vunpack.c.l.b16 %v350
        %v1344 = vunpack.c.h.b16 %v350
        %v1345 = vunpack.c.l.b16 %v351
        %v1346 = vunpack.c.h.b16 %v351
        %v1347 = vunpack.c.l.b16 %v352
        %v1348 = vunpack.c.h.b16 %v352
        %v1349 = vunpack.c.l.b16 %v353
        %v1350 = vunpack.c.h.b16 %v353
        %v1351 = vunpack.c.l.b16 %v354
        %v1352 = vunpack.c.h.b16 %v354
        %v1353 = vunpack.c.l.b16 %v355
        %v1354 = vunpack.c.h.b16 %v355
        %v1355 = vunpack.c.l.b16 %v356
        %v1356 = vunpack.c.h.b16 %v356
        %v1357 = vunpack.c.l.b16 %v357
        %v1358 = vunpack.c.h.b16 %v357
        %v1359 = vunpack.c.l.b16 %v358
        %v1360 = vunpack.c.h.b16 %v358
        %v1361 = vunpack.c.l.b16 %v359
        %v1362 = vunpack.c.h.b16 %v359
        %v1363 = vunpack.c.l.b16 %v360
        %v1364 = vunpack.c.h.b16 %v360
        %v1365 = vunpack.c.l.b16 %v361
        %v1366 = vunpack.c.h.b16 %v361
        %v1367 = vunpack.c.l.b16 %v362
        %v1368 = vunpack.c.h.b16 %v362
        %v1369 = vunpack.c.l.b16 %v363
        %v1370 = vunpack.c.h.b16 %v363
        %v1371 = vunpack.c.l.b16 %v364
        %v1372 = vunpack.c.h.b16 %v364
        %v1373 = vunpack.c.l.b16 %v365
        %v1374 = vunpack.c.h.b16 %v365
        %v1375 = vunpack.c.l.b16 %v366
        %v1376 = vunpack.c.h.b16 %v366
        %v1377 = vunpack.c.l.b16 %v367
        %v1378 = vunpack.c.h.b16 %v367
        %v1379 = vunpack.c.l.b16 %v368
        %v1380 = vunpack.c.h.b16 %v368
        %v1381 = vunpack.c.l.b16 %v369
        %v1382 = vunpack.c.h.b16 %v369
        %v1383 = vunpack.c.l.b16 %v370
        %v1384 = vunpack.c.h.b16 %v370
        %v1385 = vunpack.c.l.b16 %v371
        %v1386 = vunpack.c.h.b16 %v371
        %v1387 = vunpack.c.l.b16 %v372
        %v1388 = vunpack.c.h.b16 %v372
        %v1389 = vunpack.c.l.b16 %v373
        %v1390 = vunpack.c.h.b16 %v373
        %v1391 = vunpack.c.l.b16 %v374
        %v1392 = vunpack.c.h.b16 %v374
        %v1393 = vunpack.c.l.b16 %v375
        %v1394 = vunpack.c.h.b16 %v375
        %v1395 = vunpack.c.l.b16 %v376
        %v1396 = vunpack.c.h.b16 %v376
        %v1397 = vunpack.c.l.b16 %v377
        %v1398 = vunpack.c.h.b16 %v377
        %v1399 = vunpack.c.l.b16 %v378
        %v1400 = vunpack.c.h.b16 %v378
        %v1401 = vunpack.c.l.b16 %v379
        %v1402 = vunpack.c.h.b16 %v379
        %v1403 = vunpack.c.l.b16 %v380
        %v1404 = vunpack.c.h.b16 %v380
        %v1405 = vunpack.c.l.b16 %v381
        %v1406 = vunpack.c.h.b16 %v381
        %v1407 = vunpack.c.l.b16 %v382
        %v1408 = vunpack.c.h.b16 %v382
        %v1409 = vunpack.c.l.b16 %v383
        %v1410 = vunpack.c.h.b16 %v383
        %v1411 = vunpack.c.l.b16 %v384
        %v1412 = vunpack.c.h.b16 %v384
        %v1413 = vunpack.c.l.b16 %v385
        %v1414 = vunpack.c.h.b16 %v385
        %v1415 = vunpack.c.l.b16 %v386
        %v1416 = vunpack.c.h.b16 %v386
        %v1417 = vunpack.c.l.b16 %v387
        %v1418 = vunpack.c.h.b16 %v387
        %v1419 = vunpack.c.l.b16 %v388
        %v1420 = vunpack.c.h.b16 %v388
        %v1421 = vunpack.c.l.b16 %v389
        %v1422 = vunpack.c.h.b16 %v389
        %v1423 = vunpack.c.l.b16 %v390
        %v1424 = vunpack.c.h.b16 %v390
        %v1425 = vunpack.c.l.b16 %v391
        %v1426 = vunpack.c.h.b16 %v391
        %v1427 = vunpack.c.l.b16 %v392
        %v1428 = vunpack.c.h.b16 %v392
        %v1429 = vunpack.c.l.b16 %v393
        %v1430 = vunpack.c.h.b16 %v393
        %v1431 = vunpack.c.l.b16 %v394
        %v1432 = vunpack.c.h.b16 %v394
        %v1433 = vunpack.c.l.b16 %v395
        %v1434 = vunpack.c.h.b16 %v395
        %v1435 = vunpack.c.l.b16 %v396
        %v1436 = vunpack.c.h.b16 %v396
        %v1437 = vunpack.c.l.b16 %v397
        %v1438 = vunpack.c.h.b16 %v397
        %v1439 = vunpack.c.l.b16 %v398
        %v1440 = vunpack.c.h.b16 %v398
        %v1441 = vunpack.c.l.b16 %v399
        %v1442 = vunpack.c.h.b16 %v399
        %v1443 = vunpack.c.l.b16 %v400
        %v1444 = vunpack.c.h.b16 %v400
        %v1445 = vunpack.c.l.b16 %v401
        %v1446 = vunpack.c.h.b16 %v401
        %v1447 = vunpack.c.l.b16 %v402
        %v1448 = vunpack.c.h.b16 %v402
        %v1449 = vunpack.c.l.b16 %v403
        %v1450 = vunpack.c.h.b16 %v403
        %v1451 = vunpack.c.l.b16 %v404
        %v1452 = vunpack.c.h.b16 %v404
        %v1453 = vunpack.c.l.b16 %v405
        %v1454 = vunpack.c.h.b16 %v405
        %v1455 = vunpack.c.l.b16 %v406
        %v1456 = vunpack.c.h.b16 %v406
        %v1457 = vunpack.c.l.b16 %v407
        %v1458 = vunpack.c.h.b16 %v407
        %v1459 = vunpack.c.l.b16 %v408
        %v1460 = vunpack.c.h.b16 %v408
        %v1461 = vunpack.c.l.b16 %v409
        %v1462 = vunpack.c.h.b16 %v409
        %v1463 = vunpack.c.l.b16 %v410
        %v1464 = vunpack.c.h.b16 %v410
        %v1465 = vunpack.c.l.b16 %v411
        %v1466 = vunpack.c.h.b16 %v411
        %v1467 = vunpack.c.l.b16 %v412
        %v1468 = vunpack.c.h.b16 %v412
        %v1469 = vunpack.c.l.b16 %v413
        %v1470 = vunpack.c.h.b16 %v413
        %v1471 = vunpack.c.l.b16 %v414
        %v1472 = vunpack.c.h.b16 %v414
        %v1473 = vunpack.c.l.b16 %v415
        %v1474 = vunpack.c.h.b16 %v415
        %v1475 = vunpack.c.l.b16 %v416
        %v1476 = vunpack.c.h.b16 %v416
        %v1477 = vunpack.c.l.b16 %v417
        %v1478 = vunpack.c.h.b16 %v417
        %v1479 = vunpack.c.l.b16 %v418
        %v1480 = vunpack.c.h.b16 %v418
        %v1481 = vunpack.c.l.b16 %v419
        %v1482 = vunpack.c.h.b16 %v419
        %v1483 = vunpack.c.l.b16 %v420
        %v1484 = vunpack.c.h.b16 %v420
        %v1485 = vunpack.c.l.b16 %v421
        %v1486 = vunpack.c.h.b16 %v421
        %v1487 = vunpack.c.l.b16 %v422
        %v1488 = vunpack.c.h.b16 %v422
        %v1489 = vunpack.c.l.b16 %v423
        %v1490 = vunpack.c.h.b16 %v423
        %v1491 = vunpack.c.l.b16 %v424
        %v1492 = vunpack.c.h.b16 %v424
        %v1493 = vunpack.c.l.b16 %v425
        %v1494 = vunpack.c.h.b16 %v425
        %v1495 = vunpack.c.l.b16 %v426
        %v1496 = vunpack.c.h.b16 %v426
        %v1497 = vunpack.c.l.b16 %v427
        %v1498 = vunpack.c.h.b16 %v427
        %v1499 = vunpack.c.l.b16 %v428
        %v1500 = vunpack.c.h.b16 %v428
        %v1501 = vunpack.c.l.b16 %v429
        %v1502 = vunpack.c.h.b16 %v429
        %v1503 = vunpack.c.l.b16 %v430
        %v1504 = vunpack.c.h.b16 %v430
        %v1505 = vunpack.c.l.b16 %v431
        %v1506 = vunpack.c.h.b16 %v431
        %v1507 = vunpack.c.l.b16 %v432
        %v1508 = vunpack.c.h.b16 %v432
        %v1509 = vunpack.c.l.b16 %v433
        %v1510 = vunpack.c.h.b16 %v433
        %v1511 = vunpack.c.l.b16 %v434
        %v1512 = vunpack.c.h.b16 %v434
        %v1513 = vunpack.c.l.b16 %v435
        %v1514 = vunpack.c.h.b16 %v435
        %v1515 = vunpack.c.l.b16 %v436
        %v1516 = vunpack.c.h.b16 %v436
        %v1517 = vunpack.c.l.b16 %v437
        %v1518 = vunpack.c.h.b16 %v437
        %v1519 = vunpack.c.l.b16 %v438
        %v1520 = vunpack.c.h.b16 %v438
        %v1521 = vunpack.c.l.b16 %v439
        %v1522 = vunpack.c.h.b16 %v439
        %v1523 = vunpack.c.l.b16 %v440
        %v1524 = vunpack.c.h.b16 %v440
        %v1525 = vunpack.c.l.b16 %v441
        %v1526 = vunpack.c.h.b16 %v441
        %v1527 = vunpack.c.l.b16 %v442
        %v1528 = vunpack.c.h.b16 %v442
        %v1529 = vunpack.c.l.b16 %v443
        %v1530 = vunpack.c.h.b16 %v443
        %v1531 = vunpack.c.l.b16 %v444
        %v1532 = vunpack.c.h.b16 %v444
        %v1533 = vunpack.c.l.b16 %v445
        %v1534 = vunpack.c.h.b16 %v445
        %v1535 = vunpack.c.l.b16 %v446
        %v1536 = vunpack.c.h.b16 %v446
        %v1537 = vunpack.c.l.b16 %v447
        %v1538 = vunpack.c.h.b16 %v447
        %v1539 = vunpack.c.l.b16 %v448
        %v1540 = vunpack.c.h.b16 %v448
        %v1541 = vunpack.c.l.b16 %v449
        %v1542 = vunpack.c.h.b16 %v449
        %v1543 = vunpack.c.l.b16 %v450
        %v1544 = vunpack.c.h.b16 %v450
        %v1545 = vunpack.c.l.b16 %v451
        %v1546 = vunpack.c.h.b16 %v451
        %v1547 = vunpack.c.l.b16 %v452
        %v1548 = vunpack.c.h.b16 %v452
        %v1549 = vunpack.c.l.b16 %v453
        %v1550 = vunpack.c.h.b16 %v453
        %v1551 = vunpack.c.l.b16 %v454
        %v1552 = vunpack.c.h.b16 %v454
        %v1553 = vunpack.c.l.b16 %v455
        %v1554 = vunpack.c.h.b16 %v455
        %v1555 = vunpack.c.l.b16 %v456
        %v1556 = vunpack.c.h.b16 %v456
        %v1557 = vunpack.c.l.b16 %v457
        %v1558 = vunpack.c.h.b16 %v457
        %v1559 = vunpack.c.l.b16 %v458
        %v1560 = vunpack.c.h.b16 %v458
        %v1561 = vunpack.c.l.b16 %v459
        %v1562 = vunpack.c.h.b16 %v459
        %v1563 = vunpack.c.l.b16 %v460
        %v1564 = vunpack.c.h.b16 %v460
        %v1565 = vunpack.c.l.b16 %v461
        %v1566 = vunpack.c.h.b16 %v461
        %v1567 = vunpack.c.l.b16 %v462
        %v1568 = vunpack.c.h.b16 %v462
        %v1569 = vunpack.c.l.b16 %v463
        %v1570 = vunpack.c.h.b16 %v463
        %v1571 = vunpack.c.l.b16 %v464
        %v1572 = vunpack.c.h.b16 %v464
        %v1573 = vunpack.c.l.b16 %v465
        %v1574 = vunpack.c.h.b16 %v465
        %v1575 = vunpack.c.l.b16 %v466
        %v1576 = vunpack.c.h.b16 %v466
        %v1577 = vunpack.c.l.b16 %v467
        %v1578 = vunpack.c.h.b16 %v467
        %v1579 = vunpack.c.l.b16 %v468
        %v1580 = vunpack.c.h.b16 %v468
        %v1581 = vunpack.c.l.b16 %v469
        %v1582 = vunpack.c.h.b16 %v469
        %v1583 = vunpack.c.l.b16 %v470
        %v1584 = vunpack.c.h.b16 %v470
        %v1585 = vunpack.c.l.b16 %v471
        %v1586 = vunpack.c.h.b16 %v471
        %v1587 = vunpack.c.l.b16 %v472
        %v1588 = vunpack.c.h.b16 %v472
        %v1589 = vunpack.c.l.b16 %v473
        %v1590 = vunpack.c.h.b16 %v473
        %v1591 = vunpack.c.l.b16 %v474
        %v1592 = vunpack.c.h.b16 %v474
        %v1593 = vunpack.c.l.b16 %v475
        %v1594 = vunpack.c.h.b16 %v475
        %v1595 = vunpack.c.l.b16 %v476
        %v1596 = vunpack.c.h.b16 %v476
        %v1597 = vunpack.c.l.b16 %v477
        %v1598 = vunpack.c.h.b16 %v477
        %v1599 = vunpack.c.l.b16 %v478
        %v1600 = vunpack.c.h.b16 %v478
        %v1601 = vunpack.c.l.b16 %v479
        %v1602 = vunpack.c.h.b16 %v479
        %v1603 = vunpack.c.l.b16 %v480
        %v1604 = vunpack.c.h.b16 %v480
        %v1605 = vunpack.c.l.b16 %v481
        %v1606 = vunpack.c.h.b16 %v481
        %v1607 = vunpack.c.l.b16 %v482
        %v1608 = vunpack.c.h.b16 %v482
        %v1609 = vunpack.c.l.b16 %v483
        %v1610 = vunpack.c.h.b16 %v483
        %v1611 = vunpack.c.l.b16 %v484
        %v1612 = vunpack.c.h.b16 %v484
        %v1613 = vunpack.c.l.b16 %v485
        %v1614 = vunpack.c.h.b16 %v485
        %v1615 = vunpack.c.l.b16 %v486
        %v1616 = vunpack.c.h.b16 %v486
        %v1617 = vunpack.c.l.b16 %v487
        %v1618 = vunpack.c.h.b16 %v487
        %v1619 = vunpack.c.l.b16 %v488
        %v1620 = vunpack.c.h.b16 %v488
        %v1621 = vunpack.c.l.b16 %v489
        %v1622 = vunpack.c.h.b16 %v489
        %v1623 = vunpack.c.l.b16 %v490
        %v1624 = vunpack.c.h.b16 %v490
        %v1625 = vunpack.c.l.b16 %v491
        %v1626 = vunpack.c.h.b16 %v491
        %v1627 = vunpack.c.l.b16 %v492
        %v1628 = vunpack.c.h.b16 %v492
        %v1629 = vunpack.c.l.b16 %v493
        %v1630 = vunpack.c.h.b16 %v493
        %v1631 = vunpack.c.l.b16 %v494
        %v1632 = vunpack.c.h.b16 %v494
        %v1633 = vunpack.c.l.b16 %v495
        %v1634 = vunpack.c.h.b16 %v495
        %v1635 = vunpack.c.l.b16 %v496
        %v1636 = vunpack.c.h.b16 %v496
        %v1637 = vunpack.c.l.b16 %v497
        %v1638 = vunpack.c.h.b16 %v497
        %v1639 = vunpack.c.l.b16 %v498
        %v1640 = vunpack.c.h.b16 %v498
        %v1641 = vunpack.c.l.b16 %v499
        %v1642 = vunpack.c.h.b16 %v499
        %v1643 = vunpack.c.l.b16 %v500
        %v1644 = vunpack.c.h.b16 %v500
        %v1645 = vunpack.c.l.b16 %v501
        %v1646 = vunpack.c.h.b16 %v501
        %v1647 = vunpack.c.l.b16 %v502
        %v1648 = vunpack.c.h.b16 %v502
        %v1649 = vunpack.c.l.b16 %v503
        %v1650 = vunpack.c.h.b16 %v503
        %v1651 = vunpack.c.l.b16 %v504
        %v1652 = vunpack.c.h.b16 %v504
        %v1653 = vunpack.c.l.b16 %v505
        %v1654 = vunpack.c.h.b16 %v505
        %v1655 = vunpack.c.l.b16 %v506
        %v1656 = vunpack.c.h.b16 %v506
        %v1657 = vunpack.c.l.b16 %v507
        %v1658 = vunpack.c.h.b16 %v507
        %v1659 = vunpack.c.l.b16 %v508
        %v1660 = vunpack.c.h.b16 %v508
        %v1661 = vunpack.c.l.b16 %v509
        %v1662 = vunpack.c.h.b16 %v509
        %v1663 = vunpack.c.l.b16 %v510
        %v1664 = vunpack.c.h.b16 %v510
        %v1665 = vunpack.c.l.b16 %v511
        %v1666 = vunpack.c.h.b16 %v511
        %v1667 = vunpack.c.l.b16 %v512
        %v1668 = vunpack.c.h.b16 %v512
        %v1669 = vunpack.c.l.b16 %v513
        %v1670 = vunpack.c.h.b16 %v513
        %v1671 = vunpack.c.l.b16 %v514
        %v1672 = vunpack.c.h.b16 %v514
        %v1673 = vunpack.c.l.b16 %v515
        %v1674 = vunpack.c.h.b16 %v515
        %v1675 = vunpack.c.l.b16 %v516
        %v1676 = vunpack.c.h.b16 %v516
        %v1677 = vunpack.c.l.b16 %v517
        %v1678 = vunpack.c.h.b16 %v517
        %v1679 = vunpack.c.l.b16 %v518
        %v1680 = vunpack.c.h.b16 %v518
        %v1681 = vunpack.c.l.b16 %v519
        %v1682 = vunpack.c.h.b16 %v519
        %v1683 = vunpack.c.l.b16 %v520
        %v1684 = vunpack.c.h.b16 %v520
        %v1685 = vunpack.c.l.b16 %v521
        %v1686 = vunpack.c.h.b16 %v521
        %v1687 = vunpack.c.l.b16 %v522
        %v1688 = vunpack.c.h.b16 %v522
        %v1689 = vunpack.c.l.b16 %v523
        %v1690 = vunpack.c.h.b16 %v523
        %v1691 = vunpack.c.l.b16 %v524
        %v1692 = vunpack.c.h.b16 %v524
        %v1693 = vpack.c.b16 %v1183, %v1181
        %v1694 = vpack.c.b16 %v1184, %v1182
        %v1695 = vpack.c.b16 %v1187, %v1185
        %v1696 = vpack.c.b16 %v1188, %v1186
        %v1697 = vpack.c.b16 %v1191, %v1189
        %v1698 = vpack.c.b16 %v1192, %v1190
        %v1699 = vpack.c.b16 %v1195, %v1193
        %v1700 = vpack.c.b16 %v1196, %v1194
        %v1701 = vpack.c.b16 %v1199, %v1197
        %v1702 = vpack.c.b16 %v1200, %v1198
        %v1703 = vpack.c.b16 %v1203, %v1201
        %v1704 = vpack.c.b16 %v1204, %v1202
        %v1705 = vpack.c.b16 %v1207, %v1205
        %v1706 = vpack.c.b16 %v1208, %v1206
        %v1707 = vpack.c.b16 %v1211, %v1209
        %v1708 = vpack.c.b16 %v1212, %v1210
        %v1709 = vpack.c.b16 %v1215, %v1213
        %v1710 = vpack.c.b16 %v1216, %v1214
        %v1711 = vpack.c.b16 %v1219, %v1217
        %v1712 = vpack.c.b16 %v1220, %v1218
        %v1713 = vpack.c.b16 %v1223, %v1221
        %v1714 = vpack.c.b16 %v1224, %v1222
        %v1715 = vpack.c.b16 %v1227, %v1225
        %v1716 = vpack.c.b16 %v1228, %v1226
        %v1717 = vpack.c.b16 %v1231, %v1229
        %v1718 = vpack.c.b16 %v1232, %v1230
        %v1719 = vpack.c.b16 %v1235, %v1233
        %v1720 = vpack.c.b16 %v1236, %v1234
        %v1721 = vpack.c.b16 %v1239, %v1237
        %v1722 = vpack.c.b16 %v1240, %v1238
        %v1723 = vpack.c.b16 %v1243, %v1241
        %v1724 = vpack.c.b16 %v1244, %v1242
        %v1725 = vpack.c.b16 %v1247, %v1245
        %v1726 = vpack.c.b16 %v1248, %v1246
        %v1727 = vpack.c.b16 %v1251, %v1249
        %v1728 = vpack.c.b16 %v1252, %v1250
        %v1729 = vpack.c.b16 %v1255, %v1253
        %v1730 = vpack.c.b16 %v1256, %v1254
        %v1731 = vpack.c.b16 %v1259, %v1257
        %v1732 = vpack.c.b16 %v1260, %v1258
        %v1733 = vpack.c.b16 %v1263, %v1261
        %v1734 = vpack.c.b16 %v1264, %v1262
        %v1735 = vpack.c.b16 %v1267, %v1265
        %v1736 = vpack.c.b16 %v1268, %v1266
        %v1737 = vpack.c.b16 %v1271, %v1269
        %v1738 = vpack.c.b16 %v1272, %v1270
        %v1739 = vpack.c.b16 %v1275, %v1273
        %v1740 = vpack.c.b16 %v1276, %v1274
        %v1741 = vpack.c.b16 %v1279, %v1277
        %v1742 = vpack.c.b16 %v1280, %v1278
        %v1743 = vpack.c.b16 %v1283, %v1281
        %v1744 = vpack.c.b16 %v1284, %v1282
        %v1745 = vpack.c.b16 %v1287, %v1285
        %v1746 = vpack.c.b16 %v1288, %v1286
        %v1747 = vpack.c.b16 %v1291, %v1289
        %v1748 = vpack.c.b16 %v1292, %v1290
        %v1749 = vpack.c.b16 %v1295, %v1293
        %v1750 = vpack.c.b16 %v1296, %v1294
        %v1751 = vpack.c.b16 %v1299, %v1297
        %v1752 = vpack.c.b16 %v1300, %v1298
        %v1753 = vpack.c.b16 %v1303, %v1301
        %v1754 = vpack.c.b16 %v1304, %v1302
        %v1755 = vpack.c.b16 %v1307, %v1305
        %v1756 = vpack.c.b16 %v1308, %v1306
        %v1757 = vpack.c.b16 %v1311, %v1309
        %v1758 = vpack.c.b16 %v1312, %v1310
        %v1759 = vpack.c.b16 %v1315, %v1313
        %v1760 = vpack.c.b16 %v1316, %v1314
        %v1761 = vpack.c.b16 %v1319, %v1317
        %v1762 = vpack.c.b16 %v1320, %v1318
        %v1763 = vpack.c.b16 %v1323, %v1321
        %v1764 = vpack.c.b16 %v1324, %v1322
        %v1765 = vpack.c.b16 %v1327, %v1325
        %v1766 = vpack.c.b16 %v1328, %v1326
        %v1767 = vpack.c.b16 %v1331, %v1329
        %v1768 = vpack.c.b16 %v1332, %v1330
        %v1769 = vpack.c.b16 %v1335, %v1333
        %v1770 = vpack.c.b16 %v1336, %v1334
        %v1771 = vpack.c.b16 %v1339, %v1337
        %v1772 = vpack.c.b16 %v1340, %v1338
        %v1773 = vpack.c.b16 %v1343, %v1341
        %v1774 = vpack.c.b16 %v1344, %v1342
        %v1775 = vpack.c.b16 %v1347, %v1345
        %v1776 = vpack.c.b16 %v1348, %v1346
        %v1777 = vpack.c.b16 %v1351, %v1349
        %v1778 = vpack.c.b16 %v1352, %v1350
        %v1779 = vpack.c.b16 %v1355, %v1353
        %v1780 = vpack.c.b16 %v1356, %v1354
        %v1781 = vpack.c.b16 %v1359, %v1357
        %v1782 = vpack.c.b16 %v1360, %v1358
        %v1783 = vpack.c.b16 %v1363, %v1361
        %v1784 = vpack.c.b16 %v1364, %v1362
        %v1785 = vpack.c.b16 %v1367, %v1365
        %v1786 = vpack.c.b16 %v1368, %v1366
        %v1787 = vpack.c.b16 %v1371, %v1369
        %v1788 = vpack.c.b16 %v1372, %v1370
        %v1789 = vpack.c.b16 %v1375, %v1373
        %v1790 = vpack.c.b16 %v1376, %v1374
        %v1791 = vpack.c.b16 %v1379, %v1377
        %v1792 = vpack.c.b16 %v1380, %v1378
        %v1793 = vpack.c.b16 %v1383, %v1381
        %v1794 = vpack.c.b16 %v1384, %v1382
        %v1795 = vpack.c.b16 %v1387, %v1385
        %v1796 = vpack.c.b16 %v1388, %v1386
        %v1797 = vpack.c.b16 %v1391, %v1389
        %v1798 = vpack.c.b16 %v1392, %v1390
        %v1799 = vpack.c.b16 %v1395, %v1393
        %v1800 = vpack.c.b16 %v1396, %v1394
        %v1801 = vpack.c.b16 %v1399, %v1397
        %v1802 = vpack.c.b16 %v1400, %v1398
        %v1803 = vpack.c.b16 %v1403, %v1401
        %v1804 = vpack.c.b16 %v1404, %v1402
        %v1805 = vpack.c.b16 %v1407, %v1405
        %v1806 = vpack.c.b16 %v1408, %v1406
        %v1807 = vpack.c.b16 %v1411, %v1409
        %v1808 = vpack.c.b16 %v1412, %v1410
        %v1809 = vpack.c.b16 %v1415, %v1413
        %v1810 = vpack.c.b16 %v1416, %v1414
        %v1811 = vpack.c.b16 %v1419, %v1417
        %v1812 = vpack.c.b16 %v1420, %v1418
        %v1813 = vpack.c.b16 %v1423, %v1421
        %v1814 = vpack.c.b16 %v1424, %v1422
        %v1815 = vpack.c.b16 %v1427, %v1425
        %v1816 = vpack.c.b16 %v1428, %v1426
        %v1817 = vpack.c.b16 %v1431, %v1429
        %v1818 = vpack.c.b16 %v1432, %v1430
        %v1819 = vpack.c.b16 %v1435, %v1433
        %v1820 = vpack.c.b16 %v1436, %v1434
        %v1821 = vpack.c.b16 %v1439, %v1437
        %v1822 = vpack.c.b16 %v1440, %v1438
        %v1823 = vpack.c.b16 %v1443, %v1441
        %v1824 = vpack.c.b16 %v1444, %v1442
        %v1825 = vpack.c.b16 %v1447, %v1445
        %v1826 = vpack.c.b16 %v1448, %v1446
        %v1827 = vpack.c.b16 %v1451, %v1449
        %v1828 = vpack.c.b16 %v1452, %v1450
        %v1829 = vpack.c.b16 %v1455, %v1453
        %v1830 = vpack.c.b16 %v1456, %v1454
        %v1831 = vpack.c.b16 %v1459, %v1457
        %v1832 = vpack.c.b16 %v1460, %v1458
        %v1833 = vpack.c.b16 %v1463, %v1461
        %v1834 = vpack.c.b16 %v1464, %v1462
        %v1835 = vpack.c.b16 %v1467, %v1465
        %v1836 = vpack.c.b16 %v1468, %v1466
        %v1837 = vpack.c.b16 %v1471, %v1469
        %v1838 = vpack.c.b16 %v1472, %v1470
        %v1839 = vpack.c.b16 %v1475, %v1473
        %v1840 = vpack.c.b16 %v1476, %v1474
        %v1841 = vpack.c.b16 %v1479, %v1477
        %v1842 = vpack.c.b16 %v1480, %v1478
        %v1843 = vpack.c.b16 %v1483, %v1481
        %v1844 = vpack.c.b16 %v1484, %v1482
        %v1845 = vpack.c.b16 %v1487, %v1485
        %v1846 = vpack.c.b16 %v1488, %v1486
        %v1847 = vpack.c.b16 %v1491, %v1489
        %v1848 = vpack.c.b16 %v1492, %v1490
        %v1849 = vpack.c.b16 %v1495, %v1493
        %v1850 = vpack.c.b16 %v1496, %v1494
        %v1851 = vpack.c.b16 %v1499, %v1497
        %v1852 = vpack.c.b16 %v1500, %v1498
        %v1853 = vpack.c.b16 %v1503, %v1501
        %v1854 = vpack.c.b16 %v1504, %v1502
        %v1855 = vpack.c.b16 %v1507, %v1505
        %v1856 = vpack.c.b16 %v1508, %v1506
        %v1857 = vpack.c.b16 %v1511, %v1509
        %v1858 = vpack.c.b16 %v1512, %v1510
        %v1859 = vpack.c.b16 %v1515, %v1513
        %v1860 = vpack.c.b16 %v1516, %v1514
        %v1861 = vpack.c.b16 %v1519, %v1517
        %v1862 = vpack.c.b16 %v1520, %v1518
        %v1863 = vpack.c.b16 %v1523, %v1521
        %v1864 = vpack.c.b16 %v1524, %v1522
        %v1865 = vpack.c.b16 %v1527, %v1525
        %v1866 = vpack.c.b16 %v1528, %v1526
        %v1867 = vpack.c.b16 %v1531, %v1529
        %v1868 = vpack.c.b16 %v1532, %v1530
        %v1869 = vpack.c.b16 %v1535, %v1533
        %v1870 = vpack.c.b16 %v1536, %v1534
        %v1871 = vpack.c.b16 %v1539, %v1537
        %v1872 = vpack.c.b16 %v1540, %v1538
        %v1873 = vpack.c.b16 %v1543, %v1541
        %v1874 = vpack.c.b16 %v1544, %v1542
        %v1875 = vpack.c.b16 %v1547, %v1545
        %v1876 = vpack.c.b16 %v1548, %v1546
        %v1877 = vpack.c.b16 %v1551, %v1549
        %v1878 = vpack.c.b16 %v1552, %v1550
        %v1879 = vpack.c.b16 %v1555, %v1553
        %v1880 = vpack.c.b16 %v1556, %v1554
        %v1881 = vpack.c.b16 %v1559, %v1557
        %v1882 = vpack.c.b16 %v1560, %v1558
        %v1883 = vpack.c.b16 %v1563, %v1561
        %v1884 = vpack.c.b16 %v1564, %v1562
        %v1885 = vpack.c.b16 %v1567, %v1565
        %v1886 = vpack.c.b16 %v1568, %v1566
        %v1887 = vpack.c.b16 %v1571, %v1569
        %v1888 = vpack.c.b16 %v1572, %v1570
        %v1889 = vpack.c.b16 %v1575, %v1573
        %v1890 = vpack.c.b16 %v1576, %v1574
        %v1891 = vpack.c.b16 %v1579, %v1577
        %v1892 = vpack.c.b16 %v1580, %v1578
        %v1893 = vpack.c.b16 %v1583, %v1581
        %v1894 = vpack.c.b16 %v1584, %v1582
        %v1895 = vpack.c.b16 %v1587, %v1585
        %v1896 = vpack.c.b16 %v1588, %v1586
        %v1897 = vpack.c.b16 %v1591, %v1589
        %v1898 = vpack.c.b16 %v1592, %v1590
        %v1899 = vpack.c.b16 %v1595, %v1593
        %v1900 = vpack.c.b16 %v1596, %v1594
        %v1901 = vpack.c.b16 %v1599, %v1597
        %v1902 = vpack.c.b16 %v1600, %v1598
        %v1903 = vpack.c.b16 %v1603, %v1601
        %v1904 = vpack.c.b16 %v1604, %v1602
        %v1905 = vpack.c.b16 %v1607, %v1605
        %v1906 = vpack.c.b16 %v1608, %v1606
        %v1907 = vpack.c.b16 %v1611, %v1609
        %v1908 = vpack.c.b16 %v1612, %v1610
        %v1909 = vpack.c.b16 %v1615, %v1613
        %v1910 = vpack.c.b16 %v1616, %v1614
        %v1911 = vpack.c.b16 %v1619, %v1617
        %v1912 = vpack.c.b16 %v1620, %v1618
        %v1913 = vpack.c.b16 %v1623, %v1621
        %v1914 = vpack.c.b16 %v1624, %v1622
        %v1915 = vpack.c.b16 %v1627, %v1625
        %v1916 = vpack.c.b16 %v1628, %v1626
        %v1917 = vpack.c.b16 %v1631, %v1629
        %v1918 = vpack.c.b16 %v1632, %v1630
        %v1919 = vpack.c.b16 %v1635, %v1633
        %v1920 = vpack.c.b16 %v1636, %v1634
        %v1921 = vpack.c.b16 %v1639, %v1637
        %v1922 = vpack.c.b16 %v1640, %v1638
        %v1923 = vpack.c.b16 %v1643, %v1641
        %v1924 = vpack.c.b16 %v1644, %v1642
        %v1925 = vpack.c.b16 %v1647, %v1645
        %v1926 = vpack.c.b16 %v1648, %v1646
        %v1927 = vpack.c.b16 %v1651, %v1649
        %v1928 = vpack.c.b16 %v1652, %v1650
        %v1929 = vpack.c.b16 %v1655, %v1653
        %v1930 = vpack.c.b16 %v1656, %v1654
        %v1931 = vpack.c.b16 %v1659, %v1657
        %v1932 = vpack.c.b16 %v1660, %v1658
        %v1933 = vpack.c.b16 %v1663, %v1661
        %v1934 = vpack.c.b16 %v1664, %v1662
        %v1935 = vpack.c.b16 %v1667, %v1665
        %v1936 = vpack.c.b16 %v1668, %v1666
        %v1937 = vpack.c.b16 %v1671, %v1669
        %v1938 = vpack.c.b16 %v1672, %v1670
        %v1939 = vpack.c.b16 %v1675, %v1673
        %v1940 = vpack.c.b16 %v1676, %v1674
        %v1941 = vpack.c.b16 %v1679, %v1677
        %v1942 = vpack.c.b16 %v1680, %v1678
        %v1943 = vpack.c.b16 %v1683, %v1681
        %v1944 = vpack.c.b16 %v1684, %v1682
        %v1945 = vpack.c.b16 %v1687, %v1685
        %v1946 = vpack.c.b16 %v1688, %v1686
        %v1947 = vpack.c.b16 %v1691, %v1689
        %v1948 = vpack.c.b16 %v1692, %v1690
        %2205 = vmatprep.subr.bf16.mxu0 %v1694
        %2206 = vmatpush1.bf16.msra.mxu0 %v1693
        %2207 = vmatprep.subr.bf16.mxu0 %v1696
        %2208 = vmatpush1.bf16.msra.mxu0 %v1695
        %2209 = vmatprep.subr.bf16.mxu0 %v1698
        %2210 = vmatpush1.bf16.msra.mxu0 %v1697
        %2211 = vmatprep.subr.bf16.mxu0 %v1700
        %2212 = vmatpush1.bf16.msra.mxu0 %v1699
        %2213 = vmatprep.subr.bf16.mxu0 %v1702
        %2214 = vmatpush1.bf16.msra.mxu0 %v1701
        %2215 = vmatprep.subr.bf16.mxu0 %v1704
        %2216 = vmatpush1.bf16.msra.mxu0 %v1703
        %2217 = vmatprep.subr.bf16.mxu0 %v1706
        %2218 = vmatpush1.bf16.msra.mxu0 %v1705
        %2219 = vmatprep.subr.bf16.mxu0 %v1708
        %2220 = vmatpush1.bf16.msra.mxu0 %v1707
        %2221 = vmatprep.subr.bf16.mxu0 %v1710
        %2222 = vmatpush1.bf16.msra.mxu0 %v1709
        %2223 = vmatprep.subr.bf16.mxu0 %v1712
        %2224 = vmatpush1.bf16.msra.mxu0 %v1711
        %2225 = vmatprep.subr.bf16.mxu0 %v1714
        %2226 = vmatpush1.bf16.msra.mxu0 %v1713
        %2227 = vmatprep.subr.bf16.mxu0 %v1716
        %2228 = vmatpush1.bf16.msra.mxu0 %v1715
        %2229 = vmatprep.subr.bf16.mxu0 %v1718
        %2230 = vmatpush1.bf16.msra.mxu0 %v1717
        %2231 = vmatprep.subr.bf16.mxu0 %v1720
        %2232 = vmatpush1.bf16.msra.mxu0 %v1719
        %2233 = vmatprep.subr.bf16.mxu0 %v1722
        %2234 = vmatpush1.bf16.msra.mxu0 %v1721
        %2235 = vmatprep.subr.bf16.mxu0 %v1724
        %2236 = vmatpush1.bf16.msra.mxu0 %v1723
        %2237 = vmatprep.mubr.bf16.mxu0 %v766
        %2238 = vmatmul.mubr.bf16.gmra.mrb[0].mxu0 %v765
        %v2239 = vpop.f32.mrb[0].mxu0
        %v2240 = vadd.f32 0.0, %v2239
        %v2241 = vpop.f32.mrb[0].mxu0
        %v2242 = vadd.f32 0.0, %v2241
        %v2243 = vpop.f32.mrb[0].mxu0
        %v2244 = vadd.f32 0.0, %v2243
        %v2245 = vpop.f32.mrb[0].mxu0
        %v2246 = vadd.f32 0.0, %v2245
        %2247 = vmatprep.mubr.bf16.mxu0 %v782
        %2248 = vmatmul.mubr.bf16.gmra.mrb[0].mxu0 %v781
        %v2249 = vpop.f32.mrb[0].mxu0
        %v2250 = vadd.f32 0.0, %v2249
        %v2251 = vpop.f32.mrb[0].mxu0
        %v2252 = vadd.f32 0.0, %v2251
        %v2253 = vpop.f32.mrb[0].mxu0
        %v2254 = vadd.f32 0.0, %v2253
        %v2255 = vpop.f32.mrb[0].mxu0
        %v2256 = vadd.f32 0.0, %v2255
        %2257 = vmatprep.mubr.bf16.mxu0 %v798
        %2258 = vmatmul.mubr.bf16.gmra.mrb[0].mxu0 %v797
        %v2259 = vpop.f32.mrb[0].mxu0
        %v2260 = vadd.f32 0.0, %v2259
        %v2261 = vpop.f32.mrb[0].mxu0
        %v2262 = vadd.f32 0.0, %v2261
        %v2263 = vpop.f32.mrb[0].mxu0
        %v2264 = vadd.f32 0.0, %v2263
        %v2265 = vpop.f32.mrb[0].mxu0
        %v2266 = vadd.f32 0.0, %v2265
        %2267 = vmatprep.mubr.bf16.mxu0 %v814
        %2268 = vmatmul.mubr.bf16.gmra.mrb[0].mxu0 %v813
        %v2269 = vpop.f32.mrb[0].mxu0
        %v2270 = vadd.f32 0.0, %v2269
        %v2271 = vpop.f32.mrb[0].mxu0
        %v2272 = vadd.f32 0.0, %v2271
        %v2273 = vpop.f32.mrb[0].mxu0
        %v2274 = vadd.f32 0.0, %v2273
        %v2275 = vpop.f32.mrb[0].mxu0
        %v2276 = vadd.f32 0.0, %v2275
        %2277 = vmatprep.mubr.bf16.mxu0 %v830
        %2278 = vmatmul.mubr.bf16.gmra.mrb[0].mxu0 %v829
        %v2279 = vpop.f32.mrb[0].mxu0
        %v2280 = vadd.f32 0.0, %v2279
        %v2281 = vpop.f32.mrb[0].mxu0
        %v2282 = vadd.f32 0.0, %v2281
        %v2283 = vpop.f32.mrb[0].mxu0
        %v2284 = vadd.f32 0.0, %v2283
        %v2285 = vpop.f32.mrb[0].mxu0
        %v2286 = vadd.f32 0.0, %v2285
        %2287 = vdwg.mxu0
        %2288 = vmatprep.subr.bf16.mxu0 %v1726
        %2289 = vmatpush1.bf16.msra.mxu0 %v1725
        %2290 = vmatprep.subr.bf16.mxu0 %v1728
        %2291 = vmatpush1.bf16.msra.mxu0 %v1727
        %2292 = vmatprep.subr.bf16.mxu0 %v1730
        %2293 = vmatpush1.bf16.msra.mxu0 %v1729
        %2294 = vmatprep.subr.bf16.mxu0 %v1732
        %2295 = vmatpush1.bf16.msra.mxu0 %v1731
        %2296 = vmatprep.subr.bf16.mxu0 %v1734
        %2297 = vmatpush1.bf16.msra.mxu0 %v1733
        %2298 = vmatprep.subr.bf16.mxu0 %v1736
        %2299 = vmatpush1.bf16.msra.mxu0 %v1735
        %2300 = vmatprep.subr.bf16.mxu0 %v1738
        %2301 = vmatpush1.bf16.msra.mxu0 %v1737
        %2302 = vmatprep.subr.bf16.mxu0 %v1740
        %2303 = vmatpush1.bf16.msra.mxu0 %v1739
        %2304 = vmatprep.subr.bf16.mxu0 %v1742
        %2305 = vmatpush1.bf16.msra.mxu0 %v1741
        %2306 = vmatprep.subr.bf16.mxu0 %v1744
        %2307 = vmatpush1.bf16.msra.mxu0 %v1743
        %2308 = vmatprep.subr.bf16.mxu0 %v1746
        %2309 = vmatpush1.bf16.msra.mxu0 %v1745
        %2310 = vmatprep.subr.bf16.mxu0 %v1748
        %2311 = vmatpush1.bf16.msra.mxu0 %v1747
        %2312 = vmatprep.subr.bf16.mxu0 %v1750
        %2313 = vmatpush1.bf16.msra.mxu0 %v1749
        %2314 = vmatprep.subr.bf16.mxu0 %v1752
        %2315 = vmatpush1.bf16.msra.mxu0 %v1751
        %2316 = vmatprep.subr.bf16.mxu0 %v1754
        %2317 = vmatpush1.bf16.msra.mxu0 %v1753
        %2318 = vmatprep.subr.bf16.mxu0 %v1756
        %2319 = vmatpush1.bf16.msra.mxu0 %v1755
        %2320 = vmatprep.mubr.bf16.mxu0 %v768
        %2321 = vmatmul.mubr.bf16.gmra.mrb[0].mxu0 %v767
        %v2322 = vpop.f32.mrb[0].mxu0
        %v2323 = vadd.f32 %v2240, %v2322
        %v2324 = vpop.f32.mrb[0].mxu0
        %v2325 = vadd.f32 %v2242, %v2324
        %v2326 = vpop.f32.mrb[0].mxu0
        %v2327 = vadd.f32 %v2244, %v2326
        %v2328 = vpop.f32.mrb[0].mxu0
        %v2329 = vadd.f32 %v2246, %v2328
        %2330 = vmatprep.mubr.bf16.mxu0 %v784
        %2331 = vmatmul.mubr.bf16.gmra.mrb[0].mxu0 %v783
        %v2332 = vpop.f32.mrb[0].mxu0
        %v2333 = vadd.f32 %v2250, %v2332
        %v2334 = vpop.f32.mrb[0].mxu0
        %v2335 = vadd.f32 %v2252, %v2334
        %v2336 = vpop.f32.mrb[0].mxu0
        %v2337 = vadd.f32 %v2254, %v2336
        %v2338 = vpop.f32.mrb[0].mxu0
        %v2339 = vadd.f32 %v2256, %v2338
        %2340 = vmatprep.mubr.bf16.mxu0 %v800
        %2341 = vmatmul.mubr.bf16.gmra.mrb[0].mxu0 %v799
        %v2342 = vpop.f32.mrb[0].mxu0
        %v2343 = vadd.f32 %v2260, %v2342
        %v2344 = vpop.f32.mrb[0].mxu0
        %v2345 = vadd.f32 %v2262, %v2344
        %v2346 = vpop.f32.mrb[0].mxu0
        %v2347 = vadd.f32 %v2264, %v2346
        %v2348 = vpop.f32.mrb[0].mxu0
        %v2349 = vadd.f32 %v2266, %v2348
        %2350 = vmatprep.mubr.bf16.mxu0 %v816
        %2351 = vmatmul.mubr.bf16.gmra.mrb[0].mxu0 %v815
        %v2352 = vpop.f32.mrb[0].mxu0
        %v2353 = vadd.f32 %v2270, %v2352
        %v2354 = vpop.f32.mrb[0].mxu0
        %v2355 = vadd.f32 %v2272, %v2354
        %v2356 = vpop.f32.mrb[0].mxu0
        %v2357 = vadd.f32 %v2274, %v2356
        %v2358 = vpop.f32.mrb[0].mxu0
        %v2359 = vadd.f32 %v2276, %v2358
        %2360 = vmatprep.mubr.bf16.mxu0 %v832
        %2361 = vmatmul.mubr.bf16.gmra.mrb[0].mxu0 %v831
        %v2362 = vpop.f32.mrb[0].mxu0
        %v2363 = vadd.f32 %v2280, %v2362
        %v2364 = vpop.f32.mrb[0].mxu0
        %v2365 = vadd.f32 %v2282, %v2364
        %v2366 = vpop.f32.mrb[0].mxu0
        %v2367 = vadd.f32 %v2284, %v2366
        %v2368 = vpop.f32.mrb[0].mxu0
        %v2369 = vadd.f32 %v2286, %v2368
        %2370 = vdwg.mxu0
        %2371 = vmatprep.subr.bf16.mxu0 %v1758
        %2372 = vmatpush1.bf16.msra.mxu0 %v1757
        %2373 = vmatprep.subr.bf16.mxu0 %v1760
        %2374 = vmatpush1.bf16.msra.mxu0 %v1759
        %2375 = vmatprep.subr.bf16.mxu0 %v1762
        %2376 = vmatpush1.bf16.msra.mxu0 %v1761
        %2377 = vmatprep.subr.bf16.mxu0 %v1764
        %2378 = vmatpush1.bf16.msra.mxu0 %v1763
        %2379 = vmatprep.subr.bf16.mxu0 %v1766
        %2380 = vmatpush1.bf16.msra.mxu0 %v1765
        %2381 = vmatprep.subr.bf16.mxu0 %v1768
        %2382 = vmatpush1.bf16.msra.mxu0 %v1767
        %2383 = vmatprep.subr.bf16.mxu0 %v1770
        %2384 = vmatpush1.bf16.msra.mxu0 %v1769
        %2385 = vmatprep.subr.bf16.mxu0 %v1772
        %2386 = vmatpush1.bf16.msra.mxu0 %v1771
        %2387 = vmatprep.subr.bf16.mxu0 %v1774
        %2388 = vmatpush1.bf16.msra.mxu0 %v1773
        %2389 = vmatprep.subr.bf16.mxu0 %v1776
        %2390 = vmatpush1.bf16.msra.mxu0 %v1775
        %2391 = vmatprep.subr.bf16.mxu0 %v1778
        %2392 = vmatpush1.bf16.msra.mxu0 %v1777
        %2393 = vmatprep.subr.bf16.mxu0 %v1780
        %2394 = vmatpush1.bf16.msra.mxu0 %v1779
        %2395 = vmatprep.subr.bf16.mxu0 %v1782
        %2396 = vmatpush1.bf16.msra.mxu0 %v1781
        %2397 = vmatprep.subr.bf16.mxu0 %v1784
        %2398 = vmatpush1.bf16.msra.mxu0 %v1783
        %2399 = vmatprep.subr.bf16.mxu0 %v1786
        %2400 = vmatpush1.bf16.msra.mxu0 %v1785
        %2401 = vmatprep.subr.bf16.mxu0 %v1788
        %2402 = vmatpush1.bf16.msra.mxu0 %v1787
        %2403 = vmatprep.mubr.bf16.mxu0 %v770
        %2404 = vmatmul.mubr.bf16.gmra.mrb[0].mxu0 %v769
        %v2405 = vpop.f32.mrb[0].mxu0
        %v2406 = vadd.f32 %v2323, %v2405
        %v2407 = vpop.f32.mrb[0].mxu0
        %v2408 = vadd.f32 %v2325, %v2407
        %v2409 = vpop.f32.mrb[0].mxu0
        %v2410 = vadd.f32 %v2327, %v2409
        %v2411 = vpop.f32.mrb[0].mxu0
        %v2412 = vadd.f32 %v2329, %v2411
        %2413 = vmatprep.mubr.bf16.mxu0 %v786
        %2414 = vmatmul.mubr.bf16.gmra.mrb[0].mxu0 %v785
        %v2415 = vpop.f32.mrb[0].mxu0
        %v2416 = vadd.f32 %v2333, %v2415
        %v2417 = vpop.f32.mrb[0].mxu0
        %v2418 = vadd.f32 %v2335, %v2417
        %v2419 = vpop.f32.mrb[0].mxu0
        %v2420 = vadd.f32 %v2337, %v2419
        %v2421 = vpop.f32.mrb[0].mxu0
        %v2422 = vadd.f32 %v2339, %v2421
        %2423 = vmatprep.mubr.bf16.mxu0 %v802
        %2424 = vmatmul.mubr.bf16.gmra.mrb[0].mxu0 %v801
        %v2425 = vpop.f32.mrb[0].mxu0
        %v2426 = vadd.f32 %v2343, %v2425
        %v2427 = vpop.f32.mrb[0].mxu0
        %v2428 = vadd.f32 %v2345, %v2427
        %v2429 = vpop.f32.mrb[0].mxu0
        %v2430 = vadd.f32 %v2347, %v2429
        %v2431 = vpop.f32.mrb[0].mxu0
        %v2432 = vadd.f32 %v2349, %v2431
        %2433 = vmatprep.mubr.bf16.mxu0 %v818
        %2434 = vmatmul.mubr.bf16.gmra.mrb[0].mxu0 %v817
        %v2435 = vpop.f32.mrb[0].mxu0
        %v2436 = vadd.f32 %v2353, %v2435
        %v2437 = vpop.f32.mrb[0].mxu0
        %v2438 = vadd.f32 %v2355, %v2437
        %v2439 = vpop.f32.mrb[0].mxu0
        %v2440 = vadd.f32 %v2357, %v2439
        %v2441 = vpop.f32.mrb[0].mxu0
        %v2442 = vadd.f32 %v2359, %v2441
        %2443 = vmatprep.mubr.bf16.mxu0 %v834
        %2444 = vmatmul.mubr.bf16.gmra.mrb[0].mxu0 %v833
        %v2445 = vpop.f32.mrb[0].mxu0
        %v2446 = vadd.f32 %v2363, %v2445
        %v2447 = vpop.f32.mrb[0].mxu0
        %v2448 = vadd.f32 %v2365, %v2447
        %v2449 = vpop.f32.mrb[0].mxu0
        %v2450 = vadd.f32 %v2367, %v2449
        %v2451 = vpop.f32.mrb[0].mxu0
        %v2452 = vadd.f32 %v2369, %v2451
        %2453 = vdwg.mxu0
        %2454 = vmatprep.subr.bf16.mxu0 %v1790
        %2455 = vmatpush1.bf16.msra.mxu0 %v1789
        %2456 = vmatprep.subr.bf16.mxu0 %v1792
        %2457 = vmatpush1.bf16.msra.mxu0 %v1791
        %2458 = vmatprep.subr.bf16.mxu0 %v1794
        %2459 = vmatpush1.bf16.msra.mxu0 %v1793
        %2460 = vmatprep.subr.bf16.mxu0 %v1796
        %2461 = vmatpush1.bf16.msra.mxu0 %v1795
        %2462 = vmatprep.subr.bf16.mxu0 %v1798
        %2463 = vmatpush1.bf16.msra.mxu0 %v1797
        %2464 = vmatprep.subr.bf16.mxu0 %v1800
        %2465 = vmatpush1.bf16.msra.mxu0 %v1799
        %2466 = vmatprep.subr.bf16.mxu0 %v1802
        %2467 = vmatpush1.bf16.msra.mxu0 %v1801
        %2468 = vmatprep.subr.bf16.mxu0 %v1804
        %2469 = vmatpush1.bf16.msra.mxu0 %v1803
        %2470 = vmatprep.subr.bf16.mxu0 %v1806
        %2471 = vmatpush1.bf16.msra.mxu0 %v1805
        %2472 = vmatprep.subr.bf16.mxu0 %v1808
        %2473 = vmatpush1.bf16.msra.mxu0 %v1807
        %2474 = vmatprep.subr.bf16.mxu0 %v1810
        %2475 = vmatpush1.bf16.msra.mxu0 %v1809
        %2476 = vmatprep.subr.bf16.mxu0 %v1812
        %2477 = vmatpush1.bf16.msra.mxu0 %v1811
        %2478 = vmatprep.subr.bf16.mxu0 %v1814
        %2479 = vmatpush1.bf16.msra.mxu0 %v1813
        %2480 = vmatprep.subr.bf16.mxu0 %v1816
        %2481 = vmatpush1.bf16.msra.mxu0 %v1815
        %2482 = vmatprep.subr.bf16.mxu0 %v1818
        %2483 = vmatpush1.bf16.msra.mxu0 %v1817
        %2484 = vmatprep.subr.bf16.mxu0 %v1820
        %2485 = vmatpush1.bf16.msra.mxu0 %v1819
        %2486 = vmatprep.mubr.bf16.mxu0 %v772
        %2487 = vmatmul.mubr.bf16.gmra.mrb[0].mxu0 %v771
        %v2488 = vpop.f32.mrb[0].mxu0
        %v2489 = vadd.f32 %v2406, %v2488
        %v2490 = vpop.f32.mrb[0].mxu0
        %v2491 = vadd.f32 %v2408, %v2490
        %v2492 = vpop.f32.mrb[0].mxu0
        %v2493 = vadd.f32 %v2410, %v2492
        %v2494 = vpop.f32.mrb[0].mxu0
        %v2495 = vadd.f32 %v2412, %v2494
        %2496 = vmatprep.mubr.bf16.mxu0 %v788
        %2497 = vmatmul.mubr.bf16.gmra.mrb[0].mxu0 %v787
        %v2498 = vpop.f32.mrb[0].mxu0
        %v2499 = vadd.f32 %v2416, %v2498
        %v2500 = vpop.f32.mrb[0].mxu0
        %v2501 = vadd.f32 %v2418, %v2500
        %v2502 = vpop.f32.mrb[0].mxu0
        %v2503 = vadd.f32 %v2420, %v2502
        %v2504 = vpop.f32.mrb[0].mxu0
        %v2505 = vadd.f32 %v2422, %v2504
        %2506 = vmatprep.mubr.bf16.mxu0 %v804
        %2507 = vmatmul.mubr.bf16.gmra.mrb[0].mxu0 %v803
        %v2508 = vpop.f32.mrb[0].mxu0
        %v2509 = vadd.f32 %v2426, %v2508
        %v2510 = vpop.f32.mrb[0].mxu0
        %v2511 = vadd.f32 %v2428, %v2510
        %v2512 = vpop.f32.mrb[0].mxu0
        %v2513 = vadd.f32 %v2430, %v2512
        %v2514 = vpop.f32.mrb[0].mxu0
        %v2515 = vadd.f32 %v2432, %v2514
        %2516 = vmatprep.mubr.bf16.mxu0 %v820
        %2517 = vmatmul.mubr.bf16.gmra.mrb[0].mxu0 %v819
        %v2518 = vpop.f32.mrb[0].mxu0
        %v2519 = vadd.f32 %v2436, %v2518
        %v2520 = vpop.f32.mrb[0].mxu0
        %v2521 = vadd.f32 %v2438, %v2520
        %v2522 = vpop.f32.mrb[0].mxu0
        %v2523 = vadd.f32 %v2440, %v2522
        %v2524 = vpop.f32.mrb[0].mxu0
        %v2525 = vadd.f32 %v2442, %v2524
        %2526 = vmatprep.mubr.bf16.mxu0 %v836
        %2527 = vmatmul.mubr.bf16.gmra.mrb[0].mxu0 %v835
        %v2528 = vpop.f32.mrb[0].mxu0
        %v2529 = vadd.f32 %v2446, %v2528
        %v2530 = vpop.f32.mrb[0].mxu0
        %v2531 = vadd.f32 %v2448, %v2530
        %v2532 = vpop.f32.mrb[0].mxu0
        %v2533 = vadd.f32 %v2450, %v2532
        %v2534 = vpop.f32.mrb[0].mxu0
        %v2535 = vadd.f32 %v2452, %v2534
        %2536 = vdwg.mxu0
        %2537 = vmatprep.subr.bf16.mxu0 %v1822
        %2538 = vmatpush1.bf16.msra.mxu0 %v1821
        %2539 = vmatprep.subr.bf16.mxu0 %v1824
        %2540 = vmatpush1.bf16.msra.mxu0 %v1823
        %2541 = vmatprep.subr.bf16.mxu0 %v1826
        %2542 = vmatpush1.bf16.msra.mxu0 %v1825
        %2543 = vmatprep.subr.bf16.mxu0 %v1828
        %2544 = vmatpush1.bf16.msra.mxu0 %v1827
        %2545 = vmatprep.subr.bf16.mxu0 %v1830
        %2546 = vmatpush1.bf16.msra.mxu0 %v1829
        %2547 = vmatprep.subr.bf16.mxu0 %v1832
        %2548 = vmatpush1.bf16.msra.mxu0 %v1831
        %2549 = vmatprep.subr.bf16.mxu0 %v1834
        %2550 = vmatpush1.bf16.msra.mxu0 %v1833
        %2551 = vmatprep.subr.bf16.mxu0 %v1836
        %2552 = vmatpush1.bf16.msra.mxu0 %v1835
        %2553 = vmatprep.subr.bf16.mxu0 %v1838
        %2554 = vmatpush1.bf16.msra.mxu0 %v1837
        %2555 = vmatprep.subr.bf16.mxu0 %v1840
        %2556 = vmatpush1.bf16.msra.mxu0 %v1839
        %2557 = vmatprep.subr.bf16.mxu0 %v1842
        %2558 = vmatpush1.bf16.msra.mxu0 %v1841
        %2559 = vmatprep.subr.bf16.mxu0 %v1844
        %2560 = vmatpush1.bf16.msra.mxu0 %v1843
        %2561 = vmatprep.subr.bf16.mxu0 %v1846
        %2562 = vmatpush1.bf16.msra.mxu0 %v1845
        %2563 = vmatprep.subr.bf16.mxu0 %v1848
        %2564 = vmatpush1.bf16.msra.mxu0 %v1847
        %2565 = vmatprep.subr.bf16.mxu0 %v1850
        %2566 = vmatpush1.bf16.msra.mxu0 %v1849
        %2567 = vmatprep.subr.bf16.mxu0 %v1852
        %2568 = vmatpush1.bf16.msra.mxu0 %v1851
        %2569 = vmatprep.mubr.bf16.mxu0 %v774
        %2570 = vmatmul.mubr.bf16.gmra.mrb[0].mxu0 %v773
        %v2571 = vpop.f32.mrb[0].mxu0
        %v2572 = vadd.f32 %v2489, %v2571
        %v2573 = vpop.f32.mrb[0].mxu0
        %v2574 = vadd.f32 %v2491, %v2573
        %v2575 = vpop.f32.mrb[0].mxu0
        %v2576 = vadd.f32 %v2493, %v2575
        %v2577 = vpop.f32.mrb[0].mxu0
        %v2578 = vadd.f32 %v2495, %v2577
        %2579 = vmatprep.mubr.bf16.mxu0 %v790
        %2580 = vmatmul.mubr.bf16.gmra.mrb[0].mxu0 %v789
        %v2581 = vpop.f32.mrb[0].mxu0
        %v2582 = vadd.f32 %v2499, %v2581
        %v2583 = vpop.f32.mrb[0].mxu0
        %v2584 = vadd.f32 %v2501, %v2583
        %v2585 = vpop.f32.mrb[0].mxu0
        %v2586 = vadd.f32 %v2503, %v2585
        %v2587 = vpop.f32.mrb[0].mxu0
        %v2588 = vadd.f32 %v2505, %v2587
        %2589 = vmatprep.mubr.bf16.mxu0 %v806
        %2590 = vmatmul.mubr.bf16.gmra.mrb[0].mxu0 %v805
        %v2591 = vpop.f32.mrb[0].mxu0
        %v2592 = vadd.f32 %v2509, %v2591
        %v2593 = vpop.f32.mrb[0].mxu0
        %v2594 = vadd.f32 %v2511, %v2593
        %v2595 = vpop.f32.mrb[0].mxu0
        %v2596 = vadd.f32 %v2513, %v2595
        %v2597 = vpop.f32.mrb[0].mxu0
        %v2598 = vadd.f32 %v2515, %v2597
        %2599 = vmatprep.mubr.bf16.mxu0 %v822
        %2600 = vmatmul.mubr.bf16.gmra.mrb[0].mxu0 %v821
        %v2601 = vpop.f32.mrb[0].mxu0
        %v2602 = vadd.f32 %v2519, %v2601
        %v2603 = vpop.f32.mrb[0].mxu0
        %v2604 = vadd.f32 %v2521, %v2603
        %v2605 = vpop.f32.mrb[0].mxu0
        %v2606 = vadd.f32 %v2523, %v2605
        %v2607 = vpop.f32.mrb[0].mxu0
        %v2608 = vadd.f32 %v2525, %v2607
        %2609 = vmatprep.mubr.bf16.mxu0 %v838
        %2610 = vmatmul.mubr.bf16.gmra.mrb[0].mxu0 %v837
        %v2611 = vpop.f32.mrb[0].mxu0
        %v2612 = vadd.f32 %v2529, %v2611
        %v2613 = vpop.f32.mrb[0].mxu0
        %v2614 = vadd.f32 %v2531, %v2613
        %v2615 = vpop.f32.mrb[0].mxu0
        %v2616 = vadd.f32 %v2533, %v2615
        %v2617 = vpop.f32.mrb[0].mxu0
        %v2618 = vadd.f32 %v2535, %v2617
        %2619 = vdwg.mxu0
        %2620 = vmatprep.subr.bf16.mxu0 %v1854
        %2621 = vmatpush1.bf16.msra.mxu0 %v1853
        %2622 = vmatprep.subr.bf16.mxu0 %v1856
        %2623 = vmatpush1.bf16.msra.mxu0 %v1855
        %2624 = vmatprep.subr.bf16.mxu0 %v1858
        %2625 = vmatpush1.bf16.msra.mxu0 %v1857
        %2626 = vmatprep.subr.bf16.mxu0 %v1860
        %2627 = vmatpush1.bf16.msra.mxu0 %v1859
        %2628 = vmatprep.subr.bf16.mxu0 %v1862
        %2629 = vmatpush1.bf16.msra.mxu0 %v1861
        %2630 = vmatprep.subr.bf16.mxu0 %v1864
        %2631 = vmatpush1.bf16.msra.mxu0 %v1863
        %2632 = vmatprep.subr.bf16.mxu0 %v1866
        %2633 = vmatpush1.bf16.msra.mxu0 %v1865
        %2634 = vmatprep.subr.bf16.mxu0 %v1868
        %2635 = vmatpush1.bf16.msra.mxu0 %v1867
        %2636 = vmatprep.subr.bf16.mxu0 %v1870
        %2637 = vmatpush1.bf16.msra.mxu0 %v1869
        %2638 = vmatprep.subr.bf16.mxu0 %v1872
        %2639 = vmatpush1.bf16.msra.mxu0 %v1871
        %2640 = vmatprep.subr.bf16.mxu0 %v1874
        %2641 = vmatpush1.bf16.msra.mxu0 %v1873
        %2642 = vmatprep.subr.bf16.mxu0 %v1876
        %2643 = vmatpush1.bf16.msra.mxu0 %v1875
        %2644 = vmatprep.subr.bf16.mxu0 %v1878
        %2645 = vmatpush1.bf16.msra.mxu0 %v1877
        %2646 = vmatprep.subr.bf16.mxu0 %v1880
        %2647 = vmatpush1.bf16.msra.mxu0 %v1879
        %2648 = vmatprep.subr.bf16.mxu0 %v1882
        %2649 = vmatpush1.bf16.msra.mxu0 %v1881
        %2650 = vmatprep.subr.bf16.mxu0 %v1884
        %2651 = vmatpush1.bf16.msra.mxu0 %v1883
        %2652 = vmatprep.mubr.bf16.mxu0 %v776
        %2653 = vmatmul.mubr.bf16.gmra.mrb[0].mxu0 %v775
        %v2654 = vpop.f32.mrb[0].mxu0
        %v2655 = vadd.f32 %v2572, %v2654
        %v2656 = vpop.f32.mrb[0].mxu0
        %v2657 = vadd.f32 %v2574, %v2656
        %v2658 = vpop.f32.mrb[0].mxu0
        %v2659 = vadd.f32 %v2576, %v2658
        %v2660 = vpop.f32.mrb[0].mxu0
        %v2661 = vadd.f32 %v2578, %v2660
        %2662 = vmatprep.mubr.bf16.mxu0 %v792
        %2663 = vmatmul.mubr.bf16.gmra.mrb[0].mxu0 %v791
        %v2664 = vpop.f32.mrb[0].mxu0
        %v2665 = vadd.f32 %v2582, %v2664
        %v2666 = vpop.f32.mrb[0].mxu0
        %v2667 = vadd.f32 %v2584, %v2666
        %v2668 = vpop.f32.mrb[0].mxu0
        %v2669 = vadd.f32 %v2586, %v2668
        %v2670 = vpop.f32.mrb[0].mxu0
        %v2671 = vadd.f32 %v2588, %v2670
        %2672 = vmatprep.mubr.bf16.mxu0 %v808
        %2673 = vmatmul.mubr.bf16.gmra.mrb[0].mxu0 %v807
        %v2674 = vpop.f32.mrb[0].mxu0
        %v2675 = vadd.f32 %v2592, %v2674
        %v2676 = vpop.f32.mrb[0].mxu0
        %v2677 = vadd.f32 %v2594, %v2676
        %v2678 = vpop.f32.mrb[0].mxu0
        %v2679 = vadd.f32 %v2596, %v2678
        %v2680 = vpop.f32.mrb[0].mxu0
        %v2681 = vadd.f32 %v2598, %v2680
        %2682 = vmatprep.mubr.bf16.mxu0 %v824
        %2683 = vmatmul.mubr.bf16.gmra.mrb[0].mxu0 %v823
        %v2684 = vpop.f32.mrb[0].mxu0
        %v2685 = vadd.f32 %v2602, %v2684
        %v2686 = vpop.f32.mrb[0].mxu0
        %v2687 = vadd.f32 %v2604, %v2686
        %v2688 = vpop.f32.mrb[0].mxu0
        %v2689 = vadd.f32 %v2606, %v2688
        %v2690 = vpop.f32.mrb[0].mxu0
        %v2691 = vadd.f32 %v2608, %v2690
        %2692 = vmatprep.mubr.bf16.mxu0 %v840
        %2693 = vmatmul.mubr.bf16.gmra.mrb[0].mxu0 %v839
        %v2694 = vpop.f32.mrb[0].mxu0
        %v2695 = vadd.f32 %v2612, %v2694
        %v2696 = vpop.f32.mrb[0].mxu0
        %v2697 = vadd.f32 %v2614, %v2696
        %v2698 = vpop.f32.mrb[0].mxu0
        %v2699 = vadd.f32 %v2616, %v2698
        %v2700 = vpop.f32.mrb[0].mxu0
        %v2701 = vadd.f32 %v2618, %v2700
        %2702 = vdwg.mxu0
        %2703 = vmatprep.subr.bf16.mxu0 %v1886
        %2704 = vmatpush1.bf16.msra.mxu0 %v1885
        %2705 = vmatprep.subr.bf16.mxu0 %v1888
        %2706 = vmatpush1.bf16.msra.mxu0 %v1887
        %2707 = vmatprep.subr.bf16.mxu0 %v1890
        %2708 = vmatpush1.bf16.msra.mxu0 %v1889
        %2709 = vmatprep.subr.bf16.mxu0 %v1892
        %2710 = vmatpush1.bf16.msra.mxu0 %v1891
        %2711 = vmatprep.subr.bf16.mxu0 %v1894
        %2712 = vmatpush1.bf16.msra.mxu0 %v1893
        %2713 = vmatprep.subr.bf16.mxu0 %v1896
        %2714 = vmatpush1.bf16.msra.mxu0 %v1895
        %2715 = vmatprep.subr.bf16.mxu0 %v1898
        %2716 = vmatpush1.bf16.msra.mxu0 %v1897
        %2717 = vmatprep.subr.bf16.mxu0 %v1900
        %2718 = vmatpush1.bf16.msra.mxu0 %v1899
        %2719 = vmatprep.subr.bf16.mxu0 %v1902
        %2720 = vmatpush1.bf16.msra.mxu0 %v1901
        %2721 = vmatprep.subr.bf16.mxu0 %v1904
        %2722 = vmatpush1.bf16.msra.mxu0 %v1903
        %2723 = vmatprep.subr.bf16.mxu0 %v1906
        %2724 = vmatpush1.bf16.msra.mxu0 %v1905
        %2725 = vmatprep.subr.bf16.mxu0 %v1908
        %2726 = vmatpush1.bf16.msra.mxu0 %v1907
        %2727 = vmatprep.subr.bf16.mxu0 %v1910
        %2728 = vmatpush1.bf16.msra.mxu0 %v1909
        %2729 = vmatprep.subr.bf16.mxu0 %v1912
        %2730 = vmatpush1.bf16.msra.mxu0 %v1911
        %2731 = vmatprep.subr.bf16.mxu0 %v1914
        %2732 = vmatpush1.bf16.msra.mxu0 %v1913
        %2733 = vmatprep.subr.bf16.mxu0 %v1916
        %2734 = vmatpush1.bf16.msra.mxu0 %v1915
        %2735 = vmatprep.mubr.bf16.mxu0 %v778
        %2736 = vmatmul.mubr.bf16.gmra.mrb[0].mxu0 %v777
        %v2737 = vpop.f32.mrb[0].mxu0
        %v2738 = vadd.f32 %v2655, %v2737
        %v2739 = vpop.f32.mrb[0].mxu0
        %v2740 = vadd.f32 %v2657, %v2739
        %v2741 = vpop.f32.mrb[0].mxu0
        %v2742 = vadd.f32 %v2659, %v2741
        %v2743 = vpop.f32.mrb[0].mxu0
        %v2744 = vadd.f32 %v2661, %v2743
        %2745 = vmatprep.mubr.bf16.mxu0 %v794
        %2746 = vmatmul.mubr.bf16.gmra.mrb[0].mxu0 %v793
        %v2747 = vpop.f32.mrb[0].mxu0
        %v2748 = vadd.f32 %v2665, %v2747
        %v2749 = vpop.f32.mrb[0].mxu0
        %v2750 = vadd.f32 %v2667, %v2749
        %v2751 = vpop.f32.mrb[0].mxu0
        %v2752 = vadd.f32 %v2669, %v2751
        %v2753 = vpop.f32.mrb[0].mxu0
        %v2754 = vadd.f32 %v2671, %v2753
        %2755 = vmatprep.mubr.bf16.mxu0 %v810
        %2756 = vmatmul.mubr.bf16.gmra.mrb[0].mxu0 %v809
        %v2757 = vpop.f32.mrb[0].mxu0
        %v2758 = vadd.f32 %v2675, %v2757
        %v2759 = vpop.f32.mrb[0].mxu0
        %v2760 = vadd.f32 %v2677, %v2759
        %v2761 = vpop.f32.mrb[0].mxu0
        %v2762 = vadd.f32 %v2679, %v2761
        %v2763 = vpop.f32.mrb[0].mxu0
        %v2764 = vadd.f32 %v2681, %v2763
        %2765 = vmatprep.mubr.bf16.mxu0 %v826
        %2766 = vmatmul.mubr.bf16.gmra.mrb[0].mxu0 %v825
        %v2767 = vpop.f32.mrb[0].mxu0
        %v2768 = vadd.f32 %v2685, %v2767
        %v2769 = vpop.f32.mrb[0].mxu0
        %v2770 = vadd.f32 %v2687, %v2769
        %v2771 = vpop.f32.mrb[0].mxu0
        %v2772 = vadd.f32 %v2689, %v2771
        %v2773 = vpop.f32.mrb[0].mxu0
        %v2774 = vadd.f32 %v2691, %v2773
        %2775 = vmatprep.mubr.bf16.mxu0 %v842
        %2776 = vmatmul.mubr.bf16.gmra.mrb[0].mxu0 %v841
        %v2777 = vpop.f32.mrb[0].mxu0
        %v2778 = vadd.f32 %v2695, %v2777
        %v2779 = vpop.f32.mrb[0].mxu0
        %v2780 = vadd.f32 %v2697, %v2779
        %v2781 = vpop.f32.mrb[0].mxu0
        %v2782 = vadd.f32 %v2699, %v2781
        %v2783 = vpop.f32.mrb[0].mxu0
        %v2784 = vadd.f32 %v2701, %v2783
        %2785 = vdwg.mxu0
        %2786 = vmatprep.subr.bf16.mxu0 %v1918
        %2787 = vmatpush1.bf16.msra.mxu0 %v1917
        %2788 = vmatprep.subr.bf16.mxu0 %v1920
        %2789 = vmatpush1.bf16.msra.mxu0 %v1919
        %2790 = vmatprep.subr.bf16.mxu0 %v1922
        %2791 = vmatpush1.bf16.msra.mxu0 %v1921
        %2792 = vmatprep.subr.bf16.mxu0 %v1924
        %2793 = vmatpush1.bf16.msra.mxu0 %v1923
        %2794 = vmatprep.subr.bf16.mxu0 %v1926
        %2795 = vmatpush1.bf16.msra.mxu0 %v1925
        %2796 = vmatprep.subr.bf16.mxu0 %v1928
        %2797 = vmatpush1.bf16.msra.mxu0 %v1927
        %2798 = vmatprep.subr.bf16.mxu0 %v1930
        %2799 = vmatpush1.bf16.msra.mxu0 %v1929
        %2800 = vmatprep.subr.bf16.mxu0 %v1932
        %2801 = vmatpush1.bf16.msra.mxu0 %v1931
        %2802 = vmatprep.subr.bf16.mxu0 %v1934
        %2803 = vmatpush1.bf16.msra.mxu0 %v1933
        %2804 = vmatprep.subr.bf16.mxu0 %v1936
        %2805 = vmatpush1.bf16.msra.mxu0 %v1935
        %2806 = vmatprep.subr.bf16.mxu0 %v1938
        %2807 = vmatpush1.bf16.msra.mxu0 %v1937
        %2808 = vmatprep.subr.bf16.mxu0 %v1940
        %2809 = vmatpush1.bf16.msra.mxu0 %v1939
        %2810 = vmatprep.subr.bf16.mxu0 %v1942
        %2811 = vmatpush1.bf16.msra.mxu0 %v1941
        %2812 = vmatprep.subr.bf16.mxu0 %v1944
        %2813 = vmatpush1.bf16.msra.mxu0 %v1943
        %2814 = vmatprep.subr.bf16.mxu0 %v1946
        %2815 = vmatpush1.bf16.msra.mxu0 %v1945
        %2816 = vmatprep.subr.bf16.mxu0 %v1948
        %2817 = vmatpush1.bf16.msra.mxu0 %v1947
        %2818 = vmatprep.mubr.bf16.mxu0 %v780
        %2819 = vmatmul.mubr.bf16.gmra.mrb[0].mxu0 %v779
        %v2820 = vpop.f32.mrb[0].mxu0
        %v2821 = vadd.f32 %v2738, %v2820
        %v2822 = vpop.f32.mrb[0].mxu0
        %v2823 = vadd.f32 %v2740, %v2822
        %v2824 = vpop.f32.mrb[0].mxu0
        %v2825 = vadd.f32 %v2742, %v2824
        %v2826 = vpop.f32.mrb[0].mxu0
        %v2827 = vadd.f32 %v2744, %v2826
        %2828 = vmatprep.mubr.bf16.mxu0 %v796
        %2829 = vmatmul.mubr.bf16.gmra.mrb[0].mxu0 %v795
        %v2830 = vpop.f32.mrb[0].mxu0
        %v2831 = vadd.f32 %v2748, %v2830
        %v2832 = vpop.f32.mrb[0].mxu0
        %v2833 = vadd.f32 %v2750, %v2832
        %v2834 = vpop.f32.mrb[0].mxu0
        %v2835 = vadd.f32 %v2752, %v2834
        %v2836 = vpop.f32.mrb[0].mxu0
        %v2837 = vadd.f32 %v2754, %v2836
        %2838 = vmatprep.mubr.bf16.mxu0 %v812
        %2839 = vmatmul.mubr.bf16.gmra.mrb[0].mxu0 %v811
        %v2840 = vpop.f32.mrb[0].mxu0
        %v2841 = vadd.f32 %v2758, %v2840
        %v2842 = vpop.f32.mrb[0].mxu0
        %v2843 = vadd.f32 %v2760, %v2842
        %v2844 = vpop.f32.mrb[0].mxu0
        %v2845 = vadd.f32 %v2762, %v2844
        %v2846 = vpop.f32.mrb[0].mxu0
        %v2847 = vadd.f32 %v2764, %v2846
        %2848 = vmatprep.mubr.bf16.mxu0 %v828
        %2849 = vmatmul.mubr.bf16.gmra.mrb[0].mxu0 %v827
        %v2850 = vpop.f32.mrb[0].mxu0
        %v2851 = vadd.f32 %v2768, %v2850
        %v2852 = vpop.f32.mrb[0].mxu0
        %v2853 = vadd.f32 %v2770, %v2852
        %v2854 = vpop.f32.mrb[0].mxu0
        %v2855 = vadd.f32 %v2772, %v2854
        %v2856 = vpop.f32.mrb[0].mxu0
        %v2857 = vadd.f32 %v2774, %v2856
        %2858 = vmatprep.mubr.bf16.mxu0 %v844
        %2859 = vmatmul.mubr.bf16.gmra.mrb[0].mxu0 %v843
        %v2860 = vpop.f32.mrb[0].mxu0
        %v2861 = vadd.f32 %v2778, %v2860
        %v2862 = vpop.f32.mrb[0].mxu0
        %v2863 = vadd.f32 %v2780, %v2862
        %v2864 = vpop.f32.mrb[0].mxu0
        %v2865 = vadd.f32 %v2782, %v2864
        %v2866 = vpop.f32.mrb[0].mxu0
        %v2867 = vadd.f32 %v2784, %v2866
        %2868 = vdwg.mxu0
        %v2869 = vmul.f32 %v2821, %v2821
        %v2870 = vmul.f32 %v2825, %v2825
        %v2871 = vmul.f32 %v2831, %v2831
        %v2872 = vmul.f32 %v2835, %v2835
        %v2873 = vmul.f32 %v2841, %v2841
        %v2874 = vmul.f32 %v2823, %v2823
        %v2875 = vmul.f32 %v2827, %v2827
        %v2876 = vmul.f32 %v2833, %v2833
        %v2877 = vmul.f32 %v2837, %v2837
        %v2878 = vmul.f32 %v2843, %v2843
        %v2879 = vadd.f32 %v2869, %v2874
        %v2880 = vadd.f32 %v2870, %v2875
        %v2881 = vadd.f32 %v2871, %v2876
        %v2882 = vadd.f32 %v2872, %v2877
        %v2883 = vadd.f32 %v2873, %v2878
        %v2884 = vrsqrt.pop %v2879
        %v2885 = vmul.f32 %v2879, %v2884
        %vm2886 = vcmp.eq.f32.partialorder %v2879, inf
        %v2887 = vsel %vm2886, %v2879, %v2885
        %vm2888 = vcmp.eq.f32.partialorder %v2879, 0.0
        %v2889 = vand.u32 %v2879, 2147483648
        %v2890 = vsel %vm2888, %v2889, %v2887
        %v2891 = vrsqrt.pop %v2880
        %v2892 = vmul.f32 %v2880, %v2891
        %vm2893 = vcmp.eq.f32.partialorder %v2880, inf
        %v2894 = vsel %vm2893, %v2880, %v2892
        %vm2895 = vcmp.eq.f32.partialorder %v2880, 0.0
        %v2896 = vand.u32 %v2880, 2147483648
        %v2897 = vsel %vm2895, %v2896, %v2894
        %v2898 = vrsqrt.pop %v2881
        %v2899 = vmul.f32 %v2881, %v2898
        %vm2900 = vcmp.eq.f32.partialorder %v2881, inf
        %v2901 = vsel %vm2900, %v2881, %v2899
        %vm2902 = vcmp.eq.f32.partialorder %v2881, 0.0
        %v2903 = vand.u32 %v2881, 2147483648
        %v2904 = vsel %vm2902, %v2903, %v2901
        %v2905 = vrsqrt.pop %v2882
        %v2906 = vmul.f32 %v2882, %v2905
        %vm2907 = vcmp.eq.f32.partialorder %v2882, inf
        %v2908 = vsel %vm2907, %v2882, %v2906
        %vm2909 = vcmp.eq.f32.partialorder %v2882, 0.0
        %v2910 = vand.u32 %v2882, 2147483648
        %v2911 = vsel %vm2909, %v2910, %v2908
        %v2912 = vrsqrt.pop %v2883
        %v2913 = vmul.f32 %v2883, %v2912
        %vm2914 = vcmp.eq.f32.partialorder %v2883, inf
        %v2915 = vsel %vm2914, %v2883, %v2913
        %vm2916 = vcmp.eq.f32.partialorder %v2883, 0.0
        %v2917 = vand.u32 %v2883, 2147483648
        %v2918 = vsel %vm2916, %v2917, %v2915
        %v2919 = vmul.f32 %v2845, %v2845
        %v2920 = vmul.f32 %v2851, %v2851
        %v2921 = vmul.f32 %v2855, %v2855
        %v2922 = vmul.f32 %v2861, %v2861
        %v2923 = vmul.f32 %v2865, %v2865
        %v2924 = vmul.f32 %v2847, %v2847
        %v2925 = vmul.f32 %v2853, %v2853
        %v2926 = vmul.f32 %v2857, %v2857
        %v2927 = vmul.f32 %v2863, %v2863
        %v2928 = vmul.f32 %v2867, %v2867
        %v2929 = vadd.f32 %v2919, %v2924
        %v2930 = vadd.f32 %v2920, %v2925
        %v2931 = vadd.f32 %v2921, %v2926
        %v2932 = vadd.f32 %v2922, %v2927
        %v2933 = vadd.f32 %v2923, %v2928
        %v2934 = vrsqrt.pop %v2929
        %v2935 = vmul.f32 %v2929, %v2934
        %vm2936 = vcmp.eq.f32.partialorder %v2929, inf
        %v2937 = vsel %vm2936, %v2929, %v2935
        %vm2938 = vcmp.eq.f32.partialorder %v2929, 0.0
        %v2939 = vand.u32 %v2929, 2147483648
        %v2940 = vsel %vm2938, %v2939, %v2937
        %v2941 = vrsqrt.pop %v2930
        %v2942 = vmul.f32 %v2930, %v2941
        %vm2943 = vcmp.eq.f32.partialorder %v2930, inf
        %v2944 = vsel %vm2943, %v2930, %v2942
        %vm2945 = vcmp.eq.f32.partialorder %v2930, 0.0
        %v2946 = vand.u32 %v2930, 2147483648
        %v2947 = vsel %vm2945, %v2946, %v2944
        %v2948 = vrsqrt.pop %v2931
        %v2949 = vmul.f32 %v2931, %v2948
        %vm2950 = vcmp.eq.f32.partialorder %v2931, inf
        %v2951 = vsel %vm2950, %v2931, %v2949
        %vm2952 = vcmp.eq.f32.partialorder %v2931, 0.0
        %v2953 = vand.u32 %v2931, 2147483648
        %v2954 = vsel %vm2952, %v2953, %v2951
        %v2955 = vrsqrt.pop %v2932
        %v2956 = vmul.f32 %v2932, %v2955
        %vm2957 = vcmp.eq.f32.partialorder %v2932, inf
        %v2958 = vsel %vm2957, %v2932, %v2956
        %vm2959 = vcmp.eq.f32.partialorder %v2932, 0.0
        %v2960 = vand.u32 %v2932, 2147483648
        %v2961 = vsel %vm2959, %v2960, %v2958
        %v2962 = vrsqrt.pop %v2933
        %v2963 = vmul.f32 %v2933, %v2962
        %vm2964 = vcmp.eq.f32.partialorder %v2933, inf
        %v2965 = vsel %vm2964, %v2933, %v2963
        %vm2966 = vcmp.eq.f32.partialorder %v2933, 0.0
        %v2967 = vand.u32 %v2933, 2147483648
        %v2968 = vsel %vm2966, %v2967, %v2965
        %v2969 = vsub.f32 %v2890, %v2940
        %v2970 = vsub.f32 %v2897, %v2947
        %v2971 = vsub.f32 %v2904, %v2954
        %v2972 = vsub.f32 %v2911, %v2961
        %v2973 = vsub.f32 %v2918, %v2968
        %v2974 = vmul.f32 %v2969, %v2969
        %v2975 = vmul.f32 %v2970, %v2970
        %v2976 = vmul.f32 %v2971, %v2971
        %v2977 = vmul.f32 %v2972, %v2972
        %v2978 = vmul.f32 %v2973, %v2973
        %v2979 = vand.u32 2147483647, %v2821
        %v2980 = vand.u32 2147483647, %v2825
        %v2981 = vand.u32 2147483647, %v2831
        %v2982 = vand.u32 2147483647, %v2835
        %v2983 = vand.u32 2147483647, %v2841
        %v2984 = vand.u32 2147483647, %v2845
        %v2985 = vand.u32 2147483647, %v2851
        %v2986 = vand.u32 2147483647, %v2855
        %v2987 = vand.u32 2147483647, %v2861
        %v2988 = vand.u32 2147483647, %v2865
        %v2989 = vsub.f32 %v2979, %v2984
        %v2990 = vsub.f32 %v2980, %v2985
        %v2991 = vsub.f32 %v2981, %v2986
        %v2992 = vsub.f32 %v2982, %v2987
        %v2993 = vsub.f32 %v2983, %v2988
        %v2994 = vand.u32 2147483647, %v2823
        %v2995 = vand.u32 2147483647, %v2827
        %v2996 = vand.u32 2147483647, %v2833
        %v2997 = vand.u32 2147483647, %v2837
        %v2998 = vand.u32 2147483647, %v2843
        %v2999 = vand.u32 2147483647, %v2847
        %v3000 = vand.u32 2147483647, %v2853
        %v3001 = vand.u32 2147483647, %v2857
        %v3002 = vand.u32 2147483647, %v2863
        %v3003 = vand.u32 2147483647, %v2867
        %v3004 = vsub.f32 %v2994, %v2999
        %v3005 = vsub.f32 %v2995, %v3000
        %v3006 = vsub.f32 %v2996, %v3001
        %v3007 = vsub.f32 %v2997, %v3002
        %v3008 = vsub.f32 %v2998, %v3003
        %s3009 = scalar_select %p268, 1, 0
        %v3010 = vstv %s3009
        %vm3011 = vcmp.eq.s32.totalorder %v3010, 1
        %vm3012 = vmand %vm267, %vm3011
        %v3013 = vmul.f32 %v2989, %v2989
        %v3014 = vmul.f32 %v2990, %v2990
        %v3015 = vmul.f32 %v2991, %v2991
        %v3016 = vmul.f32 %v2992, %v2992
        %v3017 = vmul.f32 %v2993, %v2993
        %v3018 = vmul.f32 %v3004, %v3004
        %v3019 = vmul.f32 %v3005, %v3005
        %v3020 = vmul.f32 %v3006, %v3006
        %v3021 = vmul.f32 %v3007, %v3007
        %v3022 = vmul.f32 %v3008, %v3008
        %v3023 = vadd.f32 %v3013, %v3018
        %v3024 = vadd.f32 %v3014, %v3019
        %v3025 = vadd.f32 %v3015, %v3020
        %v3026 = vadd.f32 %v3016, %v3021
        %v3027 = vadd.f32 %v3017, %v3022
        %v3028 = vsel %vm3012, %v3023, %v2974
        %v3029 = vsel %vm3012, %v3024, %v2975
        %v3030 = vsel %vm3012, %v3025, %v2976
        %v3031 = vsel %vm3012, %v3026, %v2977
        %v3032 = vsel %vm3012, %v3027, %v2978
        %v3033 = vadd.f32 %v3028, 0.0
        %v3034 = vadd.f32 %v3029, 0.0
        %v3035 = vadd.f32 %v3030, 0.0
        %v3036 = vadd.f32 %v3031, 0.0
        %v3037 = vadd.f32 %v3032, 0.0
        %v3038 = vld [vmem:[#allocation5 + $0x8] sm:$0xff]
        %v3039 = vld [vmem:[#allocation5 + $0x28] sm:$0xff]
        %v3040 = vld [vmem:[#allocation5 + $0x48] sm:$0xff]
        %v3041 = vld [vmem:[#allocation5 + $0x68] sm:$0xff]
        %v3042 = vld [vmem:[#allocation5 + $0x88] sm:$0xff]
        %v3043 = vld [vmem:[#allocation5 + $0xa8] sm:$0xff]
        %v3044 = vld [vmem:[#allocation5 + $0xc8] sm:$0xff]
        %v3045 = vld [vmem:[#allocation5 + $0xe8] sm:$0xff]
        %v3046 = vld [vmem:[#allocation5 + $0x108] sm:$0xff]
        %v3047 = vld [vmem:[#allocation5 + $0x128] sm:$0xff]
        %v3048 = vld [vmem:[#allocation5 + $0x148] sm:$0xff]
        %v3049 = vld [vmem:[#allocation5 + $0x168] sm:$0xff]
        %v3050 = vld [vmem:[#allocation5 + $0x188] sm:$0xff]
        %v3051 = vld [vmem:[#allocation5 + $0x1a8] sm:$0xff]
        %v3052 = vld [vmem:[#allocation5 + $0x1c8] sm:$0xff]
        %v3053 = vld [vmem:[#allocation5 + $0x1e8] sm:$0xff]
        %v3054 = vld [vmem:[#allocation5 + $0x208] sm:$0xff]
        %v3055 = vld [vmem:[#allocation5 + $0x228] sm:$0xff]
        %v3056 = vld [vmem:[#allocation5 + $0x248] sm:$0xff]
        %v3057 = vld [vmem:[#allocation5 + $0x268] sm:$0xff]
        %v3058 = vld [vmem:[#allocation5 + $0x288] sm:$0xff]
        %v3059 = vld [vmem:[#allocation5 + $0x2a8] sm:$0xff]
        %v3060 = vld [vmem:[#allocation5 + $0x2c8] sm:$0xff]
        %v3061 = vld [vmem:[#allocation5 + $0x2e8] sm:$0xff]
        %v3062 = vld [vmem:[#allocation5 + $0x308] sm:$0xff]
        %v3063 = vld [vmem:[#allocation5 + $0x328] sm:$0xff]
        %v3064 = vld [vmem:[#allocation5 + $0x348] sm:$0xff]
        %v3065 = vld [vmem:[#allocation5 + $0x368] sm:$0xff]
        %v3066 = vld [vmem:[#allocation5 + $0x388] sm:$0xff]
        %v3067 = vld [vmem:[#allocation5 + $0x3a8] sm:$0xff]
        %v3068 = vld [vmem:[#allocation5 + $0x3c8] sm:$0xff]
        %v3069 = vld [vmem:[#allocation5 + $0x3e8] sm:$0xff]
        %v3070 = vld [vmem:[#allocation5 + $0x408] sm:$0xff]
        %v3071 = vld [vmem:[#allocation5 + $0x428] sm:$0xff]
        %v3072 = vld [vmem:[#allocation5 + $0x448] sm:$0xff]
        %v3073 = vld [vmem:[#allocation5 + $0x468] sm:$0xff]
        %v3074 = vld [vmem:[#allocation5 + $0x488] sm:$0xff]
        %v3075 = vld [vmem:[#allocation5 + $0x4a8] sm:$0xff]
        %v3076 = vld [vmem:[#allocation5 + $0x4c8] sm:$0xff]
        %v3077 = vld [vmem:[#allocation5 + $0x4e8] sm:$0xff]
        %v3078 = vld [vmem:[#allocation5 + $0x508] sm:$0xff]
        %v3079 = vld [vmem:[#allocation5 + $0x528] sm:$0xff]
        %v3080 = vld [vmem:[#allocation5 + $0x548] sm:$0xff]
        %v3081 = vld [vmem:[#allocation5 + $0x568] sm:$0xff]
        %v3082 = vld [vmem:[#allocation5 + $0x588] sm:$0xff]
        %v3083 = vld [vmem:[#allocation5 + $0x5a8] sm:$0xff]
        %v3084 = vld [vmem:[#allocation5 + $0x5c8] sm:$0xff]
        %v3085 = vld [vmem:[#allocation5 + $0x5e8] sm:$0xff]
        %v3086 = vld [vmem:[#allocation5 + $0x608] sm:$0xff]
        %v3087 = vld [vmem:[#allocation5 + $0x628] sm:$0xff]
        %v3088 = vld [vmem:[#allocation5 + $0x648] sm:$0xff]
        %v3089 = vld [vmem:[#allocation5 + $0x668] sm:$0xff]
        %v3090 = vld [vmem:[#allocation5 + $0x688] sm:$0xff]
        %v3091 = vld [vmem:[#allocation5 + $0x6a8] sm:$0xff]
        %v3092 = vld [vmem:[#allocation5 + $0x6c8] sm:$0xff]
        %v3093 = vld [vmem:[#allocation5 + $0x6e8] sm:$0xff]
        %v3094 = vld [vmem:[#allocation5 + $0x708] sm:$0xff]
        %v3095 = vld [vmem:[#allocation5 + $0x728] sm:$0xff]
        %v3096 = vld [vmem:[#allocation5 + $0x748] sm:$0xff]
        %v3097 = vld [vmem:[#allocation5 + $0x768] sm:$0xff]
        %v3098 = vld [vmem:[#allocation5 + $0x788] sm:$0xff]
        %v3099 = vld [vmem:[#allocation5 + $0x7a8] sm:$0xff]
        %v3100 = vld [vmem:[#allocation5 + $0x7c8] sm:$0xff]
        %v3101 = vld [vmem:[#allocation5 + $0x7e8] sm:$0xff]
        %v3102 = vld [vmem:[#allocation5 + $0x808] sm:$0xff]
        %v3103 = vld [vmem:[#allocation5 + $0x828] sm:$0xff]
        %v3104 = vld [vmem:[#allocation5 + $0x848] sm:$0xff]
        %v3105 = vld [vmem:[#allocation5 + $0x868] sm:$0xff]
        %v3106 = vld [vmem:[#allocation5 + $0x888] sm:$0xff]
        %v3107 = vld [vmem:[#allocation5 + $0x8a8] sm:$0xff]
        %v3108 = vld [vmem:[#allocation5 + $0x8c8] sm:$0xff]
        %v3109 = vld [vmem:[#allocation5 + $0x8e8] sm:$0xff]
        %v3110 = vld [vmem:[#allocation5 + $0x908] sm:$0xff]
        %v3111 = vld [vmem:[#allocation5 + $0x928] sm:$0xff]
        %v3112 = vld [vmem:[#allocation5 + $0x948] sm:$0xff]
        %v3113 = vld [vmem:[#allocation5 + $0x968] sm:$0xff]
        %v3114 = vld [vmem:[#allocation5 + $0x988] sm:$0xff]
        %v3115 = vld [vmem:[#allocation5 + $0x9a8] sm:$0xff]
        %v3116 = vld [vmem:[#allocation5 + $0x9c8] sm:$0xff]
        %v3117 = vld [vmem:[#allocation5 + $0x9e8] sm:$0xff]
        %v3118 = vld [vmem:[#allocation5 + $0xa08] sm:$0xff]
        %v3119 = vld [vmem:[#allocation5 + $0xa28] sm:$0xff]
        %v3120 = vld [vmem:[#allocation5 + $0xa48] sm:$0xff]
        %v3121 = vld [vmem:[#allocation5 + $0xa68] sm:$0xff]
        %v3122 = vld [vmem:[#allocation5 + $0xa88] sm:$0xff]
        %v3123 = vld [vmem:[#allocation5 + $0xaa8] sm:$0xff]
        %v3124 = vld [vmem:[#allocation5 + $0xac8] sm:$0xff]
        %v3125 = vld [vmem:[#allocation5 + $0xae8] sm:$0xff]
        %v3126 = vld [vmem:[#allocation5 + $0xb08] sm:$0xff]
        %v3127 = vld [vmem:[#allocation5 + $0xb28] sm:$0xff]
        %v3128 = vld [vmem:[#allocation5 + $0xb48] sm:$0xff]
        %v3129 = vld [vmem:[#allocation5 + $0xb68] sm:$0xff]
        %v3130 = vld [vmem:[#allocation5 + $0xb88] sm:$0xff]
        %v3131 = vld [vmem:[#allocation5 + $0xba8] sm:$0xff]
        %v3132 = vld [vmem:[#allocation5 + $0xbc8] sm:$0xff]
        %v3133 = vld [vmem:[#allocation5 + $0xbe8] sm:$0xff]
        %v3134 = vld [vmem:[#allocation5 + $0xc08] sm:$0xff]
        %v3135 = vld [vmem:[#allocation5 + $0xc28] sm:$0xff]
        %v3136 = vld [vmem:[#allocation5 + $0xc48] sm:$0xff]
        %v3137 = vld [vmem:[#allocation5 + $0xc68] sm:$0xff]
        %v3138 = vld [vmem:[#allocation5 + $0xc88] sm:$0xff]
        %v3139 = vld [vmem:[#allocation5 + $0xca8] sm:$0xff]
        %v3140 = vld [vmem:[#allocation5 + $0xcc8] sm:$0xff]
        %v3141 = vld [vmem:[#allocation5 + $0xce8] sm:$0xff]
        %v3142 = vld [vmem:[#allocation5 + $0xd08] sm:$0xff]
        %v3143 = vld [vmem:[#allocation5 + $0xd28] sm:$0xff]
        %v3144 = vld [vmem:[#allocation5 + $0xd48] sm:$0xff]
        %v3145 = vld [vmem:[#allocation5 + $0xd68] sm:$0xff]
        %v3146 = vld [vmem:[#allocation5 + $0xd88] sm:$0xff]
        %v3147 = vld [vmem:[#allocation5 + $0xda8] sm:$0xff]
        %v3148 = vld [vmem:[#allocation5 + $0xdc8] sm:$0xff]
        %v3149 = vld [vmem:[#allocation5 + $0xde8] sm:$0xff]
        %v3150 = vld [vmem:[#allocation5 + $0xe08] sm:$0xff]
        %v3151 = vld [vmem:[#allocation5 + $0xe28] sm:$0xff]
        %v3152 = vld [vmem:[#allocation5 + $0xe48] sm:$0xff]
        %v3153 = vld [vmem:[#allocation5 + $0xe68] sm:$0xff]
        %v3154 = vld [vmem:[#allocation5 + $0xe88] sm:$0xff]
        %v3155 = vld [vmem:[#allocation5 + $0xea8] sm:$0xff]
        %v3156 = vld [vmem:[#allocation5 + $0xec8] sm:$0xff]
        %v3157 = vld [vmem:[#allocation5 + $0xee8] sm:$0xff]
        %v3158 = vld [vmem:[#allocation5 + $0xf08] sm:$0xff]
        %v3159 = vld [vmem:[#allocation5 + $0xf28] sm:$0xff]
        %v3160 = vld [vmem:[#allocation5 + $0xf48] sm:$0xff]
        %v3161 = vld [vmem:[#allocation5 + $0xf68] sm:$0xff]
        %v3162 = vld [vmem:[#allocation5 + $0xf88] sm:$0xff]
        %v3163 = vld [vmem:[#allocation5 + $0xfa8] sm:$0xff]
        %v3164 = vld [vmem:[#allocation5 + $0xfc8] sm:$0xff]
        %v3165 = vld [vmem:[#allocation5 + $0xfe8] sm:$0xff]
        %v3166 = vld [vmem:[#allocation5 + $0x1008] sm:$0xff]
        %v3167 = vld [vmem:[#allocation5 + $0x1028] sm:$0xff]
        %v3168 = vld [vmem:[#allocation5 + $0x1048] sm:$0xff]
        %v3169 = vld [vmem:[#allocation5 + $0x1068] sm:$0xff]
        %v3170 = vld [vmem:[#allocation5 + $0x1088] sm:$0xff]
        %v3171 = vld [vmem:[#allocation5 + $0x10a8] sm:$0xff]
        %v3172 = vld [vmem:[#allocation5 + $0x10c8] sm:$0xff]
        %v3173 = vld [vmem:[#allocation5 + $0x10e8] sm:$0xff]
        %v3174 = vld [vmem:[#allocation5 + $0x1108] sm:$0xff]
        %v3175 = vld [vmem:[#allocation5 + $0x1128] sm:$0xff]
        %v3176 = vld [vmem:[#allocation5 + $0x1148] sm:$0xff]
        %v3177 = vld [vmem:[#allocation5 + $0x1168] sm:$0xff]
        %v3178 = vld [vmem:[#allocation5 + $0x1188] sm:$0xff]
        %v3179 = vld [vmem:[#allocation5 + $0x11a8] sm:$0xff]
        %v3180 = vld [vmem:[#allocation5 + $0x11c8] sm:$0xff]
        %v3181 = vld [vmem:[#allocation5 + $0x11e8] sm:$0xff]
        %v3182 = vld [vmem:[#allocation5 + $0x1208] sm:$0xff]
        %v3183 = vld [vmem:[#allocation5 + $0x1228] sm:$0xff]
        %v3184 = vld [vmem:[#allocation5 + $0x1248] sm:$0xff]
        %v3185 = vld [vmem:[#allocation5 + $0x1268] sm:$0xff]
        %v3186 = vld [vmem:[#allocation5 + $0x1288] sm:$0xff]
        %v3187 = vld [vmem:[#allocation5 + $0x12a8] sm:$0xff]
        %v3188 = vld [vmem:[#allocation5 + $0x12c8] sm:$0xff]
        %v3189 = vld [vmem:[#allocation5 + $0x12e8] sm:$0xff]
        %v3190 = vld [vmem:[#allocation5 + $0x1308] sm:$0xff]
        %v3191 = vld [vmem:[#allocation5 + $0x1328] sm:$0xff]
        %v3192 = vld [vmem:[#allocation5 + $0x1348] sm:$0xff]
        %v3193 = vld [vmem:[#allocation5 + $0x1368] sm:$0xff]
        %v3194 = vld [vmem:[#allocation5 + $0x1388] sm:$0xff]
        %v3195 = vld [vmem:[#allocation5 + $0x13a8] sm:$0xff]
        %v3196 = vld [vmem:[#allocation5 + $0x13c8] sm:$0xff]
        %v3197 = vld [vmem:[#allocation5 + $0x13e8] sm:$0xff]
        %v3198 = vld [vmem:[#allocation5 + $0x1408] sm:$0xff]
        %v3199 = vld [vmem:[#allocation5 + $0x1428] sm:$0xff]
        %v3200 = vld [vmem:[#allocation5 + $0x1448] sm:$0xff]
        %v3201 = vld [vmem:[#allocation5 + $0x1468] sm:$0xff]
        %v3202 = vld [vmem:[#allocation5 + $0x1488] sm:$0xff]
        %v3203 = vld [vmem:[#allocation5 + $0x14a8] sm:$0xff]
        %v3204 = vld [vmem:[#allocation5 + $0x14c8] sm:$0xff]
        %v3205 = vld [vmem:[#allocation5 + $0x14e8] sm:$0xff]
        %v3206 = vld [vmem:[#allocation5 + $0x1508] sm:$0xff]
        %v3207 = vld [vmem:[#allocation5 + $0x1528] sm:$0xff]
        %v3208 = vld [vmem:[#allocation5 + $0x1548] sm:$0xff]
        %v3209 = vld [vmem:[#allocation5 + $0x1568] sm:$0xff]
        %v3210 = vld [vmem:[#allocation5 + $0x1588] sm:$0xff]
        %v3211 = vld [vmem:[#allocation5 + $0x15a8] sm:$0xff]
        %v3212 = vld [vmem:[#allocation5 + $0x15c8] sm:$0xff]
        %v3213 = vld [vmem:[#allocation5 + $0x15e8] sm:$0xff]
        %v3214 = vld [vmem:[#allocation5 + $0x1608] sm:$0xff]
        %v3215 = vld [vmem:[#allocation5 + $0x1628] sm:$0xff]
        %v3216 = vld [vmem:[#allocation5 + $0x1648] sm:$0xff]
        %v3217 = vld [vmem:[#allocation5 + $0x1668] sm:$0xff]
        %v3218 = vld [vmem:[#allocation5 + $0x1688] sm:$0xff]
        %v3219 = vld [vmem:[#allocation5 + $0x16a8] sm:$0xff]
        %v3220 = vld [vmem:[#allocation5 + $0x16c8] sm:$0xff]
        %v3221 = vld [vmem:[#allocation5 + $0x16e8] sm:$0xff]
        %v3222 = vld [vmem:[#allocation5 + $0x1708] sm:$0xff]
        %v3223 = vld [vmem:[#allocation5 + $0x1728] sm:$0xff]
        %v3224 = vld [vmem:[#allocation5 + $0x1748] sm:$0xff]
        %v3225 = vld [vmem:[#allocation5 + $0x1768] sm:$0xff]
        %v3226 = vld [vmem:[#allocation5 + $0x1788] sm:$0xff]
        %v3227 = vld [vmem:[#allocation5 + $0x17a8] sm:$0xff]
        %v3228 = vld [vmem:[#allocation5 + $0x17c8] sm:$0xff]
        %v3229 = vld [vmem:[#allocation5 + $0x17e8] sm:$0xff]
        %v3230 = vld [vmem:[#allocation5 + $0x1808] sm:$0xff]
        %v3231 = vld [vmem:[#allocation5 + $0x1828] sm:$0xff]
        %v3232 = vld [vmem:[#allocation5 + $0x1848] sm:$0xff]
        %v3233 = vld [vmem:[#allocation5 + $0x1868] sm:$0xff]
        %v3234 = vld [vmem:[#allocation5 + $0x1888] sm:$0xff]
        %v3235 = vld [vmem:[#allocation5 + $0x18a8] sm:$0xff]
        %v3236 = vld [vmem:[#allocation5 + $0x18c8] sm:$0xff]
        %v3237 = vld [vmem:[#allocation5 + $0x18e8] sm:$0xff]
        %v3238 = vld [vmem:[#allocation5 + $0x1908] sm:$0xff]
        %v3239 = vld [vmem:[#allocation5 + $0x1928] sm:$0xff]
        %v3240 = vld [vmem:[#allocation5 + $0x1948] sm:$0xff]
        %v3241 = vld [vmem:[#allocation5 + $0x1968] sm:$0xff]
        %v3242 = vld [vmem:[#allocation5 + $0x1988] sm:$0xff]
        %v3243 = vld [vmem:[#allocation5 + $0x19a8] sm:$0xff]
        %v3244 = vld [vmem:[#allocation5 + $0x19c8] sm:$0xff]
        %v3245 = vld [vmem:[#allocation5 + $0x19e8] sm:$0xff]
        %v3246 = vld [vmem:[#allocation5 + $0x1a08] sm:$0xff]
        %v3247 = vld [vmem:[#allocation5 + $0x1a28] sm:$0xff]
        %v3248 = vld [vmem:[#allocation5 + $0x1a48] sm:$0xff]
        %v3249 = vld [vmem:[#allocation5 + $0x1a68] sm:$0xff]
        %v3250 = vld [vmem:[#allocation5 + $0x1a88] sm:$0xff]
        %v3251 = vld [vmem:[#allocation5 + $0x1aa8] sm:$0xff]
        %v3252 = vld [vmem:[#allocation5 + $0x1ac8] sm:$0xff]
        %v3253 = vld [vmem:[#allocation5 + $0x1ae8] sm:$0xff]
        %v3254 = vld [vmem:[#allocation5 + $0x1b08] sm:$0xff]
        %v3255 = vld [vmem:[#allocation5 + $0x1b28] sm:$0xff]
        %v3256 = vld [vmem:[#allocation5 + $0x1b48] sm:$0xff]
        %v3257 = vld [vmem:[#allocation5 + $0x1b68] sm:$0xff]
        %v3258 = vld [vmem:[#allocation5 + $0x1b88] sm:$0xff]
        %v3259 = vld [vmem:[#allocation5 + $0x1ba8] sm:$0xff]
        %v3260 = vld [vmem:[#allocation5 + $0x1bc8] sm:$0xff]
        %v3261 = vld [vmem:[#allocation5 + $0x1be8] sm:$0xff]
        %v3262 = vld [vmem:[#allocation5 + $0x1c08] sm:$0xff]
        %v3263 = vld [vmem:[#allocation5 + $0x1c28] sm:$0xff]
        %v3264 = vld [vmem:[#allocation5 + $0x1c48] sm:$0xff]
        %v3265 = vld [vmem:[#allocation5 + $0x1c68] sm:$0xff]
        %v3266 = vld [vmem:[#allocation5 + $0x1c88] sm:$0xff]
        %v3267 = vld [vmem:[#allocation5 + $0x1ca8] sm:$0xff]
        %v3268 = vld [vmem:[#allocation5 + $0x1cc8] sm:$0xff]
        %v3269 = vld [vmem:[#allocation5 + $0x1ce8] sm:$0xff]
        %v3270 = vld [vmem:[#allocation5 + $0x1d08] sm:$0xff]
        %v3271 = vld [vmem:[#allocation5 + $0x1d28] sm:$0xff]
        %v3272 = vld [vmem:[#allocation5 + $0x1d48] sm:$0xff]
        %v3273 = vld [vmem:[#allocation5 + $0x1d68] sm:$0xff]
        %v3274 = vld [vmem:[#allocation5 + $0x1d88] sm:$0xff]
        %v3275 = vld [vmem:[#allocation5 + $0x1da8] sm:$0xff]
        %v3276 = vld [vmem:[#allocation5 + $0x1dc8] sm:$0xff]
        %v3277 = vld [vmem:[#allocation5 + $0x1de8] sm:$0xff]
        %v3278 = vld [vmem:[#allocation5 + $0x1e08] sm:$0xff]
        %v3279 = vld [vmem:[#allocation5 + $0x1e28] sm:$0xff]
        %v3280 = vld [vmem:[#allocation5 + $0x1e48] sm:$0xff]
        %v3281 = vld [vmem:[#allocation5 + $0x1e68] sm:$0xff]
        %v3282 = vld [vmem:[#allocation5 + $0x1e88] sm:$0xff]
        %v3283 = vld [vmem:[#allocation5 + $0x1ea8] sm:$0xff]
        %v3284 = vld [vmem:[#allocation5 + $0x1ec8] sm:$0xff]
        %v3285 = vld [vmem:[#allocation5 + $0x1ee8] sm:$0xff]
        %v3286 = vld [vmem:[#allocation5 + $0x1f08] sm:$0xff]
        %v3287 = vld [vmem:[#allocation5 + $0x1f28] sm:$0xff]
        %v3288 = vld [vmem:[#allocation5 + $0x1f48] sm:$0xff]
        %v3289 = vld [vmem:[#allocation5 + $0x1f68] sm:$0xff]
        %v3290 = vld [vmem:[#allocation5 + $0x1f88] sm:$0xff]
        %v3291 = vld [vmem:[#allocation5 + $0x1fa8] sm:$0xff]
        %v3292 = vld [vmem:[#allocation5 + $0x1fc8] sm:$0xff]
        %v3293 = vld [vmem:[#allocation5 + $0x1fe8] sm:$0xff]
        %v3550 = vunpack.c.l.b16 %v3038
        %v3551 = vunpack.c.h.b16 %v3038
        %v3552 = vunpack.c.l.b16 %v3039
        %v3553 = vunpack.c.h.b16 %v3039
        %v3554 = vunpack.c.l.b16 %v3040
        %v3555 = vunpack.c.h.b16 %v3040
        %v3556 = vunpack.c.l.b16 %v3041
        %v3557 = vunpack.c.h.b16 %v3041
        %v3558 = vunpack.c.l.b16 %v3042
        %v3559 = vunpack.c.h.b16 %v3042
        %v3560 = vunpack.c.l.b16 %v3043
        %v3561 = vunpack.c.h.b16 %v3043
        %v3562 = vunpack.c.l.b16 %v3044
        %v3563 = vunpack.c.h.b16 %v3044
        %v3564 = vunpack.c.l.b16 %v3045
        %v3565 = vunpack.c.h.b16 %v3045
        %v3566 = vunpack.c.l.b16 %v3046
        %v3567 = vunpack.c.h.b16 %v3046
        %v3568 = vunpack.c.l.b16 %v3047
        %v3569 = vunpack.c.h.b16 %v3047
        %v3570 = vunpack.c.l.b16 %v3048
        %v3571 = vunpack.c.h.b16 %v3048
        %v3572 = vunpack.c.l.b16 %v3049
        %v3573 = vunpack.c.h.b16 %v3049
        %v3574 = vunpack.c.l.b16 %v3050
        %v3575 = vunpack.c.h.b16 %v3050
        %v3576 = vunpack.c.l.b16 %v3051
        %v3577 = vunpack.c.h.b16 %v3051
        %v3578 = vunpack.c.l.b16 %v3052
        %v3579 = vunpack.c.h.b16 %v3052
        %v3580 = vunpack.c.l.b16 %v3053
        %v3581 = vunpack.c.h.b16 %v3053
        %v3582 = vunpack.c.l.b16 %v3054
        %v3583 = vunpack.c.h.b16 %v3054
        %v3584 = vunpack.c.l.b16 %v3055
        %v3585 = vunpack.c.h.b16 %v3055
        %v3586 = vunpack.c.l.b16 %v3056
        %v3587 = vunpack.c.h.b16 %v3056
        %v3588 = vunpack.c.l.b16 %v3057
        %v3589 = vunpack.c.h.b16 %v3057
        %v3590 = vunpack.c.l.b16 %v3058
        %v3591 = vunpack.c.h.b16 %v3058
        %v3592 = vunpack.c.l.b16 %v3059
        %v3593 = vunpack.c.h.b16 %v3059
        %v3594 = vunpack.c.l.b16 %v3060
        %v3595 = vunpack.c.h.b16 %v3060
        %v3596 = vunpack.c.l.b16 %v3061
        %v3597 = vunpack.c.h.b16 %v3061
        %v3598 = vunpack.c.l.b16 %v3062
        %v3599 = vunpack.c.h.b16 %v3062
        %v3600 = vunpack.c.l.b16 %v3063
        %v3601 = vunpack.c.h.b16 %v3063
        %v3602 = vunpack.c.l.b16 %v3064
        %v3603 = vunpack.c.h.b16 %v3064
        %v3604 = vunpack.c.l.b16 %v3065
        %v3605 = vunpack.c.h.b16 %v3065
        %v3606 = vunpack.c.l.b16 %v3066
        %v3607 = vunpack.c.h.b16 %v3066
        %v3608 = vunpack.c.l.b16 %v3067
        %v3609 = vunpack.c.h.b16 %v3067
        %v3610 = vunpack.c.l.b16 %v3068
        %v3611 = vunpack.c.h.b16 %v3068
        %v3612 = vunpack.c.l.b16 %v3069
        %v3613 = vunpack.c.h.b16 %v3069
        %v3614 = vunpack.c.l.b16 %v3070
        %v3615 = vunpack.c.h.b16 %v3070
        %v3616 = vunpack.c.l.b16 %v3071
        %v3617 = vunpack.c.h.b16 %v3071
        %v3618 = vunpack.c.l.b16 %v3072
        %v3619 = vunpack.c.h.b16 %v3072
        %v3620 = vunpack.c.l.b16 %v3073
        %v3621 = vunpack.c.h.b16 %v3073
        %v3622 = vunpack.c.l.b16 %v3074
        %v3623 = vunpack.c.h.b16 %v3074
        %v3624 = vunpack.c.l.b16 %v3075
        %v3625 = vunpack.c.h.b16 %v3075
        %v3626 = vunpack.c.l.b16 %v3076
        %v3627 = vunpack.c.h.b16 %v3076
        %v3628 = vunpack.c.l.b16 %v3077
        %v3629 = vunpack.c.h.b16 %v3077
        %v3630 = vunpack.c.l.b16 %v3078
        %v3631 = vunpack.c.h.b16 %v3078
        %v3632 = vunpack.c.l.b16 %v3079
        %v3633 = vunpack.c.h.b16 %v3079
        %v3634 = vunpack.c.l.b16 %v3080
        %v3635 = vunpack.c.h.b16 %v3080
        %v3636 = vunpack.c.l.b16 %v3081
        %v3637 = vunpack.c.h.b16 %v3081
        %v3638 = vunpack.c.l.b16 %v3082
        %v3639 = vunpack.c.h.b16 %v3082
        %v3640 = vunpack.c.l.b16 %v3083
        %v3641 = vunpack.c.h.b16 %v3083
        %v3642 = vunpack.c.l.b16 %v3084
        %v3643 = vunpack.c.h.b16 %v3084
        %v3644 = vunpack.c.l.b16 %v3085
        %v3645 = vunpack.c.h.b16 %v3085
        %v3646 = vunpack.c.l.b16 %v3086
        %v3647 = vunpack.c.h.b16 %v3086
        %v3648 = vunpack.c.l.b16 %v3087
        %v3649 = vunpack.c.h.b16 %v3087
        %v3650 = vunpack.c.l.b16 %v3088
        %v3651 = vunpack.c.h.b16 %v3088
        %v3652 = vunpack.c.l.b16 %v3089
        %v3653 = vunpack.c.h.b16 %v3089
        %v3654 = vunpack.c.l.b16 %v3090
        %v3655 = vunpack.c.h.b16 %v3090
        %v3656 = vunpack.c.l.b16 %v3091
        %v3657 = vunpack.c.h.b16 %v3091
        %v3658 = vunpack.c.l.b16 %v3092
        %v3659 = vunpack.c.h.b16 %v3092
        %v3660 = vunpack.c.l.b16 %v3093
        %v3661 = vunpack.c.h.b16 %v3093
        %v3662 = vunpack.c.l.b16 %v3094
        %v3663 = vunpack.c.h.b16 %v3094
        %v3664 = vunpack.c.l.b16 %v3095
        %v3665 = vunpack.c.h.b16 %v3095
        %v3666 = vunpack.c.l.b16 %v3096
        %v3667 = vunpack.c.h.b16 %v3096
        %v3668 = vunpack.c.l.b16 %v3097
        %v3669 = vunpack.c.h.b16 %v3097
        %v3670 = vunpack.c.l.b16 %v3098
        %v3671 = vunpack.c.h.b16 %v3098
        %v3672 = vunpack.c.l.b16 %v3099
        %v3673 = vunpack.c.h.b16 %v3099
        %v3674 = vunpack.c.l.b16 %v3100
        %v3675 = vunpack.c.h.b16 %v3100
        %v3676 = vunpack.c.l.b16 %v3101
        %v3677 = vunpack.c.h.b16 %v3101
        %v3678 = vunpack.c.l.b16 %v3102
        %v3679 = vunpack.c.h.b16 %v3102
        %v3680 = vunpack.c.l.b16 %v3103
        %v3681 = vunpack.c.h.b16 %v3103
        %v3682 = vunpack.c.l.b16 %v3104
        %v3683 = vunpack.c.h.b16 %v3104
        %v3684 = vunpack.c.l.b16 %v3105
        %v3685 = vunpack.c.h.b16 %v3105
        %v3686 = vunpack.c.l.b16 %v3106
        %v3687 = vunpack.c.h.b16 %v3106
        %v3688 = vunpack.c.l.b16 %v3107
        %v3689 = vunpack.c.h.b16 %v3107
        %v3690 = vunpack.c.l.b16 %v3108
        %v3691 = vunpack.c.h.b16 %v3108
        %v3692 = vunpack.c.l.b16 %v3109
        %v3693 = vunpack.c.h.b16 %v3109
        %v3694 = vunpack.c.l.b16 %v3110
        %v3695 = vunpack.c.h.b16 %v3110
        %v3696 = vunpack.c.l.b16 %v3111
        %v3697 = vunpack.c.h.b16 %v3111
        %v3698 = vunpack.c.l.b16 %v3112
        %v3699 = vunpack.c.h.b16 %v3112
        %v3700 = vunpack.c.l.b16 %v3113
        %v3701 = vunpack.c.h.b16 %v3113
        %v3702 = vunpack.c.l.b16 %v3114
        %v3703 = vunpack.c.h.b16 %v3114
        %v3704 = vunpack.c.l.b16 %v3115
        %v3705 = vunpack.c.h.b16 %v3115
        %v3706 = vunpack.c.l.b16 %v3116
        %v3707 = vunpack.c.h.b16 %v3116
        %v3708 = vunpack.c.l.b16 %v3117
        %v3709 = vunpack.c.h.b16 %v3117
        %v3710 = vunpack.c.l.b16 %v3118
        %v3711 = vunpack.c.h.b16 %v3118
        %v3712 = vunpack.c.l.b16 %v3119
        %v3713 = vunpack.c.h.b16 %v3119
        %v3714 = vunpack.c.l.b16 %v3120
        %v3715 = vunpack.c.h.b16 %v3120
        %v3716 = vunpack.c.l.b16 %v3121
        %v3717 = vunpack.c.h.b16 %v3121
        %v3718 = vunpack.c.l.b16 %v3122
        %v3719 = vunpack.c.h.b16 %v3122
        %v3720 = vunpack.c.l.b16 %v3123
        %v3721 = vunpack.c.h.b16 %v3123
        %v3722 = vunpack.c.l.b16 %v3124
        %v3723 = vunpack.c.h.b16 %v3124
        %v3724 = vunpack.c.l.b16 %v3125
        %v3725 = vunpack.c.h.b16 %v3125
        %v3726 = vunpack.c.l.b16 %v3126
        %v3727 = vunpack.c.h.b16 %v3126
        %v3728 = vunpack.c.l.b16 %v3127
        %v3729 = vunpack.c.h.b16 %v3127
        %v3730 = vunpack.c.l.b16 %v3128
        %v3731 = vunpack.c.h.b16 %v3128
        %v3732 = vunpack.c.l.b16 %v3129
        %v3733 = vunpack.c.h.b16 %v3129
        %v3734 = vunpack.c.l.b16 %v3130
        %v3735 = vunpack.c.h.b16 %v3130
        %v3736 = vunpack.c.l.b16 %v3131
        %v3737 = vunpack.c.h.b16 %v3131
        %v3738 = vunpack.c.l.b16 %v3132
        %v3739 = vunpack.c.h.b16 %v3132
        %v3740 = vunpack.c.l.b16 %v3133
        %v3741 = vunpack.c.h.b16 %v3133
        %v3742 = vunpack.c.l.b16 %v3134
        %v3743 = vunpack.c.h.b16 %v3134
        %v3744 = vunpack.c.l.b16 %v3135
        %v3745 = vunpack.c.h.b16 %v3135
        %v3746 = vunpack.c.l.b16 %v3136
        %v3747 = vunpack.c.h.b16 %v3136
        %v3748 = vunpack.c.l.b16 %v3137
        %v3749 = vunpack.c.h.b16 %v3137
        %v3750 = vunpack.c.l.b16 %v3138
        %v3751 = vunpack.c.h.b16 %v3138
        %v3752 = vunpack.c.l.b16 %v3139
        %v3753 = vunpack.c.h.b16 %v3139
        %v3754 = vunpack.c.l.b16 %v3140
        %v3755 = vunpack.c.h.b16 %v3140
        %v3756 = vunpack.c.l.b16 %v3141
        %v3757 = vunpack.c.h.b16 %v3141
        %v3758 = vunpack.c.l.b16 %v3142
        %v3759 = vunpack.c.h.b16 %v3142
        %v3760 = vunpack.c.l.b16 %v3143
        %v3761 = vunpack.c.h.b16 %v3143
        %v3762 = vunpack.c.l.b16 %v3144
        %v3763 = vunpack.c.h.b16 %v3144
        %v3764 = vunpack.c.l.b16 %v3145
        %v3765 = vunpack.c.h.b16 %v3145
        %v3766 = vunpack.c.l.b16 %v3146
        %v3767 = vunpack.c.h.b16 %v3146
        %v3768 = vunpack.c.l.b16 %v3147
        %v3769 = vunpack.c.h.b16 %v3147
        %v3770 = vunpack.c.l.b16 %v3148
        %v3771 = vunpack.c.h.b16 %v3148
        %v3772 = vunpack.c.l.b16 %v3149
        %v3773 = vunpack.c.h.b16 %v3149
        %v3774 = vunpack.c.l.b16 %v3150
        %v3775 = vunpack.c.h.b16 %v3150
        %v3776 = vunpack.c.l.b16 %v3151
        %v3777 = vunpack.c.h.b16 %v3151
        %v3778 = vunpack.c.l.b16 %v3152
        %v3779 = vunpack.c.h.b16 %v3152
        %v3780 = vunpack.c.l.b16 %v3153
        %v3781 = vunpack.c.h.b16 %v3153
        %v3782 = vunpack.c.l.b16 %v3154
        %v3783 = vunpack.c.h.b16 %v3154
        %v3784 = vunpack.c.l.b16 %v3155
        %v3785 = vunpack.c.h.b16 %v3155
        %v3786 = vunpack.c.l.b16 %v3156
        %v3787 = vunpack.c.h.b16 %v3156
        %v3788 = vunpack.c.l.b16 %v3157
        %v3789 = vunpack.c.h.b16 %v3157
        %v3790 = vunpack.c.l.b16 %v3158
        %v3791 = vunpack.c.h.b16 %v3158
        %v3792 = vunpack.c.l.b16 %v3159
        %v3793 = vunpack.c.h.b16 %v3159
        %v3794 = vunpack.c.l.b16 %v3160
        %v3795 = vunpack.c.h.b16 %v3160
        %v3796 = vunpack.c.l.b16 %v3161
        %v3797 = vunpack.c.h.b16 %v3161
        %v3798 = vunpack.c.l.b16 %v3162
        %v3799 = vunpack.c.h.b16 %v3162
        %v3800 = vunpack.c.l.b16 %v3163
        %v3801 = vunpack.c.h.b16 %v3163
        %v3802 = vunpack.c.l.b16 %v3164
        %v3803 = vunpack.c.h.b16 %v3164
        %v3804 = vunpack.c.l.b16 %v3165
        %v3805 = vunpack.c.h.b16 %v3165
        %v3806 = vunpack.c.l.b16 %v3166
        %v3807 = vunpack.c.h.b16 %v3166
        %v3808 = vunpack.c.l.b16 %v3167
        %v3809 = vunpack.c.h.b16 %v3167
        %v3810 = vunpack.c.l.b16 %v3168
        %v3811 = vunpack.c.h.b16 %v3168
        %v3812 = vunpack.c.l.b16 %v3169
        %v3813 = vunpack.c.h.b16 %v3169
        %v3814 = vunpack.c.l.b16 %v3170
        %v3815 = vunpack.c.h.b16 %v3170
        %v3816 = vunpack.c.l.b16 %v3171
        %v3817 = vunpack.c.h.b16 %v3171
        %v3818 = vunpack.c.l.b16 %v3172
        %v3819 = vunpack.c.h.b16 %v3172
        %v3820 = vunpack.c.l.b16 %v3173
        %v3821 = vunpack.c.h.b16 %v3173
        %v3822 = vunpack.c.l.b16 %v3174
        %v3823 = vunpack.c.h.b16 %v3174
        %v3824 = vunpack.c.l.b16 %v3175
        %v3825 = vunpack.c.h.b16 %v3175
        %v3826 = vunpack.c.l.b16 %v3176
        %v3827 = vunpack.c.h.b16 %v3176
        %v3828 = vunpack.c.l.b16 %v3177
        %v3829 = vunpack.c.h.b16 %v3177
        %v3830 = vunpack.c.l.b16 %v3178
        %v3831 = vunpack.c.h.b16 %v3178
        %v3832 = vunpack.c.l.b16 %v3179
        %v3833 = vunpack.c.h.b16 %v3179
        %v3834 = vunpack.c.l.b16 %v3180
        %v3835 = vunpack.c.h.b16 %v3180
        %v3836 = vunpack.c.l.b16 %v3181
        %v3837 = vunpack.c.h.b16 %v3181
        %v3838 = vunpack.c.l.b16 %v3182
        %v3839 = vunpack.c.h.b16 %v3182
        %v3840 = vunpack.c.l.b16 %v3183
        %v3841 = vunpack.c.h.b16 %v3183
        %v3842 = vunpack.c.l.b16 %v3184
        %v3843 = vunpack.c.h.b16 %v3184
        %v3844 = vunpack.c.l.b16 %v3185
        %v3845 = vunpack.c.h.b16 %v3185
        %v3846 = vunpack.c.l.b16 %v3186
        %v3847 = vunpack.c.h.b16 %v3186
        %v3848 = vunpack.c.l.b16 %v3187
        %v3849 = vunpack.c.h.b16 %v3187
        %v3850 = vunpack.c.l.b16 %v3188
        %v3851 = vunpack.c.h.b16 %v3188
        %v3852 = vunpack.c.l.b16 %v3189
        %v3853 = vunpack.c.h.b16 %v3189
        %v3854 = vunpack.c.l.b16 %v3190
        %v3855 = vunpack.c.h.b16 %v3190
        %v3856 = vunpack.c.l.b16 %v3191
        %v3857 = vunpack.c.h.b16 %v3191
        %v3858 = vunpack.c.l.b16 %v3192
        %v3859 = vunpack.c.h.b16 %v3192
        %v3860 = vunpack.c.l.b16 %v3193
        %v3861 = vunpack.c.h.b16 %v3193
        %v3862 = vunpack.c.l.b16 %v3194
        %v3863 = vunpack.c.h.b16 %v3194
        %v3864 = vunpack.c.l.b16 %v3195
        %v3865 = vunpack.c.h.b16 %v3195
        %v3866 = vunpack.c.l.b16 %v3196
        %v3867 = vunpack.c.h.b16 %v3196
        %v3868 = vunpack.c.l.b16 %v3197
        %v3869 = vunpack.c.h.b16 %v3197
        %v3870 = vunpack.c.l.b16 %v3198
        %v3871 = vunpack.c.h.b16 %v3198
        %v3872 = vunpack.c.l.b16 %v3199
        %v3873 = vunpack.c.h.b16 %v3199
        %v3874 = vunpack.c.l.b16 %v3200
        %v3875 = vunpack.c.h.b16 %v3200
        %v3876 = vunpack.c.l.b16 %v3201
        %v3877 = vunpack.c.h.b16 %v3201
        %v3878 = vunpack.c.l.b16 %v3202
        %v3879 = vunpack.c.h.b16 %v3202
        %v3880 = vunpack.c.l.b16 %v3203
        %v3881 = vunpack.c.h.b16 %v3203
        %v3882 = vunpack.c.l.b16 %v3204
        %v3883 = vunpack.c.h.b16 %v3204
        %v3884 = vunpack.c.l.b16 %v3205
        %v3885 = vunpack.c.h.b16 %v3205
        %v3886 = vunpack.c.l.b16 %v3206
        %v3887 = vunpack.c.h.b16 %v3206
        %v3888 = vunpack.c.l.b16 %v3207
        %v3889 = vunpack.c.h.b16 %v3207
        %v3890 = vunpack.c.l.b16 %v3208
        %v3891 = vunpack.c.h.b16 %v3208
        %v3892 = vunpack.c.l.b16 %v3209
        %v3893 = vunpack.c.h.b16 %v3209
        %v3894 = vunpack.c.l.b16 %v3210
        %v3895 = vunpack.c.h.b16 %v3210
        %v3896 = vunpack.c.l.b16 %v3211
        %v3897 = vunpack.c.h.b16 %v3211
        %v3898 = vunpack.c.l.b16 %v3212
        %v3899 = vunpack.c.h.b16 %v3212
        %v3900 = vunpack.c.l.b16 %v3213
        %v3901 = vunpack.c.h.b16 %v3213
        %v3902 = vunpack.c.l.b16 %v3214
        %v3903 = vunpack.c.h.b16 %v3214
        %v3904 = vunpack.c.l.b16 %v3215
        %v3905 = vunpack.c.h.b16 %v3215
        %v3906 = vunpack.c.l.b16 %v3216
        %v3907 = vunpack.c.h.b16 %v3216
        %v3908 = vunpack.c.l.b16 %v3217
        %v3909 = vunpack.c.h.b16 %v3217
        %v3910 = vunpack.c.l.b16 %v3218
        %v3911 = vunpack.c.h.b16 %v3218
        %v3912 = vunpack.c.l.b16 %v3219
        %v3913 = vunpack.c.h.b16 %v3219
        %v3914 = vunpack.c.l.b16 %v3220
        %v3915 = vunpack.c.h.b16 %v3220
        %v3916 = vunpack.c.l.b16 %v3221
        %v3917 = vunpack.c.h.b16 %v3221
        %v3918 = vunpack.c.l.b16 %v3222
        %v3919 = vunpack.c.h.b16 %v3222
        %v3920 = vunpack.c.l.b16 %v3223
        %v3921 = vunpack.c.h.b16 %v3223
        %v3922 = vunpack.c.l.b16 %v3224
        %v3923 = vunpack.c.h.b16 %v3224
        %v3924 = vunpack.c.l.b16 %v3225
        %v3925 = vunpack.c.h.b16 %v3225
        %v3926 = vunpack.c.l.b16 %v3226
        %v3927 = vunpack.c.h.b16 %v3226
        %v3928 = vunpack.c.l.b16 %v3227
        %v3929 = vunpack.c.h.b16 %v3227
        %v3930 = vunpack.c.l.b16 %v3228
        %v3931 = vunpack.c.h.b16 %v3228
        %v3932 = vunpack.c.l.b16 %v3229
        %v3933 = vunpack.c.h.b16 %v3229
        %v3934 = vunpack.c.l.b16 %v3230
        %v3935 = vunpack.c.h.b16 %v3230
        %v3936 = vunpack.c.l.b16 %v3231
        %v3937 = vunpack.c.h.b16 %v3231
        %v3938 = vunpack.c.l.b16 %v3232
        %v3939 = vunpack.c.h.b16 %v3232
        %v3940 = vunpack.c.l.b16 %v3233
        %v3941 = vunpack.c.h.b16 %v3233
        %v3942 = vunpack.c.l.b16 %v3234
        %v3943 = vunpack.c.h.b16 %v3234
        %v3944 = vunpack.c.l.b16 %v3235
        %v3945 = vunpack.c.h.b16 %v3235
        %v3946 = vunpack.c.l.b16 %v3236
        %v3947 = vunpack.c.h.b16 %v3236
        %v3948 = vunpack.c.l.b16 %v3237
        %v3949 = vunpack.c.h.b16 %v3237
        %v3950 = vunpack.c.l.b16 %v3238
        %v3951 = vunpack.c.h.b16 %v3238
        %v3952 = vunpack.c.l.b16 %v3239
        %v3953 = vunpack.c.h.b16 %v3239
        %v3954 = vunpack.c.l.b16 %v3240
        %v3955 = vunpack.c.h.b16 %v3240
        %v3956 = vunpack.c.l.b16 %v3241
        %v3957 = vunpack.c.h.b16 %v3241
        %v3958 = vunpack.c.l.b16 %v3242
        %v3959 = vunpack.c.h.b16 %v3242
        %v3960 = vunpack.c.l.b16 %v3243
        %v3961 = vunpack.c.h.b16 %v3243
        %v3962 = vunpack.c.l.b16 %v3244
        %v3963 = vunpack.c.h.b16 %v3244
        %v3964 = vunpack.c.l.b16 %v3245
        %v3965 = vunpack.c.h.b16 %v3245
        %v3966 = vunpack.c.l.b16 %v3246
        %v3967 = vunpack.c.h.b16 %v3246
        %v3968 = vunpack.c.l.b16 %v3247
        %v3969 = vunpack.c.h.b16 %v3247
        %v3970 = vunpack.c.l.b16 %v3248
        %v3971 = vunpack.c.h.b16 %v3248
        %v3972 = vunpack.c.l.b16 %v3249
        %v3973 = vunpack.c.h.b16 %v3249
        %v3974 = vunpack.c.l.b16 %v3250
        %v3975 = vunpack.c.h.b16 %v3250
        %v3976 = vunpack.c.l.b16 %v3251
        %v3977 = vunpack.c.h.b16 %v3251
        %v3978 = vunpack.c.l.b16 %v3252
        %v3979 = vunpack.c.h.b16 %v3252
        %v3980 = vunpack.c.l.b16 %v3253
        %v3981 = vunpack.c.h.b16 %v3253
        %v3982 = vunpack.c.l.b16 %v3254
        %v3983 = vunpack.c.h.b16 %v3254
        %v3984 = vunpack.c.l.b16 %v3255
        %v3985 = vunpack.c.h.b16 %v3255
        %v3986 = vunpack.c.l.b16 %v3256
        %v3987 = vunpack.c.h.b16 %v3256
        %v3988 = vunpack.c.l.b16 %v3257
        %v3989 = vunpack.c.h.b16 %v3257
        %v3990 = vunpack.c.l.b16 %v3258
        %v3991 = vunpack.c.h.b16 %v3258
        %v3992 = vunpack.c.l.b16 %v3259
        %v3993 = vunpack.c.h.b16 %v3259
        %v3994 = vunpack.c.l.b16 %v3260
        %v3995 = vunpack.c.h.b16 %v3260
        %v3996 = vunpack.c.l.b16 %v3261
        %v3997 = vunpack.c.h.b16 %v3261
        %v3998 = vunpack.c.l.b16 %v3262
        %v3999 = vunpack.c.h.b16 %v3262
        %v4000 = vunpack.c.l.b16 %v3263
        %v4001 = vunpack.c.h.b16 %v3263
        %v4002 = vunpack.c.l.b16 %v3264
        %v4003 = vunpack.c.h.b16 %v3264
        %v4004 = vunpack.c.l.b16 %v3265
        %v4005 = vunpack.c.h.b16 %v3265
        %v4006 = vunpack.c.l.b16 %v3266
        %v4007 = vunpack.c.h.b16 %v3266
        %v4008 = vunpack.c.l.b16 %v3267
        %v4009 = vunpack.c.h.b16 %v3267
        %v4010 = vunpack.c.l.b16 %v3268
        %v4011 = vunpack.c.h.b16 %v3268
        %v4012 = vunpack.c.l.b16 %v3269
        %v4013 = vunpack.c.h.b16 %v3269
        %v4014 = vunpack.c.l.b16 %v3270
        %v4015 = vunpack.c.h.b16 %v3270
        %v4016 = vunpack.c.l.b16 %v3271
        %v4017 = vunpack.c.h.b16 %v3271
        %v4018 = vunpack.c.l.b16 %v3272
        %v4019 = vunpack.c.h.b16 %v3272
        %v4020 = vunpack.c.l.b16 %v3273
        %v4021 = vunpack.c.h.b16 %v3273
        %v4022 = vunpack.c.l.b16 %v3274
        %v4023 = vunpack.c.h.b16 %v3274
        %v4024 = vunpack.c.l.b16 %v3275
        %v4025 = vunpack.c.h.b16 %v3275
        %v4026 = vunpack.c.l.b16 %v3276
        %v4027 = vunpack.c.h.b16 %v3276
        %v4028 = vunpack.c.l.b16 %v3277
        %v4029 = vunpack.c.h.b16 %v3277
        %v4030 = vunpack.c.l.b16 %v3278
        %v4031 = vunpack.c.h.b16 %v3278
        %v4032 = vunpack.c.l.b16 %v3279
        %v4033 = vunpack.c.h.b16 %v3279
        %v4034 = vunpack.c.l.b16 %v3280
        %v4035 = vunpack.c.h.b16 %v3280
        %v4036 = vunpack.c.l.b16 %v3281
        %v4037 = vunpack.c.h.b16 %v3281
        %v4038 = vunpack.c.l.b16 %v3282
        %v4039 = vunpack.c.h.b16 %v3282
        %v4040 = vunpack.c.l.b16 %v3283
        %v4041 = vunpack.c.h.b16 %v3283
        %v4042 = vunpack.c.l.b16 %v3284
        %v4043 = vunpack.c.h.b16 %v3284
        %v4044 = vunpack.c.l.b16 %v3285
        %v4045 = vunpack.c.h.b16 %v3285
        %v4046 = vunpack.c.l.b16 %v3286
        %v4047 = vunpack.c.h.b16 %v3286
        %v4048 = vunpack.c.l.b16 %v3287
        %v4049 = vunpack.c.h.b16 %v3287
        %v4050 = vunpack.c.l.b16 %v3288
        %v4051 = vunpack.c.h.b16 %v3288
        %v4052 = vunpack.c.l.b16 %v3289
        %v4053 = vunpack.c.h.b16 %v3289
        %v4054 = vunpack.c.l.b16 %v3290
        %v4055 = vunpack.c.h.b16 %v3290
        %v4056 = vunpack.c.l.b16 %v3291
        %v4057 = vunpack.c.h.b16 %v3291
        %v4058 = vunpack.c.l.b16 %v3292
        %v4059 = vunpack.c.h.b16 %v3292
        %v4060 = vunpack.c.l.b16 %v3293
        %v4061 = vunpack.c.h.b16 %v3293
        %v4062 = vpack.c.b16 %v3552, %v3550
        %v4063 = vpack.c.b16 %v3553, %v3551
        %v4064 = vpack.c.b16 %v3556, %v3554
        %v4065 = vpack.c.b16 %v3557, %v3555
        %v4066 = vpack.c.b16 %v3560, %v3558
        %v4067 = vpack.c.b16 %v3561, %v3559
        %v4068 = vpack.c.b16 %v3564, %v3562
        %v4069 = vpack.c.b16 %v3565, %v3563
        %v4070 = vpack.c.b16 %v3568, %v3566
        %v4071 = vpack.c.b16 %v3569, %v3567
        %v4072 = vpack.c.b16 %v3572, %v3570
        %v4073 = vpack.c.b16 %v3573, %v3571
        %v4074 = vpack.c.b16 %v3576, %v3574
        %v4075 = vpack.c.b16 %v3577, %v3575
        %v4076 = vpack.c.b16 %v3580, %v3578
        %v4077 = vpack.c.b16 %v3581, %v3579
        %v4078 = vpack.c.b16 %v3584, %v3582
        %v4079 = vpack.c.b16 %v3585, %v3583
        %v4080 = vpack.c.b16 %v3588, %v3586
        %v4081 = vpack.c.b16 %v3589, %v3587
        %v4082 = vpack.c.b16 %v3592, %v3590
        %v4083 = vpack.c.b16 %v3593, %v3591
        %v4084 = vpack.c.b16 %v3596, %v3594
        %v4085 = vpack.c.b16 %v3597, %v3595
        %v4086 = vpack.c.b16 %v3600, %v3598
        %v4087 = vpack.c.b16 %v3601, %v3599
        %v4088 = vpack.c.b16 %v3604, %v3602
        %v4089 = vpack.c.b16 %v3605, %v3603
        %v4090 = vpack.c.b16 %v3608, %v3606
        %v4091 = vpack.c.b16 %v3609, %v3607
        %v4092 = vpack.c.b16 %v3612, %v3610
        %v4093 = vpack.c.b16 %v3613, %v3611
        %v4094 = vpack.c.b16 %v3616, %v3614
        %v4095 = vpack.c.b16 %v3617, %v3615
        %v4096 = vpack.c.b16 %v3620, %v3618
        %v4097 = vpack.c.b16 %v3621, %v3619
        %v4098 = vpack.c.b16 %v3624, %v3622
        %v4099 = vpack.c.b16 %v3625, %v3623
        %v4100 = vpack.c.b16 %v3628, %v3626
        %v4101 = vpack.c.b16 %v3629, %v3627
        %v4102 = vpack.c.b16 %v3632, %v3630
        %v4103 = vpack.c.b16 %v3633, %v3631
        %v4104 = vpack.c.b16 %v3636, %v3634
        %v4105 = vpack.c.b16 %v3637, %v3635
        %v4106 = vpack.c.b16 %v3640, %v3638
        %v4107 = vpack.c.b16 %v3641, %v3639
        %v4108 = vpack.c.b16 %v3644, %v3642
        %v4109 = vpack.c.b16 %v3645, %v3643
        %v4110 = vpack.c.b16 %v3648, %v3646
        %v4111 = vpack.c.b16 %v3649, %v3647
        %v4112 = vpack.c.b16 %v3652, %v3650
        %v4113 = vpack.c.b16 %v3653, %v3651
        %v4114 = vpack.c.b16 %v3656, %v3654
        %v4115 = vpack.c.b16 %v3657, %v3655
        %v4116 = vpack.c.b16 %v3660, %v3658
        %v4117 = vpack.c.b16 %v3661, %v3659
        %v4118 = vpack.c.b16 %v3664, %v3662
        %v4119 = vpack.c.b16 %v3665, %v3663
        %v4120 = vpack.c.b16 %v3668, %v3666
        %v4121 = vpack.c.b16 %v3669, %v3667
        %v4122 = vpack.c.b16 %v3672, %v3670
        %v4123 = vpack.c.b16 %v3673, %v3671
        %v4124 = vpack.c.b16 %v3676, %v3674
        %v4125 = vpack.c.b16 %v3677, %v3675
        %v4126 = vpack.c.b16 %v3680, %v3678
        %v4127 = vpack.c.b16 %v3681, %v3679
        %v4128 = vpack.c.b16 %v3684, %v3682
        %v4129 = vpack.c.b16 %v3685, %v3683
        %v4130 = vpack.c.b16 %v3688, %v3686
        %v4131 = vpack.c.b16 %v3689, %v3687
        %v4132 = vpack.c.b16 %v3692, %v3690
        %v4133 = vpack.c.b16 %v3693, %v3691
        %v4134 = vpack.c.b16 %v3696, %v3694
        %v4135 = vpack.c.b16 %v3697, %v3695
        %v4136 = vpack.c.b16 %v3700, %v3698
        %v4137 = vpack.c.b16 %v3701, %v3699
        %v4138 = vpack.c.b16 %v3704, %v3702
        %v4139 = vpack.c.b16 %v3705, %v3703
        %v4140 = vpack.c.b16 %v3708, %v3706
        %v4141 = vpack.c.b16 %v3709, %v3707
        %v4142 = vpack.c.b16 %v3712, %v3710
        %v4143 = vpack.c.b16 %v3713, %v3711
        %v4144 = vpack.c.b16 %v3716, %v3714
        %v4145 = vpack.c.b16 %v3717, %v3715
        %v4146 = vpack.c.b16 %v3720, %v3718
        %v4147 = vpack.c.b16 %v3721, %v3719
        %v4148 = vpack.c.b16 %v3724, %v3722
        %v4149 = vpack.c.b16 %v3725, %v3723
        %v4150 = vpack.c.b16 %v3728, %v3726
        %v4151 = vpack.c.b16 %v3729, %v3727
        %v4152 = vpack.c.b16 %v3732, %v3730
        %v4153 = vpack.c.b16 %v3733, %v3731
        %v4154 = vpack.c.b16 %v3736, %v3734
        %v4155 = vpack.c.b16 %v3737, %v3735
        %v4156 = vpack.c.b16 %v3740, %v3738
        %v4157 = vpack.c.b16 %v3741, %v3739
        %v4158 = vpack.c.b16 %v3744, %v3742
        %v4159 = vpack.c.b16 %v3745, %v3743
        %v4160 = vpack.c.b16 %v3748, %v3746
        %v4161 = vpack.c.b16 %v3749, %v3747
        %v4162 = vpack.c.b16 %v3752, %v3750
        %v4163 = vpack.c.b16 %v3753, %v3751
        %v4164 = vpack.c.b16 %v3756, %v3754
        %v4165 = vpack.c.b16 %v3757, %v3755
        %v4166 = vpack.c.b16 %v3760, %v3758
        %v4167 = vpack.c.b16 %v3761, %v3759
        %v4168 = vpack.c.b16 %v3764, %v3762
        %v4169 = vpack.c.b16 %v3765, %v3763
        %v4170 = vpack.c.b16 %v3768, %v3766
        %v4171 = vpack.c.b16 %v3769, %v3767
        %v4172 = vpack.c.b16 %v3772, %v3770
        %v4173 = vpack.c.b16 %v3773, %v3771
        %v4174 = vpack.c.b16 %v3776, %v3774
        %v4175 = vpack.c.b16 %v3777, %v3775
        %v4176 = vpack.c.b16 %v3780, %v3778
        %v4177 = vpack.c.b16 %v3781, %v3779
        %v4178 = vpack.c.b16 %v3784, %v3782
        %v4179 = vpack.c.b16 %v3785, %v3783
        %v4180 = vpack.c.b16 %v3788, %v3786
        %v4181 = vpack.c.b16 %v3789, %v3787
        %v4182 = vpack.c.b16 %v3792, %v3790
        %v4183 = vpack.c.b16 %v3793, %v3791
        %v4184 = vpack.c.b16 %v3796, %v3794
        %v4185 = vpack.c.b16 %v3797, %v3795
        %v4186 = vpack.c.b16 %v3800, %v3798
        %v4187 = vpack.c.b16 %v3801, %v3799
        %v4188 = vpack.c.b16 %v3804, %v3802
        %v4189 = vpack.c.b16 %v3805, %v3803
        %v4190 = vpack.c.b16 %v3808, %v3806
        %v4191 = vpack.c.b16 %v3809, %v3807
        %v4192 = vpack.c.b16 %v3812, %v3810
        %v4193 = vpack.c.b16 %v3813, %v3811
        %v4194 = vpack.c.b16 %v3816, %v3814
        %v4195 = vpack.c.b16 %v3817, %v3815
        %v4196 = vpack.c.b16 %v3820, %v3818
        %v4197 = vpack.c.b16 %v3821, %v3819
        %v4198 = vpack.c.b16 %v3824, %v3822
        %v4199 = vpack.c.b16 %v3825, %v3823
        %v4200 = vpack.c.b16 %v3828, %v3826
        %v4201 = vpack.c.b16 %v3829, %v3827
        %v4202 = vpack.c.b16 %v3832, %v3830
        %v4203 = vpack.c.b16 %v3833, %v3831
        %v4204 = vpack.c.b16 %v3836, %v3834
        %v4205 = vpack.c.b16 %v3837, %v3835
        %v4206 = vpack.c.b16 %v3840, %v3838
        %v4207 = vpack.c.b16 %v3841, %v3839
        %v4208 = vpack.c.b16 %v3844, %v3842
        %v4209 = vpack.c.b16 %v3845, %v3843
        %v4210 = vpack.c.b16 %v3848, %v3846
        %v4211 = vpack.c.b16 %v3849, %v3847
        %v4212 = vpack.c.b16 %v3852, %v3850
        %v4213 = vpack.c.b16 %v3853, %v3851
        %v4214 = vpack.c.b16 %v3856, %v3854
        %v4215 = vpack.c.b16 %v3857, %v3855
        %v4216 = vpack.c.b16 %v3860, %v3858
        %v4217 = vpack.c.b16 %v3861, %v3859
        %v4218 = vpack.c.b16 %v3864, %v3862
        %v4219 = vpack.c.b16 %v3865, %v3863
        %v4220 = vpack.c.b16 %v3868, %v3866
        %v4221 = vpack.c.b16 %v3869, %v3867
        %v4222 = vpack.c.b16 %v3872, %v3870
        %v4223 = vpack.c.b16 %v3873, %v3871
        %v4224 = vpack.c.b16 %v3876, %v3874
        %v4225 = vpack.c.b16 %v3877, %v3875
        %v4226 = vpack.c.b16 %v3880, %v3878
        %v4227 = vpack.c.b16 %v3881, %v3879
        %v4228 = vpack.c.b16 %v3884, %v3882
        %v4229 = vpack.c.b16 %v3885, %v3883
        %v4230 = vpack.c.b16 %v3888, %v3886
        %v4231 = vpack.c.b16 %v3889, %v3887
        %v4232 = vpack.c.b16 %v3892, %v3890
        %v4233 = vpack.c.b16 %v3893, %v3891
        %v4234 = vpack.c.b16 %v3896, %v3894
        %v4235 = vpack.c.b16 %v3897, %v3895
        %v4236 = vpack.c.b16 %v3900, %v3898
        %v4237 = vpack.c.b16 %v3901, %v3899
        %v4238 = vpack.c.b16 %v3904, %v3902
        %v4239 = vpack.c.b16 %v3905, %v3903
        %v4240 = vpack.c.b16 %v3908, %v3906
        %v4241 = vpack.c.b16 %v3909, %v3907
        %v4242 = vpack.c.b16 %v3912, %v3910
        %v4243 = vpack.c.b16 %v3913, %v3911
        %v4244 = vpack.c.b16 %v3916, %v3914
        %v4245 = vpack.c.b16 %v3917, %v3915
        %v4246 = vpack.c.b16 %v3920, %v3918
        %v4247 = vpack.c.b16 %v3921, %v3919
        %v4248 = vpack.c.b16 %v3924, %v3922
        %v4249 = vpack.c.b16 %v3925, %v3923
        %v4250 = vpack.c.b16 %v3928, %v3926
        %v4251 = vpack.c.b16 %v3929, %v3927
        %v4252 = vpack.c.b16 %v3932, %v3930
        %v4253 = vpack.c.b16 %v3933, %v3931
        %v4254 = vpack.c.b16 %v3936, %v3934
        %v4255 = vpack.c.b16 %v3937, %v3935
        %v4256 = vpack.c.b16 %v3940, %v3938
        %v4257 = vpack.c.b16 %v3941, %v3939
        %v4258 = vpack.c.b16 %v3944, %v3942
        %v4259 = vpack.c.b16 %v3945, %v3943
        %v4260 = vpack.c.b16 %v3948, %v3946
        %v4261 = vpack.c.b16 %v3949, %v3947
        %v4262 = vpack.c.b16 %v3952, %v3950
        %v4263 = vpack.c.b16 %v3953, %v3951
        %v4264 = vpack.c.b16 %v3956, %v3954
        %v4265 = vpack.c.b16 %v3957, %v3955
        %v4266 = vpack.c.b16 %v3960, %v3958
        %v4267 = vpack.c.b16 %v3961, %v3959
        %v4268 = vpack.c.b16 %v3964, %v3962
        %v4269 = vpack.c.b16 %v3965, %v3963
        %v4270 = vpack.c.b16 %v3968, %v3966
        %v4271 = vpack.c.b16 %v3969, %v3967
        %v4272 = vpack.c.b16 %v3972, %v3970
        %v4273 = vpack.c.b16 %v3973, %v3971
        %v4274 = vpack.c.b16 %v3976, %v3974
        %v4275 = vpack.c.b16 %v3977, %v3975
        %v4276 = vpack.c.b16 %v3980, %v3978
        %v4277 = vpack.c.b16 %v3981, %v3979
        %v4278 = vpack.c.b16 %v3984, %v3982
        %v4279 = vpack.c.b16 %v3985, %v3983
        %v4280 = vpack.c.b16 %v3988, %v3986
        %v4281 = vpack.c.b16 %v3989, %v3987
        %v4282 = vpack.c.b16 %v3992, %v3990
        %v4283 = vpack.c.b16 %v3993, %v3991
        %v4284 = vpack.c.b16 %v3996, %v3994
        %v4285 = vpack.c.b16 %v3997, %v3995
        %v4286 = vpack.c.b16 %v4000, %v3998
        %v4287 = vpack.c.b16 %v4001, %v3999
        %v4288 = vpack.c.b16 %v4004, %v4002
        %v4289 = vpack.c.b16 %v4005, %v4003
        %v4290 = vpack.c.b16 %v4008, %v4006
        %v4291 = vpack.c.b16 %v4009, %v4007
        %v4292 = vpack.c.b16 %v4012, %v4010
        %v4293 = vpack.c.b16 %v4013, %v4011
        %v4294 = vpack.c.b16 %v4016, %v4014
        %v4295 = vpack.c.b16 %v4017, %v4015
        %v4296 = vpack.c.b16 %v4020, %v4018
        %v4297 = vpack.c.b16 %v4021, %v4019
        %v4298 = vpack.c.b16 %v4024, %v4022
        %v4299 = vpack.c.b16 %v4025, %v4023
        %v4300 = vpack.c.b16 %v4028, %v4026
        %v4301 = vpack.c.b16 %v4029, %v4027
        %v4302 = vpack.c.b16 %v4032, %v4030
        %v4303 = vpack.c.b16 %v4033, %v4031
        %v4304 = vpack.c.b16 %v4036, %v4034
        %v4305 = vpack.c.b16 %v4037, %v4035
        %v4306 = vpack.c.b16 %v4040, %v4038
        %v4307 = vpack.c.b16 %v4041, %v4039
        %v4308 = vpack.c.b16 %v4044, %v4042
        %v4309 = vpack.c.b16 %v4045, %v4043
        %v4310 = vpack.c.b16 %v4048, %v4046
        %v4311 = vpack.c.b16 %v4049, %v4047
        %v4312 = vpack.c.b16 %v4052, %v4050
        %v4313 = vpack.c.b16 %v4053, %v4051
        %v4314 = vpack.c.b16 %v4056, %v4054
        %v4315 = vpack.c.b16 %v4057, %v4055
        %v4316 = vpack.c.b16 %v4060, %v4058
        %v4317 = vpack.c.b16 %v4061, %v4059
        %4574 = vmatprep.subr.bf16.mxu0 %v4063
        %4575 = vmatpush1.bf16.msra.mxu0 %v4062
        %4576 = vmatprep.subr.bf16.mxu0 %v4065
        %4577 = vmatpush1.bf16.msra.mxu0 %v4064
        %4578 = vmatprep.subr.bf16.mxu0 %v4067
        %4579 = vmatpush1.bf16.msra.mxu0 %v4066
        %4580 = vmatprep.subr.bf16.mxu0 %v4069
        %4581 = vmatpush1.bf16.msra.mxu0 %v4068
        %4582 = vmatprep.subr.bf16.mxu0 %v4071
        %4583 = vmatpush1.bf16.msra.mxu0 %v4070
        %4584 = vmatprep.subr.bf16.mxu0 %v4073
        %4585 = vmatpush1.bf16.msra.mxu0 %v4072
        %4586 = vmatprep.subr.bf16.mxu0 %v4075
        %4587 = vmatpush1.bf16.msra.mxu0 %v4074
        %4588 = vmatprep.subr.bf16.mxu0 %v4077
        %4589 = vmatpush1.bf16.msra.mxu0 %v4076
        %4590 = vmatprep.subr.bf16.mxu0 %v4079
        %4591 = vmatpush1.bf16.msra.mxu0 %v4078
        %4592 = vmatprep.subr.bf16.mxu0 %v4081
        %4593 = vmatpush1.bf16.msra.mxu0 %v4080
        %4594 = vmatprep.subr.bf16.mxu0 %v4083
        %4595 = vmatpush1.bf16.msra.mxu0 %v4082
        %4596 = vmatprep.subr.bf16.mxu0 %v4085
        %4597 = vmatpush1.bf16.msra.mxu0 %v4084
        %4598 = vmatprep.subr.bf16.mxu0 %v4087
        %4599 = vmatpush1.bf16.msra.mxu0 %v4086
        %4600 = vmatprep.subr.bf16.mxu0 %v4089
        %4601 = vmatpush1.bf16.msra.mxu0 %v4088
        %4602 = vmatprep.subr.bf16.mxu0 %v4091
        %4603 = vmatpush1.bf16.msra.mxu0 %v4090
        %4604 = vmatprep.subr.bf16.mxu0 %v4093
        %4605 = vmatpush1.bf16.msra.mxu0 %v4092
        %4606 = vmatprep.mubr.bf16.mxu0 %v766
        %4607 = vmatmul.mubr.bf16.gmra.mrb[0].mxu0 %v765
        %v4608 = vpop.f32.mrb[0].mxu0
        %v4609 = vadd.f32 0.0, %v4608
        %v4610 = vpop.f32.mrb[0].mxu0
        %v4611 = vadd.f32 0.0, %v4610
        %v4612 = vpop.f32.mrb[0].mxu0
        %v4613 = vadd.f32 0.0, %v4612
        %v4614 = vpop.f32.mrb[0].mxu0
        %v4615 = vadd.f32 0.0, %v4614
        %4616 = vmatprep.mubr.bf16.mxu0 %v782
        %4617 = vmatmul.mubr.bf16.gmra.mrb[0].mxu0 %v781
        %v4618 = vpop.f32.mrb[0].mxu0
        %v4619 = vadd.f32 0.0, %v4618
        %v4620 = vpop.f32.mrb[0].mxu0
        %v4621 = vadd.f32 0.0, %v4620
        %v4622 = vpop.f32.mrb[0].mxu0
        %v4623 = vadd.f32 0.0, %v4622
        %v4624 = vpop.f32.mrb[0].mxu0
        %v4625 = vadd.f32 0.0, %v4624
        %4626 = vmatprep.mubr.bf16.mxu0 %v798
        %4627 = vmatmul.mubr.bf16.gmra.mrb[0].mxu0 %v797
        %v4628 = vpop.f32.mrb[0].mxu0
        %v4629 = vadd.f32 0.0, %v4628
        %v4630 = vpop.f32.mrb[0].mxu0
        %v4631 = vadd.f32 0.0, %v4630
        %v4632 = vpop.f32.mrb[0].mxu0
        %v4633 = vadd.f32 0.0, %v4632
        %v4634 = vpop.f32.mrb[0].mxu0
        %v4635 = vadd.f32 0.0, %v4634
        %4636 = vmatprep.mubr.bf16.mxu0 %v814
        %4637 = vmatmul.mubr.bf16.gmra.mrb[0].mxu0 %v813
        %v4638 = vpop.f32.mrb[0].mxu0
        %v4639 = vadd.f32 0.0, %v4638
        %v4640 = vpop.f32.mrb[0].mxu0
        %v4641 = vadd.f32 0.0, %v4640
        %v4642 = vpop.f32.mrb[0].mxu0
        %v4643 = vadd.f32 0.0, %v4642
        %v4644 = vpop.f32.mrb[0].mxu0
        %v4645 = vadd.f32 0.0, %v4644
        %4646 = vmatprep.mubr.bf16.mxu0 %v830
        %4647 = vmatmul.mubr.bf16.gmra.mrb[0].mxu0 %v829
        %v4648 = vpop.f32.mrb[0].mxu0
        %v4649 = vadd.f32 0.0, %v4648
        %v4650 = vpop.f32.mrb[0].mxu0
        %v4651 = vadd.f32 0.0, %v4650
        %v4652 = vpop.f32.mrb[0].mxu0
        %v4653 = vadd.f32 0.0, %v4652
        %v4654 = vpop.f32.mrb[0].mxu0
        %v4655 = vadd.f32 0.0, %v4654
        %4656 = vdwg.mxu0
        %4657 = vmatprep.subr.bf16.mxu0 %v4095
        %4658 = vmatpush1.bf16.msra.mxu0 %v4094
        %4659 = vmatprep.subr.bf16.mxu0 %v4097
        %4660 = vmatpush1.bf16.msra.mxu0 %v4096
        %4661 = vmatprep.subr.bf16.mxu0 %v4099
        %4662 = vmatpush1.bf16.msra.mxu0 %v4098
        %4663 = vmatprep.subr.bf16.mxu0 %v4101
        %4664 = vmatpush1.bf16.msra.mxu0 %v4100
        %4665 = vmatprep.subr.bf16.mxu0 %v4103
        %4666 = vmatpush1.bf16.msra.mxu0 %v4102
        %4667 = vmatprep.subr.bf16.mxu0 %v4105
        %4668 = vmatpush1.bf16.msra.mxu0 %v4104
        %4669 = vmatprep.subr.bf16.mxu0 %v4107
        %4670 = vmatpush1.bf16.msra.mxu0 %v4106
        %4671 = vmatprep.subr.bf16.mxu0 %v4109
        %4672 = vmatpush1.bf16.msra.mxu0 %v4108
        %4673 = vmatprep.subr.bf16.mxu0 %v4111
        %4674 = vmatpush1.bf16.msra.mxu0 %v4110
        %4675 = vmatprep.subr.bf16.mxu0 %v4113
        %4676 = vmatpush1.bf16.msra.mxu0 %v4112
        %4677 = vmatprep.subr.bf16.mxu0 %v4115
        %4678 = vmatpush1.bf16.msra.mxu0 %v4114
        %4679 = vmatprep.subr.bf16.mxu0 %v4117
        %4680 = vmatpush1.bf16.msra.mxu0 %v4116
        %4681 = vmatprep.subr.bf16.mxu0 %v4119
        %4682 = vmatpush1.bf16.msra.mxu0 %v4118
        %4683 = vmatprep.subr.bf16.mxu0 %v4121
        %4684 = vmatpush1.bf16.msra.mxu0 %v4120
        %4685 = vmatprep.subr.bf16.mxu0 %v4123
        %4686 = vmatpush1.bf16.msra.mxu0 %v4122
        %4687 = vmatprep.subr.bf16.mxu0 %v4125
        %4688 = vmatpush1.bf16.msra.mxu0 %v4124
        %4689 = vmatprep.mubr.bf16.mxu0 %v768
        %4690 = vmatmul.mubr.bf16.gmra.mrb[0].mxu0 %v767
        %v4691 = vpop.f32.mrb[0].mxu0
        %v4692 = vadd.f32 %v4609, %v4691
        %v4693 = vpop.f32.mrb[0].mxu0
        %v4694 = vadd.f32 %v4611, %v4693
        %v4695 = vpop.f32.mrb[0].mxu0
        %v4696 = vadd.f32 %v4613, %v4695
        %v4697 = vpop.f32.mrb[0].mxu0
        %v4698 = vadd.f32 %v4615, %v4697
        %4699 = vmatprep.mubr.bf16.mxu0 %v784
        %4700 = vmatmul.mubr.bf16.gmra.mrb[0].mxu0 %v783
        %v4701 = vpop.f32.mrb[0].mxu0
        %v4702 = vadd.f32 %v4619, %v4701
        %v4703 = vpop.f32.mrb[0].mxu0
        %v4704 = vadd.f32 %v4621, %v4703
        %v4705 = vpop.f32.mrb[0].mxu0
        %v4706 = vadd.f32 %v4623, %v4705
        %v4707 = vpop.f32.mrb[0].mxu0
        %v4708 = vadd.f32 %v4625, %v4707
        %4709 = vmatprep.mubr.bf16.mxu0 %v800
        %4710 = vmatmul.mubr.bf16.gmra.mrb[0].mxu0 %v799
        %v4711 = vpop.f32.mrb[0].mxu0
        %v4712 = vadd.f32 %v4629, %v4711
        %v4713 = vpop.f32.mrb[0].mxu0
        %v4714 = vadd.f32 %v4631, %v4713
        %v4715 = vpop.f32.mrb[0].mxu0
        %v4716 = vadd.f32 %v4633, %v4715
        %v4717 = vpop.f32.mrb[0].mxu0
        %v4718 = vadd.f32 %v4635, %v4717
        %4719 = vmatprep.mubr.bf16.mxu0 %v816
        %4720 = vmatmul.mubr.bf16.gmra.mrb[0].mxu0 %v815
        %v4721 = vpop.f32.mrb[0].mxu0
        %v4722 = vadd.f32 %v4639, %v4721
        %v4723 = vpop.f32.mrb[0].mxu0
        %v4724 = vadd.f32 %v4641, %v4723
        %v4725 = vpop.f32.mrb[0].mxu0
        %v4726 = vadd.f32 %v4643, %v4725
        %v4727 = vpop.f32.mrb[0].mxu0
        %v4728 = vadd.f32 %v4645, %v4727
        %4729 = vmatprep.mubr.bf16.mxu0 %v832
        %4730 = vmatmul.mubr.bf16.gmra.mrb[0].mxu0 %v831
        %v4731 = vpop.f32.mrb[0].mxu0
        %v4732 = vadd.f32 %v4649, %v4731
        %v4733 = vpop.f32.mrb[0].mxu0
        %v4734 = vadd.f32 %v4651, %v4733
        %v4735 = vpop.f32.mrb[0].mxu0
        %v4736 = vadd.f32 %v4653, %v4735
        %v4737 = vpop.f32.mrb[0].mxu0
        %v4738 = vadd.f32 %v4655, %v4737
        %4739 = vdwg.mxu0
        %4740 = vmatprep.subr.bf16.mxu0 %v4127
        %4741 = vmatpush1.bf16.msra.mxu0 %v4126
        %4742 = vmatprep.subr.bf16.mxu0 %v4129
        %4743 = vmatpush1.bf16.msra.mxu0 %v4128
        %4744 = vmatprep.subr.bf16.mxu0 %v4131
        %4745 = vmatpush1.bf16.msra.mxu0 %v4130
        %4746 = vmatprep.subr.bf16.mxu0 %v4133
        %4747 = vmatpush1.bf16.msra.mxu0 %v4132
        %4748 = vmatprep.subr.bf16.mxu0 %v4135
        %4749 = vmatpush1.bf16.msra.mxu0 %v4134
        %4750 = vmatprep.subr.bf16.mxu0 %v4137
        %4751 = vmatpush1.bf16.msra.mxu0 %v4136
        %4752 = vmatprep.subr.bf16.mxu0 %v4139
        %4753 = vmatpush1.bf16.msra.mxu0 %v4138
        %4754 = vmatprep.subr.bf16.mxu0 %v4141
        %4755 = vmatpush1.bf16.msra.mxu0 %v4140
        %4756 = vmatprep.subr.bf16.mxu0 %v4143
        %4757 = vmatpush1.bf16.msra.mxu0 %v4142
        %4758 = vmatprep.subr.bf16.mxu0 %v4145
        %4759 = vmatpush1.bf16.msra.mxu0 %v4144
        %4760 = vmatprep.subr.bf16.mxu0 %v4147
        %4761 = vmatpush1.bf16.msra.mxu0 %v4146
        %4762 = vmatprep.subr.bf16.mxu0 %v4149
        %4763 = vmatpush1.bf16.msra.mxu0 %v4148
        %4764 = vmatprep.subr.bf16.mxu0 %v4151
        %4765 = vmatpush1.bf16.msra.mxu0 %v4150
        %4766 = vmatprep.subr.bf16.mxu0 %v4153
        %4767 = vmatpush1.bf16.msra.mxu0 %v4152
        %4768 = vmatprep.subr.bf16.mxu0 %v4155
        %4769 = vmatpush1.bf16.msra.mxu0 %v4154
        %4770 = vmatprep.subr.bf16.mxu0 %v4157
        %4771 = vmatpush1.bf16.msra.mxu0 %v4156
        %4772 = vmatprep.mubr.bf16.mxu0 %v770
        %4773 = vmatmul.mubr.bf16.gmra.mrb[0].mxu0 %v769
        %v4774 = vpop.f32.mrb[0].mxu0
        %v4775 = vadd.f32 %v4692, %v4774
        %v4776 = vpop.f32.mrb[0].mxu0
        %v4777 = vadd.f32 %v4694, %v4776
        %v4778 = vpop.f32.mrb[0].mxu0
        %v4779 = vadd.f32 %v4696, %v4778
        %v4780 = vpop.f32.mrb[0].mxu0
        %v4781 = vadd.f32 %v4698, %v4780
        %4782 = vmatprep.mubr.bf16.mxu0 %v786
        %4783 = vmatmul.mubr.bf16.gmra.mrb[0].mxu0 %v785
        %v4784 = vpop.f32.mrb[0].mxu0
        %v4785 = vadd.f32 %v4702, %v4784
        %v4786 = vpop.f32.mrb[0].mxu0
        %v4787 = vadd.f32 %v4704, %v4786
        %v4788 = vpop.f32.mrb[0].mxu0
        %v4789 = vadd.f32 %v4706, %v4788
        %v4790 = vpop.f32.mrb[0].mxu0
        %v4791 = vadd.f32 %v4708, %v4790
        %4792 = vmatprep.mubr.bf16.mxu0 %v802
        %4793 = vmatmul.mubr.bf16.gmra.mrb[0].mxu0 %v801
        %v4794 = vpop.f32.mrb[0].mxu0
        %v4795 = vadd.f32 %v4712, %v4794
        %v4796 = vpop.f32.mrb[0].mxu0
        %v4797 = vadd.f32 %v4714, %v4796
        %v4798 = vpop.f32.mrb[0].mxu0
        %v4799 = vadd.f32 %v4716, %v4798
        %v4800 = vpop.f32.mrb[0].mxu0
        %v4801 = vadd.f32 %v4718, %v4800
        %4802 = vmatprep.mubr.bf16.mxu0 %v818
        %4803 = vmatmul.mubr.bf16.gmra.mrb[0].mxu0 %v817
        %v4804 = vpop.f32.mrb[0].mxu0
        %v4805 = vadd.f32 %v4722, %v4804
        %v4806 = vpop.f32.mrb[0].mxu0
        %v4807 = vadd.f32 %v4724, %v4806
        %v4808 = vpop.f32.mrb[0].mxu0
        %v4809 = vadd.f32 %v4726, %v4808
        %v4810 = vpop.f32.mrb[0].mxu0
        %v4811 = vadd.f32 %v4728, %v4810
        %4812 = vmatprep.mubr.bf16.mxu0 %v834
        %4813 = vmatmul.mubr.bf16.gmra.mrb[0].mxu0 %v833
        %v4814 = vpop.f32.mrb[0].mxu0
        %v4815 = vadd.f32 %v4732, %v4814
        %v4816 = vpop.f32.mrb[0].mxu0
        %v4817 = vadd.f32 %v4734, %v4816
        %v4818 = vpop.f32.mrb[0].mxu0
        %v4819 = vadd.f32 %v4736, %v4818
        %v4820 = vpop.f32.mrb[0].mxu0
        %v4821 = vadd.f32 %v4738, %v4820
        %4822 = vdwg.mxu0
        %4823 = vmatprep.subr.bf16.mxu0 %v4159
        %4824 = vmatpush1.bf16.msra.mxu0 %v4158
        %4825 = vmatprep.subr.bf16.mxu0 %v4161
        %4826 = vmatpush1.bf16.msra.mxu0 %v4160
        %4827 = vmatprep.subr.bf16.mxu0 %v4163
        %4828 = vmatpush1.bf16.msra.mxu0 %v4162
        %4829 = vmatprep.subr.bf16.mxu0 %v4165
        %4830 = vmatpush1.bf16.msra.mxu0 %v4164
        %4831 = vmatprep.subr.bf16.mxu0 %v4167
        %4832 = vmatpush1.bf16.msra.mxu0 %v4166
        %4833 = vmatprep.subr.bf16.mxu0 %v4169
        %4834 = vmatpush1.bf16.msra.mxu0 %v4168
        %4835 = vmatprep.subr.bf16.mxu0 %v4171
        %4836 = vmatpush1.bf16.msra.mxu0 %v4170
        %4837 = vmatprep.subr.bf16.mxu0 %v4173
        %4838 = vmatpush1.bf16.msra.mxu0 %v4172
        %4839 = vmatprep.subr.bf16.mxu0 %v4175
        %4840 = vmatpush1.bf16.msra.mxu0 %v4174
        %4841 = vmatprep.subr.bf16.mxu0 %v4177
        %4842 = vmatpush1.bf16.msra.mxu0 %v4176
        %4843 = vmatprep.subr.bf16.mxu0 %v4179
        %4844 = vmatpush1.bf16.msra.mxu0 %v4178
        %4845 = vmatprep.subr.bf16.mxu0 %v4181
        %4846 = vmatpush1.bf16.msra.mxu0 %v4180
        %4847 = vmatprep.subr.bf16.mxu0 %v4183
        %4848 = vmatpush1.bf16.msra.mxu0 %v4182
        %4849 = vmatprep.subr.bf16.mxu0 %v4185
        %4850 = vmatpush1.bf16.msra.mxu0 %v4184
        %4851 = vmatprep.subr.bf16.mxu0 %v4187
        %4852 = vmatpush1.bf16.msra.mxu0 %v4186
        %4853 = vmatprep.subr.bf16.mxu0 %v4189
        %4854 = vmatpush1.bf16.msra.mxu0 %v4188
        %4855 = vmatprep.mubr.bf16.mxu0 %v772
        %4856 = vmatmul.mubr.bf16.gmra.mrb[0].mxu0 %v771
        %v4857 = vpop.f32.mrb[0].mxu0
        %v4858 = vadd.f32 %v4775, %v4857
        %v4859 = vpop.f32.mrb[0].mxu0
        %v4860 = vadd.f32 %v4777, %v4859
        %v4861 = vpop.f32.mrb[0].mxu0
        %v4862 = vadd.f32 %v4779, %v4861
        %v4863 = vpop.f32.mrb[0].mxu0
        %v4864 = vadd.f32 %v4781, %v4863
        %4865 = vmatprep.mubr.bf16.mxu0 %v788
        %4866 = vmatmul.mubr.bf16.gmra.mrb[0].mxu0 %v787
        %v4867 = vpop.f32.mrb[0].mxu0
        %v4868 = vadd.f32 %v4785, %v4867
        %v4869 = vpop.f32.mrb[0].mxu0
        %v4870 = vadd.f32 %v4787, %v4869
        %v4871 = vpop.f32.mrb[0].mxu0
        %v4872 = vadd.f32 %v4789, %v4871
        %v4873 = vpop.f32.mrb[0].mxu0
        %v4874 = vadd.f32 %v4791, %v4873
        %4875 = vmatprep.mubr.bf16.mxu0 %v804
        %4876 = vmatmul.mubr.bf16.gmra.mrb[0].mxu0 %v803
        %v4877 = vpop.f32.mrb[0].mxu0
        %v4878 = vadd.f32 %v4795, %v4877
        %v4879 = vpop.f32.mrb[0].mxu0
        %v4880 = vadd.f32 %v4797, %v4879
        %v4881 = vpop.f32.mrb[0].mxu0
        %v4882 = vadd.f32 %v4799, %v4881
        %v4883 = vpop.f32.mrb[0].mxu0
        %v4884 = vadd.f32 %v4801, %v4883
        %4885 = vmatprep.mubr.bf16.mxu0 %v820
        %4886 = vmatmul.mubr.bf16.gmra.mrb[0].mxu0 %v819
        %v4887 = vpop.f32.mrb[0].mxu0
        %v4888 = vadd.f32 %v4805, %v4887
        %v4889 = vpop.f32.mrb[0].mxu0
        %v4890 = vadd.f32 %v4807, %v4889
        %v4891 = vpop.f32.mrb[0].mxu0
        %v4892 = vadd.f32 %v4809, %v4891
        %v4893 = vpop.f32.mrb[0].mxu0
        %v4894 = vadd.f32 %v4811, %v4893
        %4895 = vmatprep.mubr.bf16.mxu0 %v836
        %4896 = vmatmul.mubr.bf16.gmra.mrb[0].mxu0 %v835
        %v4897 = vpop.f32.mrb[0].mxu0
        %v4898 = vadd.f32 %v4815, %v4897
        %v4899 = vpop.f32.mrb[0].mxu0
        %v4900 = vadd.f32 %v4817, %v4899
        %v4901 = vpop.f32.mrb[0].mxu0
        %v4902 = vadd.f32 %v4819, %v4901
        %v4903 = vpop.f32.mrb[0].mxu0
        %v4904 = vadd.f32 %v4821, %v4903
        %4905 = vdwg.mxu0
        %4906 = vmatprep.subr.bf16.mxu0 %v4191
        %4907 = vmatpush1.bf16.msra.mxu0 %v4190
        %4908 = vmatprep.subr.bf16.mxu0 %v4193
        %4909 = vmatpush1.bf16.msra.mxu0 %v4192
        %4910 = vmatprep.subr.bf16.mxu0 %v4195
        %4911 = vmatpush1.bf16.msra.mxu0 %v4194
        %4912 = vmatprep.subr.bf16.mxu0 %v4197
        %4913 = vmatpush1.bf16.msra.mxu0 %v4196
        %4914 = vmatprep.subr.bf16.mxu0 %v4199
        %4915 = vmatpush1.bf16.msra.mxu0 %v4198
        %4916 = vmatprep.subr.bf16.mxu0 %v4201
        %4917 = vmatpush1.bf16.msra.mxu0 %v4200
        %4918 = vmatprep.subr.bf16.mxu0 %v4203
        %4919 = vmatpush1.bf16.msra.mxu0 %v4202
        %4920 = vmatprep.subr.bf16.mxu0 %v4205
        %4921 = vmatpush1.bf16.msra.mxu0 %v4204
        %4922 = vmatprep.subr.bf16.mxu0 %v4207
        %4923 = vmatpush1.bf16.msra.mxu0 %v4206
        %4924 = vmatprep.subr.bf16.mxu0 %v4209
        %4925 = vmatpush1.bf16.msra.mxu0 %v4208
        %4926 = vmatprep.subr.bf16.mxu0 %v4211
        %4927 = vmatpush1.bf16.msra.mxu0 %v4210
        %4928 = vmatprep.subr.bf16.mxu0 %v4213
        %4929 = vmatpush1.bf16.msra.mxu0 %v4212
        %4930 = vmatprep.subr.bf16.mxu0 %v4215
        %4931 = vmatpush1.bf16.msra.mxu0 %v4214
        %4932 = vmatprep.subr.bf16.mxu0 %v4217
        %4933 = vmatpush1.bf16.msra.mxu0 %v4216
        %4934 = vmatprep.subr.bf16.mxu0 %v4219
        %4935 = vmatpush1.bf16.msra.mxu0 %v4218
        %4936 = vmatprep.subr.bf16.mxu0 %v4221
        %4937 = vmatpush1.bf16.msra.mxu0 %v4220
        %4938 = vmatprep.mubr.bf16.mxu0 %v774
        %4939 = vmatmul.mubr.bf16.gmra.mrb[0].mxu0 %v773
        %v4940 = vpop.f32.mrb[0].mxu0
        %v4941 = vadd.f32 %v4858, %v4940
        %v4942 = vpop.f32.mrb[0].mxu0
        %v4943 = vadd.f32 %v4860, %v4942
        %v4944 = vpop.f32.mrb[0].mxu0
        %v4945 = vadd.f32 %v4862, %v4944
        %v4946 = vpop.f32.mrb[0].mxu0
        %v4947 = vadd.f32 %v4864, %v4946
        %4948 = vmatprep.mubr.bf16.mxu0 %v790
        %4949 = vmatmul.mubr.bf16.gmra.mrb[0].mxu0 %v789
        %v4950 = vpop.f32.mrb[0].mxu0
        %v4951 = vadd.f32 %v4868, %v4950
        %v4952 = vpop.f32.mrb[0].mxu0
        %v4953 = vadd.f32 %v4870, %v4952
        %v4954 = vpop.f32.mrb[0].mxu0
        %v4955 = vadd.f32 %v4872, %v4954
        %v4956 = vpop.f32.mrb[0].mxu0
        %v4957 = vadd.f32 %v4874, %v4956
        %4958 = vmatprep.mubr.bf16.mxu0 %v806
        %4959 = vmatmul.mubr.bf16.gmra.mrb[0].mxu0 %v805
        %v4960 = vpop.f32.mrb[0].mxu0
        %v4961 = vadd.f32 %v4878, %v4960
        %v4962 = vpop.f32.mrb[0].mxu0
        %v4963 = vadd.f32 %v4880, %v4962
        %v4964 = vpop.f32.mrb[0].mxu0
        %v4965 = vadd.f32 %v4882, %v4964
        %v4966 = vpop.f32.mrb[0].mxu0
        %v4967 = vadd.f32 %v4884, %v4966
        %4968 = vmatprep.mubr.bf16.mxu0 %v822
        %4969 = vmatmul.mubr.bf16.gmra.mrb[0].mxu0 %v821
        %v4970 = vpop.f32.mrb[0].mxu0
        %v4971 = vadd.f32 %v4888, %v4970
        %v4972 = vpop.f32.mrb[0].mxu0
        %v4973 = vadd.f32 %v4890, %v4972
        %v4974 = vpop.f32.mrb[0].mxu0
        %v4975 = vadd.f32 %v4892, %v4974
        %v4976 = vpop.f32.mrb[0].mxu0
        %v4977 = vadd.f32 %v4894, %v4976
        %4978 = vmatprep.mubr.bf16.mxu0 %v838
        %4979 = vmatmul.mubr.bf16.gmra.mrb[0].mxu0 %v837
        %v4980 = vpop.f32.mrb[0].mxu0
        %v4981 = vadd.f32 %v4898, %v4980
        %v4982 = vpop.f32.mrb[0].mxu0
        %v4983 = vadd.f32 %v4900, %v4982
        %v4984 = vpop.f32.mrb[0].mxu0
        %v4985 = vadd.f32 %v4902, %v4984
        %v4986 = vpop.f32.mrb[0].mxu0
        %v4987 = vadd.f32 %v4904, %v4986
        %4988 = vdwg.mxu0
        %4989 = vmatprep.subr.bf16.mxu0 %v4223
        %4990 = vmatpush1.bf16.msra.mxu0 %v4222
        %4991 = vmatprep.subr.bf16.mxu0 %v4225
        %4992 = vmatpush1.bf16.msra.mxu0 %v4224
        %4993 = vmatprep.subr.bf16.mxu0 %v4227
        %4994 = vmatpush1.bf16.msra.mxu0 %v4226
        %4995 = vmatprep.subr.bf16.mxu0 %v4229
        %4996 = vmatpush1.bf16.msra.mxu0 %v4228
        %4997 = vmatprep.subr.bf16.mxu0 %v4231
        %4998 = vmatpush1.bf16.msra.mxu0 %v4230
        %4999 = vmatprep.subr.bf16.mxu0 %v4233
        %5000 = vmatpush1.bf16.msra.mxu0 %v4232
        %5001 = vmatprep.subr.bf16.mxu0 %v4235
        %5002 = vmatpush1.bf16.msra.mxu0 %v4234
        %5003 = vmatprep.subr.bf16.mxu0 %v4237
        %5004 = vmatpush1.bf16.msra.mxu0 %v4236
        %5005 = vmatprep.subr.bf16.mxu0 %v4239
        %5006 = vmatpush1.bf16.msra.mxu0 %v4238
        %5007 = vmatprep.subr.bf16.mxu0 %v4241
        %5008 = vmatpush1.bf16.msra.mxu0 %v4240
        %5009 = vmatprep.subr.bf16.mxu0 %v4243
        %5010 = vmatpush1.bf16.msra.mxu0 %v4242
        %5011 = vmatprep.subr.bf16.mxu0 %v4245
        %5012 = vmatpush1.bf16.msra.mxu0 %v4244
        %5013 = vmatprep.subr.bf16.mxu0 %v4247
        %5014 = vmatpush1.bf16.msra.mxu0 %v4246
        %5015 = vmatprep.subr.bf16.mxu0 %v4249
        %5016 = vmatpush1.bf16.msra.mxu0 %v4248
        %5017 = vmatprep.subr.bf16.mxu0 %v4251
        %5018 = vmatpush1.bf16.msra.mxu0 %v4250
        %5019 = vmatprep.subr.bf16.mxu0 %v4253
        %5020 = vmatpush1.bf16.msra.mxu0 %v4252
        %5021 = vmatprep.mubr.bf16.mxu0 %v776
        %5022 = vmatmul.mubr.bf16.gmra.mrb[0].mxu0 %v775
        %v5023 = vpop.f32.mrb[0].mxu0
        %v5024 = vadd.f32 %v4941, %v5023
        %v5025 = vpop.f32.mrb[0].mxu0
        %v5026 = vadd.f32 %v4943, %v5025
        %v5027 = vpop.f32.mrb[0].mxu0
        %v5028 = vadd.f32 %v4945, %v5027
        %v5029 = vpop.f32.mrb[0].mxu0
        %v5030 = vadd.f32 %v4947, %v5029
        %5031 = vmatprep.mubr.bf16.mxu0 %v792
        %5032 = vmatmul.mubr.bf16.gmra.mrb[0].mxu0 %v791
        %v5033 = vpop.f32.mrb[0].mxu0
        %v5034 = vadd.f32 %v4951, %v5033
        %v5035 = vpop.f32.mrb[0].mxu0
        %v5036 = vadd.f32 %v4953, %v5035
        %v5037 = vpop.f32.mrb[0].mxu0
        %v5038 = vadd.f32 %v4955, %v5037
        %v5039 = vpop.f32.mrb[0].mxu0
        %v5040 = vadd.f32 %v4957, %v5039
        %5041 = vmatprep.mubr.bf16.mxu0 %v808
        %5042 = vmatmul.mubr.bf16.gmra.mrb[0].mxu0 %v807
        %v5043 = vpop.f32.mrb[0].mxu0
        %v5044 = vadd.f32 %v4961, %v5043
        %v5045 = vpop.f32.mrb[0].mxu0
        %v5046 = vadd.f32 %v4963, %v5045
        %v5047 = vpop.f32.mrb[0].mxu0
        %v5048 = vadd.f32 %v4965, %v5047
        %v5049 = vpop.f32.mrb[0].mxu0
        %v5050 = vadd.f32 %v4967, %v5049
        %5051 = vmatprep.mubr.bf16.mxu0 %v824
        %5052 = vmatmul.mubr.bf16.gmra.mrb[0].mxu0 %v823
        %v5053 = vpop.f32.mrb[0].mxu0
        %v5054 = vadd.f32 %v4971, %v5053
        %v5055 = vpop.f32.mrb[0].mxu0
        %v5056 = vadd.f32 %v4973, %v5055
        %v5057 = vpop.f32.mrb[0].mxu0
        %v5058 = vadd.f32 %v4975, %v5057
        %v5059 = vpop.f32.mrb[0].mxu0
        %v5060 = vadd.f32 %v4977, %v5059
        %5061 = vmatprep.mubr.bf16.mxu0 %v840
        %5062 = vmatmul.mubr.bf16.gmra.mrb[0].mxu0 %v839
        %v5063 = vpop.f32.mrb[0].mxu0
        %v5064 = vadd.f32 %v4981, %v5063
        %v5065 = vpop.f32.mrb[0].mxu0
        %v5066 = vadd.f32 %v4983, %v5065
        %v5067 = vpop.f32.mrb[0].mxu0
        %v5068 = vadd.f32 %v4985, %v5067
        %v5069 = vpop.f32.mrb[0].mxu0
        %v5070 = vadd.f32 %v4987, %v5069
        %5071 = vdwg.mxu0
        %5072 = vmatprep.subr.bf16.mxu0 %v4255
        %5073 = vmatpush1.bf16.msra.mxu0 %v4254
        %5074 = vmatprep.subr.bf16.mxu0 %v4257
        %5075 = vmatpush1.bf16.msra.mxu0 %v4256
        %5076 = vmatprep.subr.bf16.mxu0 %v4259
        %5077 = vmatpush1.bf16.msra.mxu0 %v4258
        %5078 = vmatprep.subr.bf16.mxu0 %v4261
        %5079 = vmatpush1.bf16.msra.mxu0 %v4260
        %5080 = vmatprep.subr.bf16.mxu0 %v4263
        %5081 = vmatpush1.bf16.msra.mxu0 %v4262
        %5082 = vmatprep.subr.bf16.mxu0 %v4265
        %5083 = vmatpush1.bf16.msra.mxu0 %v4264
        %5084 = vmatprep.subr.bf16.mxu0 %v4267
        %5085 = vmatpush1.bf16.msra.mxu0 %v4266
        %5086 = vmatprep.subr.bf16.mxu0 %v4269
        %5087 = vmatpush1.bf16.msra.mxu0 %v4268
        %5088 = vmatprep.subr.bf16.mxu0 %v4271
        %5089 = vmatpush1.bf16.msra.mxu0 %v4270
        %5090 = vmatprep.subr.bf16.mxu0 %v4273
        %5091 = vmatpush1.bf16.msra.mxu0 %v4272
        %5092 = vmatprep.subr.bf16.mxu0 %v4275
        %5093 = vmatpush1.bf16.msra.mxu0 %v4274
        %5094 = vmatprep.subr.bf16.mxu0 %v4277
        %5095 = vmatpush1.bf16.msra.mxu0 %v4276
        %5096 = vmatprep.subr.bf16.mxu0 %v4279
        %5097 = vmatpush1.bf16.msra.mxu0 %v4278
        %5098 = vmatprep.subr.bf16.mxu0 %v4281
        %5099 = vmatpush1.bf16.msra.mxu0 %v4280
        %5100 = vmatprep.subr.bf16.mxu0 %v4283
        %5101 = vmatpush1.bf16.msra.mxu0 %v4282
        %5102 = vmatprep.subr.bf16.mxu0 %v4285
        %5103 = vmatpush1.bf16.msra.mxu0 %v4284
        %5104 = vmatprep.mubr.bf16.mxu0 %v778
        %5105 = vmatmul.mubr.bf16.gmra.mrb[0].mxu0 %v777
        %v5106 = vpop.f32.mrb[0].mxu0
        %v5107 = vadd.f32 %v5024, %v5106
        %v5108 = vpop.f32.mrb[0].mxu0
        %v5109 = vadd.f32 %v5026, %v5108
        %v5110 = vpop.f32.mrb[0].mxu0
        %v5111 = vadd.f32 %v5028, %v5110
        %v5112 = vpop.f32.mrb[0].mxu0
        %v5113 = vadd.f32 %v5030, %v5112
        %5114 = vmatprep.mubr.bf16.mxu0 %v794
        %5115 = vmatmul.mubr.bf16.gmra.mrb[0].mxu0 %v793
        %v5116 = vpop.f32.mrb[0].mxu0
        %v5117 = vadd.f32 %v5034, %v5116
        %v5118 = vpop.f32.mrb[0].mxu0
        %v5119 = vadd.f32 %v5036, %v5118
        %v5120 = vpop.f32.mrb[0].mxu0
        %v5121 = vadd.f32 %v5038, %v5120
        %v5122 = vpop.f32.mrb[0].mxu0
        %v5123 = vadd.f32 %v5040, %v5122
        %5124 = vmatprep.mubr.bf16.mxu0 %v810
        %5125 = vmatmul.mubr.bf16.gmra.mrb[0].mxu0 %v809
        %v5126 = vpop.f32.mrb[0].mxu0
        %v5127 = vadd.f32 %v5044, %v5126
        %v5128 = vpop.f32.mrb[0].mxu0
        %v5129 = vadd.f32 %v5046, %v5128
        %v5130 = vpop.f32.mrb[0].mxu0
        %v5131 = vadd.f32 %v5048, %v5130
        %v5132 = vpop.f32.mrb[0].mxu0
        %v5133 = vadd.f32 %v5050, %v5132
        %5134 = vmatprep.mubr.bf16.mxu0 %v826
        %5135 = vmatmul.mubr.bf16.gmra.mrb[0].mxu0 %v825
        %v5136 = vpop.f32.mrb[0].mxu0
        %v5137 = vadd.f32 %v5054, %v5136
        %v5138 = vpop.f32.mrb[0].mxu0
        %v5139 = vadd.f32 %v5056, %v5138
        %v5140 = vpop.f32.mrb[0].mxu0
        %v5141 = vadd.f32 %v5058, %v5140
        %v5142 = vpop.f32.mrb[0].mxu0
        %v5143 = vadd.f32 %v5060, %v5142
        %5144 = vmatprep.mubr.bf16.mxu0 %v842
        %5145 = vmatmul.mubr.bf16.gmra.mrb[0].mxu0 %v841
        %v5146 = vpop.f32.mrb[0].mxu0
        %v5147 = vadd.f32 %v5064, %v5146
        %v5148 = vpop.f32.mrb[0].mxu0
        %v5149 = vadd.f32 %v5066, %v5148
        %v5150 = vpop.f32.mrb[0].mxu0
        %v5151 = vadd.f32 %v5068, %v5150
        %v5152 = vpop.f32.mrb[0].mxu0
        %v5153 = vadd.f32 %v5070, %v5152
        %5154 = vdwg.mxu0
        %5155 = vmatprep.subr.bf16.mxu0 %v4287
        %5156 = vmatpush1.bf16.msra.mxu0 %v4286
        %5157 = vmatprep.subr.bf16.mxu0 %v4289
        %5158 = vmatpush1.bf16.msra.mxu0 %v4288
        %5159 = vmatprep.subr.bf16.mxu0 %v4291
        %5160 = vmatpush1.bf16.msra.mxu0 %v4290
        %5161 = vmatprep.subr.bf16.mxu0 %v4293
        %5162 = vmatpush1.bf16.msra.mxu0 %v4292
        %5163 = vmatprep.subr.bf16.mxu0 %v4295
        %5164 = vmatpush1.bf16.msra.mxu0 %v4294
        %5165 = vmatprep.subr.bf16.mxu0 %v4297
        %5166 = vmatpush1.bf16.msra.mxu0 %v4296
        %5167 = vmatprep.subr.bf16.mxu0 %v4299
        %5168 = vmatpush1.bf16.msra.mxu0 %v4298
        %5169 = vmatprep.subr.bf16.mxu0 %v4301
        %5170 = vmatpush1.bf16.msra.mxu0 %v4300
        %5171 = vmatprep.subr.bf16.mxu0 %v4303
        %5172 = vmatpush1.bf16.msra.mxu0 %v4302
        %5173 = vmatprep.subr.bf16.mxu0 %v4305
        %5174 = vmatpush1.bf16.msra.mxu0 %v4304
        %5175 = vmatprep.subr.bf16.mxu0 %v4307
        %5176 = vmatpush1.bf16.msra.mxu0 %v4306
        %5177 = vmatprep.subr.bf16.mxu0 %v4309
        %5178 = vmatpush1.bf16.msra.mxu0 %v4308
        %5179 = vmatprep.subr.bf16.mxu0 %v4311
        %5180 = vmatpush1.bf16.msra.mxu0 %v4310
        %5181 = vmatprep.subr.bf16.mxu0 %v4313
        %5182 = vmatpush1.bf16.msra.mxu0 %v4312
        %5183 = vmatprep.subr.bf16.mxu0 %v4315
        %5184 = vmatpush1.bf16.msra.mxu0 %v4314
        %5185 = vmatprep.subr.bf16.mxu0 %v4317
        %5186 = vmatpush1.bf16.msra.mxu0 %v4316
        %5187 = vmatprep.mubr.bf16.mxu0 %v780
        %5188 = vmatmul.mubr.bf16.gmra.mrb[0].mxu0 %v779
        %v5189 = vpop.f32.mrb[0].mxu0
        %v5190 = vadd.f32 %v5107, %v5189
        %v5191 = vpop.f32.mrb[0].mxu0
        %v5192 = vadd.f32 %v5109, %v5191
        %v5193 = vpop.f32.mrb[0].mxu0
        %v5194 = vadd.f32 %v5111, %v5193
        %v5195 = vpop.f32.mrb[0].mxu0
        %v5196 = vadd.f32 %v5113, %v5195
        %5197 = vmatprep.mubr.bf16.mxu0 %v796
        %5198 = vmatmul.mubr.bf16.gmra.mrb[0].mxu0 %v795
        %v5199 = vpop.f32.mrb[0].mxu0
        %v5200 = vadd.f32 %v5117, %v5199
        %v5201 = vpop.f32.mrb[0].mxu0
        %v5202 = vadd.f32 %v5119, %v5201
        %v5203 = vpop.f32.mrb[0].mxu0
        %v5204 = vadd.f32 %v5121, %v5203
        %v5205 = vpop.f32.mrb[0].mxu0
        %v5206 = vadd.f32 %v5123, %v5205
        %5207 = vmatprep.mubr.bf16.mxu0 %v812
        %5208 = vmatmul.mubr.bf16.gmra.mrb[0].mxu0 %v811
        %v5209 = vpop.f32.mrb[0].mxu0
        %v5210 = vadd.f32 %v5127, %v5209
        %v5211 = vpop.f32.mrb[0].mxu0
        %v5212 = vadd.f32 %v5129, %v5211
        %v5213 = vpop.f32.mrb[0].mxu0
        %v5214 = vadd.f32 %v5131, %v5213
        %v5215 = vpop.f32.mrb[0].mxu0
        %v5216 = vadd.f32 %v5133, %v5215
        %5217 = vmatprep.mubr.bf16.mxu0 %v828
        %5218 = vmatmul.mubr.bf16.gmra.mrb[0].mxu0 %v827
        %v5219 = vpop.f32.mrb[0].mxu0
        %v5220 = vadd.f32 %v5137, %v5219
        %v5221 = vpop.f32.mrb[0].mxu0
        %v5222 = vadd.f32 %v5139, %v5221
        %v5223 = vpop.f32.mrb[0].mxu0
        %v5224 = vadd.f32 %v5141, %v5223
        %v5225 = vpop.f32.mrb[0].mxu0
        %v5226 = vadd.f32 %v5143, %v5225
        %5227 = vmatprep.mubr.bf16.mxu0 %v844
        %5228 = vmatmul.mubr.bf16.gmra.mrb[0].mxu0 %v843
        %v5229 = vpop.f32.mrb[0].mxu0
        %v5230 = vadd.f32 %v5147, %v5229
        %v5231 = vpop.f32.mrb[0].mxu0
        %v5232 = vadd.f32 %v5149, %v5231
        %v5233 = vpop.f32.mrb[0].mxu0
        %v5234 = vadd.f32 %v5151, %v5233
        %v5235 = vpop.f32.mrb[0].mxu0
        %v5236 = vadd.f32 %v5153, %v5235
        %5237 = vdwg.mxu0
        %v5238 = vmul.f32 %v5190, %v5190
        %v5239 = vmul.f32 %v5194, %v5194
        %v5240 = vmul.f32 %v5200, %v5200
        %v5241 = vmul.f32 %v5204, %v5204
        %v5242 = vmul.f32 %v5210, %v5210
        %v5243 = vmul.f32 %v5192, %v5192
        %v5244 = vmul.f32 %v5196, %v5196
        %v5245 = vmul.f32 %v5202, %v5202
        %v5246 = vmul.f32 %v5206, %v5206
        %v5247 = vmul.f32 %v5212, %v5212
        %v5248 = vadd.f32 %v5238, %v5243
        %v5249 = vadd.f32 %v5239, %v5244
        %v5250 = vadd.f32 %v5240, %v5245
        %v5251 = vadd.f32 %v5241, %v5246
        %v5252 = vadd.f32 %v5242, %v5247
        %v5253 = vrsqrt.pop %v5248
        %v5254 = vmul.f32 %v5248, %v5253
        %vm5255 = vcmp.eq.f32.partialorder %v5248, inf
        %v5256 = vsel %vm5255, %v5248, %v5254
        %vm5257 = vcmp.eq.f32.partialorder %v5248, 0.0
        %v5258 = vand.u32 %v5248, 2147483648
        %v5259 = vsel %vm5257, %v5258, %v5256
        %v5260 = vrsqrt.pop %v5249
        %v5261 = vmul.f32 %v5249, %v5260
        %vm5262 = vcmp.eq.f32.partialorder %v5249, inf
        %v5263 = vsel %vm5262, %v5249, %v5261
        %vm5264 = vcmp.eq.f32.partialorder %v5249, 0.0
        %v5265 = vand.u32 %v5249, 2147483648
        %v5266 = vsel %vm5264, %v5265, %v5263
        %v5267 = vrsqrt.pop %v5250
        %v5268 = vmul.f32 %v5250, %v5267
        %vm5269 = vcmp.eq.f32.partialorder %v5250, inf
        %v5270 = vsel %vm5269, %v5250, %v5268
        %vm5271 = vcmp.eq.f32.partialorder %v5250, 0.0
        %v5272 = vand.u32 %v5250, 2147483648
        %v5273 = vsel %vm5271, %v5272, %v5270
        %v5274 = vrsqrt.pop %v5251
        %v5275 = vmul.f32 %v5251, %v5274
        %vm5276 = vcmp.eq.f32.partialorder %v5251, inf
        %v5277 = vsel %vm5276, %v5251, %v5275
        %vm5278 = vcmp.eq.f32.partialorder %v5251, 0.0
        %v5279 = vand.u32 %v5251, 2147483648
        %v5280 = vsel %vm5278, %v5279, %v5277
        %v5281 = vrsqrt.pop %v5252
        %v5282 = vmul.f32 %v5252, %v5281
        %vm5283 = vcmp.eq.f32.partialorder %v5252, inf
        %v5284 = vsel %vm5283, %v5252, %v5282
        %vm5285 = vcmp.eq.f32.partialorder %v5252, 0.0
        %v5286 = vand.u32 %v5252, 2147483648
        %v5287 = vsel %vm5285, %v5286, %v5284
        %v5288 = vmul.f32 %v5214, %v5214
        %v5289 = vmul.f32 %v5220, %v5220
        %v5290 = vmul.f32 %v5224, %v5224
        %v5291 = vmul.f32 %v5230, %v5230
        %v5292 = vmul.f32 %v5234, %v5234
        %v5293 = vmul.f32 %v5216, %v5216
        %v5294 = vmul.f32 %v5222, %v5222
        %v5295 = vmul.f32 %v5226, %v5226
        %v5296 = vmul.f32 %v5232, %v5232
        %v5297 = vmul.f32 %v5236, %v5236
        %v5298 = vadd.f32 %v5288, %v5293
        %v5299 = vadd.f32 %v5289, %v5294
        %v5300 = vadd.f32 %v5290, %v5295
        %v5301 = vadd.f32 %v5291, %v5296
        %v5302 = vadd.f32 %v5292, %v5297
        %v5303 = vrsqrt.pop %v5298
        %v5304 = vmul.f32 %v5298, %v5303
        %vm5305 = vcmp.eq.f32.partialorder %v5298, inf
        %v5306 = vsel %vm5305, %v5298, %v5304
        %vm5307 = vcmp.eq.f32.partialorder %v5298, 0.0
        %v5308 = vand.u32 %v5298, 2147483648
        %v5309 = vsel %vm5307, %v5308, %v5306
        %v5310 = vrsqrt.pop %v5299
        %v5311 = vmul.f32 %v5299, %v5310
        %vm5312 = vcmp.eq.f32.partialorder %v5299, inf
        %v5313 = vsel %vm5312, %v5299, %v5311
        %vm5314 = vcmp.eq.f32.partialorder %v5299, 0.0
        %v5315 = vand.u32 %v5299, 2147483648
        %v5316 = vsel %vm5314, %v5315, %v5313
        %v5317 = vrsqrt.pop %v5300
        %v5318 = vmul.f32 %v5300, %v5317
        %vm5319 = vcmp.eq.f32.partialorder %v5300, inf
        %v5320 = vsel %vm5319, %v5300, %v5318
        %vm5321 = vcmp.eq.f32.partialorder %v5300, 0.0
        %v5322 = vand.u32 %v5300, 2147483648
        %v5323 = vsel %vm5321, %v5322, %v5320
        %v5324 = vrsqrt.pop %v5301
        %v5325 = vmul.f32 %v5301, %v5324
        %vm5326 = vcmp.eq.f32.partialorder %v5301, inf
        %v5327 = vsel %vm5326, %v5301, %v5325
        %vm5328 = vcmp.eq.f32.partialorder %v5301, 0.0
        %v5329 = vand.u32 %v5301, 2147483648
        %v5330 = vsel %vm5328, %v5329, %v5327
        %v5331 = vrsqrt.pop %v5302
        %v5332 = vmul.f32 %v5302, %v5331
        %vm5333 = vcmp.eq.f32.partialorder %v5302, inf
        %v5334 = vsel %vm5333, %v5302, %v5332
        %vm5335 = vcmp.eq.f32.partialorder %v5302, 0.0
        %v5336 = vand.u32 %v5302, 2147483648
        %v5337 = vsel %vm5335, %v5336, %v5334
        %v5338 = vsub.f32 %v5259, %v5309
        %v5339 = vsub.f32 %v5266, %v5316
        %v5340 = vsub.f32 %v5273, %v5323
        %v5341 = vsub.f32 %v5280, %v5330
        %v5342 = vsub.f32 %v5287, %v5337
        %v5343 = vmul.f32 %v5338, %v5338
        %v5344 = vmul.f32 %v5339, %v5339
        %v5345 = vmul.f32 %v5340, %v5340
        %v5346 = vmul.f32 %v5341, %v5341
        %v5347 = vmul.f32 %v5342, %v5342
        %v5348 = vadd.f32 %v3033, %v5343
        %v5349 = vadd.f32 %v3034, %v5344
        %v5350 = vadd.f32 %v3035, %v5345
        %v5351 = vadd.f32 %v3036, %v5346
        %v5352 = vadd.f32 %v3037, %v5347
        %v5353 = vld [vmem:[#allocation5 + $0x10] sm:$0xff]
        %v5354 = vld [vmem:[#allocation5 + $0x30] sm:$0xff]
        %v5355 = vld [vmem:[#allocation5 + $0x50] sm:$0xff]
        %v5356 = vld [vmem:[#allocation5 + $0x70] sm:$0xff]
        %v5357 = vld [vmem:[#allocation5 + $0x90] sm:$0xff]
        %v5358 = vld [vmem:[#allocation5 + $0xb0] sm:$0xff]
        %v5359 = vld [vmem:[#allocation5 + $0xd0] sm:$0xff]
        %v5360 = vld [vmem:[#allocation5 + $0xf0] sm:$0xff]
        %v5361 = vld [vmem:[#allocation5 + $0x110] sm:$0xff]
        %v5362 = vld [vmem:[#allocation5 + $0x130] sm:$0xff]
        %v5363 = vld [vmem:[#allocation5 + $0x150] sm:$0xff]
        %v5364 = vld [vmem:[#allocation5 + $0x170] sm:$0xff]
        %v5365 = vld [vmem:[#allocation5 + $0x190] sm:$0xff]
        %v5366 = vld [vmem:[#allocation5 + $0x1b0] sm:$0xff]
        %v5367 = vld [vmem:[#allocation5 + $0x1d0] sm:$0xff]
        %v5368 = vld [vmem:[#allocation5 + $0x1f0] sm:$0xff]
        %v5369 = vld [vmem:[#allocation5 + $0x210] sm:$0xff]
        %v5370 = vld [vmem:[#allocation5 + $0x230] sm:$0xff]
        %v5371 = vld [vmem:[#allocation5 + $0x250] sm:$0xff]
        %v5372 = vld [vmem:[#allocation5 + $0x270] sm:$0xff]
        %v5373 = vld [vmem:[#allocation5 + $0x290] sm:$0xff]
        %v5374 = vld [vmem:[#allocation5 + $0x2b0] sm:$0xff]
        %v5375 = vld [vmem:[#allocation5 + $0x2d0] sm:$0xff]
        %v5376 = vld [vmem:[#allocation5 + $0x2f0] sm:$0xff]
        %v5377 = vld [vmem:[#allocation5 + $0x310] sm:$0xff]
        %v5378 = vld [vmem:[#allocation5 + $0x330] sm:$0xff]
        %v5379 = vld [vmem:[#allocation5 + $0x350] sm:$0xff]
        %v5380 = vld [vmem:[#allocation5 + $0x370] sm:$0xff]
        %v5381 = vld [vmem:[#allocation5 + $0x390] sm:$0xff]
        %v5382 = vld [vmem:[#allocation5 + $0x3b0] sm:$0xff]
        %v5383 = vld [vmem:[#allocation5 + $0x3d0] sm:$0xff]
        %v5384 = vld [vmem:[#allocation5 + $0x3f0] sm:$0xff]
        %v5385 = vld [vmem:[#allocation5 + $0x410] sm:$0xff]
        %v5386 = vld [vmem:[#allocation5 + $0x430] sm:$0xff]
        %v5387 = vld [vmem:[#allocation5 + $0x450] sm:$0xff]
        %v5388 = vld [vmem:[#allocation5 + $0x470] sm:$0xff]
        %v5389 = vld [vmem:[#allocation5 + $0x490] sm:$0xff]
        %v5390 = vld [vmem:[#allocation5 + $0x4b0] sm:$0xff]
        %v5391 = vld [vmem:[#allocation5 + $0x4d0] sm:$0xff]
        %v5392 = vld [vmem:[#allocation5 + $0x4f0] sm:$0xff]
        %v5393 = vld [vmem:[#allocation5 + $0x510] sm:$0xff]
        %v5394 = vld [vmem:[#allocation5 + $0x530] sm:$0xff]
        %v5395 = vld [vmem:[#allocation5 + $0x550] sm:$0xff]
        %v5396 = vld [vmem:[#allocation5 + $0x570] sm:$0xff]
        %v5397 = vld [vmem:[#allocation5 + $0x590] sm:$0xff]
        %v5398 = vld [vmem:[#allocation5 + $0x5b0] sm:$0xff]
        %v5399 = vld [vmem:[#allocation5 + $0x5d0] sm:$0xff]
        %v5400 = vld [vmem:[#allocation5 + $0x5f0] sm:$0xff]
        %v5401 = vld [vmem:[#allocation5 + $0x610] sm:$0xff]
        %v5402 = vld [vmem:[#allocation5 + $0x630] sm:$0xff]
        %v5403 = vld [vmem:[#allocation5 + $0x650] sm:$0xff]
        %v5404 = vld [vmem:[#allocation5 + $0x670] sm:$0xff]
        %v5405 = vld [vmem:[#allocation5 + $0x690] sm:$0xff]
        %v5406 = vld [vmem:[#allocation5 + $0x6b0] sm:$0xff]
        %v5407 = vld [vmem:[#allocation5 + $0x6d0] sm:$0xff]
        %v5408 = vld [vmem:[#allocation5 + $0x6f0] sm:$0xff]
        %v5409 = vld [vmem:[#allocation5 + $0x710] sm:$0xff]
        %v5410 = vld [vmem:[#allocation5 + $0x730] sm:$0xff]
        %v5411 = vld [vmem:[#allocation5 + $0x750] sm:$0xff]
        %v5412 = vld [vmem:[#allocation5 + $0x770] sm:$0xff]
        %v5413 = vld [vmem:[#allocation5 + $0x790] sm:$0xff]
        %v5414 = vld [vmem:[#allocation5 + $0x7b0] sm:$0xff]
        %v5415 = vld [vmem:[#allocation5 + $0x7d0] sm:$0xff]
        %v5416 = vld [vmem:[#allocation5 + $0x7f0] sm:$0xff]
        %v5417 = vld [vmem:[#allocation5 + $0x810] sm:$0xff]
        %v5418 = vld [vmem:[#allocation5 + $0x830] sm:$0xff]
        %v5419 = vld [vmem:[#allocation5 + $0x850] sm:$0xff]
        %v5420 = vld [vmem:[#allocation5 + $0x870] sm:$0xff]
        %v5421 = vld [vmem:[#allocation5 + $0x890] sm:$0xff]
        %v5422 = vld [vmem:[#allocation5 + $0x8b0] sm:$0xff]
        %v5423 = vld [vmem:[#allocation5 + $0x8d0] sm:$0xff]
        %v5424 = vld [vmem:[#allocation5 + $0x8f0] sm:$0xff]
        %v5425 = vld [vmem:[#allocation5 + $0x910] sm:$0xff]
        %v5426 = vld [vmem:[#allocation5 + $0x930] sm:$0xff]
        %v5427 = vld [vmem:[#allocation5 + $0x950] sm:$0xff]
        %v5428 = vld [vmem:[#allocation5 + $0x970] sm:$0xff]
        %v5429 = vld [vmem:[#allocation5 + $0x990] sm:$0xff]
        %v5430 = vld [vmem:[#allocation5 + $0x9b0] sm:$0xff]
        %v5431 = vld [vmem:[#allocation5 + $0x9d0] sm:$0xff]
        %v5432 = vld [vmem:[#allocation5 + $0x9f0] sm:$0xff]
        %v5433 = vld [vmem:[#allocation5 + $0xa10] sm:$0xff]
        %v5434 = vld [vmem:[#allocation5 + $0xa30] sm:$0xff]
        %v5435 = vld [vmem:[#allocation5 + $0xa50] sm:$0xff]
        %v5436 = vld [vmem:[#allocation5 + $0xa70] sm:$0xff]
        %v5437 = vld [vmem:[#allocation5 + $0xa90] sm:$0xff]
        %v5438 = vld [vmem:[#allocation5 + $0xab0] sm:$0xff]
        %v5439 = vld [vmem:[#allocation5 + $0xad0] sm:$0xff]
        %v5440 = vld [vmem:[#allocation5 + $0xaf0] sm:$0xff]
        %v5441 = vld [vmem:[#allocation5 + $0xb10] sm:$0xff]
        %v5442 = vld [vmem:[#allocation5 + $0xb30] sm:$0xff]
        %v5443 = vld [vmem:[#allocation5 + $0xb50] sm:$0xff]
        %v5444 = vld [vmem:[#allocation5 + $0xb70] sm:$0xff]
        %v5445 = vld [vmem:[#allocation5 + $0xb90] sm:$0xff]
        %v5446 = vld [vmem:[#allocation5 + $0xbb0] sm:$0xff]
        %v5447 = vld [vmem:[#allocation5 + $0xbd0] sm:$0xff]
        %v5448 = vld [vmem:[#allocation5 + $0xbf0] sm:$0xff]
        %v5449 = vld [vmem:[#allocation5 + $0xc10] sm:$0xff]
        %v5450 = vld [vmem:[#allocation5 + $0xc30] sm:$0xff]
        %v5451 = vld [vmem:[#allocation5 + $0xc50] sm:$0xff]
        %v5452 = vld [vmem:[#allocation5 + $0xc70] sm:$0xff]
        %v5453 = vld [vmem:[#allocation5 + $0xc90] sm:$0xff]
        %v5454 = vld [vmem:[#allocation5 + $0xcb0] sm:$0xff]
        %v5455 = vld [vmem:[#allocation5 + $0xcd0] sm:$0xff]
        %v5456 = vld [vmem:[#allocation5 + $0xcf0] sm:$0xff]
        %v5457 = vld [vmem:[#allocation5 + $0xd10] sm:$0xff]
        %v5458 = vld [vmem:[#allocation5 + $0xd30] sm:$0xff]
        %v5459 = vld [vmem:[#allocation5 + $0xd50] sm:$0xff]
        %v5460 = vld [vmem:[#allocation5 + $0xd70] sm:$0xff]
        %v5461 = vld [vmem:[#allocation5 + $0xd90] sm:$0xff]
        %v5462 = vld [vmem:[#allocation5 + $0xdb0] sm:$0xff]
        %v5463 = vld [vmem:[#allocation5 + $0xdd0] sm:$0xff]
        %v5464 = vld [vmem:[#allocation5 + $0xdf0] sm:$0xff]
        %v5465 = vld [vmem:[#allocation5 + $0xe10] sm:$0xff]
        %v5466 = vld [vmem:[#allocation5 + $0xe30] sm:$0xff]
        %v5467 = vld [vmem:[#allocation5 + $0xe50] sm:$0xff]
        %v5468 = vld [vmem:[#allocation5 + $0xe70] sm:$0xff]
        %v5469 = vld [vmem:[#allocation5 + $0xe90] sm:$0xff]
        %v5470 = vld [vmem:[#allocation5 + $0xeb0] sm:$0xff]
        %v5471 = vld [vmem:[#allocation5 + $0xed0] sm:$0xff]
        %v5472 = vld [vmem:[#allocation5 + $0xef0] sm:$0xff]
        %v5473 = vld [vmem:[#allocation5 + $0xf10] sm:$0xff]
        %v5474 = vld [vmem:[#allocation5 + $0xf30] sm:$0xff]
        %v5475 = vld [vmem:[#allocation5 + $0xf50] sm:$0xff]
        %v5476 = vld [vmem:[#allocation5 + $0xf70] sm:$0xff]
        %v5477 = vld [vmem:[#allocation5 + $0xf90] sm:$0xff]
        %v5478 = vld [vmem:[#allocation5 + $0xfb0] sm:$0xff]
        %v5479 = vld [vmem:[#allocation5 + $0xfd0] sm:$0xff]
        %v5480 = vld [vmem:[#allocation5 + $0xff0] sm:$0xff]
        %v5481 = vld [vmem:[#allocation5 + $0x1010] sm:$0xff]
        %v5482 = vld [vmem:[#allocation5 + $0x1030] sm:$0xff]
        %v5483 = vld [vmem:[#allocation5 + $0x1050] sm:$0xff]
        %v5484 = vld [vmem:[#allocation5 + $0x1070] sm:$0xff]
        %v5485 = vld [vmem:[#allocation5 + $0x1090] sm:$0xff]
        %v5486 = vld [vmem:[#allocation5 + $0x10b0] sm:$0xff]
        %v5487 = vld [vmem:[#allocation5 + $0x10d0] sm:$0xff]
        %v5488 = vld [vmem:[#allocation5 + $0x10f0] sm:$0xff]
        %v5489 = vld [vmem:[#allocation5 + $0x1110] sm:$0xff]
        %v5490 = vld [vmem:[#allocation5 + $0x1130] sm:$0xff]
        %v5491 = vld [vmem:[#allocation5 + $0x1150] sm:$0xff]
        %v5492 = vld [vmem:[#allocation5 + $0x1170] sm:$0xff]
        %v5493 = vld [vmem:[#allocation5 + $0x1190] sm:$0xff]
        %v5494 = vld [vmem:[#allocation5 + $0x11b0] sm:$0xff]
        %v5495 = vld [vmem:[#allocation5 + $0x11d0] sm:$0xff]
        %v5496 = vld [vmem:[#allocation5 + $0x11f0] sm:$0xff]
        %v5497 = vld [vmem:[#allocation5 + $0x1210] sm:$0xff]
        %v5498 = vld [vmem:[#allocation5 + $0x1230] sm:$0xff]
        %v5499 = vld [vmem:[#allocation5 + $0x1250] sm:$0xff]
        %v5500 = vld [vmem:[#allocation5 + $0x1270] sm:$0xff]
        %v5501 = vld [vmem:[#allocation5 + $0x1290] sm:$0xff]
        %v5502 = vld [vmem:[#allocation5 + $0x12b0] sm:$0xff]
        %v5503 = vld [vmem:[#allocation5 + $0x12d0] sm:$0xff]
        %v5504 = vld [vmem:[#allocation5 + $0x12f0] sm:$0xff]
        %v5505 = vld [vmem:[#allocation5 + $0x1310] sm:$0xff]
        %v5506 = vld [vmem:[#allocation5 + $0x1330] sm:$0xff]
        %v5507 = vld [vmem:[#allocation5 + $0x1350] sm:$0xff]
        %v5508 = vld [vmem:[#allocation5 + $0x1370] sm:$0xff]
        %v5509 = vld [vmem:[#allocation5 + $0x1390] sm:$0xff]
        %v5510 = vld [vmem:[#allocation5 + $0x13b0] sm:$0xff]
        %v5511 = vld [vmem:[#allocation5 + $0x13d0] sm:$0xff]
        %v5512 = vld [vmem:[#allocation5 + $0x13f0] sm:$0xff]
        %v5513 = vld [vmem:[#allocation5 + $0x1410] sm:$0xff]
        %v5514 = vld [vmem:[#allocation5 + $0x1430] sm:$0xff]
        %v5515 = vld [vmem:[#allocation5 + $0x1450] sm:$0xff]
        %v5516 = vld [vmem:[#allocation5 + $0x1470] sm:$0xff]
        %v5517 = vld [vmem:[#allocation5 + $0x1490] sm:$0xff]
        %v5518 = vld [vmem:[#allocation5 + $0x14b0] sm:$0xff]
        %v5519 = vld [vmem:[#allocation5 + $0x14d0] sm:$0xff]
        %v5520 = vld [vmem:[#allocation5 + $0x14f0] sm:$0xff]
        %v5521 = vld [vmem:[#allocation5 + $0x1510] sm:$0xff]
        %v5522 = vld [vmem:[#allocation5 + $0x1530] sm:$0xff]
        %v5523 = vld [vmem:[#allocation5 + $0x1550] sm:$0xff]
        %v5524 = vld [vmem:[#allocation5 + $0x1570] sm:$0xff]
        %v5525 = vld [vmem:[#allocation5 + $0x1590] sm:$0xff]
        %v5526 = vld [vmem:[#allocation5 + $0x15b0] sm:$0xff]
        %v5527 = vld [vmem:[#allocation5 + $0x15d0] sm:$0xff]
        %v5528 = vld [vmem:[#allocation5 + $0x15f0] sm:$0xff]
        %v5529 = vld [vmem:[#allocation5 + $0x1610] sm:$0xff]
        %v5530 = vld [vmem:[#allocation5 + $0x1630] sm:$0xff]
        %v5531 = vld [vmem:[#allocation5 + $0x1650] sm:$0xff]
        %v5532 = vld [vmem:[#allocation5 + $0x1670] sm:$0xff]
        %v5533 = vld [vmem:[#allocation5 + $0x1690] sm:$0xff]
        %v5534 = vld [vmem:[#allocation5 + $0x16b0] sm:$0xff]
        %v5535 = vld [vmem:[#allocation5 + $0x16d0] sm:$0xff]
        %v5536 = vld [vmem:[#allocation5 + $0x16f0] sm:$0xff]
        %v5537 = vld [vmem:[#allocation5 + $0x1710] sm:$0xff]
        %v5538 = vld [vmem:[#allocation5 + $0x1730] sm:$0xff]
        %v5539 = vld [vmem:[#allocation5 + $0x1750] sm:$0xff]
        %v5540 = vld [vmem:[#allocation5 + $0x1770] sm:$0xff]
        %v5541 = vld [vmem:[#allocation5 + $0x1790] sm:$0xff]
        %v5542 = vld [vmem:[#allocation5 + $0x17b0] sm:$0xff]
        %v5543 = vld [vmem:[#allocation5 + $0x17d0] sm:$0xff]
        %v5544 = vld [vmem:[#allocation5 + $0x17f0] sm:$0xff]
        %v5545 = vld [vmem:[#allocation5 + $0x1810] sm:$0xff]
        %v5546 = vld [vmem:[#allocation5 + $0x1830] sm:$0xff]
        %v5547 = vld [vmem:[#allocation5 + $0x1850] sm:$0xff]
        %v5548 = vld [vmem:[#allocation5 + $0x1870] sm:$0xff]
        %v5549 = vld [vmem:[#allocation5 + $0x1890] sm:$0xff]
        %v5550 = vld [vmem:[#allocation5 + $0x18b0] sm:$0xff]
        %v5551 = vld [vmem:[#allocation5 + $0x18d0] sm:$0xff]
        %v5552 = vld [vmem:[#allocation5 + $0x18f0] sm:$0xff]
        %v5553 = vld [vmem:[#allocation5 + $0x1910] sm:$0xff]
        %v5554 = vld [vmem:[#allocation5 + $0x1930] sm:$0xff]
        %v5555 = vld [vmem:[#allocation5 + $0x1950] sm:$0xff]
        %v5556 = vld [vmem:[#allocation5 + $0x1970] sm:$0xff]
        %v5557 = vld [vmem:[#allocation5 + $0x1990] sm:$0xff]
        %v5558 = vld [vmem:[#allocation5 + $0x19b0] sm:$0xff]
        %v5559 = vld [vmem:[#allocation5 + $0x19d0] sm:$0xff]
        %v5560 = vld [vmem:[#allocation5 + $0x19f0] sm:$0xff]
        %v5561 = vld [vmem:[#allocation5 + $0x1a10] sm:$0xff]
        %v5562 = vld [vmem:[#allocation5 + $0x1a30] sm:$0xff]
        %v5563 = vld [vmem:[#allocation5 + $0x1a50] sm:$0xff]
        %v5564 = vld [vmem:[#allocation5 + $0x1a70] sm:$0xff]
        %v5565 = vld [vmem:[#allocation5 + $0x1a90] sm:$0xff]
        %v5566 = vld [vmem:[#allocation5 + $0x1ab0] sm:$0xff]
        %v5567 = vld [vmem:[#allocation5 + $0x1ad0] sm:$0xff]
        %v5568 = vld [vmem:[#allocation5 + $0x1af0] sm:$0xff]
        %v5569 = vld [vmem:[#allocation5 + $0x1b10] sm:$0xff]
        %v5570 = vld [vmem:[#allocation5 + $0x1b30] sm:$0xff]
        %v5571 = vld [vmem:[#allocation5 + $0x1b50] sm:$0xff]
        %v5572 = vld [vmem:[#allocation5 + $0x1b70] sm:$0xff]
        %v5573 = vld [vmem:[#allocation5 + $0x1b90] sm:$0xff]
        %v5574 = vld [vmem:[#allocation5 + $0x1bb0] sm:$0xff]
        %v5575 = vld [vmem:[#allocation5 + $0x1bd0] sm:$0xff]
        %v5576 = vld [vmem:[#allocation5 + $0x1bf0] sm:$0xff]
        %v5577 = vld [vmem:[#allocation5 + $0x1c10] sm:$0xff]
        %v5578 = vld [vmem:[#allocation5 + $0x1c30] sm:$0xff]
        %v5579 = vld [vmem:[#allocation5 + $0x1c50] sm:$0xff]
        %v5580 = vld [vmem:[#allocation5 + $0x1c70] sm:$0xff]
        %v5581 = vld [vmem:[#allocation5 + $0x1c90] sm:$0xff]
        %v5582 = vld [vmem:[#allocation5 + $0x1cb0] sm:$0xff]
        %v5583 = vld [vmem:[#allocation5 + $0x1cd0] sm:$0xff]
        %v5584 = vld [vmem:[#allocation5 + $0x1cf0] sm:$0xff]
        %v5585 = vld [vmem:[#allocation5 + $0x1d10] sm:$0xff]
        %v5586 = vld [vmem:[#allocation5 + $0x1d30] sm:$0xff]
        %v5587 = vld [vmem:[#allocation5 + $0x1d50] sm:$0xff]
        %v5588 = vld [vmem:[#allocation5 + $0x1d70] sm:$0xff]
        %v5589 = vld [vmem:[#allocation5 + $0x1d90] sm:$0xff]
        %v5590 = vld [vmem:[#allocation5 + $0x1db0] sm:$0xff]
        %v5591 = vld [vmem:[#allocation5 + $0x1dd0] sm:$0xff]
        %v5592 = vld [vmem:[#allocation5 + $0x1df0] sm:$0xff]
        %v5593 = vld [vmem:[#allocation5 + $0x1e10] sm:$0xff]
        %v5594 = vld [vmem:[#allocation5 + $0x1e30] sm:$0xff]
        %v5595 = vld [vmem:[#allocation5 + $0x1e50] sm:$0xff]
        %v5596 = vld [vmem:[#allocation5 + $0x1e70] sm:$0xff]
        %v5597 = vld [vmem:[#allocation5 + $0x1e90] sm:$0xff]
        %v5598 = vld [vmem:[#allocation5 + $0x1eb0] sm:$0xff]
        %v5599 = vld [vmem:[#allocation5 + $0x1ed0] sm:$0xff]
        %v5600 = vld [vmem:[#allocation5 + $0x1ef0] sm:$0xff]
        %v5601 = vld [vmem:[#allocation5 + $0x1f10] sm:$0xff]
        %v5602 = vld [vmem:[#allocation5 + $0x1f30] sm:$0xff]
        %v5603 = vld [vmem:[#allocation5 + $0x1f50] sm:$0xff]
        %v5604 = vld [vmem:[#allocation5 + $0x1f70] sm:$0xff]
        %v5605 = vld [vmem:[#allocation5 + $0x1f90] sm:$0xff]
        %v5606 = vld [vmem:[#allocation5 + $0x1fb0] sm:$0xff]
        %v5607 = vld [vmem:[#allocation5 + $0x1fd0] sm:$0xff]
        %v5608 = vld [vmem:[#allocation5 + $0x1ff0] sm:$0xff]
        %v5865 = vunpack.c.l.b16 %v5353
        %v5866 = vunpack.c.h.b16 %v5353
        %v5867 = vunpack.c.l.b16 %v5354
        %v5868 = vunpack.c.h.b16 %v5354
        %v5869 = vunpack.c.l.b16 %v5355
        %v5870 = vunpack.c.h.b16 %v5355
        %v5871 = vunpack.c.l.b16 %v5356
        %v5872 = vunpack.c.h.b16 %v5356
        %v5873 = vunpack.c.l.b16 %v5357
        %v5874 = vunpack.c.h.b16 %v5357
        %v5875 = vunpack.c.l.b16 %v5358
        %v5876 = vunpack.c.h.b16 %v5358
        %v5877 = vunpack.c.l.b16 %v5359
        %v5878 = vunpack.c.h.b16 %v5359
        %v5879 = vunpack.c.l.b16 %v5360
        %v5880 = vunpack.c.h.b16 %v5360
        %v5881 = vunpack.c.l.b16 %v5361
        %v5882 = vunpack.c.h.b16 %v5361
        %v5883 = vunpack.c.l.b16 %v5362
        %v5884 = vunpack.c.h.b16 %v5362
        %v5885 = vunpack.c.l.b16 %v5363
        %v5886 = vunpack.c.h.b16 %v5363
        %v5887 = vunpack.c.l.b16 %v5364
        %v5888 = vunpack.c.h.b16 %v5364
        %v5889 = vunpack.c.l.b16 %v5365
        %v5890 = vunpack.c.h.b16 %v5365
        %v5891 = vunpack.c.l.b16 %v5366
        %v5892 = vunpack.c.h.b16 %v5366
        %v5893 = vunpack.c.l.b16 %v5367
        %v5894 = vunpack.c.h.b16 %v5367
        %v5895 = vunpack.c.l.b16 %v5368
        %v5896 = vunpack.c.h.b16 %v5368
        %v5897 = vunpack.c.l.b16 %v5369
        %v5898 = vunpack.c.h.b16 %v5369
        %v5899 = vunpack.c.l.b16 %v5370
        %v5900 = vunpack.c.h.b16 %v5370
        %v5901 = vunpack.c.l.b16 %v5371
        %v5902 = vunpack.c.h.b16 %v5371
        %v5903 = vunpack.c.l.b16 %v5372
        %v5904 = vunpack.c.h.b16 %v5372
        %v5905 = vunpack.c.l.b16 %v5373
        %v5906 = vunpack.c.h.b16 %v5373
        %v5907 = vunpack.c.l.b16 %v5374
        %v5908 = vunpack.c.h.b16 %v5374
        %v5909 = vunpack.c.l.b16 %v5375
        %v5910 = vunpack.c.h.b16 %v5375
        %v5911 = vunpack.c.l.b16 %v5376
        %v5912 = vunpack.c.h.b16 %v5376
        %v5913 = vunpack.c.l.b16 %v5377
        %v5914 = vunpack.c.h.b16 %v5377
        %v5915 = vunpack.c.l.b16 %v5378
        %v5916 = vunpack.c.h.b16 %v5378
        %v5917 = vunpack.c.l.b16 %v5379
        %v5918 = vunpack.c.h.b16 %v5379
        %v5919 = vunpack.c.l.b16 %v5380
        %v5920 = vunpack.c.h.b16 %v5380
        %v5921 = vunpack.c.l.b16 %v5381
        %v5922 = vunpack.c.h.b16 %v5381
        %v5923 = vunpack.c.l.b16 %v5382
        %v5924 = vunpack.c.h.b16 %v5382
        %v5925 = vunpack.c.l.b16 %v5383
        %v5926 = vunpack.c.h.b16 %v5383
        %v5927 = vunpack.c.l.b16 %v5384
        %v5928 = vunpack.c.h.b16 %v5384
        %v5929 = vunpack.c.l.b16 %v5385
        %v5930 = vunpack.c.h.b16 %v5385
        %v5931 = vunpack.c.l.b16 %v5386
        %v5932 = vunpack.c.h.b16 %v5386
        %v5933 = vunpack.c.l.b16 %v5387
        %v5934 = vunpack.c.h.b16 %v5387
        %v5935 = vunpack.c.l.b16 %v5388
        %v5936 = vunpack.c.h.b16 %v5388
        %v5937 = vunpack.c.l.b16 %v5389
        %v5938 = vunpack.c.h.b16 %v5389
        %v5939 = vunpack.c.l.b16 %v5390
        %v5940 = vunpack.c.h.b16 %v5390
        %v5941 = vunpack.c.l.b16 %v5391
        %v5942 = vunpack.c.h.b16 %v5391
        %v5943 = vunpack.c.l.b16 %v5392
        %v5944 = vunpack.c.h.b16 %v5392
        %v5945 = vunpack.c.l.b16 %v5393
        %v5946 = vunpack.c.h.b16 %v5393
        %v5947 = vunpack.c.l.b16 %v5394
        %v5948 = vunpack.c.h.b16 %v5394
        %v5949 = vunpack.c.l.b16 %v5395
        %v5950 = vunpack.c.h.b16 %v5395
        %v5951 = vunpack.c.l.b16 %v5396
        %v5952 = vunpack.c.h.b16 %v5396
        %v5953 = vunpack.c.l.b16 %v5397
        %v5954 = vunpack.c.h.b16 %v5397
        %v5955 = vunpack.c.l.b16 %v5398
        %v5956 = vunpack.c.h.b16 %v5398
        %v5957 = vunpack.c.l.b16 %v5399
        %v5958 = vunpack.c.h.b16 %v5399
        %v5959 = vunpack.c.l.b16 %v5400
        %v5960 = vunpack.c.h.b16 %v5400
        %v5961 = vunpack.c.l.b16 %v5401
        %v5962 = vunpack.c.h.b16 %v5401
        %v5963 = vunpack.c.l.b16 %v5402
        %v5964 = vunpack.c.h.b16 %v5402
        %v5965 = vunpack.c.l.b16 %v5403
        %v5966 = vunpack.c.h.b16 %v5403
        %v5967 = vunpack.c.l.b16 %v5404
        %v5968 = vunpack.c.h.b16 %v5404
        %v5969 = vunpack.c.l.b16 %v5405
        %v5970 = vunpack.c.h.b16 %v5405
        %v5971 = vunpack.c.l.b16 %v5406
        %v5972 = vunpack.c.h.b16 %v5406
        %v5973 = vunpack.c.l.b16 %v5407
        %v5974 = vunpack.c.h.b16 %v5407
        %v5975 = vunpack.c.l.b16 %v5408
        %v5976 = vunpack.c.h.b16 %v5408
        %v5977 = vunpack.c.l.b16 %v5409
        %v5978 = vunpack.c.h.b16 %v5409
        %v5979 = vunpack.c.l.b16 %v5410
        %v5980 = vunpack.c.h.b16 %v5410
        %v5981 = vunpack.c.l.b16 %v5411
        %v5982 = vunpack.c.h.b16 %v5411
        %v5983 = vunpack.c.l.b16 %v5412
        %v5984 = vunpack.c.h.b16 %v5412
        %v5985 = vunpack.c.l.b16 %v5413
        %v5986 = vunpack.c.h.b16 %v5413
        %v5987 = vunpack.c.l.b16 %v5414
        %v5988 = vunpack.c.h.b16 %v5414
        %v5989 = vunpack.c.l.b16 %v5415
        %v5990 = vunpack.c.h.b16 %v5415
        %v5991 = vunpack.c.l.b16 %v5416
        %v5992 = vunpack.c.h.b16 %v5416
        %v5993 = vunpack.c.l.b16 %v5417
        %v5994 = vunpack.c.h.b16 %v5417
        %v5995 = vunpack.c.l.b16 %v5418
        %v5996 = vunpack.c.h.b16 %v5418
        %v5997 = vunpack.c.l.b16 %v5419
        %v5998 = vunpack.c.h.b16 %v5419
        %v5999 = vunpack.c.l.b16 %v5420
        %v6000 = vunpack.c.h.b16 %v5420
        %v6001 = vunpack.c.l.b16 %v5421
        %v6002 = vunpack.c.h.b16 %v5421
        %v6003 = vunpack.c.l.b16 %v5422
        %v6004 = vunpack.c.h.b16 %v5422
        %v6005 = vunpack.c.l.b16 %v5423
        %v6006 = vunpack.c.h.b16 %v5423
        %v6007 = vunpack.c.l.b16 %v5424
        %v6008 = vunpack.c.h.b16 %v5424
        %v6009 = vunpack.c.l.b16 %v5425
        %v6010 = vunpack.c.h.b16 %v5425
        %v6011 = vunpack.c.l.b16 %v5426
        %v6012 = vunpack.c.h.b16 %v5426
        %v6013 = vunpack.c.l.b16 %v5427
        %v6014 = vunpack.c.h.b16 %v5427
        %v6015 = vunpack.c.l.b16 %v5428
        %v6016 = vunpack.c.h.b16 %v5428
        %v6017 = vunpack.c.l.b16 %v5429
        %v6018 = vunpack.c.h.b16 %v5429
        %v6019 = vunpack.c.l.b16 %v5430
        %v6020 = vunpack.c.h.b16 %v5430
        %v6021 = vunpack.c.l.b16 %v5431
        %v6022 = vunpack.c.h.b16 %v5431
        %v6023 = vunpack.c.l.b16 %v5432
        %v6024 = vunpack.c.h.b16 %v5432
        %v6025 = vunpack.c.l.b16 %v5433
        %v6026 = vunpack.c.h.b16 %v5433
        %v6027 = vunpack.c.l.b16 %v5434
        %v6028 = vunpack.c.h.b16 %v5434
        %v6029 = vunpack.c.l.b16 %v5435
        %v6030 = vunpack.c.h.b16 %v5435
        %v6031 = vunpack.c.l.b16 %v5436
        %v6032 = vunpack.c.h.b16 %v5436
        %v6033 = vunpack.c.l.b16 %v5437
        %v6034 = vunpack.c.h.b16 %v5437
        %v6035 = vunpack.c.l.b16 %v5438
        %v6036 = vunpack.c.h.b16 %v5438
        %v6037 = vunpack.c.l.b16 %v5439
        %v6038 = vunpack.c.h.b16 %v5439
        %v6039 = vunpack.c.l.b16 %v5440
        %v6040 = vunpack.c.h.b16 %v5440
        %v6041 = vunpack.c.l.b16 %v5441
        %v6042 = vunpack.c.h.b16 %v5441
        %v6043 = vunpack.c.l.b16 %v5442
        %v6044 = vunpack.c.h.b16 %v5442
        %v6045 = vunpack.c.l.b16 %v5443
        %v6046 = vunpack.c.h.b16 %v5443
        %v6047 = vunpack.c.l.b16 %v5444
        %v6048 = vunpack.c.h.b16 %v5444
        %v6049 = vunpack.c.l.b16 %v5445
        %v6050 = vunpack.c.h.b16 %v5445
        %v6051 = vunpack.c.l.b16 %v5446
        %v6052 = vunpack.c.h.b16 %v5446
        %v6053 = vunpack.c.l.b16 %v5447
        %v6054 = vunpack.c.h.b16 %v5447
        %v6055 = vunpack.c.l.b16 %v5448
        %v6056 = vunpack.c.h.b16 %v5448
        %v6057 = vunpack.c.l.b16 %v5449
        %v6058 = vunpack.c.h.b16 %v5449
        %v6059 = vunpack.c.l.b16 %v5450
        %v6060 = vunpack.c.h.b16 %v5450
        %v6061 = vunpack.c.l.b16 %v5451
        %v6062 = vunpack.c.h.b16 %v5451
        %v6063 = vunpack.c.l.b16 %v5452
        %v6064 = vunpack.c.h.b16 %v5452
        %v6065 = vunpack.c.l.b16 %v5453
        %v6066 = vunpack.c.h.b16 %v5453
        %v6067 = vunpack.c.l.b16 %v5454
        %v6068 = vunpack.c.h.b16 %v5454
        %v6069 = vunpack.c.l.b16 %v5455
        %v6070 = vunpack.c.h.b16 %v5455
        %v6071 = vunpack.c.l.b16 %v5456
        %v6072 = vunpack.c.h.b16 %v5456
        %v6073 = vunpack.c.l.b16 %v5457
        %v6074 = vunpack.c.h.b16 %v5457
        %v6075 = vunpack.c.l.b16 %v5458
        %v6076 = vunpack.c.h.b16 %v5458
        %v6077 = vunpack.c.l.b16 %v5459
        %v6078 = vunpack.c.h.b16 %v5459
        %v6079 = vunpack.c.l.b16 %v5460
        %v6080 = vunpack.c.h.b16 %v5460
        %v6081 = vunpack.c.l.b16 %v5461
        %v6082 = vunpack.c.h.b16 %v5461
        %v6083 = vunpack.c.l.b16 %v5462
        %v6084 = vunpack.c.h.b16 %v5462
        %v6085 = vunpack.c.l.b16 %v5463
        %v6086 = vunpack.c.h.b16 %v5463
        %v6087 = vunpack.c.l.b16 %v5464
        %v6088 = vunpack.c.h.b16 %v5464
        %v6089 = vunpack.c.l.b16 %v5465
        %v6090 = vunpack.c.h.b16 %v5465
        %v6091 = vunpack.c.l.b16 %v5466
        %v6092 = vunpack.c.h.b16 %v5466
        %v6093 = vunpack.c.l.b16 %v5467
        %v6094 = vunpack.c.h.b16 %v5467
        %v6095 = vunpack.c.l.b16 %v5468
        %v6096 = vunpack.c.h.b16 %v5468
        %v6097 = vunpack.c.l.b16 %v5469
        %v6098 = vunpack.c.h.b16 %v5469
        %v6099 = vunpack.c.l.b16 %v5470
        %v6100 = vunpack.c.h.b16 %v5470
        %v6101 = vunpack.c.l.b16 %v5471
        %v6102 = vunpack.c.h.b16 %v5471
        %v6103 = vunpack.c.l.b16 %v5472
        %v6104 = vunpack.c.h.b16 %v5472
        %v6105 = vunpack.c.l.b16 %v5473
        %v6106 = vunpack.c.h.b16 %v5473
        %v6107 = vunpack.c.l.b16 %v5474
        %v6108 = vunpack.c.h.b16 %v5474
        %v6109 = vunpack.c.l.b16 %v5475
        %v6110 = vunpack.c.h.b16 %v5475
        %v6111 = vunpack.c.l.b16 %v5476
        %v6112 = vunpack.c.h.b16 %v5476
        %v6113 = vunpack.c.l.b16 %v5477
        %v6114 = vunpack.c.h.b16 %v5477
        %v6115 = vunpack.c.l.b16 %v5478
        %v6116 = vunpack.c.h.b16 %v5478
        %v6117 = vunpack.c.l.b16 %v5479
        %v6118 = vunpack.c.h.b16 %v5479
        %v6119 = vunpack.c.l.b16 %v5480
        %v6120 = vunpack.c.h.b16 %v5480
        %v6121 = vunpack.c.l.b16 %v5481
        %v6122 = vunpack.c.h.b16 %v5481
        %v6123 = vunpack.c.l.b16 %v5482
        %v6124 = vunpack.c.h.b16 %v5482
        %v6125 = vunpack.c.l.b16 %v5483
        %v6126 = vunpack.c.h.b16 %v5483
        %v6127 = vunpack.c.l.b16 %v5484
        %v6128 = vunpack.c.h.b16 %v5484
        %v6129 = vunpack.c.l.b16 %v5485
        %v6130 = vunpack.c.h.b16 %v5485
        %v6131 = vunpack.c.l.b16 %v5486
        %v6132 = vunpack.c.h.b16 %v5486
        %v6133 = vunpack.c.l.b16 %v5487
        %v6134 = vunpack.c.h.b16 %v5487
        %v6135 = vunpack.c.l.b16 %v5488
        %v6136 = vunpack.c.h.b16 %v5488
        %v6137 = vunpack.c.l.b16 %v5489
        %v6138 = vunpack.c.h.b16 %v5489
        %v6139 = vunpack.c.l.b16 %v5490
        %v6140 = vunpack.c.h.b16 %v5490
        %v6141 = vunpack.c.l.b16 %v5491
        %v6142 = vunpack.c.h.b16 %v5491
        %v6143 = vunpack.c.l.b16 %v5492
        %v6144 = vunpack.c.h.b16 %v5492
        %v6145 = vunpack.c.l.b16 %v5493
        %v6146 = vunpack.c.h.b16 %v5493
        %v6147 = vunpack.c.l.b16 %v5494
        %v6148 = vunpack.c.h.b16 %v5494
        %v6149 = vunpack.c.l.b16 %v5495
        %v6150 = vunpack.c.h.b16 %v5495
        %v6151 = vunpack.c.l.b16 %v5496
        %v6152 = vunpack.c.h.b16 %v5496
        %v6153 = vunpack.c.l.b16 %v5497
        %v6154 = vunpack.c.h.b16 %v5497
        %v6155 = vunpack.c.l.b16 %v5498
        %v6156 = vunpack.c.h.b16 %v5498
        %v6157 = vunpack.c.l.b16 %v5499
        %v6158 = vunpack.c.h.b16 %v5499
        %v6159 = vunpack.c.l.b16 %v5500
        %v6160 = vunpack.c.h.b16 %v5500
        %v6161 = vunpack.c.l.b16 %v5501
        %v6162 = vunpack.c.h.b16 %v5501
        %v6163 = vunpack.c.l.b16 %v5502
        %v6164 = vunpack.c.h.b16 %v5502
        %v6165 = vunpack.c.l.b16 %v5503
        %v6166 = vunpack.c.h.b16 %v5503
        %v6167 = vunpack.c.l.b16 %v5504
        %v6168 = vunpack.c.h.b16 %v5504
        %v6169 = vunpack.c.l.b16 %v5505
        %v6170 = vunpack.c.h.b16 %v5505
        %v6171 = vunpack.c.l.b16 %v5506
        %v6172 = vunpack.c.h.b16 %v5506
        %v6173 = vunpack.c.l.b16 %v5507
        %v6174 = vunpack.c.h.b16 %v5507
        %v6175 = vunpack.c.l.b16 %v5508
        %v6176 = vunpack.c.h.b16 %v5508
        %v6177 = vunpack.c.l.b16 %v5509
        %v6178 = vunpack.c.h.b16 %v5509
        %v6179 = vunpack.c.l.b16 %v5510
        %v6180 = vunpack.c.h.b16 %v5510
        %v6181 = vunpack.c.l.b16 %v5511
        %v6182 = vunpack.c.h.b16 %v5511
        %v6183 = vunpack.c.l.b16 %v5512
        %v6184 = vunpack.c.h.b16 %v5512
        %v6185 = vunpack.c.l.b16 %v5513
        %v6186 = vunpack.c.h.b16 %v5513
        %v6187 = vunpack.c.l.b16 %v5514
        %v6188 = vunpack.c.h.b16 %v5514
        %v6189 = vunpack.c.l.b16 %v5515
        %v6190 = vunpack.c.h.b16 %v5515
        %v6191 = vunpack.c.l.b16 %v5516
        %v6192 = vunpack.c.h.b16 %v5516
        %v6193 = vunpack.c.l.b16 %v5517
        %v6194 = vunpack.c.h.b16 %v5517
        %v6195 = vunpack.c.l.b16 %v5518
        %v6196 = vunpack.c.h.b16 %v5518
        %v6197 = vunpack.c.l.b16 %v5519
        %v6198 = vunpack.c.h.b16 %v5519
        %v6199 = vunpack.c.l.b16 %v5520
        %v6200 = vunpack.c.h.b16 %v5520
        %v6201 = vunpack.c.l.b16 %v5521
        %v6202 = vunpack.c.h.b16 %v5521
        %v6203 = vunpack.c.l.b16 %v5522
        %v6204 = vunpack.c.h.b16 %v5522
        %v6205 = vunpack.c.l.b16 %v5523
        %v6206 = vunpack.c.h.b16 %v5523
        %v6207 = vunpack.c.l.b16 %v5524
        %v6208 = vunpack.c.h.b16 %v5524
        %v6209 = vunpack.c.l.b16 %v5525
        %v6210 = vunpack.c.h.b16 %v5525
        %v6211 = vunpack.c.l.b16 %v5526
        %v6212 = vunpack.c.h.b16 %v5526
        %v6213 = vunpack.c.l.b16 %v5527
        %v6214 = vunpack.c.h.b16 %v5527
        %v6215 = vunpack.c.l.b16 %v5528
        %v6216 = vunpack.c.h.b16 %v5528
        %v6217 = vunpack.c.l.b16 %v5529
        %v6218 = vunpack.c.h.b16 %v5529
        %v6219 = vunpack.c.l.b16 %v5530
        %v6220 = vunpack.c.h.b16 %v5530
        %v6221 = vunpack.c.l.b16 %v5531
        %v6222 = vunpack.c.h.b16 %v5531
        %v6223 = vunpack.c.l.b16 %v5532
        %v6224 = vunpack.c.h.b16 %v5532
        %v6225 = vunpack.c.l.b16 %v5533
        %v6226 = vunpack.c.h.b16 %v5533
        %v6227 = vunpack.c.l.b16 %v5534
        %v6228 = vunpack.c.h.b16 %v5534
        %v6229 = vunpack.c.l.b16 %v5535
        %v6230 = vunpack.c.h.b16 %v5535
        %v6231 = vunpack.c.l.b16 %v5536
        %v6232 = vunpack.c.h.b16 %v5536
        %v6233 = vunpack.c.l.b16 %v5537
        %v6234 = vunpack.c.h.b16 %v5537
        %v6235 = vunpack.c.l.b16 %v5538
        %v6236 = vunpack.c.h.b16 %v5538
        %v6237 = vunpack.c.l.b16 %v5539
        %v6238 = vunpack.c.h.b16 %v5539
        %v6239 = vunpack.c.l.b16 %v5540
        %v6240 = vunpack.c.h.b16 %v5540
        %v6241 = vunpack.c.l.b16 %v5541
        %v6242 = vunpack.c.h.b16 %v5541
        %v6243 = vunpack.c.l.b16 %v5542
        %v6244 = vunpack.c.h.b16 %v5542
        %v6245 = vunpack.c.l.b16 %v5543
        %v6246 = vunpack.c.h.b16 %v5543
        %v6247 = vunpack.c.l.b16 %v5544
        %v6248 = vunpack.c.h.b16 %v5544
        %v6249 = vunpack.c.l.b16 %v5545
        %v6250 = vunpack.c.h.b16 %v5545
        %v6251 = vunpack.c.l.b16 %v5546
        %v6252 = vunpack.c.h.b16 %v5546
        %v6253 = vunpack.c.l.b16 %v5547
        %v6254 = vunpack.c.h.b16 %v5547
        %v6255 = vunpack.c.l.b16 %v5548
        %v6256 = vunpack.c.h.b16 %v5548
        %v6257 = vunpack.c.l.b16 %v5549
        %v6258 = vunpack.c.h.b16 %v5549
        %v6259 = vunpack.c.l.b16 %v5550
        %v6260 = vunpack.c.h.b16 %v5550
        %v6261 = vunpack.c.l.b16 %v5551
        %v6262 = vunpack.c.h.b16 %v5551
        %v6263 = vunpack.c.l.b16 %v5552
        %v6264 = vunpack.c.h.b16 %v5552
        %v6265 = vunpack.c.l.b16 %v5553
        %v6266 = vunpack.c.h.b16 %v5553
        %v6267 = vunpack.c.l.b16 %v5554
        %v6268 = vunpack.c.h.b16 %v5554
        %v6269 = vunpack.c.l.b16 %v5555
        %v6270 = vunpack.c.h.b16 %v5555
        %v6271 = vunpack.c.l.b16 %v5556
        %v6272 = vunpack.c.h.b16 %v5556
        %v6273 = vunpack.c.l.b16 %v5557
        %v6274 = vunpack.c.h.b16 %v5557
        %v6275 = vunpack.c.l.b16 %v5558
        %v6276 = vunpack.c.h.b16 %v5558
        %v6277 = vunpack.c.l.b16 %v5559
        %v6278 = vunpack.c.h.b16 %v5559
        %v6279 = vunpack.c.l.b16 %v5560
        %v6280 = vunpack.c.h.b16 %v5560
        %v6281 = vunpack.c.l.b16 %v5561
        %v6282 = vunpack.c.h.b16 %v5561
        %v6283 = vunpack.c.l.b16 %v5562
        %v6284 = vunpack.c.h.b16 %v5562
        %v6285 = vunpack.c.l.b16 %v5563
        %v6286 = vunpack.c.h.b16 %v5563
        %v6287 = vunpack.c.l.b16 %v5564
        %v6288 = vunpack.c.h.b16 %v5564
        %v6289 = vunpack.c.l.b16 %v5565
        %v6290 = vunpack.c.h.b16 %v5565
        %v6291 = vunpack.c.l.b16 %v5566
        %v6292 = vunpack.c.h.b16 %v5566
        %v6293 = vunpack.c.l.b16 %v5567
        %v6294 = vunpack.c.h.b16 %v5567
        %v6295 = vunpack.c.l.b16 %v5568
        %v6296 = vunpack.c.h.b16 %v5568
        %v6297 = vunpack.c.l.b16 %v5569
        %v6298 = vunpack.c.h.b16 %v5569
        %v6299 = vunpack.c.l.b16 %v5570
        %v6300 = vunpack.c.h.b16 %v5570
        %v6301 = vunpack.c.l.b16 %v5571
        %v6302 = vunpack.c.h.b16 %v5571
        %v6303 = vunpack.c.l.b16 %v5572
        %v6304 = vunpack.c.h.b16 %v5572
        %v6305 = vunpack.c.l.b16 %v5573
        %v6306 = vunpack.c.h.b16 %v5573
        %v6307 = vunpack.c.l.b16 %v5574
        %v6308 = vunpack.c.h.b16 %v5574
        %v6309 = vunpack.c.l.b16 %v5575
        %v6310 = vunpack.c.h.b16 %v5575
        %v6311 = vunpack.c.l.b16 %v5576
        %v6312 = vunpack.c.h.b16 %v5576
        %v6313 = vunpack.c.l.b16 %v5577
        %v6314 = vunpack.c.h.b16 %v5577
        %v6315 = vunpack.c.l.b16 %v5578
        %v6316 = vunpack.c.h.b16 %v5578
        %v6317 = vunpack.c.l.b16 %v5579
        %v6318 = vunpack.c.h.b16 %v5579
        %v6319 = vunpack.c.l.b16 %v5580
        %v6320 = vunpack.c.h.b16 %v5580
        %v6321 = vunpack.c.l.b16 %v5581
        %v6322 = vunpack.c.h.b16 %v5581
        %v6323 = vunpack.c.l.b16 %v5582
        %v6324 = vunpack.c.h.b16 %v5582
        %v6325 = vunpack.c.l.b16 %v5583
        %v6326 = vunpack.c.h.b16 %v5583
        %v6327 = vunpack.c.l.b16 %v5584
        %v6328 = vunpack.c.h.b16 %v5584
        %v6329 = vunpack.c.l.b16 %v5585
        %v6330 = vunpack.c.h.b16 %v5585
        %v6331 = vunpack.c.l.b16 %v5586
        %v6332 = vunpack.c.h.b16 %v5586
        %v6333 = vunpack.c.l.b16 %v5587
        %v6334 = vunpack.c.h.b16 %v5587
        %v6335 = vunpack.c.l.b16 %v5588
        %v6336 = vunpack.c.h.b16 %v5588
        %v6337 = vunpack.c.l.b16 %v5589
        %v6338 = vunpack.c.h.b16 %v5589
        %v6339 = vunpack.c.l.b16 %v5590
        %v6340 = vunpack.c.h.b16 %v5590
        %v6341 = vunpack.c.l.b16 %v5591
        %v6342 = vunpack.c.h.b16 %v5591
        %v6343 = vunpack.c.l.b16 %v5592
        %v6344 = vunpack.c.h.b16 %v5592
        %v6345 = vunpack.c.l.b16 %v5593
        %v6346 = vunpack.c.h.b16 %v5593
        %v6347 = vunpack.c.l.b16 %v5594
        %v6348 = vunpack.c.h.b16 %v5594
        %v6349 = vunpack.c.l.b16 %v5595
        %v6350 = vunpack.c.h.b16 %v5595
        %v6351 = vunpack.c.l.b16 %v5596
        %v6352 = vunpack.c.h.b16 %v5596
        %v6353 = vunpack.c.l.b16 %v5597
        %v6354 = vunpack.c.h.b16 %v5597
        %v6355 = vunpack.c.l.b16 %v5598
        %v6356 = vunpack.c.h.b16 %v5598
        %v6357 = vunpack.c.l.b16 %v5599
        %v6358 = vunpack.c.h.b16 %v5599
        %v6359 = vunpack.c.l.b16 %v5600
        %v6360 = vunpack.c.h.b16 %v5600
        %v6361 = vunpack.c.l.b16 %v5601
        %v6362 = vunpack.c.h.b16 %v5601
        %v6363 = vunpack.c.l.b16 %v5602
        %v6364 = vunpack.c.h.b16 %v5602
        %v6365 = vunpack.c.l.b16 %v5603
        %v6366 = vunpack.c.h.b16 %v5603
        %v6367 = vunpack.c.l.b16 %v5604
        %v6368 = vunpack.c.h.b16 %v5604
        %v6369 = vunpack.c.l.b16 %v5605
        %v6370 = vunpack.c.h.b16 %v5605
        %v6371 = vunpack.c.l.b16 %v5606
        %v6372 = vunpack.c.h.b16 %v5606
        %v6373 = vunpack.c.l.b16 %v5607
        %v6374 = vunpack.c.h.b16 %v5607
        %v6375 = vunpack.c.l.b16 %v5608
        %v6376 = vunpack.c.h.b16 %v5608
        %v6377 = vpack.c.b16 %v5867, %v5865
        %v6378 = vpack.c.b16 %v5868, %v5866
        %v6379 = vpack.c.b16 %v5871, %v5869
        %v6380 = vpack.c.b16 %v5872, %v5870
        %v6381 = vpack.c.b16 %v5875, %v5873
        %v6382 = vpack.c.b16 %v5876, %v5874
        %v6383 = vpack.c.b16 %v5879, %v5877
        %v6384 = vpack.c.b16 %v5880, %v5878
        %v6385 = vpack.c.b16 %v5883, %v5881
        %v6386 = vpack.c.b16 %v5884, %v5882
        %v6387 = vpack.c.b16 %v5887, %v5885
        %v6388 = vpack.c.b16 %v5888, %v5886
        %v6389 = vpack.c.b16 %v5891, %v5889
        %v6390 = vpack.c.b16 %v5892, %v5890
        %v6391 = vpack.c.b16 %v5895, %v5893
        %v6392 = vpack.c.b16 %v5896, %v5894
        %v6393 = vpack.c.b16 %v5899, %v5897
        %v6394 = vpack.c.b16 %v5900, %v5898
        %v6395 = vpack.c.b16 %v5903, %v5901
        %v6396 = vpack.c.b16 %v5904, %v5902
        %v6397 = vpack.c.b16 %v5907, %v5905
        %v6398 = vpack.c.b16 %v5908, %v5906
        %v6399 = vpack.c.b16 %v5911, %v5909
        %v6400 = vpack.c.b16 %v5912, %v5910
        %v6401 = vpack.c.b16 %v5915, %v5913
        %v6402 = vpack.c.b16 %v5916, %v5914
        %v6403 = vpack.c.b16 %v5919, %v5917
        %v6404 = vpack.c.b16 %v5920, %v5918
        %v6405 = vpack.c.b16 %v5923, %v5921
        %v6406 = vpack.c.b16 %v5924, %v5922
        %v6407 = vpack.c.b16 %v5927, %v5925
        %v6408 = vpack.c.b16 %v5928, %v5926
        %v6409 = vpack.c.b16 %v5931, %v5929
        %v6410 = vpack.c.b16 %v5932, %v5930
        %v6411 = vpack.c.b16 %v5935, %v5933
        %v6412 = vpack.c.b16 %v5936, %v5934
        %v6413 = vpack.c.b16 %v5939, %v5937
        %v6414 = vpack.c.b16 %v5940, %v5938
        %v6415 = vpack.c.b16 %v5943, %v5941
        %v6416 = vpack.c.b16 %v5944, %v5942
        %v6417 = vpack.c.b16 %v5947, %v5945
        %v6418 = vpack.c.b16 %v5948, %v5946
        %v6419 = vpack.c.b16 %v5951, %v5949
        %v6420 = vpack.c.b16 %v5952, %v5950
        %v6421 = vpack.c.b16 %v5955, %v5953
        %v6422 = vpack.c.b16 %v5956, %v5954
        %v6423 = vpack.c.b16 %v5959, %v5957
        %v6424 = vpack.c.b16 %v5960, %v5958
        %v6425 = vpack.c.b16 %v5963, %v5961
        %v6426 = vpack.c.b16 %v5964, %v5962
        %v6427 = vpack.c.b16 %v5967, %v5965
        %v6428 = vpack.c.b16 %v5968, %v5966
        %v6429 = vpack.c.b16 %v5971, %v5969
        %v6430 = vpack.c.b16 %v5972, %v5970
        %v6431 = vpack.c.b16 %v5975, %v5973
        %v6432 = vpack.c.b16 %v5976, %v5974
        %v6433 = vpack.c.b16 %v5979, %v5977
        %v6434 = vpack.c.b16 %v5980, %v5978
        %v6435 = vpack.c.b16 %v5983, %v5981
        %v6436 = vpack.c.b16 %v5984, %v5982
        %v6437 = vpack.c.b16 %v5987, %v5985
        %v6438 = vpack.c.b16 %v5988, %v5986
        %v6439 = vpack.c.b16 %v5991, %v5989
        %v6440 = vpack.c.b16 %v5992, %v5990
        %v6441 = vpack.c.b16 %v5995, %v5993
        %v6442 = vpack.c.b16 %v5996, %v5994
        %v6443 = vpack.c.b16 %v5999, %v5997
        %v6444 = vpack.c.b16 %v6000, %v5998
        %v6445 = vpack.c.b16 %v6003, %v6001
        %v6446 = vpack.c.b16 %v6004, %v6002
        %v6447 = vpack.c.b16 %v6007, %v6005
        %v6448 = vpack.c.b16 %v6008, %v6006
        %v6449 = vpack.c.b16 %v6011, %v6009
        %v6450 = vpack.c.b16 %v6012, %v6010
        %v6451 = vpack.c.b16 %v6015, %v6013
        %v6452 = vpack.c.b16 %v6016, %v6014
        %v6453 = vpack.c.b16 %v6019, %v6017
        %v6454 = vpack.c.b16 %v6020, %v6018
        %v6455 = vpack.c.b16 %v6023, %v6021
        %v6456 = vpack.c.b16 %v6024, %v6022
        %v6457 = vpack.c.b16 %v6027, %v6025
        %v6458 = vpack.c.b16 %v6028, %v6026
        %v6459 = vpack.c.b16 %v6031, %v6029
        %v6460 = vpack.c.b16 %v6032, %v6030
        %v6461 = vpack.c.b16 %v6035, %v6033
        %v6462 = vpack.c.b16 %v6036, %v6034
        %v6463 = vpack.c.b16 %v6039, %v6037
        %v6464 = vpack.c.b16 %v6040, %v6038
        %v6465 = vpack.c.b16 %v6043, %v6041
        %v6466 = vpack.c.b16 %v6044, %v6042
        %v6467 = vpack.c.b16 %v6047, %v6045
        %v6468 = vpack.c.b16 %v6048, %v6046
        %v6469 = vpack.c.b16 %v6051, %v6049
        %v6470 = vpack.c.b16 %v6052, %v6050
        %v6471 = vpack.c.b16 %v6055, %v6053
        %v6472 = vpack.c.b16 %v6056, %v6054
        %v6473 = vpack.c.b16 %v6059, %v6057
        %v6474 = vpack.c.b16 %v6060, %v6058
        %v6475 = vpack.c.b16 %v6063, %v6061
        %v6476 = vpack.c.b16 %v6064, %v6062
        %v6477 = vpack.c.b16 %v6067, %v6065
        %v6478 = vpack.c.b16 %v6068, %v6066
        %v6479 = vpack.c.b16 %v6071, %v6069
        %v6480 = vpack.c.b16 %v6072, %v6070
        %v6481 = vpack.c.b16 %v6075, %v6073
        %v6482 = vpack.c.b16 %v6076, %v6074
        %v6483 = vpack.c.b16 %v6079, %v6077
        %v6484 = vpack.c.b16 %v6080, %v6078
        %v6485 = vpack.c.b16 %v6083, %v6081
        %v6486 = vpack.c.b16 %v6084, %v6082
        %v6487 = vpack.c.b16 %v6087, %v6085
        %v6488 = vpack.c.b16 %v6088, %v6086
        %v6489 = vpack.c.b16 %v6091, %v6089
        %v6490 = vpack.c.b16 %v6092, %v6090
        %v6491 = vpack.c.b16 %v6095, %v6093
        %v6492 = vpack.c.b16 %v6096, %v6094
        %v6493 = vpack.c.b16 %v6099, %v6097
        %v6494 = vpack.c.b16 %v6100, %v6098
        %v6495 = vpack.c.b16 %v6103, %v6101
        %v6496 = vpack.c.b16 %v6104, %v6102
        %v6497 = vpack.c.b16 %v6107, %v6105
        %v6498 = vpack.c.b16 %v6108, %v6106
        %v6499 = vpack.c.b16 %v6111, %v6109
        %v6500 = vpack.c.b16 %v6112, %v6110
        %v6501 = vpack.c.b16 %v6115, %v6113
        %v6502 = vpack.c.b16 %v6116, %v6114
        %v6503 = vpack.c.b16 %v6119, %v6117
        %v6504 = vpack.c.b16 %v6120, %v6118
        %v6505 = vpack.c.b16 %v6123, %v6121
        %v6506 = vpack.c.b16 %v6124, %v6122
        %v6507 = vpack.c.b16 %v6127, %v6125
        %v6508 = vpack.c.b16 %v6128, %v6126
        %v6509 = vpack.c.b16 %v6131, %v6129
        %v6510 = vpack.c.b16 %v6132, %v6130
        %v6511 = vpack.c.b16 %v6135, %v6133
        %v6512 = vpack.c.b16 %v6136, %v6134
        %v6513 = vpack.c.b16 %v6139, %v6137
        %v6514 = vpack.c.b16 %v6140, %v6138
        %v6515 = vpack.c.b16 %v6143, %v6141
        %v6516 = vpack.c.b16 %v6144, %v6142
        %v6517 = vpack.c.b16 %v6147, %v6145
        %v6518 = vpack.c.b16 %v6148, %v6146
        %v6519 = vpack.c.b16 %v6151, %v6149
        %v6520 = vpack.c.b16 %v6152, %v6150
        %v6521 = vpack.c.b16 %v6155, %v6153
        %v6522 = vpack.c.b16 %v6156, %v6154
        %v6523 = vpack.c.b16 %v6159, %v6157
        %v6524 = vpack.c.b16 %v6160, %v6158
        %v6525 = vpack.c.b16 %v6163, %v6161
        %v6526 = vpack.c.b16 %v6164, %v6162
        %v6527 = vpack.c.b16 %v6167, %v6165
        %v6528 = vpack.c.b16 %v6168, %v6166
        %v6529 = vpack.c.b16 %v6171, %v6169
        %v6530 = vpack.c.b16 %v6172, %v6170
        %v6531 = vpack.c.b16 %v6175, %v6173
        %v6532 = vpack.c.b16 %v6176, %v6174
        %v6533 = vpack.c.b16 %v6179, %v6177
        %v6534 = vpack.c.b16 %v6180, %v6178
        %v6535 = vpack.c.b16 %v6183, %v6181
        %v6536 = vpack.c.b16 %v6184, %v6182
        %v6537 = vpack.c.b16 %v6187, %v6185
        %v6538 = vpack.c.b16 %v6188, %v6186
        %v6539 = vpack.c.b16 %v6191, %v6189
        %v6540 = vpack.c.b16 %v6192, %v6190
        %v6541 = vpack.c.b16 %v6195, %v6193
        %v6542 = vpack.c.b16 %v6196, %v6194
        %v6543 = vpack.c.b16 %v6199, %v6197
        %v6544 = vpack.c.b16 %v6200, %v6198
        %v6545 = vpack.c.b16 %v6203, %v6201
        %v6546 = vpack.c.b16 %v6204, %v6202
        %v6547 = vpack.c.b16 %v6207, %v6205
        %v6548 = vpack.c.b16 %v6208, %v6206
        %v6549 = vpack.c.b16 %v6211, %v6209
        %v6550 = vpack.c.b16 %v6212, %v6210
        %v6551 = vpack.c.b16 %v6215, %v6213
        %v6552 = vpack.c.b16 %v6216, %v6214
        %v6553 = vpack.c.b16 %v6219, %v6217
        %v6554 = vpack.c.b16 %v6220, %v6218
        %v6555 = vpack.c.b16 %v6223, %v6221
        %v6556 = vpack.c.b16 %v6224, %v6222
        %v6557 = vpack.c.b16 %v6227, %v6225
        %v6558 = vpack.c.b16 %v6228, %v6226
        %v6559 = vpack.c.b16 %v6231, %v6229
        %v6560 = vpack.c.b16 %v6232, %v6230
        %v6561 = vpack.c.b16 %v6235, %v6233
        %v6562 = vpack.c.b16 %v6236, %v6234
        %v6563 = vpack.c.b16 %v6239, %v6237
        %v6564 = vpack.c.b16 %v6240, %v6238
        %v6565 = vpack.c.b16 %v6243, %v6241
        %v6566 = vpack.c.b16 %v6244, %v6242
        %v6567 = vpack.c.b16 %v6247, %v6245
        %v6568 = vpack.c.b16 %v6248, %v6246
        %v6569 = vpack.c.b16 %v6251, %v6249
        %v6570 = vpack.c.b16 %v6252, %v6250
        %v6571 = vpack.c.b16 %v6255, %v6253
        %v6572 = vpack.c.b16 %v6256, %v6254
        %v6573 = vpack.c.b16 %v6259, %v6257
        %v6574 = vpack.c.b16 %v6260, %v6258
        %v6575 = vpack.c.b16 %v6263, %v6261
        %v6576 = vpack.c.b16 %v6264, %v6262
        %v6577 = vpack.c.b16 %v6267, %v6265
        %v6578 = vpack.c.b16 %v6268, %v6266
        %v6579 = vpack.c.b16 %v6271, %v6269
        %v6580 = vpack.c.b16 %v6272, %v6270
        %v6581 = vpack.c.b16 %v6275, %v6273
        %v6582 = vpack.c.b16 %v6276, %v6274
        %v6583 = vpack.c.b16 %v6279, %v6277
        %v6584 = vpack.c.b16 %v6280, %v6278
        %v6585 = vpack.c.b16 %v6283, %v6281
        %v6586 = vpack.c.b16 %v6284, %v6282
        %v6587 = vpack.c.b16 %v6287, %v6285
        %v6588 = vpack.c.b16 %v6288, %v6286
        %v6589 = vpack.c.b16 %v6291, %v6289
        %v6590 = vpack.c.b16 %v6292, %v6290
        %v6591 = vpack.c.b16 %v6295, %v6293
        %v6592 = vpack.c.b16 %v6296, %v6294
        %v6593 = vpack.c.b16 %v6299, %v6297
        %v6594 = vpack.c.b16 %v6300, %v6298
        %v6595 = vpack.c.b16 %v6303, %v6301
        %v6596 = vpack.c.b16 %v6304, %v6302
        %v6597 = vpack.c.b16 %v6307, %v6305
        %v6598 = vpack.c.b16 %v6308, %v6306
        %v6599 = vpack.c.b16 %v6311, %v6309
        %v6600 = vpack.c.b16 %v6312, %v6310
        %v6601 = vpack.c.b16 %v6315, %v6313
        %v6602 = vpack.c.b16 %v6316, %v6314
        %v6603 = vpack.c.b16 %v6319, %v6317
        %v6604 = vpack.c.b16 %v6320, %v6318
        %v6605 = vpack.c.b16 %v6323, %v6321
        %v6606 = vpack.c.b16 %v6324, %v6322
        %v6607 = vpack.c.b16 %v6327, %v6325
        %v6608 = vpack.c.b16 %v6328, %v6326
        %v6609 = vpack.c.b16 %v6331, %v6329
        %v6610 = vpack.c.b16 %v6332, %v6330
        %v6611 = vpack.c.b16 %v6335, %v6333
        %v6612 = vpack.c.b16 %v6336, %v6334
        %v6613 = vpack.c.b16 %v6339, %v6337
        %v6614 = vpack.c.b16 %v6340, %v6338
        %v6615 = vpack.c.b16 %v6343, %v6341
        %v6616 = vpack.c.b16 %v6344, %v6342
        %v6617 = vpack.c.b16 %v6347, %v6345
        %v6618 = vpack.c.b16 %v6348, %v6346
        %v6619 = vpack.c.b16 %v6351, %v6349
        %v6620 = vpack.c.b16 %v6352, %v6350
        %v6621 = vpack.c.b16 %v6355, %v6353
        %v6622 = vpack.c.b16 %v6356, %v6354
        %v6623 = vpack.c.b16 %v6359, %v6357
        %v6624 = vpack.c.b16 %v6360, %v6358
        %v6625 = vpack.c.b16 %v6363, %v6361
        %v6626 = vpack.c.b16 %v6364, %v6362
        %v6627 = vpack.c.b16 %v6367, %v6365
        %v6628 = vpack.c.b16 %v6368, %v6366
        %v6629 = vpack.c.b16 %v6371, %v6369
        %v6630 = vpack.c.b16 %v6372, %v6370
        %v6631 = vpack.c.b16 %v6375, %v6373
        %v6632 = vpack.c.b16 %v6376, %v6374
        %6889 = vmatprep.subr.bf16.mxu0 %v6378
        %6890 = vmatpush1.bf16.msra.mxu0 %v6377
        %6891 = vmatprep.subr.bf16.mxu0 %v6380
        %6892 = vmatpush1.bf16.msra.mxu0 %v6379
        %6893 = vmatprep.subr.bf16.mxu0 %v6382
        %6894 = vmatpush1.bf16.msra.mxu0 %v6381
        %6895 = vmatprep.subr.bf16.mxu0 %v6384
        %6896 = vmatpush1.bf16.msra.mxu0 %v6383
        %6897 = vmatprep.subr.bf16.mxu0 %v6386
        %6898 = vmatpush1.bf16.msra.mxu0 %v6385
        %6899 = vmatprep.subr.bf16.mxu0 %v6388
        %6900 = vmatpush1.bf16.msra.mxu0 %v6387
        %6901 = vmatprep.subr.bf16.mxu0 %v6390
        %6902 = vmatpush1.bf16.msra.mxu0 %v6389
        %6903 = vmatprep.subr.bf16.mxu0 %v6392
        %6904 = vmatpush1.bf16.msra.mxu0 %v6391
        %6905 = vmatprep.subr.bf16.mxu0 %v6394
        %6906 = vmatpush1.bf16.msra.mxu0 %v6393
        %6907 = vmatprep.subr.bf16.mxu0 %v6396
        %6908 = vmatpush1.bf16.msra.mxu0 %v6395
        %6909 = vmatprep.subr.bf16.mxu0 %v6398
        %6910 = vmatpush1.bf16.msra.mxu0 %v6397
        %6911 = vmatprep.subr.bf16.mxu0 %v6400
        %6912 = vmatpush1.bf16.msra.mxu0 %v6399
        %6913 = vmatprep.subr.bf16.mxu0 %v6402
        %6914 = vmatpush1.bf16.msra.mxu0 %v6401
        %6915 = vmatprep.subr.bf16.mxu0 %v6404
        %6916 = vmatpush1.bf16.msra.mxu0 %v6403
        %6917 = vmatprep.subr.bf16.mxu0 %v6406
        %6918 = vmatpush1.bf16.msra.mxu0 %v6405
        %6919 = vmatprep.subr.bf16.mxu0 %v6408
        %6920 = vmatpush1.bf16.msra.mxu0 %v6407
        %6921 = vmatprep.mubr.bf16.mxu0 %v766
        %6922 = vmatmul.mubr.bf16.gmra.mrb[0].mxu0 %v765
        %v6923 = vpop.f32.mrb[0].mxu0
        %v6924 = vadd.f32 0.0, %v6923
        %v6925 = vpop.f32.mrb[0].mxu0
        %v6926 = vadd.f32 0.0, %v6925
        %v6927 = vpop.f32.mrb[0].mxu0
        %v6928 = vadd.f32 0.0, %v6927
        %v6929 = vpop.f32.mrb[0].mxu0
        %v6930 = vadd.f32 0.0, %v6929
        %6931 = vmatprep.mubr.bf16.mxu0 %v782
        %6932 = vmatmul.mubr.bf16.gmra.mrb[0].mxu0 %v781
        %v6933 = vpop.f32.mrb[0].mxu0
        %v6934 = vadd.f32 0.0, %v6933
        %v6935 = vpop.f32.mrb[0].mxu0
        %v6936 = vadd.f32 0.0, %v6935
        %v6937 = vpop.f32.mrb[0].mxu0
        %v6938 = vadd.f32 0.0, %v6937
        %v6939 = vpop.f32.mrb[0].mxu0
        %v6940 = vadd.f32 0.0, %v6939
        %6941 = vmatprep.mubr.bf16.mxu0 %v798
        %6942 = vmatmul.mubr.bf16.gmra.mrb[0].mxu0 %v797
        %v6943 = vpop.f32.mrb[0].mxu0
        %v6944 = vadd.f32 0.0, %v6943
        %v6945 = vpop.f32.mrb[0].mxu0
        %v6946 = vadd.f32 0.0, %v6945
        %v6947 = vpop.f32.mrb[0].mxu0
        %v6948 = vadd.f32 0.0, %v6947
        %v6949 = vpop.f32.mrb[0].mxu0
        %v6950 = vadd.f32 0.0, %v6949
        %6951 = vmatprep.mubr.bf16.mxu0 %v814
        %6952 = vmatmul.mubr.bf16.gmra.mrb[0].mxu0 %v813
        %v6953 = vpop.f32.mrb[0].mxu0
        %v6954 = vadd.f32 0.0, %v6953
        %v6955 = vpop.f32.mrb[0].mxu0
        %v6956 = vadd.f32 0.0, %v6955
        %v6957 = vpop.f32.mrb[0].mxu0
        %v6958 = vadd.f32 0.0, %v6957
        %v6959 = vpop.f32.mrb[0].mxu0
        %v6960 = vadd.f32 0.0, %v6959
        %6961 = vmatprep.mubr.bf16.mxu0 %v830
        %6962 = vmatmul.mubr.bf16.gmra.mrb[0].mxu0 %v829
        %v6963 = vpop.f32.mrb[0].mxu0
        %v6964 = vadd.f32 0.0, %v6963
        %v6965 = vpop.f32.mrb[0].mxu0
        %v6966 = vadd.f32 0.0, %v6965
        %v6967 = vpop.f32.mrb[0].mxu0
        %v6968 = vadd.f32 0.0, %v6967
        %v6969 = vpop.f32.mrb[0].mxu0
        %v6970 = vadd.f32 0.0, %v6969
        %6971 = vdwg.mxu0
        %6972 = vmatprep.subr.bf16.mxu0 %v6410
        %6973 = vmatpush1.bf16.msra.mxu0 %v6409
        %6974 = vmatprep.subr.bf16.mxu0 %v6412
        %6975 = vmatpush1.bf16.msra.mxu0 %v6411
        %6976 = vmatprep.subr.bf16.mxu0 %v6414
        %6977 = vmatpush1.bf16.msra.mxu0 %v6413
        %6978 = vmatprep.subr.bf16.mxu0 %v6416
        %6979 = vmatpush1.bf16.msra.mxu0 %v6415
        %6980 = vmatprep.subr.bf16.mxu0 %v6418
        %6981 = vmatpush1.bf16.msra.mxu0 %v6417
        %6982 = vmatprep.subr.bf16.mxu0 %v6420
        %6983 = vmatpush1.bf16.msra.mxu0 %v6419
        %6984 = vmatprep.subr.bf16.mxu0 %v6422
        %6985 = vmatpush1.bf16.msra.mxu0 %v6421
        %6986 = vmatprep.subr.bf16.mxu0 %v6424
        %6987 = vmatpush1.bf16.msra.mxu0 %v6423
        %6988 = vmatprep.subr.bf16.mxu0 %v6426
        %6989 = vmatpush1.bf16.msra.mxu0 %v6425
        %6990 = vmatprep.subr.bf16.mxu0 %v6428
        %6991 = vmatpush1.bf16.msra.mxu0 %v6427
        %6992 = vmatprep.subr.bf16.mxu0 %v6430
        %6993 = vmatpush1.bf16.msra.mxu0 %v6429
        %6994 = vmatprep.subr.bf16.mxu0 %v6432
        %6995 = vmatpush1.bf16.msra.mxu0 %v6431
        %6996 = vmatprep.subr.bf16.mxu0 %v6434
        %6997 = vmatpush1.bf16.msra.mxu0 %v6433
        %6998 = vmatprep.subr.bf16.mxu0 %v6436
        %6999 = vmatpush1.bf16.msra.mxu0 %v6435
        %7000 = vmatprep.subr.bf16.mxu0 %v6438
        %7001 = vmatpush1.bf16.msra.mxu0 %v6437
        %7002 = vmatprep.subr.bf16.mxu0 %v6440
        %7003 = vmatpush1.bf16.msra.mxu0 %v6439
        %7004 = vmatprep.mubr.bf16.mxu0 %v768
        %7005 = vmatmul.mubr.bf16.gmra.mrb[0].mxu0 %v767
        %v7006 = vpop.f32.mrb[0].mxu0
        %v7007 = vadd.f32 %v6924, %v7006
        %v7008 = vpop.f32.mrb[0].mxu0
        %v7009 = vadd.f32 %v6926, %v7008
        %v7010 = vpop.f32.mrb[0].mxu0
        %v7011 = vadd.f32 %v6928, %v7010
        %v7012 = vpop.f32.mrb[0].mxu0
        %v7013 = vadd.f32 %v6930, %v7012
        %7014 = vmatprep.mubr.bf16.mxu0 %v784
        %7015 = vmatmul.mubr.bf16.gmra.mrb[0].mxu0 %v783
        %v7016 = vpop.f32.mrb[0].mxu0
        %v7017 = vadd.f32 %v6934, %v7016
        %v7018 = vpop.f32.mrb[0].mxu0
        %v7019 = vadd.f32 %v6936, %v7018
        %v7020 = vpop.f32.mrb[0].mxu0
        %v7021 = vadd.f32 %v6938, %v7020
        %v7022 = vpop.f32.mrb[0].mxu0
        %v7023 = vadd.f32 %v6940, %v7022
        %7024 = vmatprep.mubr.bf16.mxu0 %v800
        %7025 = vmatmul.mubr.bf16.gmra.mrb[0].mxu0 %v799
        %v7026 = vpop.f32.mrb[0].mxu0
        %v7027 = vadd.f32 %v6944, %v7026
        %v7028 = vpop.f32.mrb[0].mxu0
        %v7029 = vadd.f32 %v6946, %v7028
        %v7030 = vpop.f32.mrb[0].mxu0
        %v7031 = vadd.f32 %v6948, %v7030
        %v7032 = vpop.f32.mrb[0].mxu0
        %v7033 = vadd.f32 %v6950, %v7032
        %7034 = vmatprep.mubr.bf16.mxu0 %v816
        %7035 = vmatmul.mubr.bf16.gmra.mrb[0].mxu0 %v815
        %v7036 = vpop.f32.mrb[0].mxu0
        %v7037 = vadd.f32 %v6954, %v7036
        %v7038 = vpop.f32.mrb[0].mxu0
        %v7039 = vadd.f32 %v6956, %v7038
        %v7040 = vpop.f32.mrb[0].mxu0
        %v7041 = vadd.f32 %v6958, %v7040
        %v7042 = vpop.f32.mrb[0].mxu0
        %v7043 = vadd.f32 %v6960, %v7042
        %7044 = vmatprep.mubr.bf16.mxu0 %v832
        %7045 = vmatmul.mubr.bf16.gmra.mrb[0].mxu0 %v831
        %v7046 = vpop.f32.mrb[0].mxu0
        %v7047 = vadd.f32 %v6964, %v7046
        %v7048 = vpop.f32.mrb[0].mxu0
        %v7049 = vadd.f32 %v6966, %v7048
        %v7050 = vpop.f32.mrb[0].mxu0
        %v7051 = vadd.f32 %v6968, %v7050
        %v7052 = vpop.f32.mrb[0].mxu0
        %v7053 = vadd.f32 %v6970, %v7052
        %7054 = vdwg.mxu0
        %7055 = vmatprep.subr.bf16.mxu0 %v6442
        %7056 = vmatpush1.bf16.msra.mxu0 %v6441
        %7057 = vmatprep.subr.bf16.mxu0 %v6444
        %7058 = vmatpush1.bf16.msra.mxu0 %v6443
        %7059 = vmatprep.subr.bf16.mxu0 %v6446
        %7060 = vmatpush1.bf16.msra.mxu0 %v6445
        %7061 = vmatprep.subr.bf16.mxu0 %v6448
        %7062 = vmatpush1.bf16.msra.mxu0 %v6447
        %7063 = vmatprep.subr.bf16.mxu0 %v6450
        %7064 = vmatpush1.bf16.msra.mxu0 %v6449
        %7065 = vmatprep.subr.bf16.mxu0 %v6452
        %7066 = vmatpush1.bf16.msra.mxu0 %v6451
        %7067 = vmatprep.subr.bf16.mxu0 %v6454
        %7068 = vmatpush1.bf16.msra.mxu0 %v6453
        %7069 = vmatprep.subr.bf16.mxu0 %v6456
        %7070 = vmatpush1.bf16.msra.mxu0 %v6455
        %7071 = vmatprep.subr.bf16.mxu0 %v6458
        %7072 = vmatpush1.bf16.msra.mxu0 %v6457
        %7073 = vmatprep.subr.bf16.mxu0 %v6460
        %7074 = vmatpush1.bf16.msra.mxu0 %v6459
        %7075 = vmatprep.subr.bf16.mxu0 %v6462
        %7076 = vmatpush1.bf16.msra.mxu0 %v6461
        %7077 = vmatprep.subr.bf16.mxu0 %v6464
        %7078 = vmatpush1.bf16.msra.mxu0 %v6463
        %7079 = vmatprep.subr.bf16.mxu0 %v6466
        %7080 = vmatpush1.bf16.msra.mxu0 %v6465
        %7081 = vmatprep.subr.bf16.mxu0 %v6468
        %7082 = vmatpush1.bf16.msra.mxu0 %v6467
        %7083 = vmatprep.subr.bf16.mxu0 %v6470
        %7084 = vmatpush1.bf16.msra.mxu0 %v6469
        %7085 = vmatprep.subr.bf16.mxu0 %v6472
        %7086 = vmatpush1.bf16.msra.mxu0 %v6471
        %7087 = vmatprep.mubr.bf16.mxu0 %v770
        %7088 = vmatmul.mubr.bf16.gmra.mrb[0].mxu0 %v769
        %v7089 = vpop.f32.mrb[0].mxu0
        %v7090 = vadd.f32 %v7007, %v7089
        %v7091 = vpop.f32.mrb[0].mxu0
        %v7092 = vadd.f32 %v7009, %v7091
        %v7093 = vpop.f32.mrb[0].mxu0
        %v7094 = vadd.f32 %v7011, %v7093
        %v7095 = vpop.f32.mrb[0].mxu0
        %v7096 = vadd.f32 %v7013, %v7095
        %7097 = vmatprep.mubr.bf16.mxu0 %v786
        %7098 = vmatmul.mubr.bf16.gmra.mrb[0].mxu0 %v785
        %v7099 = vpop.f32.mrb[0].mxu0
        %v7100 = vadd.f32 %v7017, %v7099
        %v7101 = vpop.f32.mrb[0].mxu0
        %v7102 = vadd.f32 %v7019, %v7101
        %v7103 = vpop.f32.mrb[0].mxu0
        %v7104 = vadd.f32 %v7021, %v7103
        %v7105 = vpop.f32.mrb[0].mxu0
        %v7106 = vadd.f32 %v7023, %v7105
        %7107 = vmatprep.mubr.bf16.mxu0 %v802
        %7108 = vmatmul.mubr.bf16.gmra.mrb[0].mxu0 %v801
        %v7109 = vpop.f32.mrb[0].mxu0
        %v7110 = vadd.f32 %v7027, %v7109
        %v7111 = vpop.f32.mrb[0].mxu0
        %v7112 = vadd.f32 %v7029, %v7111
        %v7113 = vpop.f32.mrb[0].mxu0
        %v7114 = vadd.f32 %v7031, %v7113
        %v7115 = vpop.f32.mrb[0].mxu0
        %v7116 = vadd.f32 %v7033, %v7115
        %7117 = vmatprep.mubr.bf16.mxu0 %v818
        %7118 = vmatmul.mubr.bf16.gmra.mrb[0].mxu0 %v817
        %v7119 = vpop.f32.mrb[0].mxu0
        %v7120 = vadd.f32 %v7037, %v7119
        %v7121 = vpop.f32.mrb[0].mxu0
        %v7122 = vadd.f32 %v7039, %v7121
        %v7123 = vpop.f32.mrb[0].mxu0
        %v7124 = vadd.f32 %v7041, %v7123
        %v7125 = vpop.f32.mrb[0].mxu0
        %v7126 = vadd.f32 %v7043, %v7125
        %7127 = vmatprep.mubr.bf16.mxu0 %v834
        %7128 = vmatmul.mubr.bf16.gmra.mrb[0].mxu0 %v833
        %v7129 = vpop.f32.mrb[0].mxu0
        %v7130 = vadd.f32 %v7047, %v7129
        %v7131 = vpop.f32.mrb[0].mxu0
        %v7132 = vadd.f32 %v7049, %v7131
        %v7133 = vpop.f32.mrb[0].mxu0
        %v7134 = vadd.f32 %v7051, %v7133
        %v7135 = vpop.f32.mrb[0].mxu0
        %v7136 = vadd.f32 %v7053, %v7135
        %7137 = vdwg.mxu0
        %7138 = vmatprep.subr.bf16.mxu0 %v6474
        %7139 = vmatpush1.bf16.msra.mxu0 %v6473
        %7140 = vmatprep.subr.bf16.mxu0 %v6476
        %7141 = vmatpush1.bf16.msra.mxu0 %v6475
        %7142 = vmatprep.subr.bf16.mxu0 %v6478
        %7143 = vmatpush1.bf16.msra.mxu0 %v6477
        %7144 = vmatprep.subr.bf16.mxu0 %v6480
        %7145 = vmatpush1.bf16.msra.mxu0 %v6479
        %7146 = vmatprep.subr.bf16.mxu0 %v6482
        %7147 = vmatpush1.bf16.msra.mxu0 %v6481
        %7148 = vmatprep.subr.bf16.mxu0 %v6484
        %7149 = vmatpush1.bf16.msra.mxu0 %v6483
        %7150 = vmatprep.subr.bf16.mxu0 %v6486
        %7151 = vmatpush1.bf16.msra.mxu0 %v6485
        %7152 = vmatprep.subr.bf16.mxu0 %v6488
        %7153 = vmatpush1.bf16.msra.mxu0 %v6487
        %7154 = vmatprep.subr.bf16.mxu0 %v6490
        %7155 = vmatpush1.bf16.msra.mxu0 %v6489
        %7156 = vmatprep.subr.bf16.mxu0 %v6492
        %7157 = vmatpush1.bf16.msra.mxu0 %v6491
        %7158 = vmatprep.subr.bf16.mxu0 %v6494
        %7159 = vmatpush1.bf16.msra.mxu0 %v6493
        %7160 = vmatprep.subr.bf16.mxu0 %v6496
        %7161 = vmatpush1.bf16.msra.mxu0 %v6495
        %7162 = vmatprep.subr.bf16.mxu0 %v6498
        %7163 = vmatpush1.bf16.msra.mxu0 %v6497
        %7164 = vmatprep.subr.bf16.mxu0 %v6500
        %7165 = vmatpush1.bf16.msra.mxu0 %v6499
        %7166 = vmatprep.subr.bf16.mxu0 %v6502
        %7167 = vmatpush1.bf16.msra.mxu0 %v6501
        %7168 = vmatprep.subr.bf16.mxu0 %v6504
        %7169 = vmatpush1.bf16.msra.mxu0 %v6503
        %7170 = vmatprep.mubr.bf16.mxu0 %v772
        %7171 = vmatmul.mubr.bf16.gmra.mrb[0].mxu0 %v771
        %v7172 = vpop.f32.mrb[0].mxu0
        %v7173 = vadd.f32 %v7090, %v7172
        %v7174 = vpop.f32.mrb[0].mxu0
        %v7175 = vadd.f32 %v7092, %v7174
        %v7176 = vpop.f32.mrb[0].mxu0
        %v7177 = vadd.f32 %v7094, %v7176
        %v7178 = vpop.f32.mrb[0].mxu0
        %v7179 = vadd.f32 %v7096, %v7178
        %7180 = vmatprep.mubr.bf16.mxu0 %v788
        %7181 = vmatmul.mubr.bf16.gmra.mrb[0].mxu0 %v787
        %v7182 = vpop.f32.mrb[0].mxu0
        %v7183 = vadd.f32 %v7100, %v7182
        %v7184 = vpop.f32.mrb[0].mxu0
        %v7185 = vadd.f32 %v7102, %v7184
        %v7186 = vpop.f32.mrb[0].mxu0
        %v7187 = vadd.f32 %v7104, %v7186
        %v7188 = vpop.f32.mrb[0].mxu0
        %v7189 = vadd.f32 %v7106, %v7188
        %7190 = vmatprep.mubr.bf16.mxu0 %v804
        %7191 = vmatmul.mubr.bf16.gmra.mrb[0].mxu0 %v803
        %v7192 = vpop.f32.mrb[0].mxu0
        %v7193 = vadd.f32 %v7110, %v7192
        %v7194 = vpop.f32.mrb[0].mxu0
        %v7195 = vadd.f32 %v7112, %v7194
        %v7196 = vpop.f32.mrb[0].mxu0
        %v7197 = vadd.f32 %v7114, %v7196
        %v7198 = vpop.f32.mrb[0].mxu0
        %v7199 = vadd.f32 %v7116, %v7198
        %7200 = vmatprep.mubr.bf16.mxu0 %v820
        %7201 = vmatmul.mubr.bf16.gmra.mrb[0].mxu0 %v819
        %v7202 = vpop.f32.mrb[0].mxu0
        %v7203 = vadd.f32 %v7120, %v7202
        %v7204 = vpop.f32.mrb[0].mxu0
        %v7205 = vadd.f32 %v7122, %v7204
        %v7206 = vpop.f32.mrb[0].mxu0
        %v7207 = vadd.f32 %v7124, %v7206
        %v7208 = vpop.f32.mrb[0].mxu0
        %v7209 = vadd.f32 %v7126, %v7208
        %7210 = vmatprep.mubr.bf16.mxu0 %v836
        %7211 = vmatmul.mubr.bf16.gmra.mrb[0].mxu0 %v835
        %v7212 = vpop.f32.mrb[0].mxu0
        %v7213 = vadd.f32 %v7130, %v7212
        %v7214 = vpop.f32.mrb[0].mxu0
        %v7215 = vadd.f32 %v7132, %v7214
        %v7216 = vpop.f32.mrb[0].mxu0
        %v7217 = vadd.f32 %v7134, %v7216
        %v7218 = vpop.f32.mrb[0].mxu0
        %v7219 = vadd.f32 %v7136, %v7218
        %7220 = vdwg.mxu0
        %7221 = vmatprep.subr.bf16.mxu0 %v6506
        %7222 = vmatpush1.bf16.msra.mxu0 %v6505
        %7223 = vmatprep.subr.bf16.mxu0 %v6508
        %7224 = vmatpush1.bf16.msra.mxu0 %v6507
        %7225 = vmatprep.subr.bf16.mxu0 %v6510
        %7226 = vmatpush1.bf16.msra.mxu0 %v6509
        %7227 = vmatprep.subr.bf16.mxu0 %v6512
        %7228 = vmatpush1.bf16.msra.mxu0 %v6511
        %7229 = vmatprep.subr.bf16.mxu0 %v6514
        %7230 = vmatpush1.bf16.msra.mxu0 %v6513
        %7231 = vmatprep.subr.bf16.mxu0 %v6516
        %7232 = vmatpush1.bf16.msra.mxu0 %v6515
        %7233 = vmatprep.subr.bf16.mxu0 %v6518
        %7234 = vmatpush1.bf16.msra.mxu0 %v6517
        %7235 = vmatprep.subr.bf16.mxu0 %v6520
        %7236 = vmatpush1.bf16.msra.mxu0 %v6519
        %7237 = vmatprep.subr.bf16.mxu0 %v6522
        %7238 = vmatpush1.bf16.msra.mxu0 %v6521
        %7239 = vmatprep.subr.bf16.mxu0 %v6524
        %7240 = vmatpush1.bf16.msra.mxu0 %v6523
        %7241 = vmatprep.subr.bf16.mxu0 %v6526
        %7242 = vmatpush1.bf16.msra.mxu0 %v6525
        %7243 = vmatprep.subr.bf16.mxu0 %v6528
        %7244 = vmatpush1.bf16.msra.mxu0 %v6527
        %7245 = vmatprep.subr.bf16.mxu0 %v6530
        %7246 = vmatpush1.bf16.msra.mxu0 %v6529
        %7247 = vmatprep.subr.bf16.mxu0 %v6532
        %7248 = vmatpush1.bf16.msra.mxu0 %v6531
        %7249 = vmatprep.subr.bf16.mxu0 %v6534
        %7250 = vmatpush1.bf16.msra.mxu0 %v6533
        %7251 = vmatprep.subr.bf16.mxu0 %v6536
        %7252 = vmatpush1.bf16.msra.mxu0 %v6535
        %7253 = vmatprep.mubr.bf16.mxu0 %v774
        %7254 = vmatmul.mubr.bf16.gmra.mrb[0].mxu0 %v773
        %v7255 = vpop.f32.mrb[0].mxu0
        %v7256 = vadd.f32 %v7173, %v7255
        %v7257 = vpop.f32.mrb[0].mxu0
        %v7258 = vadd.f32 %v7175, %v7257
        %v7259 = vpop.f32.mrb[0].mxu0
        %v7260 = vadd.f32 %v7177, %v7259
        %v7261 = vpop.f32.mrb[0].mxu0
        %v7262 = vadd.f32 %v7179, %v7261
        %7263 = vmatprep.mubr.bf16.mxu0 %v790
        %7264 = vmatmul.mubr.bf16.gmra.mrb[0].mxu0 %v789
        %v7265 = vpop.f32.mrb[0].mxu0
        %v7266 = vadd.f32 %v7183, %v7265
        %v7267 = vpop.f32.mrb[0].mxu0
        %v7268 = vadd.f32 %v7185, %v7267
        %v7269 = vpop.f32.mrb[0].mxu0
        %v7270 = vadd.f32 %v7187, %v7269
        %v7271 = vpop.f32.mrb[0].mxu0
        %v7272 = vadd.f32 %v7189, %v7271
        %7273 = vmatprep.mubr.bf16.mxu0 %v806
        %7274 = vmatmul.mubr.bf16.gmra.mrb[0].mxu0 %v805
        %v7275 = vpop.f32.mrb[0].mxu0
        %v7276 = vadd.f32 %v7193, %v7275
        %v7277 = vpop.f32.mrb[0].mxu0
        %v7278 = vadd.f32 %v7195, %v7277
        %v7279 = vpop.f32.mrb[0].mxu0
        %v7280 = vadd.f32 %v7197, %v7279
        %v7281 = vpop.f32.mrb[0].mxu0
        %v7282 = vadd.f32 %v7199, %v7281
        %7283 = vmatprep.mubr.bf16.mxu0 %v822
        %7284 = vmatmul.mubr.bf16.gmra.mrb[0].mxu0 %v821
        %v7285 = vpop.f32.mrb[0].mxu0
        %v7286 = vadd.f32 %v7203, %v7285
        %v7287 = vpop.f32.mrb[0].mxu0
        %v7288 = vadd.f32 %v7205, %v7287
        %v7289 = vpop.f32.mrb[0].mxu0
        %v7290 = vadd.f32 %v7207, %v7289
        %v7291 = vpop.f32.mrb[0].mxu0
        %v7292 = vadd.f32 %v7209, %v7291
        %7293 = vmatprep.mubr.bf16.mxu0 %v838
        %7294 = vmatmul.mubr.bf16.gmra.mrb[0].mxu0 %v837
        %v7295 = vpop.f32.mrb[0].mxu0
        %v7296 = vadd.f32 %v7213, %v7295
        %v7297 = vpop.f32.mrb[0].mxu0
        %v7298 = vadd.f32 %v7215, %v7297
        %v7299 = vpop.f32.mrb[0].mxu0
        %v7300 = vadd.f32 %v7217, %v7299
        %v7301 = vpop.f32.mrb[0].mxu0
        %v7302 = vadd.f32 %v7219, %v7301
        %7303 = vdwg.mxu0
        %7304 = vmatprep.subr.bf16.mxu0 %v6538
        %7305 = vmatpush1.bf16.msra.mxu0 %v6537
        %7306 = vmatprep.subr.bf16.mxu0 %v6540
        %7307 = vmatpush1.bf16.msra.mxu0 %v6539
        %7308 = vmatprep.subr.bf16.mxu0 %v6542
        %7309 = vmatpush1.bf16.msra.mxu0 %v6541
        %7310 = vmatprep.subr.bf16.mxu0 %v6544
        %7311 = vmatpush1.bf16.msra.mxu0 %v6543
        %7312 = vmatprep.subr.bf16.mxu0 %v6546
        %7313 = vmatpush1.bf16.msra.mxu0 %v6545
        %7314 = vmatprep.subr.bf16.mxu0 %v6548
        %7315 = vmatpush1.bf16.msra.mxu0 %v6547
        %7316 = vmatprep.subr.bf16.mxu0 %v6550
        %7317 = vmatpush1.bf16.msra.mxu0 %v6549
        %7318 = vmatprep.subr.bf16.mxu0 %v6552
        %7319 = vmatpush1.bf16.msra.mxu0 %v6551
        %7320 = vmatprep.subr.bf16.mxu0 %v6554
        %7321 = vmatpush1.bf16.msra.mxu0 %v6553
        %7322 = vmatprep.subr.bf16.mxu0 %v6556
        %7323 = vmatpush1.bf16.msra.mxu0 %v6555
        %7324 = vmatprep.subr.bf16.mxu0 %v6558
        %7325 = vmatpush1.bf16.msra.mxu0 %v6557
        %7326 = vmatprep.subr.bf16.mxu0 %v6560
        %7327 = vmatpush1.bf16.msra.mxu0 %v6559
        %7328 = vmatprep.subr.bf16.mxu0 %v6562
        %7329 = vmatpush1.bf16.msra.mxu0 %v6561
        %7330 = vmatprep.subr.bf16.mxu0 %v6564
        %7331 = vmatpush1.bf16.msra.mxu0 %v6563
        %7332 = vmatprep.subr.bf16.mxu0 %v6566
        %7333 = vmatpush1.bf16.msra.mxu0 %v6565
        %7334 = vmatprep.subr.bf16.mxu0 %v6568
        %7335 = vmatpush1.bf16.msra.mxu0 %v6567
        %7336 = vmatprep.mubr.bf16.mxu0 %v776
        %7337 = vmatmul.mubr.bf16.gmra.mrb[0].mxu0 %v775
        %v7338 = vpop.f32.mrb[0].mxu0
        %v7339 = vadd.f32 %v7256, %v7338
        %v7340 = vpop.f32.mrb[0].mxu0
        %v7341 = vadd.f32 %v7258, %v7340
        %v7342 = vpop.f32.mrb[0].mxu0
        %v7343 = vadd.f32 %v7260, %v7342
        %v7344 = vpop.f32.mrb[0].mxu0
        %v7345 = vadd.f32 %v7262, %v7344
        %7346 = vmatprep.mubr.bf16.mxu0 %v792
        %7347 = vmatmul.mubr.bf16.gmra.mrb[0].mxu0 %v791
        %v7348 = vpop.f32.mrb[0].mxu0
        %v7349 = vadd.f32 %v7266, %v7348
        %v7350 = vpop.f32.mrb[0].mxu0
        %v7351 = vadd.f32 %v7268, %v7350
        %v7352 = vpop.f32.mrb[0].mxu0
        %v7353 = vadd.f32 %v7270, %v7352
        %v7354 = vpop.f32.mrb[0].mxu0
        %v7355 = vadd.f32 %v7272, %v7354
        %7356 = vmatprep.mubr.bf16.mxu0 %v808
        %7357 = vmatmul.mubr.bf16.gmra.mrb[0].mxu0 %v807
        %v7358 = vpop.f32.mrb[0].mxu0
        %v7359 = vadd.f32 %v7276, %v7358
        %v7360 = vpop.f32.mrb[0].mxu0
        %v7361 = vadd.f32 %v7278, %v7360
        %v7362 = vpop.f32.mrb[0].mxu0
        %v7363 = vadd.f32 %v7280, %v7362
        %v7364 = vpop.f32.mrb[0].mxu0
        %v7365 = vadd.f32 %v7282, %v7364
        %7366 = vmatprep.mubr.bf16.mxu0 %v824
        %7367 = vmatmul.mubr.bf16.gmra.mrb[0].mxu0 %v823
        %v7368 = vpop.f32.mrb[0].mxu0
        %v7369 = vadd.f32 %v7286, %v7368
        %v7370 = vpop.f32.mrb[0].mxu0
        %v7371 = vadd.f32 %v7288, %v7370
        %v7372 = vpop.f32.mrb[0].mxu0
        %v7373 = vadd.f32 %v7290, %v7372
        %v7374 = vpop.f32.mrb[0].mxu0
        %v7375 = vadd.f32 %v7292, %v7374
        %7376 = vmatprep.mubr.bf16.mxu0 %v840
        %7377 = vmatmul.mubr.bf16.gmra.mrb[0].mxu0 %v839
        %v7378 = vpop.f32.mrb[0].mxu0
        %v7379 = vadd.f32 %v7296, %v7378
        %v7380 = vpop.f32.mrb[0].mxu0
        %v7381 = vadd.f32 %v7298, %v7380
        %v7382 = vpop.f32.mrb[0].mxu0
        %v7383 = vadd.f32 %v7300, %v7382
        %v7384 = vpop.f32.mrb[0].mxu0
        %v7385 = vadd.f32 %v7302, %v7384
        %7386 = vdwg.mxu0
        %7387 = vmatprep.subr.bf16.mxu0 %v6570
        %7388 = vmatpush1.bf16.msra.mxu0 %v6569
        %7389 = vmatprep.subr.bf16.mxu0 %v6572
        %7390 = vmatpush1.bf16.msra.mxu0 %v6571
        %7391 = vmatprep.subr.bf16.mxu0 %v6574
        %7392 = vmatpush1.bf16.msra.mxu0 %v6573
        %7393 = vmatprep.subr.bf16.mxu0 %v6576
        %7394 = vmatpush1.bf16.msra.mxu0 %v6575
        %7395 = vmatprep.subr.bf16.mxu0 %v6578
        %7396 = vmatpush1.bf16.msra.mxu0 %v6577
        %7397 = vmatprep.subr.bf16.mxu0 %v6580
        %7398 = vmatpush1.bf16.msra.mxu0 %v6579
        %7399 = vmatprep.subr.bf16.mxu0 %v6582
        %7400 = vmatpush1.bf16.msra.mxu0 %v6581
        %7401 = vmatprep.subr.bf16.mxu0 %v6584
        %7402 = vmatpush1.bf16.msra.mxu0 %v6583
        %7403 = vmatprep.subr.bf16.mxu0 %v6586
        %7404 = vmatpush1.bf16.msra.mxu0 %v6585
        %7405 = vmatprep.subr.bf16.mxu0 %v6588
        %7406 = vmatpush1.bf16.msra.mxu0 %v6587
        %7407 = vmatprep.subr.bf16.mxu0 %v6590
        %7408 = vmatpush1.bf16.msra.mxu0 %v6589
        %7409 = vmatprep.subr.bf16.mxu0 %v6592
        %7410 = vmatpush1.bf16.msra.mxu0 %v6591
        %7411 = vmatprep.subr.bf16.mxu0 %v6594
        %7412 = vmatpush1.bf16.msra.mxu0 %v6593
        %7413 = vmatprep.subr.bf16.mxu0 %v6596
        %7414 = vmatpush1.bf16.msra.mxu0 %v6595
        %7415 = vmatprep.subr.bf16.mxu0 %v6598
        %7416 = vmatpush1.bf16.msra.mxu0 %v6597
        %7417 = vmatprep.subr.bf16.mxu0 %v6600
        %7418 = vmatpush1.bf16.msra.mxu0 %v6599
        %7419 = vmatprep.mubr.bf16.mxu0 %v778
        %7420 = vmatmul.mubr.bf16.gmra.mrb[0].mxu0 %v777
        %v7421 = vpop.f32.mrb[0].mxu0
        %v7422 = vadd.f32 %v7339, %v7421
        %v7423 = vpop.f32.mrb[0].mxu0
        %v7424 = vadd.f32 %v7341, %v7423
        %v7425 = vpop.f32.mrb[0].mxu0
        %v7426 = vadd.f32 %v7343, %v7425
        %v7427 = vpop.f32.mrb[0].mxu0
        %v7428 = vadd.f32 %v7345, %v7427
        %7429 = vmatprep.mubr.bf16.mxu0 %v794
        %7430 = vmatmul.mubr.bf16.gmra.mrb[0].mxu0 %v793
        %v7431 = vpop.f32.mrb[0].mxu0
        %v7432 = vadd.f32 %v7349, %v7431
        %v7433 = vpop.f32.mrb[0].mxu0
        %v7434 = vadd.f32 %v7351, %v7433
        %v7435 = vpop.f32.mrb[0].mxu0
        %v7436 = vadd.f32 %v7353, %v7435
        %v7437 = vpop.f32.mrb[0].mxu0
        %v7438 = vadd.f32 %v7355, %v7437
        %7439 = vmatprep.mubr.bf16.mxu0 %v810
        %7440 = vmatmul.mubr.bf16.gmra.mrb[0].mxu0 %v809
        %v7441 = vpop.f32.mrb[0].mxu0
        %v7442 = vadd.f32 %v7359, %v7441
        %v7443 = vpop.f32.mrb[0].mxu0
        %v7444 = vadd.f32 %v7361, %v7443
        %v7445 = vpop.f32.mrb[0].mxu0
        %v7446 = vadd.f32 %v7363, %v7445
        %v7447 = vpop.f32.mrb[0].mxu0
        %v7448 = vadd.f32 %v7365, %v7447
        %7449 = vmatprep.mubr.bf16.mxu0 %v826
        %7450 = vmatmul.mubr.bf16.gmra.mrb[0].mxu0 %v825
        %v7451 = vpop.f32.mrb[0].mxu0
        %v7452 = vadd.f32 %v7369, %v7451
        %v7453 = vpop.f32.mrb[0].mxu0
        %v7454 = vadd.f32 %v7371, %v7453
        %v7455 = vpop.f32.mrb[0].mxu0
        %v7456 = vadd.f32 %v7373, %v7455
        %v7457 = vpop.f32.mrb[0].mxu0
        %v7458 = vadd.f32 %v7375, %v7457
        %7459 = vmatprep.mubr.bf16.mxu0 %v842
        %7460 = vmatmul.mubr.bf16.gmra.mrb[0].mxu0 %v841
        %v7461 = vpop.f32.mrb[0].mxu0
        %v7462 = vadd.f32 %v7379, %v7461
        %v7463 = vpop.f32.mrb[0].mxu0
        %v7464 = vadd.f32 %v7381, %v7463
        %v7465 = vpop.f32.mrb[0].mxu0
        %v7466 = vadd.f32 %v7383, %v7465
        %v7467 = vpop.f32.mrb[0].mxu0
        %v7468 = vadd.f32 %v7385, %v7467
        %7469 = vdwg.mxu0
        %7470 = vmatprep.subr.bf16.mxu0 %v6602
        %7471 = vmatpush1.bf16.msra.mxu0 %v6601
        %7472 = vmatprep.subr.bf16.mxu0 %v6604
        %7473 = vmatpush1.bf16.msra.mxu0 %v6603
        %7474 = vmatprep.subr.bf16.mxu0 %v6606
        %7475 = vmatpush1.bf16.msra.mxu0 %v6605
        %7476 = vmatprep.subr.bf16.mxu0 %v6608
        %7477 = vmatpush1.bf16.msra.mxu0 %v6607
        %7478 = vmatprep.subr.bf16.mxu0 %v6610
        %7479 = vmatpush1.bf16.msra.mxu0 %v6609
        %7480 = vmatprep.subr.bf16.mxu0 %v6612
        %7481 = vmatpush1.bf16.msra.mxu0 %v6611
        %7482 = vmatprep.subr.bf16.mxu0 %v6614
        %7483 = vmatpush1.bf16.msra.mxu0 %v6613
        %7484 = vmatprep.subr.bf16.mxu0 %v6616
        %7485 = vmatpush1.bf16.msra.mxu0 %v6615
        %7486 = vmatprep.subr.bf16.mxu0 %v6618
        %7487 = vmatpush1.bf16.msra.mxu0 %v6617
        %7488 = vmatprep.subr.bf16.mxu0 %v6620
        %7489 = vmatpush1.bf16.msra.mxu0 %v6619
        %7490 = vmatprep.subr.bf16.mxu0 %v6622
        %7491 = vmatpush1.bf16.msra.mxu0 %v6621
        %7492 = vmatprep.subr.bf16.mxu0 %v6624
        %7493 = vmatpush1.bf16.msra.mxu0 %v6623
        %7494 = vmatprep.subr.bf16.mxu0 %v6626
        %7495 = vmatpush1.bf16.msra.mxu0 %v6625
        %7496 = vmatprep.subr.bf16.mxu0 %v6628
        %7497 = vmatpush1.bf16.msra.mxu0 %v6627
        %7498 = vmatprep.subr.bf16.mxu0 %v6630
        %7499 = vmatpush1.bf16.msra.mxu0 %v6629
        %7500 = vmatprep.subr.bf16.mxu0 %v6632
        %7501 = vmatpush1.bf16.msra.mxu0 %v6631
        %7502 = vmatprep.mubr.bf16.mxu0 %v780
        %7503 = vmatmul.mubr.bf16.gmra.mrb[0].mxu0 %v779
        %v7504 = vpop.f32.mrb[0].mxu0
        %v7505 = vadd.f32 %v7422, %v7504
        %v7506 = vpop.f32.mrb[0].mxu0
        %v7507 = vadd.f32 %v7424, %v7506
        %v7508 = vpop.f32.mrb[0].mxu0
        %v7509 = vadd.f32 %v7426, %v7508
        %v7510 = vpop.f32.mrb[0].mxu0
        %v7511 = vadd.f32 %v7428, %v7510
        %7512 = vmatprep.mubr.bf16.mxu0 %v796
        %7513 = vmatmul.mubr.bf16.gmra.mrb[0].mxu0 %v795
        %v7514 = vpop.f32.mrb[0].mxu0
        %v7515 = vadd.f32 %v7432, %v7514
        %v7516 = vpop.f32.mrb[0].mxu0
        %v7517 = vadd.f32 %v7434, %v7516
        %v7518 = vpop.f32.mrb[0].mxu0
        %v7519 = vadd.f32 %v7436, %v7518
        %v7520 = vpop.f32.mrb[0].mxu0
        %v7521 = vadd.f32 %v7438, %v7520
        %7522 = vmatprep.mubr.bf16.mxu0 %v812
        %7523 = vmatmul.mubr.bf16.gmra.mrb[0].mxu0 %v811
        %v7524 = vpop.f32.mrb[0].mxu0
        %v7525 = vadd.f32 %v7442, %v7524
        %v7526 = vpop.f32.mrb[0].mxu0
        %v7527 = vadd.f32 %v7444, %v7526
        %v7528 = vpop.f32.mrb[0].mxu0
        %v7529 = vadd.f32 %v7446, %v7528
        %v7530 = vpop.f32.mrb[0].mxu0
        %v7531 = vadd.f32 %v7448, %v7530
        %7532 = vmatprep.mubr.bf16.mxu0 %v828
        %7533 = vmatmul.mubr.bf16.gmra.mrb[0].mxu0 %v827
        %v7534 = vpop.f32.mrb[0].mxu0
        %v7535 = vadd.f32 %v7452, %v7534
        %v7536 = vpop.f32.mrb[0].mxu0
        %v7537 = vadd.f32 %v7454, %v7536
        %v7538 = vpop.f32.mrb[0].mxu0
        %v7539 = vadd.f32 %v7456, %v7538
        %v7540 = vpop.f32.mrb[0].mxu0
        %v7541 = vadd.f32 %v7458, %v7540
        %7542 = vmatprep.mubr.bf16.mxu0 %v844
        %7543 = vmatmul.mubr.bf16.gmra.mrb[0].mxu0 %v843
        %v7544 = vpop.f32.mrb[0].mxu0
        %v7545 = vadd.f32 %v7462, %v7544
        %v7546 = vpop.f32.mrb[0].mxu0
        %v7547 = vadd.f32 %v7464, %v7546
        %v7548 = vpop.f32.mrb[0].mxu0
        %v7549 = vadd.f32 %v7466, %v7548
        %v7550 = vpop.f32.mrb[0].mxu0
        %v7551 = vadd.f32 %v7468, %v7550
        %7552 = vdwg.mxu0
        %v7553 = vmul.f32 %v7505, %v7505
        %v7554 = vmul.f32 %v7509, %v7509
        %v7555 = vmul.f32 %v7515, %v7515
        %v7556 = vmul.f32 %v7519, %v7519
        %v7557 = vmul.f32 %v7525, %v7525
        %v7558 = vmul.f32 %v7507, %v7507
        %v7559 = vmul.f32 %v7511, %v7511
        %v7560 = vmul.f32 %v7517, %v7517
        %v7561 = vmul.f32 %v7521, %v7521
        %v7562 = vmul.f32 %v7527, %v7527
        %v7563 = vadd.f32 %v7553, %v7558
        %v7564 = vadd.f32 %v7554, %v7559
        %v7565 = vadd.f32 %v7555, %v7560
        %v7566 = vadd.f32 %v7556, %v7561
        %v7567 = vadd.f32 %v7557, %v7562
        %v7568 = vrsqrt.pop %v7563
        %v7569 = vmul.f32 %v7563, %v7568
        %vm7570 = vcmp.eq.f32.partialorder %v7563, inf
        %v7571 = vsel %vm7570, %v7563, %v7569
        %vm7572 = vcmp.eq.f32.partialorder %v7563, 0.0
        %v7573 = vand.u32 %v7563, 2147483648
        %v7574 = vsel %vm7572, %v7573, %v7571
        %v7575 = vrsqrt.pop %v7564
        %v7576 = vmul.f32 %v7564, %v7575
        %vm7577 = vcmp.eq.f32.partialorder %v7564, inf
        %v7578 = vsel %vm7577, %v7564, %v7576
        %vm7579 = vcmp.eq.f32.partialorder %v7564, 0.0
        %v7580 = vand.u32 %v7564, 2147483648
        %v7581 = vsel %vm7579, %v7580, %v7578
        %v7582 = vrsqrt.pop %v7565
        %v7583 = vmul.f32 %v7565, %v7582
        %vm7584 = vcmp.eq.f32.partialorder %v7565, inf
        %v7585 = vsel %vm7584, %v7565, %v7583
        %vm7586 = vcmp.eq.f32.partialorder %v7565, 0.0
        %v7587 = vand.u32 %v7565, 2147483648
        %v7588 = vsel %vm7586, %v7587, %v7585
        %v7589 = vrsqrt.pop %v7566
        %v7590 = vmul.f32 %v7566, %v7589
        %vm7591 = vcmp.eq.f32.partialorder %v7566, inf
        %v7592 = vsel %vm7591, %v7566, %v7590
        %vm7593 = vcmp.eq.f32.partialorder %v7566, 0.0
        %v7594 = vand.u32 %v7566, 2147483648
        %v7595 = vsel %vm7593, %v7594, %v7592
        %v7596 = vrsqrt.pop %v7567
        %v7597 = vmul.f32 %v7567, %v7596
        %vm7598 = vcmp.eq.f32.partialorder %v7567, inf
        %v7599 = vsel %vm7598, %v7567, %v7597
        %vm7600 = vcmp.eq.f32.partialorder %v7567, 0.0
        %v7601 = vand.u32 %v7567, 2147483648
        %v7602 = vsel %vm7600, %v7601, %v7599
        %v7603 = vmul.f32 %v7529, %v7529
        %v7604 = vmul.f32 %v7535, %v7535
        %v7605 = vmul.f32 %v7539, %v7539
        %v7606 = vmul.f32 %v7545, %v7545
        %v7607 = vmul.f32 %v7549, %v7549
        %v7608 = vmul.f32 %v7531, %v7531
        %v7609 = vmul.f32 %v7537, %v7537
        %v7610 = vmul.f32 %v7541, %v7541
        %v7611 = vmul.f32 %v7547, %v7547
        %v7612 = vmul.f32 %v7551, %v7551
        %v7613 = vadd.f32 %v7603, %v7608
        %v7614 = vadd.f32 %v7604, %v7609
        %v7615 = vadd.f32 %v7605, %v7610
        %v7616 = vadd.f32 %v7606, %v7611
        %v7617 = vadd.f32 %v7607, %v7612
        %v7618 = vrsqrt.pop %v7613
        %v7619 = vmul.f32 %v7613, %v7618
        %vm7620 = vcmp.eq.f32.partialorder %v7613, inf
        %v7621 = vsel %vm7620, %v7613, %v7619
        %vm7622 = vcmp.eq.f32.partialorder %v7613, 0.0
        %v7623 = vand.u32 %v7613, 2147483648
        %v7624 = vsel %vm7622, %v7623, %v7621
        %v7625 = vrsqrt.pop %v7614
        %v7626 = vmul.f32 %v7614, %v7625
        %vm7627 = vcmp.eq.f32.partialorder %v7614, inf
        %v7628 = vsel %vm7627, %v7614, %v7626
        %vm7629 = vcmp.eq.f32.partialorder %v7614, 0.0
        %v7630 = vand.u32 %v7614, 2147483648
        %v7631 = vsel %vm7629, %v7630, %v7628
        %v7632 = vrsqrt.pop %v7615
        %v7633 = vmul.f32 %v7615, %v7632
        %vm7634 = vcmp.eq.f32.partialorder %v7615, inf
        %v7635 = vsel %vm7634, %v7615, %v7633
        %vm7636 = vcmp.eq.f32.partialorder %v7615, 0.0
        %v7637 = vand.u32 %v7615, 2147483648
        %v7638 = vsel %vm7636, %v7637, %v7635
        %v7639 = vrsqrt.pop %v7616
        %v7640 = vmul.f32 %v7616, %v7639
        %vm7641 = vcmp.eq.f32.partialorder %v7616, inf
        %v7642 = vsel %vm7641, %v7616, %v7640
        %vm7643 = vcmp.eq.f32.partialorder %v7616, 0.0
        %v7644 = vand.u32 %v7616, 2147483648
        %v7645 = vsel %vm7643, %v7644, %v7642
        %v7646 = vrsqrt.pop %v7617
        %v7647 = vmul.f32 %v7617, %v7646
        %vm7648 = vcmp.eq.f32.partialorder %v7617, inf
        %v7649 = vsel %vm7648, %v7617, %v7647
        %vm7650 = vcmp.eq.f32.partialorder %v7617, 0.0
        %v7651 = vand.u32 %v7617, 2147483648
        %v7652 = vsel %vm7650, %v7651, %v7649
        %v7653 = vsub.f32 %v7574, %v7624
        %v7654 = vsub.f32 %v7581, %v7631
        %v7655 = vsub.f32 %v7588, %v7638
        %v7656 = vsub.f32 %v7595, %v7645
        %v7657 = vsub.f32 %v7602, %v7652
        %v7658 = vmul.f32 %v7653, %v7653
        %v7659 = vmul.f32 %v7654, %v7654
        %v7660 = vmul.f32 %v7655, %v7655
        %v7661 = vmul.f32 %v7656, %v7656
        %v7662 = vmul.f32 %v7657, %v7657
        %v7663 = vadd.f32 %v5348, %v7658
        %v7664 = vadd.f32 %v5349, %v7659
        %v7665 = vadd.f32 %v5350, %v7660
        %v7666 = vadd.f32 %v5351, %v7661
        %v7667 = vadd.f32 %v5352, %v7662
        %v7668 = vld [vmem:[#allocation5 + $0x18] sm:$0xff]
        %v7669 = vld [vmem:[#allocation5 + $0x38] sm:$0xff]
        %v7670 = vld [vmem:[#allocation5 + $0x58] sm:$0xff]
        %v7671 = vld [vmem:[#allocation5 + $0x78] sm:$0xff]
        %v7672 = vld [vmem:[#allocation5 + $0x98] sm:$0xff]
        %v7673 = vld [vmem:[#allocation5 + $0xb8] sm:$0xff]
        %v7674 = vld [vmem:[#allocation5 + $0xd8] sm:$0xff]
        %v7675 = vld [vmem:[#allocation5 + $0xf8] sm:$0xff]
        %v7676 = vld [vmem:[#allocation5 + $0x118] sm:$0xff]
        %v7677 = vld [vmem:[#allocation5 + $0x138] sm:$0xff]
        %v7678 = vld [vmem:[#allocation5 + $0x158] sm:$0xff]
        %v7679 = vld [vmem:[#allocation5 + $0x178] sm:$0xff]
        %v7680 = vld [vmem:[#allocation5 + $0x198] sm:$0xff]
        %v7681 = vld [vmem:[#allocation5 + $0x1b8] sm:$0xff]
        %v7682 = vld [vmem:[#allocation5 + $0x1d8] sm:$0xff]
        %v7683 = vld [vmem:[#allocation5 + $0x1f8] sm:$0xff]
        %v7684 = vld [vmem:[#allocation5 + $0x218] sm:$0xff]
        %v7685 = vld [vmem:[#allocation5 + $0x238] sm:$0xff]
        %v7686 = vld [vmem:[#allocation5 + $0x258] sm:$0xff]
        %v7687 = vld [vmem:[#allocation5 + $0x278] sm:$0xff]
        %v7688 = vld [vmem:[#allocation5 + $0x298] sm:$0xff]
        %v7689 = vld [vmem:[#allocation5 + $0x2b8] sm:$0xff]
        %v7690 = vld [vmem:[#allocation5 + $0x2d8] sm:$0xff]
        %v7691 = vld [vmem:[#allocation5 + $0x2f8] sm:$0xff]
        %v7692 = vld [vmem:[#allocation5 + $0x318] sm:$0xff]
        %v7693 = vld [vmem:[#allocation5 + $0x338] sm:$0xff]
        %v7694 = vld [vmem:[#allocation5 + $0x358] sm:$0xff]
        %v7695 = vld [vmem:[#allocation5 + $0x378] sm:$0xff]
        %v7696 = vld [vmem:[#allocation5 + $0x398] sm:$0xff]
        %v7697 = vld [vmem:[#allocation5 + $0x3b8] sm:$0xff]
        %v7698 = vld [vmem:[#allocation5 + $0x3d8] sm:$0xff]
        %v7699 = vld [vmem:[#allocation5 + $0x3f8] sm:$0xff]
        %v7700 = vld [vmem:[#allocation5 + $0x418] sm:$0xff]
        %v7701 = vld [vmem:[#allocation5 + $0x438] sm:$0xff]
        %v7702 = vld [vmem:[#allocation5 + $0x458] sm:$0xff]
        %v7703 = vld [vmem:[#allocation5 + $0x478] sm:$0xff]
        %v7704 = vld [vmem:[#allocation5 + $0x498] sm:$0xff]
        %v7705 = vld [vmem:[#allocation5 + $0x4b8] sm:$0xff]
        %v7706 = vld [vmem:[#allocation5 + $0x4d8] sm:$0xff]
        %v7707 = vld [vmem:[#allocation5 + $0x4f8] sm:$0xff]
        %v7708 = vld [vmem:[#allocation5 + $0x518] sm:$0xff]
        %v7709 = vld [vmem:[#allocation5 + $0x538] sm:$0xff]
        %v7710 = vld [vmem:[#allocation5 + $0x558] sm:$0xff]
        %v7711 = vld [vmem:[#allocation5 + $0x578] sm:$0xff]
        %v7712 = vld [vmem:[#allocation5 + $0x598] sm:$0xff]
        %v7713 = vld [vmem:[#allocation5 + $0x5b8] sm:$0xff]
        %v7714 = vld [vmem:[#allocation5 + $0x5d8] sm:$0xff]
        %v7715 = vld [vmem:[#allocation5 + $0x5f8] sm:$0xff]
        %v7716 = vld [vmem:[#allocation5 + $0x618] sm:$0xff]
        %v7717 = vld [vmem:[#allocation5 + $0x638] sm:$0xff]
        %v7718 = vld [vmem:[#allocation5 + $0x658] sm:$0xff]
        %v7719 = vld [vmem:[#allocation5 + $0x678] sm:$0xff]
        %v7720 = vld [vmem:[#allocation5 + $0x698] sm:$0xff]
        %v7721 = vld [vmem:[#allocation5 + $0x6b8] sm:$0xff]
        %v7722 = vld [vmem:[#allocation5 + $0x6d8] sm:$0xff]
        %v7723 = vld [vmem:[#allocation5 + $0x6f8] sm:$0xff]
        %v7724 = vld [vmem:[#allocation5 + $0x718] sm:$0xff]
        %v7725 = vld [vmem:[#allocation5 + $0x738] sm:$0xff]
        %v7726 = vld [vmem:[#allocation5 + $0x758] sm:$0xff]
        %v7727 = vld [vmem:[#allocation5 + $0x778] sm:$0xff]
        %v7728 = vld [vmem:[#allocation5 + $0x798] sm:$0xff]
        %v7729 = vld [vmem:[#allocation5 + $0x7b8] sm:$0xff]
        %v7730 = vld [vmem:[#allocation5 + $0x7d8] sm:$0xff]
        %v7731 = vld [vmem:[#allocation5 + $0x7f8] sm:$0xff]
        %v7732 = vld [vmem:[#allocation5 + $0x818] sm:$0xff]
        %v7733 = vld [vmem:[#allocation5 + $0x838] sm:$0xff]
        %v7734 = vld [vmem:[#allocation5 + $0x858] sm:$0xff]
        %v7735 = vld [vmem:[#allocation5 + $0x878] sm:$0xff]
        %v7736 = vld [vmem:[#allocation5 + $0x898] sm:$0xff]
        %v7737 = vld [vmem:[#allocation5 + $0x8b8] sm:$0xff]
        %v7738 = vld [vmem:[#allocation5 + $0x8d8] sm:$0xff]
        %v7739 = vld [vmem:[#allocation5 + $0x8f8] sm:$0xff]
        %v7740 = vld [vmem:[#allocation5 + $0x918] sm:$0xff]
        %v7741 = vld [vmem:[#allocation5 + $0x938] sm:$0xff]
        %v7742 = vld [vmem:[#allocation5 + $0x958] sm:$0xff]
        %v7743 = vld [vmem:[#allocation5 + $0x978] sm:$0xff]
        %v7744 = vld [vmem:[#allocation5 + $0x998] sm:$0xff]
        %v7745 = vld [vmem:[#allocation5 + $0x9b8] sm:$0xff]
        %v7746 = vld [vmem:[#allocation5 + $0x9d8] sm:$0xff]
        %v7747 = vld [vmem:[#allocation5 + $0x9f8] sm:$0xff]
        %v7748 = vld [vmem:[#allocation5 + $0xa18] sm:$0xff]
        %v7749 = vld [vmem:[#allocation5 + $0xa38] sm:$0xff]
        %v7750 = vld [vmem:[#allocation5 + $0xa58] sm:$0xff]
        %v7751 = vld [vmem:[#allocation5 + $0xa78] sm:$0xff]
        %v7752 = vld [vmem:[#allocation5 + $0xa98] sm:$0xff]
        %v7753 = vld [vmem:[#allocation5 + $0xab8] sm:$0xff]
        %v7754 = vld [vmem:[#allocation5 + $0xad8] sm:$0xff]
        %v7755 = vld [vmem:[#allocation5 + $0xaf8] sm:$0xff]
        %v7756 = vld [vmem:[#allocation5 + $0xb18] sm:$0xff]
        %v7757 = vld [vmem:[#allocation5 + $0xb38] sm:$0xff]
        %v7758 = vld [vmem:[#allocation5 + $0xb58] sm:$0xff]
        %v7759 = vld [vmem:[#allocation5 + $0xb78] sm:$0xff]
        %v7760 = vld [vmem:[#allocation5 + $0xb98] sm:$0xff]
        %v7761 = vld [vmem:[#allocation5 + $0xbb8] sm:$0xff]
        %v7762 = vld [vmem:[#allocation5 + $0xbd8] sm:$0xff]
        %v7763 = vld [vmem:[#allocation5 + $0xbf8] sm:$0xff]
        %v7764 = vld [vmem:[#allocation5 + $0xc18] sm:$0xff]
        %v7765 = vld [vmem:[#allocation5 + $0xc38] sm:$0xff]
        %v7766 = vld [vmem:[#allocation5 + $0xc58] sm:$0xff]
        %v7767 = vld [vmem:[#allocation5 + $0xc78] sm:$0xff]
        %v7768 = vld [vmem:[#allocation5 + $0xc98] sm:$0xff]
        %v7769 = vld [vmem:[#allocation5 + $0xcb8] sm:$0xff]
        %v7770 = vld [vmem:[#allocation5 + $0xcd8] sm:$0xff]
        %v7771 = vld [vmem:[#allocation5 + $0xcf8] sm:$0xff]
        %v7772 = vld [vmem:[#allocation5 + $0xd18] sm:$0xff]
        %v7773 = vld [vmem:[#allocation5 + $0xd38] sm:$0xff]
        %v7774 = vld [vmem:[#allocation5 + $0xd58] sm:$0xff]
        %v7775 = vld [vmem:[#allocation5 + $0xd78] sm:$0xff]
        %v7776 = vld [vmem:[#allocation5 + $0xd98] sm:$0xff]
        %v7777 = vld [vmem:[#allocation5 + $0xdb8] sm:$0xff]
        %v7778 = vld [vmem:[#allocation5 + $0xdd8] sm:$0xff]
        %v7779 = vld [vmem:[#allocation5 + $0xdf8] sm:$0xff]
        %v7780 = vld [vmem:[#allocation5 + $0xe18] sm:$0xff]
        %v7781 = vld [vmem:[#allocation5 + $0xe38] sm:$0xff]
        %v7782 = vld [vmem:[#allocation5 + $0xe58] sm:$0xff]
        %v7783 = vld [vmem:[#allocation5 + $0xe78] sm:$0xff]
        %v7784 = vld [vmem:[#allocation5 + $0xe98] sm:$0xff]
        %v7785 = vld [vmem:[#allocation5 + $0xeb8] sm:$0xff]
        %v7786 = vld [vmem:[#allocation5 + $0xed8] sm:$0xff]
        %v7787 = vld [vmem:[#allocation5 + $0xef8] sm:$0xff]
        %v7788 = vld [vmem:[#allocation5 + $0xf18] sm:$0xff]
        %v7789 = vld [vmem:[#allocation5 + $0xf38] sm:$0xff]
        %v7790 = vld [vmem:[#allocation5 + $0xf58] sm:$0xff]
        %v7791 = vld [vmem:[#allocation5 + $0xf78] sm:$0xff]
        %v7792 = vld [vmem:[#allocation5 + $0xf98] sm:$0xff]
        %v7793 = vld [vmem:[#allocation5 + $0xfb8] sm:$0xff]
        %v7794 = vld [vmem:[#allocation5 + $0xfd8] sm:$0xff]
        %v7795 = vld [vmem:[#allocation5 + $0xff8] sm:$0xff]
        %v7796 = vld [vmem:[#allocation5 + $0x1018] sm:$0xff]
        %v7797 = vld [vmem:[#allocation5 + $0x1038] sm:$0xff]
        %v7798 = vld [vmem:[#allocation5 + $0x1058] sm:$0xff]
        %v7799 = vld [vmem:[#allocation5 + $0x1078] sm:$0xff]
        %v7800 = vld [vmem:[#allocation5 + $0x1098] sm:$0xff]
        %v7801 = vld [vmem:[#allocation5 + $0x10b8] sm:$0xff]
        %v7802 = vld [vmem:[#allocation5 + $0x10d8] sm:$0xff]
        %v7803 = vld [vmem:[#allocation5 + $0x10f8] sm:$0xff]
        %v7804 = vld [vmem:[#allocation5 + $0x1118] sm:$0xff]
        %v7805 = vld [vmem:[#allocation5 + $0x1138] sm:$0xff]
        %v7806 = vld [vmem:[#allocation5 + $0x1158] sm:$0xff]
        %v7807 = vld [vmem:[#allocation5 + $0x1178] sm:$0xff]
        %v7808 = vld [vmem:[#allocation5 + $0x1198] sm:$0xff]
        %v7809 = vld [vmem:[#allocation5 + $0x11b8] sm:$0xff]
        %v7810 = vld [vmem:[#allocation5 + $0x11d8] sm:$0xff]
        %v7811 = vld [vmem:[#allocation5 + $0x11f8] sm:$0xff]
        %v7812 = vld [vmem:[#allocation5 + $0x1218] sm:$0xff]
        %v7813 = vld [vmem:[#allocation5 + $0x1238] sm:$0xff]
        %v7814 = vld [vmem:[#allocation5 + $0x1258] sm:$0xff]
        %v7815 = vld [vmem:[#allocation5 + $0x1278] sm:$0xff]
        %v7816 = vld [vmem:[#allocation5 + $0x1298] sm:$0xff]
        %v7817 = vld [vmem:[#allocation5 + $0x12b8] sm:$0xff]
        %v7818 = vld [vmem:[#allocation5 + $0x12d8] sm:$0xff]
        %v7819 = vld [vmem:[#allocation5 + $0x12f8] sm:$0xff]
        %v7820 = vld [vmem:[#allocation5 + $0x1318] sm:$0xff]
        %v7821 = vld [vmem:[#allocation5 + $0x1338] sm:$0xff]
        %v7822 = vld [vmem:[#allocation5 + $0x1358] sm:$0xff]
        %v7823 = vld [vmem:[#allocation5 + $0x1378] sm:$0xff]
        %v7824 = vld [vmem:[#allocation5 + $0x1398] sm:$0xff]
        %v7825 = vld [vmem:[#allocation5 + $0x13b8] sm:$0xff]
        %v7826 = vld [vmem:[#allocation5 + $0x13d8] sm:$0xff]
        %v7827 = vld [vmem:[#allocation5 + $0x13f8] sm:$0xff]
        %v7828 = vld [vmem:[#allocation5 + $0x1418] sm:$0xff]
        %v7829 = vld [vmem:[#allocation5 + $0x1438] sm:$0xff]
        %v7830 = vld [vmem:[#allocation5 + $0x1458] sm:$0xff]
        %v7831 = vld [vmem:[#allocation5 + $0x1478] sm:$0xff]
        %v7832 = vld [vmem:[#allocation5 + $0x1498] sm:$0xff]
        %v7833 = vld [vmem:[#allocation5 + $0x14b8] sm:$0xff]
        %v7834 = vld [vmem:[#allocation5 + $0x14d8] sm:$0xff]
        %v7835 = vld [vmem:[#allocation5 + $0x14f8] sm:$0xff]
        %v7836 = vld [vmem:[#allocation5 + $0x1518] sm:$0xff]
        %v7837 = vld [vmem:[#allocation5 + $0x1538] sm:$0xff]
        %v7838 = vld [vmem:[#allocation5 + $0x1558] sm:$0xff]
        %v7839 = vld [vmem:[#allocation5 + $0x1578] sm:$0xff]
        %v7840 = vld [vmem:[#allocation5 + $0x1598] sm:$0xff]
        %v7841 = vld [vmem:[#allocation5 + $0x15b8] sm:$0xff]
        %v7842 = vld [vmem:[#allocation5 + $0x15d8] sm:$0xff]
        %v7843 = vld [vmem:[#allocation5 + $0x15f8] sm:$0xff]
        %v7844 = vld [vmem:[#allocation5 + $0x1618] sm:$0xff]
        %v7845 = vld [vmem:[#allocation5 + $0x1638] sm:$0xff]
        %v7846 = vld [vmem:[#allocation5 + $0x1658] sm:$0xff]
        %v7847 = vld [vmem:[#allocation5 + $0x1678] sm:$0xff]
        %v7848 = vld [vmem:[#allocation5 + $0x1698] sm:$0xff]
        %v7849 = vld [vmem:[#allocation5 + $0x16b8] sm:$0xff]
        %v7850 = vld [vmem:[#allocation5 + $0x16d8] sm:$0xff]
        %v7851 = vld [vmem:[#allocation5 + $0x16f8] sm:$0xff]
        %v7852 = vld [vmem:[#allocation5 + $0x1718] sm:$0xff]
        %v7853 = vld [vmem:[#allocation5 + $0x1738] sm:$0xff]
        %v7854 = vld [vmem:[#allocation5 + $0x1758] sm:$0xff]
        %v7855 = vld [vmem:[#allocation5 + $0x1778] sm:$0xff]
        %v7856 = vld [vmem:[#allocation5 + $0x1798] sm:$0xff]
        %v7857 = vld [vmem:[#allocation5 + $0x17b8] sm:$0xff]
        %v7858 = vld [vmem:[#allocation5 + $0x17d8] sm:$0xff]
        %v7859 = vld [vmem:[#allocation5 + $0x17f8] sm:$0xff]
        %v7860 = vld [vmem:[#allocation5 + $0x1818] sm:$0xff]
        %v7861 = vld [vmem:[#allocation5 + $0x1838] sm:$0xff]
        %v7862 = vld [vmem:[#allocation5 + $0x1858] sm:$0xff]
        %v7863 = vld [vmem:[#allocation5 + $0x1878] sm:$0xff]
        %v7864 = vld [vmem:[#allocation5 + $0x1898] sm:$0xff]
        %v7865 = vld [vmem:[#allocation5 + $0x18b8] sm:$0xff]
        %v7866 = vld [vmem:[#allocation5 + $0x18d8] sm:$0xff]
        %v7867 = vld [vmem:[#allocation5 + $0x18f8] sm:$0xff]
        %v7868 = vld [vmem:[#allocation5 + $0x1918] sm:$0xff]
        %v7869 = vld [vmem:[#allocation5 + $0x1938] sm:$0xff]
        %v7870 = vld [vmem:[#allocation5 + $0x1958] sm:$0xff]
        %v7871 = vld [vmem:[#allocation5 + $0x1978] sm:$0xff]
        %v7872 = vld [vmem:[#allocation5 + $0x1998] sm:$0xff]
        %v7873 = vld [vmem:[#allocation5 + $0x19b8] sm:$0xff]
        %v7874 = vld [vmem:[#allocation5 + $0x19d8] sm:$0xff]
        %v7875 = vld [vmem:[#allocation5 + $0x19f8] sm:$0xff]
        %v7876 = vld [vmem:[#allocation5 + $0x1a18] sm:$0xff]
        %v7877 = vld [vmem:[#allocation5 + $0x1a38] sm:$0xff]
        %v7878 = vld [vmem:[#allocation5 + $0x1a58] sm:$0xff]
        %v7879 = vld [vmem:[#allocation5 + $0x1a78] sm:$0xff]
        %v7880 = vld [vmem:[#allocation5 + $0x1a98] sm:$0xff]
        %v7881 = vld [vmem:[#allocation5 + $0x1ab8] sm:$0xff]
        %v7882 = vld [vmem:[#allocation5 + $0x1ad8] sm:$0xff]
        %v7883 = vld [vmem:[#allocation5 + $0x1af8] sm:$0xff]
        %v7884 = vld [vmem:[#allocation5 + $0x1b18] sm:$0xff]
        %v7885 = vld [vmem:[#allocation5 + $0x1b38] sm:$0xff]
        %v7886 = vld [vmem:[#allocation5 + $0x1b58] sm:$0xff]
        %v7887 = vld [vmem:[#allocation5 + $0x1b78] sm:$0xff]
        %v7888 = vld [vmem:[#allocation5 + $0x1b98] sm:$0xff]
        %v7889 = vld [vmem:[#allocation5 + $0x1bb8] sm:$0xff]
        %v7890 = vld [vmem:[#allocation5 + $0x1bd8] sm:$0xff]
        %v7891 = vld [vmem:[#allocation5 + $0x1bf8] sm:$0xff]
        %v7892 = vld [vmem:[#allocation5 + $0x1c18] sm:$0xff]
        %v7893 = vld [vmem:[#allocation5 + $0x1c38] sm:$0xff]
        %v7894 = vld [vmem:[#allocation5 + $0x1c58] sm:$0xff]
        %v7895 = vld [vmem:[#allocation5 + $0x1c78] sm:$0xff]
        %v7896 = vld [vmem:[#allocation5 + $0x1c98] sm:$0xff]
        %v7897 = vld [vmem:[#allocation5 + $0x1cb8] sm:$0xff]
        %v7898 = vld [vmem:[#allocation5 + $0x1cd8] sm:$0xff]
        %v7899 = vld [vmem:[#allocation5 + $0x1cf8] sm:$0xff]
        %v7900 = vld [vmem:[#allocation5 + $0x1d18] sm:$0xff]
        %v7901 = vld [vmem:[#allocation5 + $0x1d38] sm:$0xff]
        %v7902 = vld [vmem:[#allocation5 + $0x1d58] sm:$0xff]
        %v7903 = vld [vmem:[#allocation5 + $0x1d78] sm:$0xff]
        %v7904 = vld [vmem:[#allocation5 + $0x1d98] sm:$0xff]
        %v7905 = vld [vmem:[#allocation5 + $0x1db8] sm:$0xff]
        %v7906 = vld [vmem:[#allocation5 + $0x1dd8] sm:$0xff]
        %v7907 = vld [vmem:[#allocation5 + $0x1df8] sm:$0xff]
        %v7908 = vld [vmem:[#allocation5 + $0x1e18] sm:$0xff]
        %v7909 = vld [vmem:[#allocation5 + $0x1e38] sm:$0xff]
        %v7910 = vld [vmem:[#allocation5 + $0x1e58] sm:$0xff]
        %v7911 = vld [vmem:[#allocation5 + $0x1e78] sm:$0xff]
        %v7912 = vld [vmem:[#allocation5 + $0x1e98] sm:$0xff]
        %v7913 = vld [vmem:[#allocation5 + $0x1eb8] sm:$0xff]
        %v7914 = vld [vmem:[#allocation5 + $0x1ed8] sm:$0xff]
        %v7915 = vld [vmem:[#allocation5 + $0x1ef8] sm:$0xff]
        %v7916 = vld [vmem:[#allocation5 + $0x1f18] sm:$0xff]
        %v7917 = vld [vmem:[#allocation5 + $0x1f38] sm:$0xff]
        %v7918 = vld [vmem:[#allocation5 + $0x1f58] sm:$0xff]
        %v7919 = vld [vmem:[#allocation5 + $0x1f78] sm:$0xff]
        %v7920 = vld [vmem:[#allocation5 + $0x1f98] sm:$0xff]
        %v7921 = vld [vmem:[#allocation5 + $0x1fb8] sm:$0xff]
        %v7922 = vld [vmem:[#allocation5 + $0x1fd8] sm:$0xff]
        %v7923 = vld [vmem:[#allocation5 + $0x1ff8] sm:$0xff]
        %v8180 = vunpack.c.l.b16 %v7668
        %v8181 = vunpack.c.h.b16 %v7668
        %v8182 = vunpack.c.l.b16 %v7669
        %v8183 = vunpack.c.h.b16 %v7669
        %v8184 = vunpack.c.l.b16 %v7670
        %v8185 = vunpack.c.h.b16 %v7670
        %v8186 = vunpack.c.l.b16 %v7671
        %v8187 = vunpack.c.h.b16 %v7671
        %v8188 = vunpack.c.l.b16 %v7672
        %v8189 = vunpack.c.h.b16 %v7672
        %v8190 = vunpack.c.l.b16 %v7673
        %v8191 = vunpack.c.h.b16 %v7673
        %v8192 = vunpack.c.l.b16 %v7674
        %v8193 = vunpack.c.h.b16 %v7674
        %v8194 = vunpack.c.l.b16 %v7675
        %v8195 = vunpack.c.h.b16 %v7675
        %v8196 = vunpack.c.l.b16 %v7676
        %v8197 = vunpack.c.h.b16 %v7676
        %v8198 = vunpack.c.l.b16 %v7677
        %v8199 = vunpack.c.h.b16 %v7677
        %v8200 = vunpack.c.l.b16 %v7678
        %v8201 = vunpack.c.h.b16 %v7678
        %v8202 = vunpack.c.l.b16 %v7679
        %v8203 = vunpack.c.h.b16 %v7679
        %v8204 = vunpack.c.l.b16 %v7680
        %v8205 = vunpack.c.h.b16 %v7680
        %v8206 = vunpack.c.l.b16 %v7681
        %v8207 = vunpack.c.h.b16 %v7681
        %v8208 = vunpack.c.l.b16 %v7682
        %v8209 = vunpack.c.h.b16 %v7682
        %v8210 = vunpack.c.l.b16 %v7683
        %v8211 = vunpack.c.h.b16 %v7683
        %v8212 = vunpack.c.l.b16 %v7684
        %v8213 = vunpack.c.h.b16 %v7684
        %v8214 = vunpack.c.l.b16 %v7685
        %v8215 = vunpack.c.h.b16 %v7685
        %v8216 = vunpack.c.l.b16 %v7686
        %v8217 = vunpack.c.h.b16 %v7686
        %v8218 = vunpack.c.l.b16 %v7687
        %v8219 = vunpack.c.h.b16 %v7687
        %v8220 = vunpack.c.l.b16 %v7688
        %v8221 = vunpack.c.h.b16 %v7688
        %v8222 = vunpack.c.l.b16 %v7689
        %v8223 = vunpack.c.h.b16 %v7689
        %v8224 = vunpack.c.l.b16 %v7690
        %v8225 = vunpack.c.h.b16 %v7690
        %v8226 = vunpack.c.l.b16 %v7691
        %v8227 = vunpack.c.h.b16 %v7691
        %v8228 = vunpack.c.l.b16 %v7692
        %v8229 = vunpack.c.h.b16 %v7692
        %v8230 = vunpack.c.l.b16 %v7693
        %v8231 = vunpack.c.h.b16 %v7693
        %v8232 = vunpack.c.l.b16 %v7694
        %v8233 = vunpack.c.h.b16 %v7694
        %v8234 = vunpack.c.l.b16 %v7695
        %v8235 = vunpack.c.h.b16 %v7695
        %v8236 = vunpack.c.l.b16 %v7696
        %v8237 = vunpack.c.h.b16 %v7696
        %v8238 = vunpack.c.l.b16 %v7697
        %v8239 = vunpack.c.h.b16 %v7697
        %v8240 = vunpack.c.l.b16 %v7698
        %v8241 = vunpack.c.h.b16 %v7698
        %v8242 = vunpack.c.l.b16 %v7699
        %v8243 = vunpack.c.h.b16 %v7699
        %v8244 = vunpack.c.l.b16 %v7700
        %v8245 = vunpack.c.h.b16 %v7700
        %v8246 = vunpack.c.l.b16 %v7701
        %v8247 = vunpack.c.h.b16 %v7701
        %v8248 = vunpack.c.l.b16 %v7702
        %v8249 = vunpack.c.h.b16 %v7702
        %v8250 = vunpack.c.l.b16 %v7703
        %v8251 = vunpack.c.h.b16 %v7703
        %v8252 = vunpack.c.l.b16 %v7704
        %v8253 = vunpack.c.h.b16 %v7704
        %v8254 = vunpack.c.l.b16 %v7705
        %v8255 = vunpack.c.h.b16 %v7705
        %v8256 = vunpack.c.l.b16 %v7706
        %v8257 = vunpack.c.h.b16 %v7706
        %v8258 = vunpack.c.l.b16 %v7707
        %v8259 = vunpack.c.h.b16 %v7707
        %v8260 = vunpack.c.l.b16 %v7708
        %v8261 = vunpack.c.h.b16 %v7708
        %v8262 = vunpack.c.l.b16 %v7709
        %v8263 = vunpack.c.h.b16 %v7709
        %v8264 = vunpack.c.l.b16 %v7710
        %v8265 = vunpack.c.h.b16 %v7710
        %v8266 = vunpack.c.l.b16 %v7711
        %v8267 = vunpack.c.h.b16 %v7711
        %v8268 = vunpack.c.l.b16 %v7712
        %v8269 = vunpack.c.h.b16 %v7712
        %v8270 = vunpack.c.l.b16 %v7713
        %v8271 = vunpack.c.h.b16 %v7713
        %v8272 = vunpack.c.l.b16 %v7714
        %v8273 = vunpack.c.h.b16 %v7714
        %v8274 = vunpack.c.l.b16 %v7715
        %v8275 = vunpack.c.h.b16 %v7715
        %v8276 = vunpack.c.l.b16 %v7716
        %v8277 = vunpack.c.h.b16 %v7716
        %v8278 = vunpack.c.l.b16 %v7717
        %v8279 = vunpack.c.h.b16 %v7717
        %v8280 = vunpack.c.l.b16 %v7718
        %v8281 = vunpack.c.h.b16 %v7718
        %v8282 = vunpack.c.l.b16 %v7719
        %v8283 = vunpack.c.h.b16 %v7719
        %v8284 = vunpack.c.l.b16 %v7720
        %v8285 = vunpack.c.h.b16 %v7720
        %v8286 = vunpack.c.l.b16 %v7721
        %v8287 = vunpack.c.h.b16 %v7721
        %v8288 = vunpack.c.l.b16 %v7722
        %v8289 = vunpack.c.h.b16 %v7722
        %v8290 = vunpack.c.l.b16 %v7723
        %v8291 = vunpack.c.h.b16 %v7723
        %v8292 = vunpack.c.l.b16 %v7724
        %v8293 = vunpack.c.h.b16 %v7724
        %v8294 = vunpack.c.l.b16 %v7725
        %v8295 = vunpack.c.h.b16 %v7725
        %v8296 = vunpack.c.l.b16 %v7726
        %v8297 = vunpack.c.h.b16 %v7726
        %v8298 = vunpack.c.l.b16 %v7727
        %v8299 = vunpack.c.h.b16 %v7727
        %v8300 = vunpack.c.l.b16 %v7728
        %v8301 = vunpack.c.h.b16 %v7728
        %v8302 = vunpack.c.l.b16 %v7729
        %v8303 = vunpack.c.h.b16 %v7729
        %v8304 = vunpack.c.l.b16 %v7730
        %v8305 = vunpack.c.h.b16 %v7730
        %v8306 = vunpack.c.l.b16 %v7731
        %v8307 = vunpack.c.h.b16 %v7731
        %v8308 = vunpack.c.l.b16 %v7732
        %v8309 = vunpack.c.h.b16 %v7732
        %v8310 = vunpack.c.l.b16 %v7733
        %v8311 = vunpack.c.h.b16 %v7733
        %v8312 = vunpack.c.l.b16 %v7734
        %v8313 = vunpack.c.h.b16 %v7734
        %v8314 = vunpack.c.l.b16 %v7735
        %v8315 = vunpack.c.h.b16 %v7735
        %v8316 = vunpack.c.l.b16 %v7736
        %v8317 = vunpack.c.h.b16 %v7736
        %v8318 = vunpack.c.l.b16 %v7737
        %v8319 = vunpack.c.h.b16 %v7737
        %v8320 = vunpack.c.l.b16 %v7738
        %v8321 = vunpack.c.h.b16 %v7738
        %v8322 = vunpack.c.l.b16 %v7739
        %v8323 = vunpack.c.h.b16 %v7739
        %v8324 = vunpack.c.l.b16 %v7740
        %v8325 = vunpack.c.h.b16 %v7740
        %v8326 = vunpack.c.l.b16 %v7741
        %v8327 = vunpack.c.h.b16 %v7741
        %v8328 = vunpack.c.l.b16 %v7742
        %v8329 = vunpack.c.h.b16 %v7742
        %v8330 = vunpack.c.l.b16 %v7743
        %v8331 = vunpack.c.h.b16 %v7743
        %v8332 = vunpack.c.l.b16 %v7744
        %v8333 = vunpack.c.h.b16 %v7744
        %v8334 = vunpack.c.l.b16 %v7745
        %v8335 = vunpack.c.h.b16 %v7745
        %v8336 = vunpack.c.l.b16 %v7746
        %v8337 = vunpack.c.h.b16 %v7746
        %v8338 = vunpack.c.l.b16 %v7747
        %v8339 = vunpack.c.h.b16 %v7747
        %v8340 = vunpack.c.l.b16 %v7748
        %v8341 = vunpack.c.h.b16 %v7748
        %v8342 = vunpack.c.l.b16 %v7749
        %v8343 = vunpack.c.h.b16 %v7749
        %v8344 = vunpack.c.l.b16 %v7750
        %v8345 = vunpack.c.h.b16 %v7750
        %v8346 = vunpack.c.l.b16 %v7751
        %v8347 = vunpack.c.h.b16 %v7751
        %v8348 = vunpack.c.l.b16 %v7752
        %v8349 = vunpack.c.h.b16 %v7752
        %v8350 = vunpack.c.l.b16 %v7753
        %v8351 = vunpack.c.h.b16 %v7753
        %v8352 = vunpack.c.l.b16 %v7754
        %v8353 = vunpack.c.h.b16 %v7754
        %v8354 = vunpack.c.l.b16 %v7755
        %v8355 = vunpack.c.h.b16 %v7755
        %v8356 = vunpack.c.l.b16 %v7756
        %v8357 = vunpack.c.h.b16 %v7756
        %v8358 = vunpack.c.l.b16 %v7757
        %v8359 = vunpack.c.h.b16 %v7757
        %v8360 = vunpack.c.l.b16 %v7758
        %v8361 = vunpack.c.h.b16 %v7758
        %v8362 = vunpack.c.l.b16 %v7759
        %v8363 = vunpack.c.h.b16 %v7759
        %v8364 = vunpack.c.l.b16 %v7760
        %v8365 = vunpack.c.h.b16 %v7760
        %v8366 = vunpack.c.l.b16 %v7761
        %v8367 = vunpack.c.h.b16 %v7761
        %v8368 = vunpack.c.l.b16 %v7762
        %v8369 = vunpack.c.h.b16 %v7762
        %v8370 = vunpack.c.l.b16 %v7763
        %v8371 = vunpack.c.h.b16 %v7763
        %v8372 = vunpack.c.l.b16 %v7764
        %v8373 = vunpack.c.h.b16 %v7764
        %v8374 = vunpack.c.l.b16 %v7765
        %v8375 = vunpack.c.h.b16 %v7765
        %v8376 = vunpack.c.l.b16 %v7766
        %v8377 = vunpack.c.h.b16 %v7766
        %v8378 = vunpack.c.l.b16 %v7767
        %v8379 = vunpack.c.h.b16 %v7767
        %v8380 = vunpack.c.l.b16 %v7768
        %v8381 = vunpack.c.h.b16 %v7768
        %v8382 = vunpack.c.l.b16 %v7769
        %v8383 = vunpack.c.h.b16 %v7769
        %v8384 = vunpack.c.l.b16 %v7770
        %v8385 = vunpack.c.h.b16 %v7770
        %v8386 = vunpack.c.l.b16 %v7771
        %v8387 = vunpack.c.h.b16 %v7771
        %v8388 = vunpack.c.l.b16 %v7772
        %v8389 = vunpack.c.h.b16 %v7772
        %v8390 = vunpack.c.l.b16 %v7773
        %v8391 = vunpack.c.h.b16 %v7773
        %v8392 = vunpack.c.l.b16 %v7774
        %v8393 = vunpack.c.h.b16 %v7774
        %v8394 = vunpack.c.l.b16 %v7775
        %v8395 = vunpack.c.h.b16 %v7775
        %v8396 = vunpack.c.l.b16 %v7776
        %v8397 = vunpack.c.h.b16 %v7776
        %v8398 = vunpack.c.l.b16 %v7777
        %v8399 = vunpack.c.h.b16 %v7777
        %v8400 = vunpack.c.l.b16 %v7778
        %v8401 = vunpack.c.h.b16 %v7778
        %v8402 = vunpack.c.l.b16 %v7779
        %v8403 = vunpack.c.h.b16 %v7779
        %v8404 = vunpack.c.l.b16 %v7780
        %v8405 = vunpack.c.h.b16 %v7780
        %v8406 = vunpack.c.l.b16 %v7781
        %v8407 = vunpack.c.h.b16 %v7781
        %v8408 = vunpack.c.l.b16 %v7782
        %v8409 = vunpack.c.h.b16 %v7782
        %v8410 = vunpack.c.l.b16 %v7783
        %v8411 = vunpack.c.h.b16 %v7783
        %v8412 = vunpack.c.l.b16 %v7784
        %v8413 = vunpack.c.h.b16 %v7784
        %v8414 = vunpack.c.l.b16 %v7785
        %v8415 = vunpack.c.h.b16 %v7785
        %v8416 = vunpack.c.l.b16 %v7786
        %v8417 = vunpack.c.h.b16 %v7786
        %v8418 = vunpack.c.l.b16 %v7787
        %v8419 = vunpack.c.h.b16 %v7787
        %v8420 = vunpack.c.l.b16 %v7788
        %v8421 = vunpack.c.h.b16 %v7788
        %v8422 = vunpack.c.l.b16 %v7789
        %v8423 = vunpack.c.h.b16 %v7789
        %v8424 = vunpack.c.l.b16 %v7790
        %v8425 = vunpack.c.h.b16 %v7790
        %v8426 = vunpack.c.l.b16 %v7791
        %v8427 = vunpack.c.h.b16 %v7791
        %v8428 = vunpack.c.l.b16 %v7792
        %v8429 = vunpack.c.h.b16 %v7792
        %v8430 = vunpack.c.l.b16 %v7793
        %v8431 = vunpack.c.h.b16 %v7793
        %v8432 = vunpack.c.l.b16 %v7794
        %v8433 = vunpack.c.h.b16 %v7794
        %v8434 = vunpack.c.l.b16 %v7795
        %v8435 = vunpack.c.h.b16 %v7795
        %v8436 = vunpack.c.l.b16 %v7796
        %v8437 = vunpack.c.h.b16 %v7796
        %v8438 = vunpack.c.l.b16 %v7797
        %v8439 = vunpack.c.h.b16 %v7797
        %v8440 = vunpack.c.l.b16 %v7798
        %v8441 = vunpack.c.h.b16 %v7798
        %v8442 = vunpack.c.l.b16 %v7799
        %v8443 = vunpack.c.h.b16 %v7799
        %v8444 = vunpack.c.l.b16 %v7800
        %v8445 = vunpack.c.h.b16 %v7800
        %v8446 = vunpack.c.l.b16 %v7801
        %v8447 = vunpack.c.h.b16 %v7801
        %v8448 = vunpack.c.l.b16 %v7802
        %v8449 = vunpack.c.h.b16 %v7802
        %v8450 = vunpack.c.l.b16 %v7803
        %v8451 = vunpack.c.h.b16 %v7803
        %v8452 = vunpack.c.l.b16 %v7804
        %v8453 = vunpack.c.h.b16 %v7804
        %v8454 = vunpack.c.l.b16 %v7805
        %v8455 = vunpack.c.h.b16 %v7805
        %v8456 = vunpack.c.l.b16 %v7806
        %v8457 = vunpack.c.h.b16 %v7806
        %v8458 = vunpack.c.l.b16 %v7807
        %v8459 = vunpack.c.h.b16 %v7807
        %v8460 = vunpack.c.l.b16 %v7808
        %v8461 = vunpack.c.h.b16 %v7808
        %v8462 = vunpack.c.l.b16 %v7809
        %v8463 = vunpack.c.h.b16 %v7809
        %v8464 = vunpack.c.l.b16 %v7810
        %v8465 = vunpack.c.h.b16 %v7810
        %v8466 = vunpack.c.l.b16 %v7811
        %v8467 = vunpack.c.h.b16 %v7811
        %v8468 = vunpack.c.l.b16 %v7812
        %v8469 = vunpack.c.h.b16 %v7812
        %v8470 = vunpack.c.l.b16 %v7813
        %v8471 = vunpack.c.h.b16 %v7813
        %v8472 = vunpack.c.l.b16 %v7814
        %v8473 = vunpack.c.h.b16 %v7814
        %v8474 = vunpack.c.l.b16 %v7815
        %v8475 = vunpack.c.h.b16 %v7815
        %v8476 = vunpack.c.l.b16 %v7816
        %v8477 = vunpack.c.h.b16 %v7816
        %v8478 = vunpack.c.l.b16 %v7817
        %v8479 = vunpack.c.h.b16 %v7817
        %v8480 = vunpack.c.l.b16 %v7818
        %v8481 = vunpack.c.h.b16 %v7818
        %v8482 = vunpack.c.l.b16 %v7819
        %v8483 = vunpack.c.h.b16 %v7819
        %v8484 = vunpack.c.l.b16 %v7820
        %v8485 = vunpack.c.h.b16 %v7820
        %v8486 = vunpack.c.l.b16 %v7821
        %v8487 = vunpack.c.h.b16 %v7821
        %v8488 = vunpack.c.l.b16 %v7822
        %v8489 = vunpack.c.h.b16 %v7822
        %v8490 = vunpack.c.l.b16 %v7823
        %v8491 = vunpack.c.h.b16 %v7823
        %v8492 = vunpack.c.l.b16 %v7824
        %v8493 = vunpack.c.h.b16 %v7824
        %v8494 = vunpack.c.l.b16 %v7825
        %v8495 = vunpack.c.h.b16 %v7825
        %v8496 = vunpack.c.l.b16 %v7826
        %v8497 = vunpack.c.h.b16 %v7826
        %v8498 = vunpack.c.l.b16 %v7827
        %v8499 = vunpack.c.h.b16 %v7827
        %v8500 = vunpack.c.l.b16 %v7828
        %v8501 = vunpack.c.h.b16 %v7828
        %v8502 = vunpack.c.l.b16 %v7829
        %v8503 = vunpack.c.h.b16 %v7829
        %v8504 = vunpack.c.l.b16 %v7830
        %v8505 = vunpack.c.h.b16 %v7830
        %v8506 = vunpack.c.l.b16 %v7831
        %v8507 = vunpack.c.h.b16 %v7831
        %v8508 = vunpack.c.l.b16 %v7832
        %v8509 = vunpack.c.h.b16 %v7832
        %v8510 = vunpack.c.l.b16 %v7833
        %v8511 = vunpack.c.h.b16 %v7833
        %v8512 = vunpack.c.l.b16 %v7834
        %v8513 = vunpack.c.h.b16 %v7834
        %v8514 = vunpack.c.l.b16 %v7835
        %v8515 = vunpack.c.h.b16 %v7835
        %v8516 = vunpack.c.l.b16 %v7836
        %v8517 = vunpack.c.h.b16 %v7836
        %v8518 = vunpack.c.l.b16 %v7837
        %v8519 = vunpack.c.h.b16 %v7837
        %v8520 = vunpack.c.l.b16 %v7838
        %v8521 = vunpack.c.h.b16 %v7838
        %v8522 = vunpack.c.l.b16 %v7839
        %v8523 = vunpack.c.h.b16 %v7839
        %v8524 = vunpack.c.l.b16 %v7840
        %v8525 = vunpack.c.h.b16 %v7840
        %v8526 = vunpack.c.l.b16 %v7841
        %v8527 = vunpack.c.h.b16 %v7841
        %v8528 = vunpack.c.l.b16 %v7842
        %v8529 = vunpack.c.h.b16 %v7842
        %v8530 = vunpack.c.l.b16 %v7843
        %v8531 = vunpack.c.h.b16 %v7843
        %v8532 = vunpack.c.l.b16 %v7844
        %v8533 = vunpack.c.h.b16 %v7844
        %v8534 = vunpack.c.l.b16 %v7845
        %v8535 = vunpack.c.h.b16 %v7845
        %v8536 = vunpack.c.l.b16 %v7846
        %v8537 = vunpack.c.h.b16 %v7846
        %v8538 = vunpack.c.l.b16 %v7847
        %v8539 = vunpack.c.h.b16 %v7847
        %v8540 = vunpack.c.l.b16 %v7848
        %v8541 = vunpack.c.h.b16 %v7848
        %v8542 = vunpack.c.l.b16 %v7849
        %v8543 = vunpack.c.h.b16 %v7849
        %v8544 = vunpack.c.l.b16 %v7850
        %v8545 = vunpack.c.h.b16 %v7850
        %v8546 = vunpack.c.l.b16 %v7851
        %v8547 = vunpack.c.h.b16 %v7851
        %v8548 = vunpack.c.l.b16 %v7852
        %v8549 = vunpack.c.h.b16 %v7852
        %v8550 = vunpack.c.l.b16 %v7853
        %v8551 = vunpack.c.h.b16 %v7853
        %v8552 = vunpack.c.l.b16 %v7854
        %v8553 = vunpack.c.h.b16 %v7854
        %v8554 = vunpack.c.l.b16 %v7855
        %v8555 = vunpack.c.h.b16 %v7855
        %v8556 = vunpack.c.l.b16 %v7856
        %v8557 = vunpack.c.h.b16 %v7856
        %v8558 = vunpack.c.l.b16 %v7857
        %v8559 = vunpack.c.h.b16 %v7857
        %v8560 = vunpack.c.l.b16 %v7858
        %v8561 = vunpack.c.h.b16 %v7858
        %v8562 = vunpack.c.l.b16 %v7859
        %v8563 = vunpack.c.h.b16 %v7859
        %v8564 = vunpack.c.l.b16 %v7860
        %v8565 = vunpack.c.h.b16 %v7860
        %v8566 = vunpack.c.l.b16 %v7861
        %v8567 = vunpack.c.h.b16 %v7861
        %v8568 = vunpack.c.l.b16 %v7862
        %v8569 = vunpack.c.h.b16 %v7862
        %v8570 = vunpack.c.l.b16 %v7863
        %v8571 = vunpack.c.h.b16 %v7863
        %v8572 = vunpack.c.l.b16 %v7864
        %v8573 = vunpack.c.h.b16 %v7864
        %v8574 = vunpack.c.l.b16 %v7865
        %v8575 = vunpack.c.h.b16 %v7865
        %v8576 = vunpack.c.l.b16 %v7866
        %v8577 = vunpack.c.h.b16 %v7866
        %v8578 = vunpack.c.l.b16 %v7867
        %v8579 = vunpack.c.h.b16 %v7867
        %v8580 = vunpack.c.l.b16 %v7868
        %v8581 = vunpack.c.h.b16 %v7868
        %v8582 = vunpack.c.l.b16 %v7869
        %v8583 = vunpack.c.h.b16 %v7869
        %v8584 = vunpack.c.l.b16 %v7870
        %v8585 = vunpack.c.h.b16 %v7870
        %v8586 = vunpack.c.l.b16 %v7871
        %v8587 = vunpack.c.h.b16 %v7871
        %v8588 = vunpack.c.l.b16 %v7872
        %v8589 = vunpack.c.h.b16 %v7872
        %v8590 = vunpack.c.l.b16 %v7873
        %v8591 = vunpack.c.h.b16 %v7873
        %v8592 = vunpack.c.l.b16 %v7874
        %v8593 = vunpack.c.h.b16 %v7874
        %v8594 = vunpack.c.l.b16 %v7875
        %v8595 = vunpack.c.h.b16 %v7875
        %v8596 = vunpack.c.l.b16 %v7876
        %v8597 = vunpack.c.h.b16 %v7876
        %v8598 = vunpack.c.l.b16 %v7877
        %v8599 = vunpack.c.h.b16 %v7877
        %v8600 = vunpack.c.l.b16 %v7878
        %v8601 = vunpack.c.h.b16 %v7878
        %v8602 = vunpack.c.l.b16 %v7879
        %v8603 = vunpack.c.h.b16 %v7879
        %v8604 = vunpack.c.l.b16 %v7880
        %v8605 = vunpack.c.h.b16 %v7880
        %v8606 = vunpack.c.l.b16 %v7881
        %v8607 = vunpack.c.h.b16 %v7881
        %v8608 = vunpack.c.l.b16 %v7882
        %v8609 = vunpack.c.h.b16 %v7882
        %v8610 = vunpack.c.l.b16 %v7883
        %v8611 = vunpack.c.h.b16 %v7883
        %v8612 = vunpack.c.l.b16 %v7884
        %v8613 = vunpack.c.h.b16 %v7884
        %v8614 = vunpack.c.l.b16 %v7885
        %v8615 = vunpack.c.h.b16 %v7885
        %v8616 = vunpack.c.l.b16 %v7886
        %v8617 = vunpack.c.h.b16 %v7886
        %v8618 = vunpack.c.l.b16 %v7887
        %v8619 = vunpack.c.h.b16 %v7887
        %v8620 = vunpack.c.l.b16 %v7888
        %v8621 = vunpack.c.h.b16 %v7888
        %v8622 = vunpack.c.l.b16 %v7889
        %v8623 = vunpack.c.h.b16 %v7889
        %v8624 = vunpack.c.l.b16 %v7890
        %v8625 = vunpack.c.h.b16 %v7890
        %v8626 = vunpack.c.l.b16 %v7891
        %v8627 = vunpack.c.h.b16 %v7891
        %v8628 = vunpack.c.l.b16 %v7892
        %v8629 = vunpack.c.h.b16 %v7892
        %v8630 = vunpack.c.l.b16 %v7893
        %v8631 = vunpack.c.h.b16 %v7893
        %v8632 = vunpack.c.l.b16 %v7894
        %v8633 = vunpack.c.h.b16 %v7894
        %v8634 = vunpack.c.l.b16 %v7895
        %v8635 = vunpack.c.h.b16 %v7895
        %v8636 = vunpack.c.l.b16 %v7896
        %v8637 = vunpack.c.h.b16 %v7896
        %v8638 = vunpack.c.l.b16 %v7897
        %v8639 = vunpack.c.h.b16 %v7897
        %v8640 = vunpack.c.l.b16 %v7898
        %v8641 = vunpack.c.h.b16 %v7898
        %v8642 = vunpack.c.l.b16 %v7899
        %v8643 = vunpack.c.h.b16 %v7899
        %v8644 = vunpack.c.l.b16 %v7900
        %v8645 = vunpack.c.h.b16 %v7900
        %v8646 = vunpack.c.l.b16 %v7901
        %v8647 = vunpack.c.h.b16 %v7901
        %v8648 = vunpack.c.l.b16 %v7902
        %v8649 = vunpack.c.h.b16 %v7902
        %v8650 = vunpack.c.l.b16 %v7903
        %v8651 = vunpack.c.h.b16 %v7903
        %v8652 = vunpack.c.l.b16 %v7904
        %v8653 = vunpack.c.h.b16 %v7904
        %v8654 = vunpack.c.l.b16 %v7905
        %v8655 = vunpack.c.h.b16 %v7905
        %v8656 = vunpack.c.l.b16 %v7906
        %v8657 = vunpack.c.h.b16 %v7906
        %v8658 = vunpack.c.l.b16 %v7907
        %v8659 = vunpack.c.h.b16 %v7907
        %v8660 = vunpack.c.l.b16 %v7908
        %v8661 = vunpack.c.h.b16 %v7908
        %v8662 = vunpack.c.l.b16 %v7909
        %v8663 = vunpack.c.h.b16 %v7909
        %v8664 = vunpack.c.l.b16 %v7910
        %v8665 = vunpack.c.h.b16 %v7910
        %v8666 = vunpack.c.l.b16 %v7911
        %v8667 = vunpack.c.h.b16 %v7911
        %v8668 = vunpack.c.l.b16 %v7912
        %v8669 = vunpack.c.h.b16 %v7912
        %v8670 = vunpack.c.l.b16 %v7913
        %v8671 = vunpack.c.h.b16 %v7913
        %v8672 = vunpack.c.l.b16 %v7914
        %v8673 = vunpack.c.h.b16 %v7914
        %v8674 = vunpack.c.l.b16 %v7915
        %v8675 = vunpack.c.h.b16 %v7915
        %v8676 = vunpack.c.l.b16 %v7916
        %v8677 = vunpack.c.h.b16 %v7916
        %v8678 = vunpack.c.l.b16 %v7917
        %v8679 = vunpack.c.h.b16 %v7917
        %v8680 = vunpack.c.l.b16 %v7918
        %v8681 = vunpack.c.h.b16 %v7918
        %v8682 = vunpack.c.l.b16 %v7919
        %v8683 = vunpack.c.h.b16 %v7919
        %v8684 = vunpack.c.l.b16 %v7920
        %v8685 = vunpack.c.h.b16 %v7920
        %v8686 = vunpack.c.l.b16 %v7921
        %v8687 = vunpack.c.h.b16 %v7921
        %v8688 = vunpack.c.l.b16 %v7922
        %v8689 = vunpack.c.h.b16 %v7922
        %v8690 = vunpack.c.l.b16 %v7923
        %v8691 = vunpack.c.h.b16 %v7923
        %v8692 = vpack.c.b16 %v8182, %v8180
        %v8693 = vpack.c.b16 %v8183, %v8181
        %v8694 = vpack.c.b16 %v8186, %v8184
        %v8695 = vpack.c.b16 %v8187, %v8185
        %v8696 = vpack.c.b16 %v8190, %v8188
        %v8697 = vpack.c.b16 %v8191, %v8189
        %v8698 = vpack.c.b16 %v8194, %v8192
        %v8699 = vpack.c.b16 %v8195, %v8193
        %v8700 = vpack.c.b16 %v8198, %v8196
        %v8701 = vpack.c.b16 %v8199, %v8197
        %v8702 = vpack.c.b16 %v8202, %v8200
        %v8703 = vpack.c.b16 %v8203, %v8201
        %v8704 = vpack.c.b16 %v8206, %v8204
        %v8705 = vpack.c.b16 %v8207, %v8205
        %v8706 = vpack.c.b16 %v8210, %v8208
        %v8707 = vpack.c.b16 %v8211, %v8209
        %v8708 = vpack.c.b16 %v8214, %v8212
        %v8709 = vpack.c.b16 %v8215, %v8213
        %v8710 = vpack.c.b16 %v8218, %v8216
        %v8711 = vpack.c.b16 %v8219, %v8217
        %v8712 = vpack.c.b16 %v8222, %v8220
        %v8713 = vpack.c.b16 %v8223, %v8221
        %v8714 = vpack.c.b16 %v8226, %v8224
        %v8715 = vpack.c.b16 %v8227, %v8225
        %v8716 = vpack.c.b16 %v8230, %v8228
        %v8717 = vpack.c.b16 %v8231, %v8229
        %v8718 = vpack.c.b16 %v8234, %v8232
        %v8719 = vpack.c.b16 %v8235, %v8233
        %v8720 = vpack.c.b16 %v8238, %v8236
        %v8721 = vpack.c.b16 %v8239, %v8237
        %v8722 = vpack.c.b16 %v8242, %v8240
        %v8723 = vpack.c.b16 %v8243, %v8241
        %v8724 = vpack.c.b16 %v8246, %v8244
        %v8725 = vpack.c.b16 %v8247, %v8245
        %v8726 = vpack.c.b16 %v8250, %v8248
        %v8727 = vpack.c.b16 %v8251, %v8249
        %v8728 = vpack.c.b16 %v8254, %v8252
        %v8729 = vpack.c.b16 %v8255, %v8253
        %v8730 = vpack.c.b16 %v8258, %v8256
        %v8731 = vpack.c.b16 %v8259, %v8257
        %v8732 = vpack.c.b16 %v8262, %v8260
        %v8733 = vpack.c.b16 %v8263, %v8261
        %v8734 = vpack.c.b16 %v8266, %v8264
        %v8735 = vpack.c.b16 %v8267, %v8265
        %v8736 = vpack.c.b16 %v8270, %v8268
        %v8737 = vpack.c.b16 %v8271, %v8269
        %v8738 = vpack.c.b16 %v8274, %v8272
        %v8739 = vpack.c.b16 %v8275, %v8273
        %v8740 = vpack.c.b16 %v8278, %v8276
        %v8741 = vpack.c.b16 %v8279, %v8277
        %v8742 = vpack.c.b16 %v8282, %v8280
        %v8743 = vpack.c.b16 %v8283, %v8281
        %v8744 = vpack.c.b16 %v8286, %v8284
        %v8745 = vpack.c.b16 %v8287, %v8285
        %v8746 = vpack.c.b16 %v8290, %v8288
        %v8747 = vpack.c.b16 %v8291, %v8289
        %v8748 = vpack.c.b16 %v8294, %v8292
        %v8749 = vpack.c.b16 %v8295, %v8293
        %v8750 = vpack.c.b16 %v8298, %v8296
        %v8751 = vpack.c.b16 %v8299, %v8297
        %v8752 = vpack.c.b16 %v8302, %v8300
        %v8753 = vpack.c.b16 %v8303, %v8301
        %v8754 = vpack.c.b16 %v8306, %v8304
        %v8755 = vpack.c.b16 %v8307, %v8305
        %v8756 = vpack.c.b16 %v8310, %v8308
        %v8757 = vpack.c.b16 %v8311, %v8309
        %v8758 = vpack.c.b16 %v8314, %v8312
        %v8759 = vpack.c.b16 %v8315, %v8313
        %v8760 = vpack.c.b16 %v8318, %v8316
        %v8761 = vpack.c.b16 %v8319, %v8317
        %v8762 = vpack.c.b16 %v8322, %v8320
        %v8763 = vpack.c.b16 %v8323, %v8321
        %v8764 = vpack.c.b16 %v8326, %v8324
        %v8765 = vpack.c.b16 %v8327, %v8325
        %v8766 = vpack.c.b16 %v8330, %v8328
        %v8767 = vpack.c.b16 %v8331, %v8329
        %v8768 = vpack.c.b16 %v8334, %v8332
        %v8769 = vpack.c.b16 %v8335, %v8333
        %v8770 = vpack.c.b16 %v8338, %v8336
        %v8771 = vpack.c.b16 %v8339, %v8337
        %v8772 = vpack.c.b16 %v8342, %v8340
        %v8773 = vpack.c.b16 %v8343, %v8341
        %v8774 = vpack.c.b16 %v8346, %v8344
        %v8775 = vpack.c.b16 %v8347, %v8345
        %v8776 = vpack.c.b16 %v8350, %v8348
        %v8777 = vpack.c.b16 %v8351, %v8349
        %v8778 = vpack.c.b16 %v8354, %v8352
        %v8779 = vpack.c.b16 %v8355, %v8353
        %v8780 = vpack.c.b16 %v8358, %v8356
        %v8781 = vpack.c.b16 %v8359, %v8357
        %v8782 = vpack.c.b16 %v8362, %v8360
        %v8783 = vpack.c.b16 %v8363, %v8361
        %v8784 = vpack.c.b16 %v8366, %v8364
        %v8785 = vpack.c.b16 %v8367, %v8365
        %v8786 = vpack.c.b16 %v8370, %v8368
        %v8787 = vpack.c.b16 %v8371, %v8369
        %v8788 = vpack.c.b16 %v8374, %v8372
        %v8789 = vpack.c.b16 %v8375, %v8373
        %v8790 = vpack.c.b16 %v8378, %v8376
        %v8791 = vpack.c.b16 %v8379, %v8377
        %v8792 = vpack.c.b16 %v8382, %v8380
        %v8793 = vpack.c.b16 %v8383, %v8381
        %v8794 = vpack.c.b16 %v8386, %v8384
        %v8795 = vpack.c.b16 %v8387, %v8385
        %v8796 = vpack.c.b16 %v8390, %v8388
        %v8797 = vpack.c.b16 %v8391, %v8389
        %v8798 = vpack.c.b16 %v8394, %v8392
        %v8799 = vpack.c.b16 %v8395, %v8393
        %v8800 = vpack.c.b16 %v8398, %v8396
        %v8801 = vpack.c.b16 %v8399, %v8397
        %v8802 = vpack.c.b16 %v8402, %v8400
        %v8803 = vpack.c.b16 %v8403, %v8401
        %v8804 = vpack.c.b16 %v8406, %v8404
        %v8805 = vpack.c.b16 %v8407, %v8405
        %v8806 = vpack.c.b16 %v8410, %v8408
        %v8807 = vpack.c.b16 %v8411, %v8409
        %v8808 = vpack.c.b16 %v8414, %v8412
        %v8809 = vpack.c.b16 %v8415, %v8413
        %v8810 = vpack.c.b16 %v8418, %v8416
        %v8811 = vpack.c.b16 %v8419, %v8417
        %v8812 = vpack.c.b16 %v8422, %v8420
        %v8813 = vpack.c.b16 %v8423, %v8421
        %v8814 = vpack.c.b16 %v8426, %v8424
        %v8815 = vpack.c.b16 %v8427, %v8425
        %v8816 = vpack.c.b16 %v8430, %v8428
        %v8817 = vpack.c.b16 %v8431, %v8429
        %v8818 = vpack.c.b16 %v8434, %v8432
        %v8819 = vpack.c.b16 %v8435, %v8433
        %v8820 = vpack.c.b16 %v8438, %v8436
        %v8821 = vpack.c.b16 %v8439, %v8437
        %v8822 = vpack.c.b16 %v8442, %v8440
        %v8823 = vpack.c.b16 %v8443, %v8441
        %v8824 = vpack.c.b16 %v8446, %v8444
        %v8825 = vpack.c.b16 %v8447, %v8445
        %v8826 = vpack.c.b16 %v8450, %v8448
        %v8827 = vpack.c.b16 %v8451, %v8449
        %v8828 = vpack.c.b16 %v8454, %v8452
        %v8829 = vpack.c.b16 %v8455, %v8453
        %v8830 = vpack.c.b16 %v8458, %v8456
        %v8831 = vpack.c.b16 %v8459, %v8457
        %v8832 = vpack.c.b16 %v8462, %v8460
        %v8833 = vpack.c.b16 %v8463, %v8461
        %v8834 = vpack.c.b16 %v8466, %v8464
        %v8835 = vpack.c.b16 %v8467, %v8465
        %v8836 = vpack.c.b16 %v8470, %v8468
        %v8837 = vpack.c.b16 %v8471, %v8469
        %v8838 = vpack.c.b16 %v8474, %v8472
        %v8839 = vpack.c.b16 %v8475, %v8473
        %v8840 = vpack.c.b16 %v8478, %v8476
        %v8841 = vpack.c.b16 %v8479, %v8477
        %v8842 = vpack.c.b16 %v8482, %v8480
        %v8843 = vpack.c.b16 %v8483, %v8481
        %v8844 = vpack.c.b16 %v8486, %v8484
        %v8845 = vpack.c.b16 %v8487, %v8485
        %v8846 = vpack.c.b16 %v8490, %v8488
        %v8847 = vpack.c.b16 %v8491, %v8489
        %v8848 = vpack.c.b16 %v8494, %v8492
        %v8849 = vpack.c.b16 %v8495, %v8493
        %v8850 = vpack.c.b16 %v8498, %v8496
        %v8851 = vpack.c.b16 %v8499, %v8497
        %v8852 = vpack.c.b16 %v8502, %v8500
        %v8853 = vpack.c.b16 %v8503, %v8501
        %v8854 = vpack.c.b16 %v8506, %v8504
        %v8855 = vpack.c.b16 %v8507, %v8505
        %v8856 = vpack.c.b16 %v8510, %v8508
        %v8857 = vpack.c.b16 %v8511, %v8509
        %v8858 = vpack.c.b16 %v8514, %v8512
        %v8859 = vpack.c.b16 %v8515, %v8513
        %v8860 = vpack.c.b16 %v8518, %v8516
        %v8861 = vpack.c.b16 %v8519, %v8517
        %v8862 = vpack.c.b16 %v8522, %v8520
        %v8863 = vpack.c.b16 %v8523, %v8521
        %v8864 = vpack.c.b16 %v8526, %v8524
        %v8865 = vpack.c.b16 %v8527, %v8525
        %v8866 = vpack.c.b16 %v8530, %v8528
        %v8867 = vpack.c.b16 %v8531, %v8529
        %v8868 = vpack.c.b16 %v8534, %v8532
        %v8869 = vpack.c.b16 %v8535, %v8533
        %v8870 = vpack.c.b16 %v8538, %v8536
        %v8871 = vpack.c.b16 %v8539, %v8537
        %v8872 = vpack.c.b16 %v8542, %v8540
        %v8873 = vpack.c.b16 %v8543, %v8541
        %v8874 = vpack.c.b16 %v8546, %v8544
        %v8875 = vpack.c.b16 %v8547, %v8545
        %v8876 = vpack.c.b16 %v8550, %v8548
        %v8877 = vpack.c.b16 %v8551, %v8549
        %v8878 = vpack.c.b16 %v8554, %v8552
        %v8879 = vpack.c.b16 %v8555, %v8553
        %v8880 = vpack.c.b16 %v8558, %v8556
        %v8881 = vpack.c.b16 %v8559, %v8557
        %v8882 = vpack.c.b16 %v8562, %v8560
        %v8883 = vpack.c.b16 %v8563, %v8561
        %v8884 = vpack.c.b16 %v8566, %v8564
        %v8885 = vpack.c.b16 %v8567, %v8565
        %v8886 = vpack.c.b16 %v8570, %v8568
        %v8887 = vpack.c.b16 %v8571, %v8569
        %v8888 = vpack.c.b16 %v8574, %v8572
        %v8889 = vpack.c.b16 %v8575, %v8573
        %v8890 = vpack.c.b16 %v8578, %v8576
        %v8891 = vpack.c.b16 %v8579, %v8577
        %v8892 = vpack.c.b16 %v8582, %v8580
        %v8893 = vpack.c.b16 %v8583, %v8581
        %v8894 = vpack.c.b16 %v8586, %v8584
        %v8895 = vpack.c.b16 %v8587, %v8585
        %v8896 = vpack.c.b16 %v8590, %v8588
        %v8897 = vpack.c.b16 %v8591, %v8589
        %v8898 = vpack.c.b16 %v8594, %v8592
        %v8899 = vpack.c.b16 %v8595, %v8593
        %v8900 = vpack.c.b16 %v8598, %v8596
        %v8901 = vpack.c.b16 %v8599, %v8597
        %v8902 = vpack.c.b16 %v8602, %v8600
        %v8903 = vpack.c.b16 %v8603, %v8601
        %v8904 = vpack.c.b16 %v8606, %v8604
        %v8905 = vpack.c.b16 %v8607, %v8605
        %v8906 = vpack.c.b16 %v8610, %v8608
        %v8907 = vpack.c.b16 %v8611, %v8609
        %v8908 = vpack.c.b16 %v8614, %v8612
        %v8909 = vpack.c.b16 %v8615, %v8613
        %v8910 = vpack.c.b16 %v8618, %v8616
        %v8911 = vpack.c.b16 %v8619, %v8617
        %v8912 = vpack.c.b16 %v8622, %v8620
        %v8913 = vpack.c.b16 %v8623, %v8621
        %v8914 = vpack.c.b16 %v8626, %v8624
        %v8915 = vpack.c.b16 %v8627, %v8625
        %v8916 = vpack.c.b16 %v8630, %v8628
        %v8917 = vpack.c.b16 %v8631, %v8629
        %v8918 = vpack.c.b16 %v8634, %v8632
        %v8919 = vpack.c.b16 %v8635, %v8633
        %v8920 = vpack.c.b16 %v8638, %v8636
        %v8921 = vpack.c.b16 %v8639, %v8637
        %v8922 = vpack.c.b16 %v8642, %v8640
        %v8923 = vpack.c.b16 %v8643, %v8641
        %v8924 = vpack.c.b16 %v8646, %v8644
        %v8925 = vpack.c.b16 %v8647, %v8645
        %v8926 = vpack.c.b16 %v8650, %v8648
        %v8927 = vpack.c.b16 %v8651, %v8649
        %v8928 = vpack.c.b16 %v8654, %v8652
        %v8929 = vpack.c.b16 %v8655, %v8653
        %v8930 = vpack.c.b16 %v8658, %v8656
        %v8931 = vpack.c.b16 %v8659, %v8657
        %v8932 = vpack.c.b16 %v8662, %v8660
        %v8933 = vpack.c.b16 %v8663, %v8661
        %v8934 = vpack.c.b16 %v8666, %v8664
        %v8935 = vpack.c.b16 %v8667, %v8665
        %v8936 = vpack.c.b16 %v8670, %v8668
        %v8937 = vpack.c.b16 %v8671, %v8669
        %v8938 = vpack.c.b16 %v8674, %v8672
        %v8939 = vpack.c.b16 %v8675, %v8673
        %v8940 = vpack.c.b16 %v8678, %v8676
        %v8941 = vpack.c.b16 %v8679, %v8677
        %v8942 = vpack.c.b16 %v8682, %v8680
        %v8943 = vpack.c.b16 %v8683, %v8681
        %v8944 = vpack.c.b16 %v8686, %v8684
        %v8945 = vpack.c.b16 %v8687, %v8685
        %v8946 = vpack.c.b16 %v8690, %v8688
        %v8947 = vpack.c.b16 %v8691, %v8689
        %9204 = vmatprep.subr.bf16.mxu0 %v8693
        %9205 = vmatpush1.bf16.msra.mxu0 %v8692
        %9206 = vmatprep.subr.bf16.mxu0 %v8695
        %9207 = vmatpush1.bf16.msra.mxu0 %v8694
        %9208 = vmatprep.subr.bf16.mxu0 %v8697
        %9209 = vmatpush1.bf16.msra.mxu0 %v8696
        %9210 = vmatprep.subr.bf16.mxu0 %v8699
        %9211 = vmatpush1.bf16.msra.mxu0 %v8698
        %9212 = vmatprep.subr.bf16.mxu0 %v8701
        %9213 = vmatpush1.bf16.msra.mxu0 %v8700
        %9214 = vmatprep.subr.bf16.mxu0 %v8703
        %9215 = vmatpush1.bf16.msra.mxu0 %v8702
        %9216 = vmatprep.subr.bf16.mxu0 %v8705
        %9217 = vmatpush1.bf16.msra.mxu0 %v8704
        %9218 = vmatprep.subr.bf16.mxu0 %v8707
        %9219 = vmatpush1.bf16.msra.mxu0 %v8706
        %9220 = vmatprep.subr.bf16.mxu0 %v8709
        %9221 = vmatpush1.bf16.msra.mxu0 %v8708
        %9222 = vmatprep.subr.bf16.mxu0 %v8711
        %9223 = vmatpush1.bf16.msra.mxu0 %v8710
        %9224 = vmatprep.subr.bf16.mxu0 %v8713
        %9225 = vmatpush1.bf16.msra.mxu0 %v8712
        %9226 = vmatprep.subr.bf16.mxu0 %v8715
        %9227 = vmatpush1.bf16.msra.mxu0 %v8714
        %9228 = vmatprep.subr.bf16.mxu0 %v8717
        %9229 = vmatpush1.bf16.msra.mxu0 %v8716
        %9230 = vmatprep.subr.bf16.mxu0 %v8719
        %9231 = vmatpush1.bf16.msra.mxu0 %v8718
        %9232 = vmatprep.subr.bf16.mxu0 %v8721
        %9233 = vmatpush1.bf16.msra.mxu0 %v8720
        %9234 = vmatprep.subr.bf16.mxu0 %v8723
        %9235 = vmatpush1.bf16.msra.mxu0 %v8722
        %9236 = vmatprep.mubr.bf16.mxu0 %v766
        %9237 = vmatmul.mubr.bf16.gmra.mrb[0].mxu0 %v765
        %v9238 = vpop.f32.mrb[0].mxu0
        %v9239 = vadd.f32 0.0, %v9238
        %v9240 = vpop.f32.mrb[0].mxu0
        %v9241 = vadd.f32 0.0, %v9240
        %v9242 = vpop.f32.mrb[0].mxu0
        %v9243 = vadd.f32 0.0, %v9242
        %v9244 = vpop.f32.mrb[0].mxu0
        %v9245 = vadd.f32 0.0, %v9244
        %9246 = vmatprep.mubr.bf16.mxu0 %v782
        %9247 = vmatmul.mubr.bf16.gmra.mrb[0].mxu0 %v781
        %v9248 = vpop.f32.mrb[0].mxu0
        %v9249 = vadd.f32 0.0, %v9248
        %v9250 = vpop.f32.mrb[0].mxu0
        %v9251 = vadd.f32 0.0, %v9250
        %v9252 = vpop.f32.mrb[0].mxu0
        %v9253 = vadd.f32 0.0, %v9252
        %v9254 = vpop.f32.mrb[0].mxu0
        %v9255 = vadd.f32 0.0, %v9254
        %9256 = vmatprep.mubr.bf16.mxu0 %v798
        %9257 = vmatmul.mubr.bf16.gmra.mrb[0].mxu0 %v797
        %v9258 = vpop.f32.mrb[0].mxu0
        %v9259 = vadd.f32 0.0, %v9258
        %v9260 = vpop.f32.mrb[0].mxu0
        %v9261 = vadd.f32 0.0, %v9260
        %v9262 = vpop.f32.mrb[0].mxu0
        %v9263 = vadd.f32 0.0, %v9262
        %v9264 = vpop.f32.mrb[0].mxu0
        %v9265 = vadd.f32 0.0, %v9264
        %9266 = vmatprep.mubr.bf16.mxu0 %v814
        %9267 = vmatmul.mubr.bf16.gmra.mrb[0].mxu0 %v813
        %v9268 = vpop.f32.mrb[0].mxu0
        %v9269 = vadd.f32 0.0, %v9268
        %v9270 = vpop.f32.mrb[0].mxu0
        %v9271 = vadd.f32 0.0, %v9270
        %v9272 = vpop.f32.mrb[0].mxu0
        %v9273 = vadd.f32 0.0, %v9272
        %v9274 = vpop.f32.mrb[0].mxu0
        %v9275 = vadd.f32 0.0, %v9274
        %9276 = vmatprep.mubr.bf16.mxu0 %v830
        %9277 = vmatmul.mubr.bf16.gmra.mrb[0].mxu0 %v829
        %v9278 = vpop.f32.mrb[0].mxu0
        %v9279 = vadd.f32 0.0, %v9278
        %v9280 = vpop.f32.mrb[0].mxu0
        %v9281 = vadd.f32 0.0, %v9280
        %v9282 = vpop.f32.mrb[0].mxu0
        %v9283 = vadd.f32 0.0, %v9282
        %v9284 = vpop.f32.mrb[0].mxu0
        %v9285 = vadd.f32 0.0, %v9284
        %9286 = vdwg.mxu0
        %9287 = vmatprep.subr.bf16.mxu0 %v8725
        %9288 = vmatpush1.bf16.msra.mxu0 %v8724
        %9289 = vmatprep.subr.bf16.mxu0 %v8727
        %9290 = vmatpush1.bf16.msra.mxu0 %v8726
        %9291 = vmatprep.subr.bf16.mxu0 %v8729
        %9292 = vmatpush1.bf16.msra.mxu0 %v8728
        %9293 = vmatprep.subr.bf16.mxu0 %v8731
        %9294 = vmatpush1.bf16.msra.mxu0 %v8730
        %9295 = vmatprep.subr.bf16.mxu0 %v8733
        %9296 = vmatpush1.bf16.msra.mxu0 %v8732
        %9297 = vmatprep.subr.bf16.mxu0 %v8735
        %9298 = vmatpush1.bf16.msra.mxu0 %v8734
        %9299 = vmatprep.subr.bf16.mxu0 %v8737
        %9300 = vmatpush1.bf16.msra.mxu0 %v8736
        %9301 = vmatprep.subr.bf16.mxu0 %v8739
        %9302 = vmatpush1.bf16.msra.mxu0 %v8738
        %9303 = vmatprep.subr.bf16.mxu0 %v8741
        %9304 = vmatpush1.bf16.msra.mxu0 %v8740
        %9305 = vmatprep.subr.bf16.mxu0 %v8743
        %9306 = vmatpush1.bf16.msra.mxu0 %v8742
        %9307 = vmatprep.subr.bf16.mxu0 %v8745
        %9308 = vmatpush1.bf16.msra.mxu0 %v8744
        %9309 = vmatprep.subr.bf16.mxu0 %v8747
        %9310 = vmatpush1.bf16.msra.mxu0 %v8746
        %9311 = vmatprep.subr.bf16.mxu0 %v8749
        %9312 = vmatpush1.bf16.msra.mxu0 %v8748
        %9313 = vmatprep.subr.bf16.mxu0 %v8751
        %9314 = vmatpush1.bf16.msra.mxu0 %v8750
        %9315 = vmatprep.subr.bf16.mxu0 %v8753
        %9316 = vmatpush1.bf16.msra.mxu0 %v8752
        %9317 = vmatprep.subr.bf16.mxu0 %v8755
        %9318 = vmatpush1.bf16.msra.mxu0 %v8754
        %9319 = vmatprep.mubr.bf16.mxu0 %v768
        %9320 = vmatmul.mubr.bf16.gmra.mrb[0].mxu0 %v767
        %v9321 = vpop.f32.mrb[0].mxu0
        %v9322 = vadd.f32 %v9239, %v9321
        %v9323 = vpop.f32.mrb[0].mxu0
        %v9324 = vadd.f32 %v9241, %v9323
        %v9325 = vpop.f32.mrb[0].mxu0
        %v9326 = vadd.f32 %v9243, %v9325
        %v9327 = vpop.f32.mrb[0].mxu0
        %v9328 = vadd.f32 %v9245, %v9327
        %9329 = vmatprep.mubr.bf16.mxu0 %v784
        %9330 = vmatmul.mubr.bf16.gmra.mrb[0].mxu0 %v783
        %v9331 = vpop.f32.mrb[0].mxu0
        %v9332 = vadd.f32 %v9249, %v9331
        %v9333 = vpop.f32.mrb[0].mxu0
        %v9334 = vadd.f32 %v9251, %v9333
        %v9335 = vpop.f32.mrb[0].mxu0
        %v9336 = vadd.f32 %v9253, %v9335
        %v9337 = vpop.f32.mrb[0].mxu0
        %v9338 = vadd.f32 %v9255, %v9337
        %9339 = vmatprep.mubr.bf16.mxu0 %v800
        %9340 = vmatmul.mubr.bf16.gmra.mrb[0].mxu0 %v799
        %v9341 = vpop.f32.mrb[0].mxu0
        %v9342 = vadd.f32 %v9259, %v9341
        %v9343 = vpop.f32.mrb[0].mxu0
        %v9344 = vadd.f32 %v9261, %v9343
        %v9345 = vpop.f32.mrb[0].mxu0
        %v9346 = vadd.f32 %v9263, %v9345
        %v9347 = vpop.f32.mrb[0].mxu0
        %v9348 = vadd.f32 %v9265, %v9347
        %9349 = vmatprep.mubr.bf16.mxu0 %v816
        %9350 = vmatmul.mubr.bf16.gmra.mrb[0].mxu0 %v815
        %v9351 = vpop.f32.mrb[0].mxu0
        %v9352 = vadd.f32 %v9269, %v9351
        %v9353 = vpop.f32.mrb[0].mxu0
        %v9354 = vadd.f32 %v9271, %v9353
        %v9355 = vpop.f32.mrb[0].mxu0
        %v9356 = vadd.f32 %v9273, %v9355
        %v9357 = vpop.f32.mrb[0].mxu0
        %v9358 = vadd.f32 %v9275, %v9357
        %9359 = vmatprep.mubr.bf16.mxu0 %v832
        %9360 = vmatmul.mubr.bf16.gmra.mrb[0].mxu0 %v831
        %v9361 = vpop.f32.mrb[0].mxu0
        %v9362 = vadd.f32 %v9279, %v9361
        %v9363 = vpop.f32.mrb[0].mxu0
        %v9364 = vadd.f32 %v9281, %v9363
        %v9365 = vpop.f32.mrb[0].mxu0
        %v9366 = vadd.f32 %v9283, %v9365
        %v9367 = vpop.f32.mrb[0].mxu0
        %v9368 = vadd.f32 %v9285, %v9367
        %9369 = vdwg.mxu0
        %9370 = vmatprep.subr.bf16.mxu0 %v8757
        %9371 = vmatpush1.bf16.msra.mxu0 %v8756
        %9372 = vmatprep.subr.bf16.mxu0 %v8759
        %9373 = vmatpush1.bf16.msra.mxu0 %v8758
        %9374 = vmatprep.subr.bf16.mxu0 %v8761
        %9375 = vmatpush1.bf16.msra.mxu0 %v8760
        %9376 = vmatprep.subr.bf16.mxu0 %v8763
        %9377 = vmatpush1.bf16.msra.mxu0 %v8762
        %9378 = vmatprep.subr.bf16.mxu0 %v8765
        %9379 = vmatpush1.bf16.msra.mxu0 %v8764
        %9380 = vmatprep.subr.bf16.mxu0 %v8767
        %9381 = vmatpush1.bf16.msra.mxu0 %v8766
        %9382 = vmatprep.subr.bf16.mxu0 %v8769
        %9383 = vmatpush1.bf16.msra.mxu0 %v8768
        %9384 = vmatprep.subr.bf16.mxu0 %v8771
        %9385 = vmatpush1.bf16.msra.mxu0 %v8770
        %9386 = vmatprep.subr.bf16.mxu0 %v8773
        %9387 = vmatpush1.bf16.msra.mxu0 %v8772
        %9388 = vmatprep.subr.bf16.mxu0 %v8775
        %9389 = vmatpush1.bf16.msra.mxu0 %v8774
        %9390 = vmatprep.subr.bf16.mxu0 %v8777
        %9391 = vmatpush1.bf16.msra.mxu0 %v8776
        %9392 = vmatprep.subr.bf16.mxu0 %v8779
        %9393 = vmatpush1.bf16.msra.mxu0 %v8778
        %9394 = vmatprep.subr.bf16.mxu0 %v8781
        %9395 = vmatpush1.bf16.msra.mxu0 %v8780
        %9396 = vmatprep.subr.bf16.mxu0 %v8783
        %9397 = vmatpush1.bf16.msra.mxu0 %v8782
        %9398 = vmatprep.subr.bf16.mxu0 %v8785
        %9399 = vmatpush1.bf16.msra.mxu0 %v8784
        %9400 = vmatprep.subr.bf16.mxu0 %v8787
        %9401 = vmatpush1.bf16.msra.mxu0 %v8786
        %9402 = vmatprep.mubr.bf16.mxu0 %v770
        %9403 = vmatmul.mubr.bf16.gmra.mrb[0].mxu0 %v769
        %v9404 = vpop.f32.mrb[0].mxu0
        %v9405 = vadd.f32 %v9322, %v9404
        %v9406 = vpop.f32.mrb[0].mxu0
        %v9407 = vadd.f32 %v9324, %v9406
        %v9408 = vpop.f32.mrb[0].mxu0
        %v9409 = vadd.f32 %v9326, %v9408
        %v9410 = vpop.f32.mrb[0].mxu0
        %v9411 = vadd.f32 %v9328, %v9410
        %9412 = vmatprep.mubr.bf16.mxu0 %v786
        %9413 = vmatmul.mubr.bf16.gmra.mrb[0].mxu0 %v785
        %v9414 = vpop.f32.mrb[0].mxu0
        %v9415 = vadd.f32 %v9332, %v9414
        %v9416 = vpop.f32.mrb[0].mxu0
        %v9417 = vadd.f32 %v9334, %v9416
        %v9418 = vpop.f32.mrb[0].mxu0
        %v9419 = vadd.f32 %v9336, %v9418
        %v9420 = vpop.f32.mrb[0].mxu0
        %v9421 = vadd.f32 %v9338, %v9420
        %9422 = vmatprep.mubr.bf16.mxu0 %v802
        %9423 = vmatmul.mubr.bf16.gmra.mrb[0].mxu0 %v801
        %v9424 = vpop.f32.mrb[0].mxu0
        %v9425 = vadd.f32 %v9342, %v9424
        %v9426 = vpop.f32.mrb[0].mxu0
        %v9427 = vadd.f32 %v9344, %v9426
        %v9428 = vpop.f32.mrb[0].mxu0
        %v9429 = vadd.f32 %v9346, %v9428
        %v9430 = vpop.f32.mrb[0].mxu0
        %v9431 = vadd.f32 %v9348, %v9430
        %9432 = vmatprep.mubr.bf16.mxu0 %v818
        %9433 = vmatmul.mubr.bf16.gmra.mrb[0].mxu0 %v817
        %v9434 = vpop.f32.mrb[0].mxu0
        %v9435 = vadd.f32 %v9352, %v9434
        %v9436 = vpop.f32.mrb[0].mxu0
        %v9437 = vadd.f32 %v9354, %v9436
        %v9438 = vpop.f32.mrb[0].mxu0
        %v9439 = vadd.f32 %v9356, %v9438
        %v9440 = vpop.f32.mrb[0].mxu0
        %v9441 = vadd.f32 %v9358, %v9440
        %9442 = vmatprep.mubr.bf16.mxu0 %v834
        %9443 = vmatmul.mubr.bf16.gmra.mrb[0].mxu0 %v833
        %v9444 = vpop.f32.mrb[0].mxu0
        %v9445 = vadd.f32 %v9362, %v9444
        %v9446 = vpop.f32.mrb[0].mxu0
        %v9447 = vadd.f32 %v9364, %v9446
        %v9448 = vpop.f32.mrb[0].mxu0
        %v9449 = vadd.f32 %v9366, %v9448
        %v9450 = vpop.f32.mrb[0].mxu0
        %v9451 = vadd.f32 %v9368, %v9450
        %9452 = vdwg.mxu0
        %9453 = vmatprep.subr.bf16.mxu0 %v8789
        %9454 = vmatpush1.bf16.msra.mxu0 %v8788
        %9455 = vmatprep.subr.bf16.mxu0 %v8791
        %9456 = vmatpush1.bf16.msra.mxu0 %v8790
        %9457 = vmatprep.subr.bf16.mxu0 %v8793
        %9458 = vmatpush1.bf16.msra.mxu0 %v8792
        %9459 = vmatprep.subr.bf16.mxu0 %v8795
        %9460 = vmatpush1.bf16.msra.mxu0 %v8794
        %9461 = vmatprep.subr.bf16.mxu0 %v8797
        %9462 = vmatpush1.bf16.msra.mxu0 %v8796
        %9463 = vmatprep.subr.bf16.mxu0 %v8799
        %9464 = vmatpush1.bf16.msra.mxu0 %v8798
        %9465 = vmatprep.subr.bf16.mxu0 %v8801
        %9466 = vmatpush1.bf16.msra.mxu0 %v8800
        %9467 = vmatprep.subr.bf16.mxu0 %v8803
        %9468 = vmatpush1.bf16.msra.mxu0 %v8802
        %9469 = vmatprep.subr.bf16.mxu0 %v8805
        %9470 = vmatpush1.bf16.msra.mxu0 %v8804
        %9471 = vmatprep.subr.bf16.mxu0 %v8807
        %9472 = vmatpush1.bf16.msra.mxu0 %v8806
        %9473 = vmatprep.subr.bf16.mxu0 %v8809
        %9474 = vmatpush1.bf16.msra.mxu0 %v8808
        %9475 = vmatprep.subr.bf16.mxu0 %v8811
        %9476 = vmatpush1.bf16.msra.mxu0 %v8810
        %9477 = vmatprep.subr.bf16.mxu0 %v8813
        %9478 = vmatpush1.bf16.msra.mxu0 %v8812
        %9479 = vmatprep.subr.bf16.mxu0 %v8815
        %9480 = vmatpush1.bf16.msra.mxu0 %v8814
        %9481 = vmatprep.subr.bf16.mxu0 %v8817
        %9482 = vmatpush1.bf16.msra.mxu0 %v8816
        %9483 = vmatprep.subr.bf16.mxu0 %v8819
        %9484 = vmatpush1.bf16.msra.mxu0 %v8818
        %9485 = vmatprep.mubr.bf16.mxu0 %v772
        %9486 = vmatmul.mubr.bf16.gmra.mrb[0].mxu0 %v771
        %v9487 = vpop.f32.mrb[0].mxu0
        %v9488 = vadd.f32 %v9405, %v9487
        %v9489 = vpop.f32.mrb[0].mxu0
        %v9490 = vadd.f32 %v9407, %v9489
        %v9491 = vpop.f32.mrb[0].mxu0
        %v9492 = vadd.f32 %v9409, %v9491
        %v9493 = vpop.f32.mrb[0].mxu0
        %v9494 = vadd.f32 %v9411, %v9493
        %9495 = vmatprep.mubr.bf16.mxu0 %v788
        %9496 = vmatmul.mubr.bf16.gmra.mrb[0].mxu0 %v787
        %v9497 = vpop.f32.mrb[0].mxu0
        %v9498 = vadd.f32 %v9415, %v9497
        %v9499 = vpop.f32.mrb[0].mxu0
        %v9500 = vadd.f32 %v9417, %v9499
        %v9501 = vpop.f32.mrb[0].mxu0
        %v9502 = vadd.f32 %v9419, %v9501
        %v9503 = vpop.f32.mrb[0].mxu0
        %v9504 = vadd.f32 %v9421, %v9503
        %9505 = vmatprep.mubr.bf16.mxu0 %v804
        %9506 = vmatmul.mubr.bf16.gmra.mrb[0].mxu0 %v803
        %v9507 = vpop.f32.mrb[0].mxu0
        %v9508 = vadd.f32 %v9425, %v9507
        %v9509 = vpop.f32.mrb[0].mxu0
        %v9510 = vadd.f32 %v9427, %v9509
        %v9511 = vpop.f32.mrb[0].mxu0
        %v9512 = vadd.f32 %v9429, %v9511
        %v9513 = vpop.f32.mrb[0].mxu0
        %v9514 = vadd.f32 %v9431, %v9513
        %9515 = vmatprep.mubr.bf16.mxu0 %v820
        %9516 = vmatmul.mubr.bf16.gmra.mrb[0].mxu0 %v819
        %v9517 = vpop.f32.mrb[0].mxu0
        %v9518 = vadd.f32 %v9435, %v9517
        %v9519 = vpop.f32.mrb[0].mxu0
        %v9520 = vadd.f32 %v9437, %v9519
        %v9521 = vpop.f32.mrb[0].mxu0
        %v9522 = vadd.f32 %v9439, %v9521
        %v9523 = vpop.f32.mrb[0].mxu0
        %v9524 = vadd.f32 %v9441, %v9523
        %9525 = vmatprep.mubr.bf16.mxu0 %v836
        %9526 = vmatmul.mubr.bf16.gmra.mrb[0].mxu0 %v835
        %v9527 = vpop.f32.mrb[0].mxu0
        %v9528 = vadd.f32 %v9445, %v9527
        %v9529 = vpop.f32.mrb[0].mxu0
        %v9530 = vadd.f32 %v9447, %v9529
        %v9531 = vpop.f32.mrb[0].mxu0
        %v9532 = vadd.f32 %v9449, %v9531
        %v9533 = vpop.f32.mrb[0].mxu0
        %v9534 = vadd.f32 %v9451, %v9533
        %9535 = vdwg.mxu0
        %9536 = vmatprep.subr.bf16.mxu0 %v8821
        %9537 = vmatpush1.bf16.msra.mxu0 %v8820
        %9538 = vmatprep.subr.bf16.mxu0 %v8823
        %9539 = vmatpush1.bf16.msra.mxu0 %v8822
        %9540 = vmatprep.subr.bf16.mxu0 %v8825
        %9541 = vmatpush1.bf16.msra.mxu0 %v8824
        %9542 = vmatprep.subr.bf16.mxu0 %v8827
        %9543 = vmatpush1.bf16.msra.mxu0 %v8826
        %9544 = vmatprep.subr.bf16.mxu0 %v8829
        %9545 = vmatpush1.bf16.msra.mxu0 %v8828
        %9546 = vmatprep.subr.bf16.mxu0 %v8831
        %9547 = vmatpush1.bf16.msra.mxu0 %v8830
        %9548 = vmatprep.subr.bf16.mxu0 %v8833
        %9549 = vmatpush1.bf16.msra.mxu0 %v8832
        %9550 = vmatprep.subr.bf16.mxu0 %v8835
        %9551 = vmatpush1.bf16.msra.mxu0 %v8834
        %9552 = vmatprep.subr.bf16.mxu0 %v8837
        %9553 = vmatpush1.bf16.msra.mxu0 %v8836
        %9554 = vmatprep.subr.bf16.mxu0 %v8839
        %9555 = vmatpush1.bf16.msra.mxu0 %v8838
        %9556 = vmatprep.subr.bf16.mxu0 %v8841
        %9557 = vmatpush1.bf16.msra.mxu0 %v8840
        %9558 = vmatprep.subr.bf16.mxu0 %v8843
        %9559 = vmatpush1.bf16.msra.mxu0 %v8842
        %9560 = vmatprep.subr.bf16.mxu0 %v8845
        %9561 = vmatpush1.bf16.msra.mxu0 %v8844
        %9562 = vmatprep.subr.bf16.mxu0 %v8847
        %9563 = vmatpush1.bf16.msra.mxu0 %v8846
        %9564 = vmatprep.subr.bf16.mxu0 %v8849
        %9565 = vmatpush1.bf16.msra.mxu0 %v8848
        %9566 = vmatprep.subr.bf16.mxu0 %v8851
        %9567 = vmatpush1.bf16.msra.mxu0 %v8850
        %9568 = vmatprep.mubr.bf16.mxu0 %v774
        %9569 = vmatmul.mubr.bf16.gmra.mrb[0].mxu0 %v773
        %v9570 = vpop.f32.mrb[0].mxu0
        %v9571 = vadd.f32 %v9488, %v9570
        %v9572 = vpop.f32.mrb[0].mxu0
        %v9573 = vadd.f32 %v9490, %v9572
        %v9574 = vpop.f32.mrb[0].mxu0
        %v9575 = vadd.f32 %v9492, %v9574
        %v9576 = vpop.f32.mrb[0].mxu0
        %v9577 = vadd.f32 %v9494, %v9576
        %9578 = vmatprep.mubr.bf16.mxu0 %v790
        %9579 = vmatmul.mubr.bf16.gmra.mrb[0].mxu0 %v789
        %v9580 = vpop.f32.mrb[0].mxu0
        %v9581 = vadd.f32 %v9498, %v9580
        %v9582 = vpop.f32.mrb[0].mxu0
        %v9583 = vadd.f32 %v9500, %v9582
        %v9584 = vpop.f32.mrb[0].mxu0
        %v9585 = vadd.f32 %v9502, %v9584
        %v9586 = vpop.f32.mrb[0].mxu0
        %v9587 = vadd.f32 %v9504, %v9586
        %9588 = vmatprep.mubr.bf16.mxu0 %v806
        %9589 = vmatmul.mubr.bf16.gmra.mrb[0].mxu0 %v805
        %v9590 = vpop.f32.mrb[0].mxu0
        %v9591 = vadd.f32 %v9508, %v9590
        %v9592 = vpop.f32.mrb[0].mxu0
        %v9593 = vadd.f32 %v9510, %v9592
        %v9594 = vpop.f32.mrb[0].mxu0
        %v9595 = vadd.f32 %v9512, %v9594
        %v9596 = vpop.f32.mrb[0].mxu0
        %v9597 = vadd.f32 %v9514, %v9596
        %9598 = vmatprep.mubr.bf16.mxu0 %v822
        %9599 = vmatmul.mubr.bf16.gmra.mrb[0].mxu0 %v821
        %v9600 = vpop.f32.mrb[0].mxu0
        %v9601 = vadd.f32 %v9518, %v9600
        %v9602 = vpop.f32.mrb[0].mxu0
        %v9603 = vadd.f32 %v9520, %v9602
        %v9604 = vpop.f32.mrb[0].mxu0
        %v9605 = vadd.f32 %v9522, %v9604
        %v9606 = vpop.f32.mrb[0].mxu0
        %v9607 = vadd.f32 %v9524, %v9606
        %9608 = vmatprep.mubr.bf16.mxu0 %v838
        %9609 = vmatmul.mubr.bf16.gmra.mrb[0].mxu0 %v837
        %v9610 = vpop.f32.mrb[0].mxu0
        %v9611 = vadd.f32 %v9528, %v9610
        %v9612 = vpop.f32.mrb[0].mxu0
        %v9613 = vadd.f32 %v9530, %v9612
        %v9614 = vpop.f32.mrb[0].mxu0
        %v9615 = vadd.f32 %v9532, %v9614
        %v9616 = vpop.f32.mrb[0].mxu0
        %v9617 = vadd.f32 %v9534, %v9616
        %9618 = vdwg.mxu0
        %9619 = vmatprep.subr.bf16.mxu0 %v8853
        %9620 = vmatpush1.bf16.msra.mxu0 %v8852
        %9621 = vmatprep.subr.bf16.mxu0 %v8855
        %9622 = vmatpush1.bf16.msra.mxu0 %v8854
        %9623 = vmatprep.subr.bf16.mxu0 %v8857
        %9624 = vmatpush1.bf16.msra.mxu0 %v8856
        %9625 = vmatprep.subr.bf16.mxu0 %v8859
        %9626 = vmatpush1.bf16.msra.mxu0 %v8858
        %9627 = vmatprep.subr.bf16.mxu0 %v8861
        %9628 = vmatpush1.bf16.msra.mxu0 %v8860
        %9629 = vmatprep.subr.bf16.mxu0 %v8863
        %9630 = vmatpush1.bf16.msra.mxu0 %v8862
        %9631 = vmatprep.subr.bf16.mxu0 %v8865
        %9632 = vmatpush1.bf16.msra.mxu0 %v8864
        %9633 = vmatprep.subr.bf16.mxu0 %v8867
        %9634 = vmatpush1.bf16.msra.mxu0 %v8866
        %9635 = vmatprep.subr.bf16.mxu0 %v8869
        %9636 = vmatpush1.bf16.msra.mxu0 %v8868
        %9637 = vmatprep.subr.bf16.mxu0 %v8871
        %9638 = vmatpush1.bf16.msra.mxu0 %v8870
        %9639 = vmatprep.subr.bf16.mxu0 %v8873
        %9640 = vmatpush1.bf16.msra.mxu0 %v8872
        %9641 = vmatprep.subr.bf16.mxu0 %v8875
        %9642 = vmatpush1.bf16.msra.mxu0 %v8874
        %9643 = vmatprep.subr.bf16.mxu0 %v8877
        %9644 = vmatpush1.bf16.msra.mxu0 %v8876
        %9645 = vmatprep.subr.bf16.mxu0 %v8879
        %9646 = vmatpush1.bf16.msra.mxu0 %v8878
        %9647 = vmatprep.subr.bf16.mxu0 %v8881
        %9648 = vmatpush1.bf16.msra.mxu0 %v8880
        %9649 = vmatprep.subr.bf16.mxu0 %v8883
        %9650 = vmatpush1.bf16.msra.mxu0 %v8882
        %9651 = vmatprep.mubr.bf16.mxu0 %v776
        %9652 = vmatmul.mubr.bf16.gmra.mrb[0].mxu0 %v775
        %v9653 = vpop.f32.mrb[0].mxu0
        %v9654 = vadd.f32 %v9571, %v9653
        %v9655 = vpop.f32.mrb[0].mxu0
        %v9656 = vadd.f32 %v9573, %v9655
        %v9657 = vpop.f32.mrb[0].mxu0
        %v9658 = vadd.f32 %v9575, %v9657
        %v9659 = vpop.f32.mrb[0].mxu0
        %v9660 = vadd.f32 %v9577, %v9659
        %9661 = vmatprep.mubr.bf16.mxu0 %v792
        %9662 = vmatmul.mubr.bf16.gmra.mrb[0].mxu0 %v791
        %v9663 = vpop.f32.mrb[0].mxu0
        %v9664 = vadd.f32 %v9581, %v9663
        %v9665 = vpop.f32.mrb[0].mxu0
        %v9666 = vadd.f32 %v9583, %v9665
        %v9667 = vpop.f32.mrb[0].mxu0
        %v9668 = vadd.f32 %v9585, %v9667
        %v9669 = vpop.f32.mrb[0].mxu0
        %v9670 = vadd.f32 %v9587, %v9669
        %9671 = vmatprep.mubr.bf16.mxu0 %v808
        %9672 = vmatmul.mubr.bf16.gmra.mrb[0].mxu0 %v807
        %v9673 = vpop.f32.mrb[0].mxu0
        %v9674 = vadd.f32 %v9591, %v9673
        %v9675 = vpop.f32.mrb[0].mxu0
        %v9676 = vadd.f32 %v9593, %v9675
        %v9677 = vpop.f32.mrb[0].mxu0
        %v9678 = vadd.f32 %v9595, %v9677
        %v9679 = vpop.f32.mrb[0].mxu0
        %v9680 = vadd.f32 %v9597, %v9679
        %9681 = vmatprep.mubr.bf16.mxu0 %v824
        %9682 = vmatmul.mubr.bf16.gmra.mrb[0].mxu0 %v823
        %v9683 = vpop.f32.mrb[0].mxu0
        %v9684 = vadd.f32 %v9601, %v9683
        %v9685 = vpop.f32.mrb[0].mxu0
        %v9686 = vadd.f32 %v9603, %v9685
        %v9687 = vpop.f32.mrb[0].mxu0
        %v9688 = vadd.f32 %v9605, %v9687
        %v9689 = vpop.f32.mrb[0].mxu0
        %v9690 = vadd.f32 %v9607, %v9689
        %9691 = vmatprep.mubr.bf16.mxu0 %v840
        %9692 = vmatmul.mubr.bf16.gmra.mrb[0].mxu0 %v839
        %v9693 = vpop.f32.mrb[0].mxu0
        %v9694 = vadd.f32 %v9611, %v9693
        %v9695 = vpop.f32.mrb[0].mxu0
        %v9696 = vadd.f32 %v9613, %v9695
        %v9697 = vpop.f32.mrb[0].mxu0
        %v9698 = vadd.f32 %v9615, %v9697
        %v9699 = vpop.f32.mrb[0].mxu0
        %v9700 = vadd.f32 %v9617, %v9699
        %9701 = vdwg.mxu0
        %9702 = vmatprep.subr.bf16.mxu0 %v8885
        %9703 = vmatpush1.bf16.msra.mxu0 %v8884
        %9704 = vmatprep.subr.bf16.mxu0 %v8887
        %9705 = vmatpush1.bf16.msra.mxu0 %v8886
        %9706 = vmatprep.subr.bf16.mxu0 %v8889
        %9707 = vmatpush1.bf16.msra.mxu0 %v8888
        %9708 = vmatprep.subr.bf16.mxu0 %v8891
        %9709 = vmatpush1.bf16.msra.mxu0 %v8890
        %9710 = vmatprep.subr.bf16.mxu0 %v8893
        %9711 = vmatpush1.bf16.msra.mxu0 %v8892
        %9712 = vmatprep.subr.bf16.mxu0 %v8895
        %9713 = vmatpush1.bf16.msra.mxu0 %v8894
        %9714 = vmatprep.subr.bf16.mxu0 %v8897
        %9715 = vmatpush1.bf16.msra.mxu0 %v8896
        %9716 = vmatprep.subr.bf16.mxu0 %v8899
        %9717 = vmatpush1.bf16.msra.mxu0 %v8898
        %9718 = vmatprep.subr.bf16.mxu0 %v8901
        %9719 = vmatpush1.bf16.msra.mxu0 %v8900
        %9720 = vmatprep.subr.bf16.mxu0 %v8903
        %9721 = vmatpush1.bf16.msra.mxu0 %v8902
        %9722 = vmatprep.subr.bf16.mxu0 %v8905
        %9723 = vmatpush1.bf16.msra.mxu0 %v8904
        %9724 = vmatprep.subr.bf16.mxu0 %v8907
        %9725 = vmatpush1.bf16.msra.mxu0 %v8906
        %9726 = vmatprep.subr.bf16.mxu0 %v8909
        %9727 = vmatpush1.bf16.msra.mxu0 %v8908
        %9728 = vmatprep.subr.bf16.mxu0 %v8911
        %9729 = vmatpush1.bf16.msra.mxu0 %v8910
        %9730 = vmatprep.subr.bf16.mxu0 %v8913
        %9731 = vmatpush1.bf16.msra.mxu0 %v8912
        %9732 = vmatprep.subr.bf16.mxu0 %v8915
        %9733 = vmatpush1.bf16.msra.mxu0 %v8914
        %9734 = vmatprep.mubr.bf16.mxu0 %v778
        %9735 = vmatmul.mubr.bf16.gmra.mrb[0].mxu0 %v777
        %v9736 = vpop.f32.mrb[0].mxu0
        %v9737 = vadd.f32 %v9654, %v9736
        %v9738 = vpop.f32.mrb[0].mxu0
        %v9739 = vadd.f32 %v9656, %v9738
        %v9740 = vpop.f32.mrb[0].mxu0
        %v9741 = vadd.f32 %v9658, %v9740
        %v9742 = vpop.f32.mrb[0].mxu0
        %v9743 = vadd.f32 %v9660, %v9742
        %9744 = vmatprep.mubr.bf16.mxu0 %v794
        %9745 = vmatmul.mubr.bf16.gmra.mrb[0].mxu0 %v793
        %v9746 = vpop.f32.mrb[0].mxu0
        %v9747 = vadd.f32 %v9664, %v9746
        %v9748 = vpop.f32.mrb[0].mxu0
        %v9749 = vadd.f32 %v9666, %v9748
        %v9750 = vpop.f32.mrb[0].mxu0
        %v9751 = vadd.f32 %v9668, %v9750
        %v9752 = vpop.f32.mrb[0].mxu0
        %v9753 = vadd.f32 %v9670, %v9752
        %9754 = vmatprep.mubr.bf16.mxu0 %v810
        %9755 = vmatmul.mubr.bf16.gmra.mrb[0].mxu0 %v809
        %v9756 = vpop.f32.mrb[0].mxu0
        %v9757 = vadd.f32 %v9674, %v9756
        %v9758 = vpop.f32.mrb[0].mxu0
        %v9759 = vadd.f32 %v9676, %v9758
        %v9760 = vpop.f32.mrb[0].mxu0
        %v9761 = vadd.f32 %v9678, %v9760
        %v9762 = vpop.f32.mrb[0].mxu0
        %v9763 = vadd.f32 %v9680, %v9762
        %9764 = vmatprep.mubr.bf16.mxu0 %v826
        %9765 = vmatmul.mubr.bf16.gmra.mrb[0].mxu0 %v825
        %v9766 = vpop.f32.mrb[0].mxu0
        %v9767 = vadd.f32 %v9684, %v9766
        %v9768 = vpop.f32.mrb[0].mxu0
        %v9769 = vadd.f32 %v9686, %v9768
        %v9770 = vpop.f32.mrb[0].mxu0
        %v9771 = vadd.f32 %v9688, %v9770
        %v9772 = vpop.f32.mrb[0].mxu0
        %v9773 = vadd.f32 %v9690, %v9772
        %9774 = vmatprep.mubr.bf16.mxu0 %v842
        %9775 = vmatmul.mubr.bf16.gmra.mrb[0].mxu0 %v841
        %v9776 = vpop.f32.mrb[0].mxu0
        %v9777 = vadd.f32 %v9694, %v9776
        %v9778 = vpop.f32.mrb[0].mxu0
        %v9779 = vadd.f32 %v9696, %v9778
        %v9780 = vpop.f32.mrb[0].mxu0
        %v9781 = vadd.f32 %v9698, %v9780
        %v9782 = vpop.f32.mrb[0].mxu0
        %v9783 = vadd.f32 %v9700, %v9782
        %9784 = vdwg.mxu0
        %9785 = vmatprep.subr.bf16.mxu0 %v8917
        %9786 = vmatpush1.bf16.msra.mxu0 %v8916
        %9787 = vmatprep.subr.bf16.mxu0 %v8919
        %9788 = vmatpush1.bf16.msra.mxu0 %v8918
        %9789 = vmatprep.subr.bf16.mxu0 %v8921
        %9790 = vmatpush1.bf16.msra.mxu0 %v8920
        %9791 = vmatprep.subr.bf16.mxu0 %v8923
        %9792 = vmatpush1.bf16.msra.mxu0 %v8922
        %9793 = vmatprep.subr.bf16.mxu0 %v8925
        %9794 = vmatpush1.bf16.msra.mxu0 %v8924
        %9795 = vmatprep.subr.bf16.mxu0 %v8927
        %9796 = vmatpush1.bf16.msra.mxu0 %v8926
        %9797 = vmatprep.subr.bf16.mxu0 %v8929
        %9798 = vmatpush1.bf16.msra.mxu0 %v8928
        %9799 = vmatprep.subr.bf16.mxu0 %v8931
        %9800 = vmatpush1.bf16.msra.mxu0 %v8930
        %9801 = vmatprep.subr.bf16.mxu0 %v8933
        %9802 = vmatpush1.bf16.msra.mxu0 %v8932
        %9803 = vmatprep.subr.bf16.mxu0 %v8935
        %9804 = vmatpush1.bf16.msra.mxu0 %v8934
        %9805 = vmatprep.subr.bf16.mxu0 %v8937
        %9806 = vmatpush1.bf16.msra.mxu0 %v8936
        %9807 = vmatprep.subr.bf16.mxu0 %v8939
        %9808 = vmatpush1.bf16.msra.mxu0 %v8938
        %9809 = vmatprep.subr.bf16.mxu0 %v8941
        %9810 = vmatpush1.bf16.msra.mxu0 %v8940
        %9811 = vmatprep.subr.bf16.mxu0 %v8943
        %9812 = vmatpush1.bf16.msra.mxu0 %v8942
        %9813 = vmatprep.subr.bf16.mxu0 %v8945
        %9814 = vmatpush1.bf16.msra.mxu0 %v8944
        %9815 = vmatprep.subr.bf16.mxu0 %v8947
        %9816 = vmatpush1.bf16.msra.mxu0 %v8946
        %9817 = vmatprep.mubr.bf16.mxu0 %v780
        %9818 = vmatmul.mubr.bf16.gmra.mrb[0].mxu0 %v779
        %v9819 = vpop.f32.mrb[0].mxu0
        %v9820 = vadd.f32 %v9737, %v9819
        %v9821 = vpop.f32.mrb[0].mxu0
        %v9822 = vadd.f32 %v9739, %v9821
        %v9823 = vpop.f32.mrb[0].mxu0
        %v9824 = vadd.f32 %v9741, %v9823
        %v9825 = vpop.f32.mrb[0].mxu0
        %v9826 = vadd.f32 %v9743, %v9825
        %9827 = vmatprep.mubr.bf16.mxu0 %v796
        %9828 = vmatmul.mubr.bf16.gmra.mrb[0].mxu0 %v795
        %v9829 = vpop.f32.mrb[0].mxu0
        %v9830 = vadd.f32 %v9747, %v9829
        %v9831 = vpop.f32.mrb[0].mxu0
        %v9832 = vadd.f32 %v9749, %v9831
        %v9833 = vpop.f32.mrb[0].mxu0
        %v9834 = vadd.f32 %v9751, %v9833
        %v9835 = vpop.f32.mrb[0].mxu0
        %v9836 = vadd.f32 %v9753, %v9835
        %9837 = vmatprep.mubr.bf16.mxu0 %v812
        %9838 = vmatmul.mubr.bf16.gmra.mrb[0].mxu0 %v811
        %v9839 = vpop.f32.mrb[0].mxu0
        %v9840 = vadd.f32 %v9757, %v9839
        %v9841 = vpop.f32.mrb[0].mxu0
        %v9842 = vadd.f32 %v9759, %v9841
        %v9843 = vpop.f32.mrb[0].mxu0
        %v9844 = vadd.f32 %v9761, %v9843
        %v9845 = vpop.f32.mrb[0].mxu0
        %v9846 = vadd.f32 %v9763, %v9845
        %9847 = vmatprep.mubr.bf16.mxu0 %v828
        %9848 = vmatmul.mubr.bf16.gmra.mrb[0].mxu0 %v827
        %v9849 = vpop.f32.mrb[0].mxu0
        %v9850 = vadd.f32 %v9767, %v9849
        %v9851 = vpop.f32.mrb[0].mxu0
        %v9852 = vadd.f32 %v9769, %v9851
        %v9853 = vpop.f32.mrb[0].mxu0
        %v9854 = vadd.f32 %v9771, %v9853
        %v9855 = vpop.f32.mrb[0].mxu0
        %v9856 = vadd.f32 %v9773, %v9855
        %9857 = vmatprep.mubr.bf16.mxu0 %v844
        %9858 = vmatmul.mubr.bf16.gmra.mrb[0].mxu0 %v843
        %v9859 = vpop.f32.mrb[0].mxu0
        %v9860 = vadd.f32 %v9777, %v9859
        %v9861 = vpop.f32.mrb[0].mxu0
        %v9862 = vadd.f32 %v9779, %v9861
        %v9863 = vpop.f32.mrb[0].mxu0
        %v9864 = vadd.f32 %v9781, %v9863
        %v9865 = vpop.f32.mrb[0].mxu0
        %v9866 = vadd.f32 %v9783, %v9865
        %9867 = vdwg.mxu0
        %v9868 = vmul.f32 %v9820, %v9820
        %v9869 = vmul.f32 %v9824, %v9824
        %v9870 = vmul.f32 %v9830, %v9830
        %v9871 = vmul.f32 %v9834, %v9834
        %v9872 = vmul.f32 %v9840, %v9840
        %v9873 = vmul.f32 %v9822, %v9822
        %v9874 = vmul.f32 %v9826, %v9826
        %v9875 = vmul.f32 %v9832, %v9832
        %v9876 = vmul.f32 %v9836, %v9836
        %v9877 = vmul.f32 %v9842, %v9842
        %v9878 = vadd.f32 %v9868, %v9873
        %v9879 = vadd.f32 %v9869, %v9874
        %v9880 = vadd.f32 %v9870, %v9875
        %v9881 = vadd.f32 %v9871, %v9876
        %v9882 = vadd.f32 %v9872, %v9877
        %v9883 = vrsqrt.pop %v9878
        %v9884 = vmul.f32 %v9878, %v9883
        %vm9885 = vcmp.eq.f32.partialorder %v9878, inf
        %v9886 = vsel %vm9885, %v9878, %v9884
        %vm9887 = vcmp.eq.f32.partialorder %v9878, 0.0
        %v9888 = vand.u32 %v9878, 2147483648
        %v9889 = vsel %vm9887, %v9888, %v9886
        %v9890 = vrsqrt.pop %v9879
        %v9891 = vmul.f32 %v9879, %v9890
        %vm9892 = vcmp.eq.f32.partialorder %v9879, inf
        %v9893 = vsel %vm9892, %v9879, %v9891
        %vm9894 = vcmp.eq.f32.partialorder %v9879, 0.0
        %v9895 = vand.u32 %v9879, 2147483648
        %v9896 = vsel %vm9894, %v9895, %v9893
        %v9897 = vrsqrt.pop %v9880
        %v9898 = vmul.f32 %v9880, %v9897
        %vm9899 = vcmp.eq.f32.partialorder %v9880, inf
        %v9900 = vsel %vm9899, %v9880, %v9898
        %vm9901 = vcmp.eq.f32.partialorder %v9880, 0.0
        %v9902 = vand.u32 %v9880, 2147483648
        %v9903 = vsel %vm9901, %v9902, %v9900
        %v9904 = vrsqrt.pop %v9881
        %v9905 = vmul.f32 %v9881, %v9904
        %vm9906 = vcmp.eq.f32.partialorder %v9881, inf
        %v9907 = vsel %vm9906, %v9881, %v9905
        %vm9908 = vcmp.eq.f32.partialorder %v9881, 0.0
        %v9909 = vand.u32 %v9881, 2147483648
        %v9910 = vsel %vm9908, %v9909, %v9907
        %v9911 = vrsqrt.pop %v9882
        %v9912 = vmul.f32 %v9882, %v9911
        %vm9913 = vcmp.eq.f32.partialorder %v9882, inf
        %v9914 = vsel %vm9913, %v9882, %v9912
        %vm9915 = vcmp.eq.f32.partialorder %v9882, 0.0
        %v9916 = vand.u32 %v9882, 2147483648
        %v9917 = vsel %vm9915, %v9916, %v9914
        %v9918 = vmul.f32 %v9844, %v9844
        %v9919 = vmul.f32 %v9850, %v9850
        %v9920 = vmul.f32 %v9854, %v9854
        %v9921 = vmul.f32 %v9860, %v9860
        %v9922 = vmul.f32 %v9864, %v9864
        %v9923 = vmul.f32 %v9846, %v9846
        %v9924 = vmul.f32 %v9852, %v9852
        %v9925 = vmul.f32 %v9856, %v9856
        %v9926 = vmul.f32 %v9862, %v9862
        %v9927 = vmul.f32 %v9866, %v9866
        %v9928 = vadd.f32 %v9918, %v9923
        %v9929 = vadd.f32 %v9919, %v9924
        %v9930 = vadd.f32 %v9920, %v9925
        %v9931 = vadd.f32 %v9921, %v9926
        %v9932 = vadd.f32 %v9922, %v9927
        %v9933 = vrsqrt.pop %v9928
        %v9934 = vmul.f32 %v9928, %v9933
        %vm9935 = vcmp.eq.f32.partialorder %v9928, inf
        %v9936 = vsel %vm9935, %v9928, %v9934
        %vm9937 = vcmp.eq.f32.partialorder %v9928, 0.0
        %v9938 = vand.u32 %v9928, 2147483648
        %v9939 = vsel %vm9937, %v9938, %v9936
        %v9940 = vrsqrt.pop %v9929
        %v9941 = vmul.f32 %v9929, %v9940
        %vm9942 = vcmp.eq.f32.partialorder %v9929, inf
        %v9943 = vsel %vm9942, %v9929, %v9941
        %vm9944 = vcmp.eq.f32.partialorder %v9929, 0.0
        %v9945 = vand.u32 %v9929, 2147483648
        %v9946 = vsel %vm9944, %v9945, %v9943
        %v9947 = vrsqrt.pop %v9930
        %v9948 = vmul.f32 %v9930, %v9947
        %vm9949 = vcmp.eq.f32.partialorder %v9930, inf
        %v9950 = vsel %vm9949, %v9930, %v9948
        %vm9951 = vcmp.eq.f32.partialorder %v9930, 0.0
        %v9952 = vand.u32 %v9930, 2147483648
        %v9953 = vsel %vm9951, %v9952, %v9950
        %v9954 = vrsqrt.pop %v9931
        %v9955 = vmul.f32 %v9931, %v9954
        %vm9956 = vcmp.eq.f32.partialorder %v9931, inf
        %v9957 = vsel %vm9956, %v9931, %v9955
        %vm9958 = vcmp.eq.f32.partialorder %v9931, 0.0
        %v9959 = vand.u32 %v9931, 2147483648
        %v9960 = vsel %vm9958, %v9959, %v9957
        %v9961 = vrsqrt.pop %v9932
        %v9962 = vmul.f32 %v9932, %v9961
        %vm9963 = vcmp.eq.f32.partialorder %v9932, inf
        %v9964 = vsel %vm9963, %v9932, %v9962
        %vm9965 = vcmp.eq.f32.partialorder %v9932, 0.0
        %v9966 = vand.u32 %v9932, 2147483648
        %v9967 = vsel %vm9965, %v9966, %v9964
        %v9968 = vsub.f32 %v9889, %v9939
        %v9969 = vsub.f32 %v9896, %v9946
        %v9970 = vsub.f32 %v9903, %v9953
        %v9971 = vsub.f32 %v9910, %v9960
        %v9972 = vsub.f32 %v9917, %v9967
        %v9973 = vmul.f32 %v9968, %v9968
        %v9974 = vmul.f32 %v9969, %v9969
        %v9975 = vmul.f32 %v9970, %v9970
        %v9976 = vmul.f32 %v9971, %v9971
        %v9977 = vmul.f32 %v9972, %v9972
        %v9978 = vadd.f32 %v7663, %v9973
        %v9979 = vadd.f32 %v7664, %v9974
        %v9980 = vadd.f32 %v7665, %v9975
        %v9981 = vadd.f32 %v7666, %v9976
        %v9982 = vadd.f32 %v7667, %v9977
        %v9983 = vadd.f32 %v9978, %v9979
        %v9984 = vadd.f32 %v9983, %v9980
        %v9985 = vadd.f32 %v9984, %v9981
        %v9986 = vadd.f32 %v9985, %v9982
        %9987 = vst [vmem:[%s182] sm:$0xff] %v9986
        %s9988 = sand.u32 %s92, 1
        %s9989 = scalar_lea.sflag [#allocation4], %s9988
        %s9990 = sand.u32 %s92, 1
        %s9991 = smul.addr %s9990, 8
        %s9992 = scalar_lea.vmem [#allocation7], %s9991
        // Predicated region
        $region37: #{tpu_custom_call.1} parent=27 // pred_check
          %p9993 = pneg %p102
        $region38: #{tpu_custom_call.1} parent=27 // pred_check_branch
          %9995 = sbr.rel (%p9993) target = $region40
        $region39: #{tpu_custom_call.1} parent=27 // pred_region
          %s9997 = ssub.s32 128, 128
          %9998 = vsyncadd %s9989, %s9997
          %s9999 = smul.addr %s22, 2
          %s10000 = sadd.s32 %s23, %s9999
          %s10001 = smul.addr %s10000, 128
          %s10002 = scalar_lea.hbm %s2, %s10001
          %s10004 = sshll.u32 %s9992, 4
          %s10005 = int_to_ptr.vmem [resolvable:$true] %s10004
          %10007 = dma.vmem_to_hbm [thread:$0]  %s10005, 128, %s10002, %s9989
        $region40: #{tpu_custom_call.1} parent=27 // pred_fallthru
          _
      $region28: #{tpu_custom_call.1} parent=5 // pred_fallthru
        _
      %p10008 = scmp.le.s32.totalorder 2, %s13
      // Predicated region
      $region41: #{tpu_custom_call.1} parent=5 // pred_check
        %p10009 = pneg %p10008
      $region42: #{tpu_custom_call.1} parent=5 // pred_check_branch
        %10011 = sbr.rel (%p10009) target = $region44
      $region43: #{tpu_custom_call.1} parent=5 // pred_region
        %s10012 = ssub.s32 %s13, 2
        // Predicated region
        $region45: #{tpu_custom_call.1} parent=43 // pred_check
          %p10013 = pneg %p108
        $region46: #{tpu_custom_call.1} parent=43 // pred_check_branch
          %10015 = sbr.rel (%p10013) target = $region48
        $region47: #{tpu_custom_call.1} parent=43 // pred_region
          %s10016 = sand.u32 %s93, 1
          %s10017 = scalar_lea.sflag [#allocation4], %s10016
          %s10018 = sand.u32 %s93, 1
          %s10019 = smul.addr %s10018, 8
          %s10020 = scalar_lea.vmem [#allocation7], %s10019
          %10021 = dma.done %s10017, 128
        $region48: #{tpu_custom_call.1} parent=43 // pred_fallthru
          _
      $region44: #{tpu_custom_call.1} parent=5 // pred_fallthru
        _
    $region6: #{tpu_custom_call.1} parent=1 // loop_footer
      %s17 = sadd.s32 1, %s13
    $region7: #{tpu_custom_call.1} parent=1 // loop_footer_branch
      %12 = sbr.rel target = $region3
    $region8: #{tpu_custom_call.1} parent=1 // loop_exit
      _
    %10022 = vsyncpa [#allocation3], 1
    %s10023 = scalar_lea.sflag [#allocation3], 1
    %10024 = vsyncpa %s10023, 1
    %10025 = vsyncpa [#allocation6], 1
    %10026 = vsyncpa [#allocation4], 1
    %s10027 = scalar_lea.sflag [#allocation4], 1
    %10028 = vsyncpa %s10027, 1

</llo_original>
